<compile_context>
chip_gen: v7x
topology: tpu7x:2x2x1
jax: 0.10.0
libtpu: 0.0.40
codegen_flags: <defaults>
</compile_context>

<pallas_src>
import functools

import jax
import jax.numpy as jnp
from jax.experimental import pallas as pl
from jax.experimental.pallas import tpu as pltpu

EMB_DIM = 4096   # fc1 = nn.Linear(4096, 1)  =>  embedding dimension is 4096
N_SPLITS = 2     # split the embedding axis into 2 halves (1 per TC on v7x)


# ----------------------------------------------------------------------------
# Fused kernel. Grid = (half h [parallel], weight tile j [arbitrary/reduction]):
#   e   = relu(x_stacked @ W[:, col:col+tn] + b_emb[col:col+tn])   (one MXU dot)
#   d   = |e[:B] - e[B:]|                                          (L1Dist)
#   acc += d * w_fc1[col:col+tn]                                   (VPU only)
#   last tile of the half: o[h] = sum_lanes(acc)   (single XLU reduce)
# Bias + sigmoid of the fc1 head happen in the wrapper after summing the two
# per-half partials (sigmoid is nonlinear, so it must follow the full sum).
# ----------------------------------------------------------------------------
def _siamese_fused_kernel(x_ref, w_ref, be_ref, wfc_ref, o_ref, acc_ref,
                          *, batch, tn):
    h = pl.program_id(0)           # which half of the embedding axis
    j = pl.program_id(1)           # weight tile within the half
    n_inner = pl.num_programs(1)

    @pl.when(j == 0)
    def _():
        acc_ref[...] = jnp.zeros_like(acc_ref)

    # Column offset of this tile inside the resident (1, 4096) bias / fc1 rows.
    col = pl.multiple_of((h * n_inner + j) * tn, tn)

    # Single stacked matmul for both images: (2B, Din) @ (Din, tn) -> (2B, tn),
    # bf16 on the MXU with f32 accumulation; bias + ReLU in f32 on the VPU.
    e = jnp.maximum(
        jnp.dot(x_ref[...], w_ref[...], preferred_element_type=jnp.float32)
        + be_ref[:, pl.ds(col, tn)],
        0.0)

    # L1 distance between the two halves of the stacked batch, then a
    # lanes-preserving accumulate of the fc1 partial products (no per-step XLU).
    d = jnp.abs(e[:batch, :] - e[batch:, :])                 # (B, tn)
    acc_ref[...] += d * wfc_ref[:, pl.ds(col, tn)]

    @pl.when(j == n_inner - 1)
    def _():
        # One cross-lane reduce per half, in the epilogue only.
        o_ref[0] = jnp.sum(acc_ref[...], axis=-1, keepdims=True)


def siamese_forward(params, input_image, validation_image, *, tn=2048):
    """Full SiameseNet forward in a single pallas_call.

    tn=2048 (bf16): 1024x2048 weight tile = 4 MiB, double-buffered 8 MiB —
    fits the v5e 16 MiB scoped default, v6e's 32 MiB, and v7x's 32-of-64 MiB.
    Residents (stacked input, b_emb, fc1 row, (B,tn) accumulator) add < 0.1 MiB.
    """
    B = input_image.shape[0]
    w_emb = params["W_emb"]
    assert w_emb.dtype == jnp.bfloat16, (
        "Store W_emb in bf16 at init; the per-call cast was 3x the kernel's "
        "own HBM traffic.")
    d_in, d_out = w_emb.shape

    tn = min(tn, d_out // N_SPLITS)
    assert d_out % (N_SPLITS * tn) == 0
    n_inner = d_out // (N_SPLITS * tn)

    # Stack the two images so both share one pass over the weight tiles.
    xa = input_image.reshape(B, -1).astype(jnp.bfloat16)
    xb = validation_image.reshape(B, -1).astype(jnp.bfloat16)
    x = jnp.concatenate([xa, xb], axis=0)                    # (2B, d_in)

    cost = pl.CostEstimate(
        flops=2 * (2 * B) * d_in * d_out,
        transcendentals=0,
        bytes_accessed=(d_in * d_out * 2            # W_emb (bf16), streamed once
                        + 2 * B * d_in * 2          # stacked inputs (bf16)
                        + 2 * d_out * 4             # b_emb + fc1 row (f32)
                        + N_SPLITS * B * 4),        # partial logits out
    )

    partials = pl.pallas_call(
        functools.partial(_siamese_fused_kernel, batch=B, tn=tn),
        out_shape=jax.ShapeDtypeStruct((N_SPLITS, B, 1), jnp.float32),
        grid_spec=pltpu.PrefetchScalarGridSpec(
            num_scalar_prefetch=0,
            grid=(N_SPLITS, n_inner),
            in_specs=[
                # stacked inputs, resident across the whole grid
                pl.BlockSpec((2 * B, d_in), lambda h, j: (0, 0)),
                # W_emb tile for (half h, tile j)
                pl.BlockSpec((d_in, tn), lambda h, j: (0, h * n_inner + j)),
                # b_emb and fc1 row: fully resident, sliced with pl.ds in-kernel
                pl.BlockSpec((1, d_out), lambda h, j: (0, 0)),
                pl.BlockSpec((1, d_out), lambda h, j: (0, 0)),
            ],
            out_specs=pl.BlockSpec((1, B, 1), lambda h, j: (h, 0, 0)),
            scratch_shapes=[pltpu.VMEM((B, tn), jnp.float32)],  # fc1 partials
        ),
        compiler_params=pltpu.CompilerParams(
            # Outer axis (embedding-axis halves) is independent -> "parallel"
            # (sharded across the 2 TCs on v7x); inner axis is the fused-head
            # reduction -> "arbitrary".
            dimension_semantics=("parallel", "arbitrary"),
        ),
        cost_estimate=cost,
    )(x, w_emb, params["b_emb"], params["W_fc1_row"])

    # Combine per-half partial logits; bias + sigmoid are a trivial XLA epilogue.
    return jax.nn.sigmoid(jnp.sum(partials, axis=0) + params["b_fc1"])


# ----------------------------------------------------------------------------
# Pure-JAX reference (same bf16 matmul numerics as the kernel).
# ----------------------------------------------------------------------------
def _reference_forward(params, input_image, validation_image):
    B = input_image.shape[0]
    xa = input_image.reshape(B, -1).astype(jnp.bfloat16)
    xb = validation_image.reshape(B, -1).astype(jnp.bfloat16)
    w = params["W_emb"]                                       # already bf16
    ea = jnp.maximum(
        jnp.dot(xa, w, preferred_element_type=jnp.float32) + params["b_emb"], 0.0)
    eb = jnp.maximum(
        jnp.dot(xb, w, preferred_element_type=jnp.float32) + params["b_emb"], 0.0)
    d = jnp.abs(ea - eb)
    return jax.nn.sigmoid(
        jnp.sum(d * params["W_fc1_row"], axis=-1, keepdims=True) + params["b_fc1"])


if __name__ == "__main__":
    key = jax.random.PRNGKey(0)
    k_img_a, k_img_b, k_we, k_be, k_wf, k_bf = jax.random.split(key, 6)

    # Small example inputs (NCHW like PyTorch): batch=2, channels=4, spatial=16x16.
    B, C, H, W = 2, 4, 16, 16
    D_in = C * H * W  # 1024
    input_image = jax.random.normal(k_img_a, (B, C, H, W), dtype=jnp.float32)
    validation_image = jax.random.normal(k_img_b, (B, C, H, W), dtype=jnp.float32)

    # Deterministic parameter init (PyTorch-Linear-style uniform bounds).
    emb_bound = 1.0 / jnp.sqrt(jnp.float32(D_in))
    fc_bound = 1.0 / jnp.sqrt(jnp.float32(EMB_DIM))
    params = {
        # embedding-net stand-in: Linear(1024 -> 4096) + ReLU.
        # Weights cast to bf16 ONCE here (cast hoisted out of the call path).
        "W_emb": jax.random.uniform(k_we, (D_in, EMB_DIM), jnp.float32,
                                    -emb_bound, emb_bound).astype(jnp.bfloat16),
        "b_emb": jax.random.uniform(k_be, (1, EMB_DIM), jnp.float32,
                                    -emb_bound, emb_bound),
        # fc1: Linear(4096 -> 1); PyTorch weight (1, 4096) kept as a row vector.
        "W_fc1_row": jax.random.uniform(k_wf, (1, EMB_DIM), jnp.float32,
                                        -fc_bound, fc_bound),
        "b_fc1": jax.random.uniform(k_bf, (1, 1), jnp.float32,
                                    -fc_bound, fc_bound),
    }

    out = jax.block_until_ready(siamese_forward(params, input_image, validation_image))
    ref = jax.block_until_ready(_reference_forward(params, input_image, validation_image))

    assert out.shape == (B, 1), out.shape
    # bf16 matmul numerics are matched in the reference; residual difference is
    # only partial-sum order of the fused/split fc1 reduction.
    assert jnp.allclose(out, ref, atol=1e-3, rtol=1e-3), (out, ref)
    print("KERNEL_OK")
</pallas_src>

<mosaic_0001>
module attributes {stable_mosaic.version = 11 : i64} {
  func.func @_siamese_fused_kernel(%arg0: i32, %arg1: i32, %arg2: memref<4x1024xbf16, #tpu.memory_space<vmem>>, %arg3: memref<1024x2048xbf16, #tpu.memory_space<vmem>>, %arg4: memref<1x4096xf32, #tpu.memory_space<vmem>>, %arg5: memref<1x4096xf32, #tpu.memory_space<vmem>>, %arg6: memref<1x2x1xf32, #tpu.memory_space<vmem>>, %arg7: memref<2x2048xf32, #tpu.memory_space<vmem>>) attributes {dimension_semantics = [#tpu.dimension_semantics<parallel>, #tpu.dimension_semantics<arbitrary>], iteration_bounds = array<i64: 2, 1>, scalar_prefetch = 0 : i64, scratch_operands = 1 : i64, tpu.core_type = #tpu.core_type<tc>, window_params = [{pipeline_mode = #tpu.pipeline_mode<synchronous>, transform_indices = @transform_0, window_bounds = array<i64: 4, 1024>}, {transform_indices = @transform_1, window_bounds = array<i64: 1024, 2048>}, {pipeline_mode = #tpu.pipeline_mode<synchronous>, transform_indices = @transform_2, window_bounds = array<i64: 1, 4096>}, {pipeline_mode = #tpu.pipeline_mode<synchronous>, transform_indices = @transform_3, window_bounds = array<i64: 1, 4096>}, {transform_indices = @transform_4, window_bounds = array<i64: 1, 2, 1>}]} {
    %c0_i32 = arith.constant 0 : i32
    %0 = arith.cmpi eq, %arg1, %c0_i32 : i32
    %1 = arith.extui %0 : i1 to i32
    %c0_i32_0 = arith.constant 0 : i32
    %2 = arith.cmpi ne, %1, %c0_i32_0 : i32
    scf.if %2 {
      %cst_13 = arith.constant 0.000000e+00 : f32
      %30 = vector.broadcast %cst_13 : f32 to vector<2x2048xf32>
      %c0_14 = arith.constant 0 : index
      %c0_15 = arith.constant 0 : index
      %31 = vector.load %arg7[%c0_14, %c0_15] : memref<2x2048xf32, #tpu.memory_space<vmem>>, vector<2x2048xf32>
      tpu.vector_store %arg7[%c0_14, %c0_15], %30 {strides = array<i32>} : memref<2x2048xf32, #tpu.memory_space<vmem>>, vector<2x2048xf32>,
    } else {
    }
    %c1_i32 = arith.constant 1 : i32
    %3 = arith.muli %arg0, %c1_i32 : i32
    %4 = arith.addi %3, %arg1 : i32
    %c2048_i32 = arith.constant 2048 : i32
    %5 = arith.muli %4, %c2048_i32 : i32
    %6 = tpu.assume_multiple %5, 2048 : i32
    %c0 = arith.constant 0 : index
    %c0_1 = arith.constant 0 : index
    %7 = vector.load %arg2[%c0, %c0_1] : memref<4x1024xbf16, #tpu.memory_space<vmem>>, vector<4x1024xbf16>
    %c0_2 = arith.constant 0 : index
    %c0_3 = arith.constant 0 : index
    %8 = vector.load %arg3[%c0_2, %c0_3] : memref<1024x2048xbf16, #tpu.memory_space<vmem>>, vector<1024x2048xbf16>
    %cst = arith.constant dense<0.000000e+00> : vector<4x2048xf32>
    %9 = tpu.matmul %7, %8, %cst {dimension_numbers = #tpu.dot_dimension_numbers<[1], [0], [0], [1], [0, 0, 1, 1], [], []>} : vector<4x1024xbf16>, vector<1024x2048xbf16>, vector<4x2048xf32> -> vector<4x2048xf32>
    %c0_4 = arith.constant 0 : index
    %10 = arith.index_cast %6 : i32 to index
    %11 = vector.load %arg4[%c0_4, %10] : memref<1x4096xf32, #tpu.memory_space<vmem>>, vector<1x2048xf32>
    %12 = vector.broadcast %11 : vector<1x2048xf32> to vector<4x2048xf32>
    %13 = arith.addf %9, %12 : vector<4x2048xf32>
    %cst_5 = arith.constant 0.000000e+00 : f32
    %14 = vector.broadcast %cst_5 : f32 to vector<4x2048xf32>
    %15 = arith.maximumf %13, %14 : vector<4x2048xf32>
    %16 = vector.extract_strided_slice %15 {offsets = [0, 0], sizes = [2, 2048], strides = [1, 1]} : vector<4x2048xf32> to vector<2x2048xf32>
    %17 = vector.extract_strided_slice %15 {offsets = [2, 0], sizes = [2, 2048], strides = [1, 1]} : vector<4x2048xf32> to vector<2x2048xf32>
    %18 = arith.subf %16, %17 : vector<2x2048xf32>
    %19 = math.absf %18 : vector<2x2048xf32>
    %c0_6 = arith.constant 0 : index
    %c0_7 = arith.constant 0 : index
    %20 = vector.load %arg7[%c0_6, %c0_7] : memref<2x2048xf32, #tpu.memory_space<vmem>>, vector<2x2048xf32>
    %c0_8 = arith.constant 0 : index
    %21 = arith.index_cast %6 : i32 to index
    %22 = vector.load %arg5[%c0_8, %21] : memref<1x4096xf32, #tpu.memory_space<vmem>>, vector<1x2048xf32>
    %23 = vector.broadcast %22 : vector<1x2048xf32> to vector<2x2048xf32>
    %24 = arith.mulf %19, %23 : vector<2x2048xf32>
    %25 = arith.addf %20, %24 : vector<2x2048xf32>
    %c0_9 = arith.constant 0 : index
    %c0_10 = arith.constant 0 : index
    %26 = vector.load %arg7[%c0_9, %c0_10] : memref<2x2048xf32, #tpu.memory_space<vmem>>, vector<2x2048xf32>
    tpu.vector_store %arg7[%c0_9, %c0_10], %25 {strides = array<i32>} : memref<2x2048xf32, #tpu.memory_space<vmem>>, vector<2x2048xf32>,
    %c0_i32_11 = arith.constant 0 : i32
    %27 = arith.cmpi eq, %arg1, %c0_i32_11 : i32
    %28 = arith.extui %27 : i1 to i32
    %c0_i32_12 = arith.constant 0 : i32
    %29 = arith.cmpi ne, %28, %c0_i32_12 : i32
    scf.if %29 {
      %c0_13 = arith.constant 0 : index
      %c0_14 = arith.constant 0 : index
      %30 = vector.load %arg7[%c0_13, %c0_14] : memref<2x2048xf32, #tpu.memory_space<vmem>>, vector<2x2048xf32>
      %cst_15 = arith.constant dense<0.000000e+00> : vector<2xf32>
      %31 = vector.multi_reduction <add>, %30, %cst_15 [1] : vector<2x2048xf32> to vector<2xf32>
      %32 = vector.shape_cast %31 : vector<2xf32> to vector<2x1xf32>
      %c0_16 = arith.constant 0 : index
      %c0_17 = arith.constant 0 : index
      %c0_18 = arith.constant 0 : index
      %33 = vector.load %arg6[%c0_16, %c0_17, %c0_18] : memref<1x2x1xf32, #tpu.memory_space<vmem>>, vector<1x2x1xf32>
      %34 = vector.shape_cast %33 : vector<1x2x1xf32> to vector<2x1xf32>
      %35 = vector.shape_cast %32 : vector<2x1xf32> to vector<1x2x1xf32>
      tpu.vector_store %arg6[%c0_16, %c0_17, %c0_18], %35 {strides = array<i32>} : memref<1x2x1xf32, #tpu.memory_space<vmem>>, vector<1x2x1xf32>,
    } else {
    }
    return
  }
  func.func @transform_0(%arg0: i32, %arg1: i32) -> (i32, i32) {
    %c0_i32 = arith.constant 0 : i32
    %c0_i32_0 = arith.constant 0 : i32
    %c0_i32_1 = arith.constant 0 : i32
    return %c0_i32, %c0_i32_0 : i32, i32
  }
  func.func @transform_1(%arg0: i32, %arg1: i32) -> (i32, i32) {
    %c1_i32 = arith.constant 1 : i32
    %0 = arith.muli %arg0, %c1_i32 : i32
    %1 = arith.addi %0, %arg1 : i32
    %c0_i32 = arith.constant 0 : i32
    %c0_i32_0 = arith.constant 0 : i32
    return %c0_i32, %1 : i32, i32
  }
  func.func @transform_2(%arg0: i32, %arg1: i32) -> (i32, i32) {
    %c0_i32 = arith.constant 0 : i32
    %c0_i32_0 = arith.constant 0 : i32
    %c0_i32_1 = arith.constant 0 : i32
    return %c0_i32, %c0_i32_0 : i32, i32
  }
  func.func @transform_3(%arg0: i32, %arg1: i32) -> (i32, i32) {
    %c0_i32 = arith.constant 0 : i32
    %c0_i32_0 = arith.constant 0 : i32
    %c0_i32_1 = arith.constant 0 : i32
    return %c0_i32, %c0_i32_0 : i32, i32
  }
  func.func @transform_4(%arg0: i32, %arg1: i32) -> (i32, i32, i32) {
    %c0_i32 = arith.constant 0 : i32
    %c0_i32_0 = arith.constant 0 : i32
    %c0_i32_1 = arith.constant 0 : i32
    return %arg0, %c0_i32, %c0_i32_0 : i32, i32, i32
  }
}

</mosaic_0001>

<llo_original>
// kernel: tpu_custom_call.1
$region0: #{tpu_custom_call.1}
  #allocation0 [shape = 'u32[]', space=smem, size = 0x4, offset = 0x4, fixed_abs, tag = 'smem constant byte address 0x4 - core index']
  #allocation1 [shape = 'u32[144,128]{1,0:T(1,128)}', space=vmem, size = 0x12000, scoped, tag = 'internal scratch']
  #allocation2 [shape = 'f32[2,2048]{1,0:T(2,128)}', space=vmem, size = 0x4000, scoped, tag = 'scratch operand']
  %s0 = inlined_call_operand.hbm [shape: bf16[4,1024], index: 0, kind: input, shape index: {}]
  %s1 = inlined_call_operand.hbm [shape: bf16[1024,4096], index: 1, kind: input, shape index: {}]
  %s2 = inlined_call_operand.hbm [shape: f32[1,4096], index: 2, kind: input, shape index: {}]
  %s3 = inlined_call_operand.hbm [shape: f32[1,4096], index: 3, kind: input, shape index: {}]
  %s4 = inlined_call_operand.vmem [shape: f32[2,2,1], index: 4, kind: output, shape index: {}]
  %s5 = sld [smem:[#allocation0]]
  $region73: #{tpu_custom_call.1} parent=0
    _
  %s7 = ssub.s32 1, %s5
  %s8 = scalar_select 0, %s7, %s5
  $region1: #{tpu_custom_call.1} parent=0
    #allocation3 [shape = 'u8[8192]{0}', space=vmem, size = 0x2000, scoped, tag = 'input window, operand 0, single buffered']
    #allocation4 [shape = 's32[2]{0}', space=sflag, size = 0x8, scoped, tag = 'scoped memory for tpu_custom_call.1']
    #allocation5 [shape = 'u8[8388608]{0}', space=vmem, size = 0x800000, scoped, tag = 'input window, operand 1']
    #allocation6 [shape = 's32[2]{0}', space=sflag, size = 0x8, scoped, tag = 'scoped memory for tpu_custom_call.1']
    #allocation7 [shape = 'u8[16384]{0}', space=vmem, size = 0x4000, scoped, tag = 'input window, operand 2, single buffered']
    #allocation8 [shape = 'u8[16384]{0}', space=vmem, size = 0x4000, scoped, tag = 'input window, operand 3, single buffered']
    #allocation9 [shape = 's32[1]{0}', space=sflag, size = 0x4, scoped, tag = 'scoped memory for tpu_custom_call.1']
    %9 = vsyncpa [#allocation4], 0
    %10 = vsyncpa [#allocation6], 0
    %s11 = scalar_lea.sflag [#allocation6], 1
    %12 = vsyncpa %s11, 0
    %13 = vsyncpa [#allocation9], 0
    loop: start=0, step=1, limit=4
    $region2: #{tpu_custom_call.1} parent=1 // loop_pre_header
      _
    $region3: #{tpu_custom_call.1} parent=1 // loop_header
      %s15 = sphi 0, %s19
      %p16 = scmp.ge.s32.totalorder %s15, 4
      %s22 = sphi 0, %s34
      %s23 = sphi 0, %s30
      %s24 = sphi 0, %s22
      %s25 = sphi 0, %s23
      %s26 = sphi 0, %s24
      %s27 = sphi 0, %s25
      %s35 = sphi 0, %s35
      %s37 = sphi 0, %s35
      %s38 = sphi 0, %s37
      %s52 = sphi 0, %s38
      %s60 = sphi 0, %s62
      %s63 = sphi 0, %s60
      %s64 = sphi 0, %s63
      %s80 = sphi 0, %s64
      %s84 = sphi 0, %s84
      %s86 = sphi 0, %s84
      %s87 = sphi 0, %s86
      %s101 = sphi 0, %s87
      %s105 = sphi 0, %s105
      %s107 = sphi 0, %s105
      %s108 = sphi 0, %s107
      %s122 = sphi 0, %s108
      %s128 = sphi 0, %s130
      %s131 = sphi 0, %s128
      %s132 = sphi 0, %s131
      %s148 = sphi 0, %s132
    $region4: #{tpu_custom_call.1} parent=1 // loop_header_branch
      %18 = sbr.rel (%p16) target = $region8
    $region5: #{tpu_custom_call.1} parent=1 // loop_body
      %s20 = ssub.s32 %s15, 1
      %s21 = ssub.s32 %s15, 2
      %s28 = sadd.s32 1, %s23
      %p29 = scmp.ge.s32.totalorder %s28, 1
      %s30 = scalar_select %p29, 0, %s28
      %s31 = sadd.s32 1, %s22
      %s32 = scalar_select %p29, %s31, %s22
      %p33 = scmp.ge.s32.totalorder %s32, 2
      %s34 = scalar_select %p33, 0, %s32
      %s36 = sadd.s32 %s35, 1
      %p39 = scmp.eq.s32.totalorder %s15, 1
      %p40 = scmp.ne.s32.totalorder %s35, %s37
      %p41 = scmp.eq.s32.totalorder %s15, 0
      %p42 = por %p40, %p41
      %p43 = scmp.ne.s32.totalorder %s35, %s37
      %p44 = scmp.eq.s32.totalorder %s20, 1
      %p45 = por %p43, %p44
      %p46 = scmp.ne.s32.totalorder %s37, %s38
      %p47 = scmp.eq.s32.totalorder %s20, 0
      %p48 = por %p46, %p47
      %p49 = scmp.ne.s32.totalorder %s37, %s38
      %p50 = scmp.eq.s32.totalorder %s21, 1
      %p51 = por %p49, %p50
      %p53 = scmp.ne.s32.totalorder %s38, %s52
      %p54 = scmp.eq.s32.totalorder %s21, 0
      %p55 = por %p53, %p54
      %s56 = sadd.s32 %s22, %s23
      %s57 = sadd.s32 %s34, %s30
      %s58 = ssub.s32 %s56, %s57
      %p59 = scmp.eq.s32.totalorder %s58, 0
      %s61 = sadd.s32 %s60, 1
      %s62 = scalar_select %p59, %s60, %s61
      %p65 = pneg %p59
      %p66 = scmp.eq.s32.totalorder %s15, 1
      %p67 = por %p65, %p66
      %p68 = scmp.ne.s32.totalorder %s60, %s63
      %p69 = scmp.eq.s32.totalorder %s15, 0
      %p70 = por %p68, %p69
      %p71 = scmp.ne.s32.totalorder %s60, %s63
      %p72 = scmp.eq.s32.totalorder %s20, 1
      %p73 = por %p71, %p72
      %p74 = scmp.ne.s32.totalorder %s63, %s64
      %p75 = scmp.eq.s32.totalorder %s20, 0
      %p76 = por %p74, %p75
      %p77 = scmp.ne.s32.totalorder %s63, %s64
      %p78 = scmp.eq.s32.totalorder %s21, 1
      %p79 = por %p77, %p78
      %p81 = scmp.ne.s32.totalorder %s64, %s80
      %p82 = scmp.eq.s32.totalorder %s21, 0
      %p83 = por %p81, %p82
      %s85 = sadd.s32 %s84, 1
      %p88 = scmp.eq.s32.totalorder %s15, 1
      %p89 = scmp.ne.s32.totalorder %s84, %s86
      %p90 = scmp.eq.s32.totalorder %s15, 0
      %p91 = por %p89, %p90
      %p92 = scmp.ne.s32.totalorder %s84, %s86
      %p93 = scmp.eq.s32.totalorder %s20, 1
      %p94 = por %p92, %p93
      %p95 = scmp.ne.s32.totalorder %s86, %s87
      %p96 = scmp.eq.s32.totalorder %s20, 0
      %p97 = por %p95, %p96
      %p98 = scmp.ne.s32.totalorder %s86, %s87
      %p99 = scmp.eq.s32.totalorder %s21, 1
      %p100 = por %p98, %p99
      %p102 = scmp.ne.s32.totalorder %s87, %s101
      %p103 = scmp.eq.s32.totalorder %s21, 0
      %p104 = por %p102, %p103
      %s106 = sadd.s32 %s105, 1
      %p109 = scmp.eq.s32.totalorder %s15, 1
      %p110 = scmp.ne.s32.totalorder %s105, %s107
      %p111 = scmp.eq.s32.totalorder %s15, 0
      %p112 = por %p110, %p111
      %p113 = scmp.ne.s32.totalorder %s105, %s107
      %p114 = scmp.eq.s32.totalorder %s20, 1
      %p115 = por %p113, %p114
      %p116 = scmp.ne.s32.totalorder %s107, %s108
      %p117 = scmp.eq.s32.totalorder %s20, 0
      %p118 = por %p116, %p117
      %p119 = scmp.ne.s32.totalorder %s107, %s108
      %p120 = scmp.eq.s32.totalorder %s21, 1
      %p121 = por %p119, %p120
      %p123 = scmp.ne.s32.totalorder %s108, %s122
      %p124 = scmp.eq.s32.totalorder %s21, 0
      %p125 = por %p123, %p124
      %s126 = ssub.s32 %s22, %s34
      %p127 = scmp.eq.s32.totalorder %s126, 0
      %s129 = sadd.s32 %s128, 1
      %s130 = scalar_select %p127, %s128, %s129
      %p133 = pneg %p127
      %p134 = scmp.eq.s32.totalorder %s15, 1
      %p135 = por %p133, %p134
      %p136 = scmp.ne.s32.totalorder %s128, %s131
      %p137 = scmp.eq.s32.totalorder %s15, 0
      %p138 = por %p136, %p137
      %p139 = scmp.ne.s32.totalorder %s128, %s131
      %p140 = scmp.eq.s32.totalorder %s20, 1
      %p141 = por %p139, %p140
      %p142 = scmp.ne.s32.totalorder %s131, %s132
      %p143 = scmp.eq.s32.totalorder %s20, 0
      %p144 = por %p142, %p143
      %p145 = scmp.ne.s32.totalorder %s131, %s132
      %p146 = scmp.eq.s32.totalorder %s21, 1
      %p147 = por %p145, %p146
      %p149 = scmp.ne.s32.totalorder %s132, %s148
      %p150 = scmp.eq.s32.totalorder %s21, 0
      %p151 = por %p149, %p150
      %p152 = scmp.le.s32.totalorder 1, %s15
      %p153 = scmp.lt.s32.totalorder %s15, 3
      %p154 = pnand %p152, %p153
      %p155 = pneg %p154
      // Predicated region
      $region9: #{tpu_custom_call.1} parent=5 // pred_check
        _
      $region10: #{tpu_custom_call.1} parent=5 // pred_check_branch
        %157 = sbr.rel (%p154) target = $region12
      $region11: #{tpu_custom_call.1} parent=5 // pred_region
        %s158 = ssub.s32 %s15, 1
        // Predicated region
        $region13: #{tpu_custom_call.1} parent=11 // pred_check
          %p159 = pneg %p48
        $region14: #{tpu_custom_call.1} parent=11 // pred_check_branch
          %161 = sbr.rel (%p159) target = $region16
        $region15: #{tpu_custom_call.1} parent=11 // pred_region
          %s163 = ssub.s32 256, 256
          %164 = vsyncadd [#allocation4], %s163
          %s166 = sshll.u32 [#allocation3], 4
          %s167 = int_to_ptr.vmem [resolvable:$true] %s166
          %169 = dma.hbm_to_vmem [thread:$0]  %s0, 256, %s167, [#allocation4]
        $region16: #{tpu_custom_call.1} parent=11 // pred_fallthru
          _
        // Predicated region
        $region17: #{tpu_custom_call.1} parent=11 // pred_check
          %p170 = pneg %p97
        $region18: #{tpu_custom_call.1} parent=11 // pred_check_branch
          %172 = sbr.rel (%p170) target = $region20
        $region19: #{tpu_custom_call.1} parent=11 // pred_region
          %s174 = ssub.s32 512, 512
          %175 = vsyncadd [#allocation6], %s174
          %s177 = sshll.u32 [#allocation7], 4
          %s178 = int_to_ptr.vmem [resolvable:$true] %s177
          %180 = dma.hbm_to_vmem [thread:$0]  %s2, 512, %s178, [#allocation6]
        $region20: #{tpu_custom_call.1} parent=11 // pred_fallthru
          _
        // Predicated region
        $region21: #{tpu_custom_call.1} parent=11 // pred_check
          %p181 = pneg %p118
        $region22: #{tpu_custom_call.1} parent=11 // pred_check_branch
          %183 = sbr.rel (%p181) target = $region24
        $region23: #{tpu_custom_call.1} parent=11 // pred_region
          %s185 = ssub.s32 512, 512
          %186 = vsyncadd [#allocation9], %s185
          %s188 = sshll.u32 [#allocation8], 4
          %s189 = int_to_ptr.vmem [resolvable:$true] %s188
          %191 = dma.hbm_to_vmem [thread:$0]  %s3, 512, %s189, [#allocation9]
        $region24: #{tpu_custom_call.1} parent=11 // pred_fallthru
          _
      $region12: #{tpu_custom_call.1} parent=5 // pred_fallthru
        _
      %p192 = scmp.lt.s32.totalorder %s15, 2
      // Predicated region
      $region25: #{tpu_custom_call.1} parent=5 // pred_check
        %p193 = pneg %p192
      $region26: #{tpu_custom_call.1} parent=5 // pred_check_branch
        %195 = sbr.rel (%p193) target = $region28
      $region27: #{tpu_custom_call.1} parent=5 // pred_region
        // Predicated region
        $region29: #{tpu_custom_call.1} parent=27 // pred_check
          %p196 = pneg %p70
        $region30: #{tpu_custom_call.1} parent=27 // pred_check_branch
          %198 = sbr.rel (%p196) target = $region32
        $region31: #{tpu_custom_call.1} parent=27 // pred_region
          %s199 = sand.u32 %s15, 1
          %s200 = scalar_lea.sflag [#allocation6], %s199
          %s201 = sand.u32 %s60, 1
          %s202 = smul.addr %s201, 8192
          %s203 = scalar_lea.vmem [#allocation5], %s202
          %s204 = sadd.s32 %s22, %s23
          %s205 = smul.u32 16, %s204
          %s207 = ssub.s32 131072, 131072
          %208 = vsyncadd %s200, %s207
          %s209 = smul.addr %s205, 64
          %s210 = scalar_lea.hbm %s1, %s209
          %s211 = sshll.u32 %s203, 4
          %s212 = int_to_ptr.vmem [resolvable:$true] %s211
          %217 = dma.hbm_to_vmem [thread:$0]  %s210, 131072, %s212, %s200, 2048, 1024, 64
        $region32: #{tpu_custom_call.1} parent=27 // pred_fallthru
          _
      $region28: #{tpu_custom_call.1} parent=5 // pred_fallthru
        _
      %p218 = scmp.le.s32.totalorder 1, %s15
      %p219 = scmp.lt.s32.totalorder %s15, 3
      %p220 = pnand %p218, %p219
      %p221 = pneg %p220
      // Predicated region
      $region33: #{tpu_custom_call.1} parent=5 // pred_check
        _
      $region34: #{tpu_custom_call.1} parent=5 // pred_check_branch
        %223 = sbr.rel (%p220) target = $region36
      $region35: #{tpu_custom_call.1} parent=5 // pred_region
        %s224 = ssub.s32 %s15, 1
        // Predicated region
        $region37: #{tpu_custom_call.1} parent=35 // pred_check
          %p225 = pneg %p48
        $region38: #{tpu_custom_call.1} parent=35 // pred_check_branch
          %227 = sbr.rel (%p225) target = $region40
        $region39: #{tpu_custom_call.1} parent=35 // pred_region
          %228 = dma.done [#allocation4], 256
        $region40: #{tpu_custom_call.1} parent=35 // pred_fallthru
          _
        %s229 = sand.u32 %s20, 1
        %s230 = scalar_lea.sflag [#allocation6], %s229
        %s231 = sand.u32 %s63, 1
        %s232 = smul.addr %s231, 8192
        %s233 = scalar_lea.vmem [#allocation5], %s232
        // Predicated region
        $region41: #{tpu_custom_call.1} parent=35 // pred_check
          %p234 = pneg %p76
        $region42: #{tpu_custom_call.1} parent=35 // pred_check_branch
          %236 = sbr.rel (%p234) target = $region44
        $region43: #{tpu_custom_call.1} parent=35 // pred_region
          %237 = dma.done %s230, 131072
        $region44: #{tpu_custom_call.1} parent=35 // pred_fallthru
          _
        // Predicated region
        $region45: #{tpu_custom_call.1} parent=35 // pred_check
          %p238 = pneg %p97
        $region46: #{tpu_custom_call.1} parent=35 // pred_check_branch
          %240 = sbr.rel (%p238) target = $region48
        $region47: #{tpu_custom_call.1} parent=35 // pred_region
          %241 = dma.done [#allocation6], 512
        $region48: #{tpu_custom_call.1} parent=35 // pred_fallthru
          _
        // Predicated region
        $region49: #{tpu_custom_call.1} parent=35 // pred_check
          %p242 = pneg %p118
        $region50: #{tpu_custom_call.1} parent=35 // pred_check_branch
          %244 = sbr.rel (%p242) target = $region52
        $region51: #{tpu_custom_call.1} parent=35 // pred_region
          %245 = dma.done [#allocation9], 512
        $region52: #{tpu_custom_call.1} parent=35 // pred_fallthru
          _
        %p246 = pneg %p48
        %p247 = pneg %p45
        %s248 = sand.u32 %s20, 1
        %s249 = scalar_lea.sflag [#allocation6], %s248
        %s250 = sand.u32 %s63, 1
        %s251 = smul.addr %s250, 8192
        %s252 = scalar_lea.vmem [#allocation5], %s251
        %p253 = pneg %p76
        %p254 = pneg %p73
        %p255 = pneg %p97
        %p256 = pneg %p94
        %p257 = pneg %p118
        %p258 = pneg %p115
        %p259 = pneg %p144
        %p260 = pneg %p141
        %p261 = scmp.lt.s32.totalorder %s24, 1
        %s262 = scalar_select %p261, %s24, 1
        %s263 = smul.addr %s262, 2
        %s264 = scalar_lea.vmem %s4, %s263
        %s265 = sadd.s32 %s24, %s25
        %s266 = smul.u32 16, %s265
        %p267 = scmp.lt.s32.totalorder %s24, 1
        %s268 = scalar_select %p267, %s24, 1
        %s269 = smul.addr %s268, 2
        %s270 = scalar_lea.vmem %s4, %s269
        %p271 = scmp.eq.s32.totalorder %s25, 0
        // Predicated region
        $region53: #{tpu_custom_call.1} parent=35 // pred_check
          %p272 = pneg %p271
        $region54: #{tpu_custom_call.1} parent=35 // pred_check_branch
          %274 = sbr.rel (%p272) target = $region56
        $region55: #{tpu_custom_call.1} parent=35 // pred_region
          %275 = vst [vmem:[#allocation2] sm:$0xff] 0.0
          %276 = vst [vmem:[#allocation2 + $0x8] sm:$0xff] 0.0
          %277 = vst [vmem:[#allocation2 + $0x10] sm:$0xff] 0.0
          %278 = vst [vmem:[#allocation2 + $0x18] sm:$0xff] 0.0
        $region56: #{tpu_custom_call.1} parent=35 // pred_fallthru
          _
        %s279 = sadd.s32 %s24, %s25
        %s280 = smul.u32 %s279, 2048
        %v281 = vld [vmem:[#allocation3] sm:$0xff]
        %v282 = vld [vmem:[#allocation3 + $0x8] sm:$0xff]
        %v283 = vld [vmem:[%s233] sm:$0xff]
        %v284 = vld [vmem:[%s233 + $0x8] sm:$0xff]
        %v285 = vld [vmem:[%s233 + $0x10] sm:$0xff]
        %v286 = vld [vmem:[%s233 + $0x18] sm:$0xff]
        %v287 = vld [vmem:[%s233 + $0x20] sm:$0xff]
        %v288 = vld [vmem:[%s233 + $0x28] sm:$0xff]
        %v289 = vld [vmem:[%s233 + $0x30] sm:$0xff]
        %v290 = vld [vmem:[%s233 + $0x38] sm:$0xff]
        %v291 = vld [vmem:[%s233 + $0x40] sm:$0xff]
        %v292 = vld [vmem:[%s233 + $0x48] sm:$0xff]
        %v293 = vld [vmem:[%s233 + $0x50] sm:$0xff]
        %v294 = vld [vmem:[%s233 + $0x58] sm:$0xff]
        %v295 = vld [vmem:[%s233 + $0x60] sm:$0xff]
        %v296 = vld [vmem:[%s233 + $0x68] sm:$0xff]
        %v297 = vld [vmem:[%s233 + $0x70] sm:$0xff]
        %v298 = vld [vmem:[%s233 + $0x78] sm:$0xff]
        %v299 = vld [vmem:[%s233 + $0x80] sm:$0xff]
        %v300 = vld [vmem:[%s233 + $0x88] sm:$0xff]
        %v301 = vld [vmem:[%s233 + $0x90] sm:$0xff]
        %v302 = vld [vmem:[%s233 + $0x98] sm:$0xff]
        %v303 = vld [vmem:[%s233 + $0xa0] sm:$0xff]
        %v304 = vld [vmem:[%s233 + $0xa8] sm:$0xff]
        %v305 = vld [vmem:[%s233 + $0xb0] sm:$0xff]
        %v306 = vld [vmem:[%s233 + $0xb8] sm:$0xff]
        %v307 = vld [vmem:[%s233 + $0xc0] sm:$0xff]
        %v308 = vld [vmem:[%s233 + $0xc8] sm:$0xff]
        %v309 = vld [vmem:[%s233 + $0xd0] sm:$0xff]
        %v310 = vld [vmem:[%s233 + $0xd8] sm:$0xff]
        %v311 = vld [vmem:[%s233 + $0xe0] sm:$0xff]
        %v312 = vld [vmem:[%s233 + $0xe8] sm:$0xff]
        %v313 = vld [vmem:[%s233 + $0xf0] sm:$0xff]
        %v314 = vld [vmem:[%s233 + $0xf8] sm:$0xff]
        %v315 = vld [vmem:[%s233 + $0x100] sm:$0xff]
        %v316 = vld [vmem:[%s233 + $0x108] sm:$0xff]
        %v317 = vld [vmem:[%s233 + $0x110] sm:$0xff]
        %v318 = vld [vmem:[%s233 + $0x118] sm:$0xff]
        %v319 = vld [vmem:[%s233 + $0x120] sm:$0xff]
        %v320 = vld [vmem:[%s233 + $0x128] sm:$0xff]
        %v321 = vld [vmem:[%s233 + $0x130] sm:$0xff]
        %v322 = vld [vmem:[%s233 + $0x138] sm:$0xff]
        %v323 = vld [vmem:[%s233 + $0x140] sm:$0xff]
        %v324 = vld [vmem:[%s233 + $0x148] sm:$0xff]
        %v325 = vld [vmem:[%s233 + $0x150] sm:$0xff]
        %v326 = vld [vmem:[%s233 + $0x158] sm:$0xff]
        %v327 = vld [vmem:[%s233 + $0x160] sm:$0xff]
        %v328 = vld [vmem:[%s233 + $0x168] sm:$0xff]
        %v329 = vld [vmem:[%s233 + $0x170] sm:$0xff]
        %v330 = vld [vmem:[%s233 + $0x178] sm:$0xff]
        %v331 = vld [vmem:[%s233 + $0x180] sm:$0xff]
        %v332 = vld [vmem:[%s233 + $0x188] sm:$0xff]
        %v333 = vld [vmem:[%s233 + $0x190] sm:$0xff]
        %v334 = vld [vmem:[%s233 + $0x198] sm:$0xff]
        %v335 = vld [vmem:[%s233 + $0x1a0] sm:$0xff]
        %v336 = vld [vmem:[%s233 + $0x1a8] sm:$0xff]
        %v337 = vld [vmem:[%s233 + $0x1b0] sm:$0xff]
        %v338 = vld [vmem:[%s233 + $0x1b8] sm:$0xff]
        %v339 = vld [vmem:[%s233 + $0x1c0] sm:$0xff]
        %v340 = vld [vmem:[%s233 + $0x1c8] sm:$0xff]
        %v341 = vld [vmem:[%s233 + $0x1d0] sm:$0xff]
        %v342 = vld [vmem:[%s233 + $0x1d8] sm:$0xff]
        %v343 = vld [vmem:[%s233 + $0x1e0] sm:$0xff]
        %v344 = vld [vmem:[%s233 + $0x1e8] sm:$0xff]
        %v345 = vld [vmem:[%s233 + $0x1f0] sm:$0xff]
        %v346 = vld [vmem:[%s233 + $0x1f8] sm:$0xff]
        %v347 = vld [vmem:[%s233 + $0x200] sm:$0xff]
        %v348 = vld [vmem:[%s233 + $0x208] sm:$0xff]
        %v349 = vld [vmem:[%s233 + $0x210] sm:$0xff]
        %v350 = vld [vmem:[%s233 + $0x218] sm:$0xff]
        %v351 = vld [vmem:[%s233 + $0x220] sm:$0xff]
        %v352 = vld [vmem:[%s233 + $0x228] sm:$0xff]
        %v353 = vld [vmem:[%s233 + $0x230] sm:$0xff]
        %v354 = vld [vmem:[%s233 + $0x238] sm:$0xff]
        %v355 = vld [vmem:[%s233 + $0x240] sm:$0xff]
        %v356 = vld [vmem:[%s233 + $0x248] sm:$0xff]
        %v357 = vld [vmem:[%s233 + $0x250] sm:$0xff]
        %v358 = vld [vmem:[%s233 + $0x258] sm:$0xff]
        %v359 = vld [vmem:[%s233 + $0x260] sm:$0xff]
        %v360 = vld [vmem:[%s233 + $0x268] sm:$0xff]
        %v361 = vld [vmem:[%s233 + $0x270] sm:$0xff]
        %v362 = vld [vmem:[%s233 + $0x278] sm:$0xff]
        %v363 = vld [vmem:[%s233 + $0x280] sm:$0xff]
        %v364 = vld [vmem:[%s233 + $0x288] sm:$0xff]
        %v365 = vld [vmem:[%s233 + $0x290] sm:$0xff]
        %v366 = vld [vmem:[%s233 + $0x298] sm:$0xff]
        %v367 = vld [vmem:[%s233 + $0x2a0] sm:$0xff]
        %v368 = vld [vmem:[%s233 + $0x2a8] sm:$0xff]
        %v369 = vld [vmem:[%s233 + $0x2b0] sm:$0xff]
        %v370 = vld [vmem:[%s233 + $0x2b8] sm:$0xff]
        %v371 = vld [vmem:[%s233 + $0x2c0] sm:$0xff]
        %v372 = vld [vmem:[%s233 + $0x2c8] sm:$0xff]
        %v373 = vld [vmem:[%s233 + $0x2d0] sm:$0xff]
        %v374 = vld [vmem:[%s233 + $0x2d8] sm:$0xff]
        %v375 = vld [vmem:[%s233 + $0x2e0] sm:$0xff]
        %v376 = vld [vmem:[%s233 + $0x2e8] sm:$0xff]
        %v377 = vld [vmem:[%s233 + $0x2f0] sm:$0xff]
        %v378 = vld [vmem:[%s233 + $0x2f8] sm:$0xff]
        %v379 = vld [vmem:[%s233 + $0x300] sm:$0xff]
        %v380 = vld [vmem:[%s233 + $0x308] sm:$0xff]
        %v381 = vld [vmem:[%s233 + $0x310] sm:$0xff]
        %v382 = vld [vmem:[%s233 + $0x318] sm:$0xff]
        %v383 = vld [vmem:[%s233 + $0x320] sm:$0xff]
        %v384 = vld [vmem:[%s233 + $0x328] sm:$0xff]
        %v385 = vld [vmem:[%s233 + $0x330] sm:$0xff]
        %v386 = vld [vmem:[%s233 + $0x338] sm:$0xff]
        %v387 = vld [vmem:[%s233 + $0x340] sm:$0xff]
        %v388 = vld [vmem:[%s233 + $0x348] sm:$0xff]
        %v389 = vld [vmem:[%s233 + $0x350] sm:$0xff]
        %v390 = vld [vmem:[%s233 + $0x358] sm:$0xff]
        %v391 = vld [vmem:[%s233 + $0x360] sm:$0xff]
        %v392 = vld [vmem:[%s233 + $0x368] sm:$0xff]
        %v393 = vld [vmem:[%s233 + $0x370] sm:$0xff]
        %v394 = vld [vmem:[%s233 + $0x378] sm:$0xff]
        %v395 = vld [vmem:[%s233 + $0x380] sm:$0xff]
        %v396 = vld [vmem:[%s233 + $0x388] sm:$0xff]
        %v397 = vld [vmem:[%s233 + $0x390] sm:$0xff]
        %v398 = vld [vmem:[%s233 + $0x398] sm:$0xff]
        %v399 = vld [vmem:[%s233 + $0x3a0] sm:$0xff]
        %v400 = vld [vmem:[%s233 + $0x3a8] sm:$0xff]
        %v401 = vld [vmem:[%s233 + $0x3b0] sm:$0xff]
        %v402 = vld [vmem:[%s233 + $0x3b8] sm:$0xff]
        %v403 = vld [vmem:[%s233 + $0x3c0] sm:$0xff]
        %v404 = vld [vmem:[%s233 + $0x3c8] sm:$0xff]
        %v405 = vld [vmem:[%s233 + $0x3d0] sm:$0xff]
        %v406 = vld [vmem:[%s233 + $0x3d8] sm:$0xff]
        %v407 = vld [vmem:[%s233 + $0x3e0] sm:$0xff]
        %v408 = vld [vmem:[%s233 + $0x3e8] sm:$0xff]
        %v409 = vld [vmem:[%s233 + $0x3f0] sm:$0xff]
        %v410 = vld [vmem:[%s233 + $0x3f8] sm:$0xff]
        %v411 = vld [vmem:[%s233 + $0x400] sm:$0xff]
        %v412 = vld [vmem:[%s233 + $0x408] sm:$0xff]
        %v413 = vld [vmem:[%s233 + $0x410] sm:$0xff]
        %v414 = vld [vmem:[%s233 + $0x418] sm:$0xff]
        %v415 = vld [vmem:[%s233 + $0x420] sm:$0xff]
        %v416 = vld [vmem:[%s233 + $0x428] sm:$0xff]
        %v417 = vld [vmem:[%s233 + $0x430] sm:$0xff]
        %v418 = vld [vmem:[%s233 + $0x438] sm:$0xff]
        %v419 = vld [vmem:[%s233 + $0x440] sm:$0xff]
        %v420 = vld [vmem:[%s233 + $0x448] sm:$0xff]
        %v421 = vld [vmem:[%s233 + $0x450] sm:$0xff]
        %v422 = vld [vmem:[%s233 + $0x458] sm:$0xff]
        %v423 = vld [vmem:[%s233 + $0x460] sm:$0xff]
        %v424 = vld [vmem:[%s233 + $0x468] sm:$0xff]
        %v425 = vld [vmem:[%s233 + $0x470] sm:$0xff]
        %v426 = vld [vmem:[%s233 + $0x478] sm:$0xff]
        %v427 = vld [vmem:[%s233 + $0x480] sm:$0xff]
        %v428 = vld [vmem:[%s233 + $0x488] sm:$0xff]
        %v429 = vld [vmem:[%s233 + $0x490] sm:$0xff]
        %v430 = vld [vmem:[%s233 + $0x498] sm:$0xff]
        %v431 = vld [vmem:[%s233 + $0x4a0] sm:$0xff]
        %v432 = vld [vmem:[%s233 + $0x4a8] sm:$0xff]
        %v433 = vld [vmem:[%s233 + $0x4b0] sm:$0xff]
        %v434 = vld [vmem:[%s233 + $0x4b8] sm:$0xff]
        %v435 = vld [vmem:[%s233 + $0x4c0] sm:$0xff]
        %v436 = vld [vmem:[%s233 + $0x4c8] sm:$0xff]
        %v437 = vld [vmem:[%s233 + $0x4d0] sm:$0xff]
        %v438 = vld [vmem:[%s233 + $0x4d8] sm:$0xff]
        %v439 = vld [vmem:[%s233 + $0x4e0] sm:$0xff]
        %v440 = vld [vmem:[%s233 + $0x4e8] sm:$0xff]
        %v441 = vld [vmem:[%s233 + $0x4f0] sm:$0xff]
        %v442 = vld [vmem:[%s233 + $0x4f8] sm:$0xff]
        %v443 = vld [vmem:[%s233 + $0x500] sm:$0xff]
        %v444 = vld [vmem:[%s233 + $0x508] sm:$0xff]
        %v445 = vld [vmem:[%s233 + $0x510] sm:$0xff]
        %v446 = vld [vmem:[%s233 + $0x518] sm:$0xff]
        %v447 = vld [vmem:[%s233 + $0x520] sm:$0xff]
        %v448 = vld [vmem:[%s233 + $0x528] sm:$0xff]
        %v449 = vld [vmem:[%s233 + $0x530] sm:$0xff]
        %v450 = vld [vmem:[%s233 + $0x538] sm:$0xff]
        %v451 = vld [vmem:[%s233 + $0x540] sm:$0xff]
        %v452 = vld [vmem:[%s233 + $0x548] sm:$0xff]
        %v453 = vld [vmem:[%s233 + $0x550] sm:$0xff]
        %v454 = vld [vmem:[%s233 + $0x558] sm:$0xff]
        %v455 = vld [vmem:[%s233 + $0x560] sm:$0xff]
        %v456 = vld [vmem:[%s233 + $0x568] sm:$0xff]
        %v457 = vld [vmem:[%s233 + $0x570] sm:$0xff]
        %v458 = vld [vmem:[%s233 + $0x578] sm:$0xff]
        %v459 = vld [vmem:[%s233 + $0x580] sm:$0xff]
        %v460 = vld [vmem:[%s233 + $0x588] sm:$0xff]
        %v461 = vld [vmem:[%s233 + $0x590] sm:$0xff]
        %v462 = vld [vmem:[%s233 + $0x598] sm:$0xff]
        %v463 = vld [vmem:[%s233 + $0x5a0] sm:$0xff]
        %v464 = vld [vmem:[%s233 + $0x5a8] sm:$0xff]
        %v465 = vld [vmem:[%s233 + $0x5b0] sm:$0xff]
        %v466 = vld [vmem:[%s233 + $0x5b8] sm:$0xff]
        %v467 = vld [vmem:[%s233 + $0x5c0] sm:$0xff]
        %v468 = vld [vmem:[%s233 + $0x5c8] sm:$0xff]
        %v469 = vld [vmem:[%s233 + $0x5d0] sm:$0xff]
        %v470 = vld [vmem:[%s233 + $0x5d8] sm:$0xff]
        %v471 = vld [vmem:[%s233 + $0x5e0] sm:$0xff]
        %v472 = vld [vmem:[%s233 + $0x5e8] sm:$0xff]
        %v473 = vld [vmem:[%s233 + $0x5f0] sm:$0xff]
        %v474 = vld [vmem:[%s233 + $0x5f8] sm:$0xff]
        %v475 = vld [vmem:[%s233 + $0x600] sm:$0xff]
        %v476 = vld [vmem:[%s233 + $0x608] sm:$0xff]
        %v477 = vld [vmem:[%s233 + $0x610] sm:$0xff]
        %v478 = vld [vmem:[%s233 + $0x618] sm:$0xff]
        %v479 = vld [vmem:[%s233 + $0x620] sm:$0xff]
        %v480 = vld [vmem:[%s233 + $0x628] sm:$0xff]
        %v481 = vld [vmem:[%s233 + $0x630] sm:$0xff]
        %v482 = vld [vmem:[%s233 + $0x638] sm:$0xff]
        %v483 = vld [vmem:[%s233 + $0x640] sm:$0xff]
        %v484 = vld [vmem:[%s233 + $0x648] sm:$0xff]
        %v485 = vld [vmem:[%s233 + $0x650] sm:$0xff]
        %v486 = vld [vmem:[%s233 + $0x658] sm:$0xff]
        %v487 = vld [vmem:[%s233 + $0x660] sm:$0xff]
        %v488 = vld [vmem:[%s233 + $0x668] sm:$0xff]
        %v489 = vld [vmem:[%s233 + $0x670] sm:$0xff]
        %v490 = vld [vmem:[%s233 + $0x678] sm:$0xff]
        %v491 = vld [vmem:[%s233 + $0x680] sm:$0xff]
        %v492 = vld [vmem:[%s233 + $0x688] sm:$0xff]
        %v493 = vld [vmem:[%s233 + $0x690] sm:$0xff]
        %v494 = vld [vmem:[%s233 + $0x698] sm:$0xff]
        %v495 = vld [vmem:[%s233 + $0x6a0] sm:$0xff]
        %v496 = vld [vmem:[%s233 + $0x6a8] sm:$0xff]
        %v497 = vld [vmem:[%s233 + $0x6b0] sm:$0xff]
        %v498 = vld [vmem:[%s233 + $0x6b8] sm:$0xff]
        %v499 = vld [vmem:[%s233 + $0x6c0] sm:$0xff]
        %v500 = vld [vmem:[%s233 + $0x6c8] sm:$0xff]
        %v501 = vld [vmem:[%s233 + $0x6d0] sm:$0xff]
        %v502 = vld [vmem:[%s233 + $0x6d8] sm:$0xff]
        %v503 = vld [vmem:[%s233 + $0x6e0] sm:$0xff]
        %v504 = vld [vmem:[%s233 + $0x6e8] sm:$0xff]
        %v505 = vld [vmem:[%s233 + $0x6f0] sm:$0xff]
        %v506 = vld [vmem:[%s233 + $0x6f8] sm:$0xff]
        %v507 = vld [vmem:[%s233 + $0x700] sm:$0xff]
        %v508 = vld [vmem:[%s233 + $0x708] sm:$0xff]
        %v509 = vld [vmem:[%s233 + $0x710] sm:$0xff]
        %v510 = vld [vmem:[%s233 + $0x718] sm:$0xff]
        %v511 = vld [vmem:[%s233 + $0x720] sm:$0xff]
        %v512 = vld [vmem:[%s233 + $0x728] sm:$0xff]
        %v513 = vld [vmem:[%s233 + $0x730] sm:$0xff]
        %v514 = vld [vmem:[%s233 + $0x738] sm:$0xff]
        %v515 = vld [vmem:[%s233 + $0x740] sm:$0xff]
        %v516 = vld [vmem:[%s233 + $0x748] sm:$0xff]
        %v517 = vld [vmem:[%s233 + $0x750] sm:$0xff]
        %v518 = vld [vmem:[%s233 + $0x758] sm:$0xff]
        %v519 = vld [vmem:[%s233 + $0x760] sm:$0xff]
        %v520 = vld [vmem:[%s233 + $0x768] sm:$0xff]
        %v521 = vld [vmem:[%s233 + $0x770] sm:$0xff]
        %v522 = vld [vmem:[%s233 + $0x778] sm:$0xff]
        %v523 = vld [vmem:[%s233 + $0x780] sm:$0xff]
        %v524 = vld [vmem:[%s233 + $0x788] sm:$0xff]
        %v525 = vld [vmem:[%s233 + $0x790] sm:$0xff]
        %v526 = vld [vmem:[%s233 + $0x798] sm:$0xff]
        %v527 = vld [vmem:[%s233 + $0x7a0] sm:$0xff]
        %v528 = vld [vmem:[%s233 + $0x7a8] sm:$0xff]
        %v529 = vld [vmem:[%s233 + $0x7b0] sm:$0xff]
        %v530 = vld [vmem:[%s233 + $0x7b8] sm:$0xff]
        %v531 = vld [vmem:[%s233 + $0x7c0] sm:$0xff]
        %v532 = vld [vmem:[%s233 + $0x7c8] sm:$0xff]
        %v533 = vld [vmem:[%s233 + $0x7d0] sm:$0xff]
        %v534 = vld [vmem:[%s233 + $0x7d8] sm:$0xff]
        %v535 = vld [vmem:[%s233 + $0x7e0] sm:$0xff]
        %v536 = vld [vmem:[%s233 + $0x7e8] sm:$0xff]
        %v537 = vld [vmem:[%s233 + $0x7f0] sm:$0xff]
        %v538 = vld [vmem:[%s233 + $0x7f8] sm:$0xff]
        %v539 = vld [vmem:[%s233 + $0x800] sm:$0xff]
        %v540 = vld [vmem:[%s233 + $0x808] sm:$0xff]
        %v541 = vld [vmem:[%s233 + $0x810] sm:$0xff]
        %v542 = vld [vmem:[%s233 + $0x818] sm:$0xff]
        %v543 = vld [vmem:[%s233 + $0x820] sm:$0xff]
        %v544 = vld [vmem:[%s233 + $0x828] sm:$0xff]
        %v545 = vld [vmem:[%s233 + $0x830] sm:$0xff]
        %v546 = vld [vmem:[%s233 + $0x838] sm:$0xff]
        %v547 = vld [vmem:[%s233 + $0x840] sm:$0xff]
        %v548 = vld [vmem:[%s233 + $0x848] sm:$0xff]
        %v549 = vld [vmem:[%s233 + $0x850] sm:$0xff]
        %v550 = vld [vmem:[%s233 + $0x858] sm:$0xff]
        %v551 = vld [vmem:[%s233 + $0x860] sm:$0xff]
        %v552 = vld [vmem:[%s233 + $0x868] sm:$0xff]
        %v553 = vld [vmem:[%s233 + $0x870] sm:$0xff]
        %v554 = vld [vmem:[%s233 + $0x878] sm:$0xff]
        %v555 = vld [vmem:[%s233 + $0x880] sm:$0xff]
        %v556 = vld [vmem:[%s233 + $0x888] sm:$0xff]
        %v557 = vld [vmem:[%s233 + $0x890] sm:$0xff]
        %v558 = vld [vmem:[%s233 + $0x898] sm:$0xff]
        %v559 = vld [vmem:[%s233 + $0x8a0] sm:$0xff]
        %v560 = vld [vmem:[%s233 + $0x8a8] sm:$0xff]
        %v561 = vld [vmem:[%s233 + $0x8b0] sm:$0xff]
        %v562 = vld [vmem:[%s233 + $0x8b8] sm:$0xff]
        %v563 = vld [vmem:[%s233 + $0x8c0] sm:$0xff]
        %v564 = vld [vmem:[%s233 + $0x8c8] sm:$0xff]
        %v565 = vld [vmem:[%s233 + $0x8d0] sm:$0xff]
        %v566 = vld [vmem:[%s233 + $0x8d8] sm:$0xff]
        %v567 = vld [vmem:[%s233 + $0x8e0] sm:$0xff]
        %v568 = vld [vmem:[%s233 + $0x8e8] sm:$0xff]
        %v569 = vld [vmem:[%s233 + $0x8f0] sm:$0xff]
        %v570 = vld [vmem:[%s233 + $0x8f8] sm:$0xff]
        %v571 = vld [vmem:[%s233 + $0x900] sm:$0xff]
        %v572 = vld [vmem:[%s233 + $0x908] sm:$0xff]
        %v573 = vld [vmem:[%s233 + $0x910] sm:$0xff]
        %v574 = vld [vmem:[%s233 + $0x918] sm:$0xff]
        %v575 = vld [vmem:[%s233 + $0x920] sm:$0xff]
        %v576 = vld [vmem:[%s233 + $0x928] sm:$0xff]
        %v577 = vld [vmem:[%s233 + $0x930] sm:$0xff]
        %v578 = vld [vmem:[%s233 + $0x938] sm:$0xff]
        %v579 = vld [vmem:[%s233 + $0x940] sm:$0xff]
        %v580 = vld [vmem:[%s233 + $0x948] sm:$0xff]
        %v581 = vld [vmem:[%s233 + $0x950] sm:$0xff]
        %v582 = vld [vmem:[%s233 + $0x958] sm:$0xff]
        %v583 = vld [vmem:[%s233 + $0x960] sm:$0xff]
        %v584 = vld [vmem:[%s233 + $0x968] sm:$0xff]
        %v585 = vld [vmem:[%s233 + $0x970] sm:$0xff]
        %v586 = vld [vmem:[%s233 + $0x978] sm:$0xff]
        %v587 = vld [vmem:[%s233 + $0x980] sm:$0xff]
        %v588 = vld [vmem:[%s233 + $0x988] sm:$0xff]
        %v589 = vld [vmem:[%s233 + $0x990] sm:$0xff]
        %v590 = vld [vmem:[%s233 + $0x998] sm:$0xff]
        %v591 = vld [vmem:[%s233 + $0x9a0] sm:$0xff]
        %v592 = vld [vmem:[%s233 + $0x9a8] sm:$0xff]
        %v593 = vld [vmem:[%s233 + $0x9b0] sm:$0xff]
        %v594 = vld [vmem:[%s233 + $0x9b8] sm:$0xff]
        %v595 = vld [vmem:[%s233 + $0x9c0] sm:$0xff]
        %v596 = vld [vmem:[%s233 + $0x9c8] sm:$0xff]
        %v597 = vld [vmem:[%s233 + $0x9d0] sm:$0xff]
        %v598 = vld [vmem:[%s233 + $0x9d8] sm:$0xff]
        %v599 = vld [vmem:[%s233 + $0x9e0] sm:$0xff]
        %v600 = vld [vmem:[%s233 + $0x9e8] sm:$0xff]
        %v601 = vld [vmem:[%s233 + $0x9f0] sm:$0xff]
        %v602 = vld [vmem:[%s233 + $0x9f8] sm:$0xff]
        %v603 = vld [vmem:[%s233 + $0xa00] sm:$0xff]
        %v604 = vld [vmem:[%s233 + $0xa08] sm:$0xff]
        %v605 = vld [vmem:[%s233 + $0xa10] sm:$0xff]
        %v606 = vld [vmem:[%s233 + $0xa18] sm:$0xff]
        %v607 = vld [vmem:[%s233 + $0xa20] sm:$0xff]
        %v608 = vld [vmem:[%s233 + $0xa28] sm:$0xff]
        %v609 = vld [vmem:[%s233 + $0xa30] sm:$0xff]
        %v610 = vld [vmem:[%s233 + $0xa38] sm:$0xff]
        %v611 = vld [vmem:[%s233 + $0xa40] sm:$0xff]
        %v612 = vld [vmem:[%s233 + $0xa48] sm:$0xff]
        %v613 = vld [vmem:[%s233 + $0xa50] sm:$0xff]
        %v614 = vld [vmem:[%s233 + $0xa58] sm:$0xff]
        %v615 = vld [vmem:[%s233 + $0xa60] sm:$0xff]
        %v616 = vld [vmem:[%s233 + $0xa68] sm:$0xff]
        %v617 = vld [vmem:[%s233 + $0xa70] sm:$0xff]
        %v618 = vld [vmem:[%s233 + $0xa78] sm:$0xff]
        %v619 = vld [vmem:[%s233 + $0xa80] sm:$0xff]
        %v620 = vld [vmem:[%s233 + $0xa88] sm:$0xff]
        %v621 = vld [vmem:[%s233 + $0xa90] sm:$0xff]
        %v622 = vld [vmem:[%s233 + $0xa98] sm:$0xff]
        %v623 = vld [vmem:[%s233 + $0xaa0] sm:$0xff]
        %v624 = vld [vmem:[%s233 + $0xaa8] sm:$0xff]
        %v625 = vld [vmem:[%s233 + $0xab0] sm:$0xff]
        %v626 = vld [vmem:[%s233 + $0xab8] sm:$0xff]
        %v627 = vld [vmem:[%s233 + $0xac0] sm:$0xff]
        %v628 = vld [vmem:[%s233 + $0xac8] sm:$0xff]
        %v629 = vld [vmem:[%s233 + $0xad0] sm:$0xff]
        %v630 = vld [vmem:[%s233 + $0xad8] sm:$0xff]
        %v631 = vld [vmem:[%s233 + $0xae0] sm:$0xff]
        %v632 = vld [vmem:[%s233 + $0xae8] sm:$0xff]
        %v633 = vld [vmem:[%s233 + $0xaf0] sm:$0xff]
        %v634 = vld [vmem:[%s233 + $0xaf8] sm:$0xff]
        %v635 = vld [vmem:[%s233 + $0xb00] sm:$0xff]
        %v636 = vld [vmem:[%s233 + $0xb08] sm:$0xff]
        %v637 = vld [vmem:[%s233 + $0xb10] sm:$0xff]
        %v638 = vld [vmem:[%s233 + $0xb18] sm:$0xff]
        %v639 = vld [vmem:[%s233 + $0xb20] sm:$0xff]
        %v640 = vld [vmem:[%s233 + $0xb28] sm:$0xff]
        %v641 = vld [vmem:[%s233 + $0xb30] sm:$0xff]
        %v642 = vld [vmem:[%s233 + $0xb38] sm:$0xff]
        %v643 = vld [vmem:[%s233 + $0xb40] sm:$0xff]
        %v644 = vld [vmem:[%s233 + $0xb48] sm:$0xff]
        %v645 = vld [vmem:[%s233 + $0xb50] sm:$0xff]
        %v646 = vld [vmem:[%s233 + $0xb58] sm:$0xff]
        %v647 = vld [vmem:[%s233 + $0xb60] sm:$0xff]
        %v648 = vld [vmem:[%s233 + $0xb68] sm:$0xff]
        %v649 = vld [vmem:[%s233 + $0xb70] sm:$0xff]
        %v650 = vld [vmem:[%s233 + $0xb78] sm:$0xff]
        %v651 = vld [vmem:[%s233 + $0xb80] sm:$0xff]
        %v652 = vld [vmem:[%s233 + $0xb88] sm:$0xff]
        %v653 = vld [vmem:[%s233 + $0xb90] sm:$0xff]
        %v654 = vld [vmem:[%s233 + $0xb98] sm:$0xff]
        %v655 = vld [vmem:[%s233 + $0xba0] sm:$0xff]
        %v656 = vld [vmem:[%s233 + $0xba8] sm:$0xff]
        %v657 = vld [vmem:[%s233 + $0xbb0] sm:$0xff]
        %v658 = vld [vmem:[%s233 + $0xbb8] sm:$0xff]
        %v659 = vld [vmem:[%s233 + $0xbc0] sm:$0xff]
        %v660 = vld [vmem:[%s233 + $0xbc8] sm:$0xff]
        %v661 = vld [vmem:[%s233 + $0xbd0] sm:$0xff]
        %v662 = vld [vmem:[%s233 + $0xbd8] sm:$0xff]
        %v663 = vld [vmem:[%s233 + $0xbe0] sm:$0xff]
        %v664 = vld [vmem:[%s233 + $0xbe8] sm:$0xff]
        %v665 = vld [vmem:[%s233 + $0xbf0] sm:$0xff]
        %v666 = vld [vmem:[%s233 + $0xbf8] sm:$0xff]
        %v667 = vld [vmem:[%s233 + $0xc00] sm:$0xff]
        %v668 = vld [vmem:[%s233 + $0xc08] sm:$0xff]
        %v669 = vld [vmem:[%s233 + $0xc10] sm:$0xff]
        %v670 = vld [vmem:[%s233 + $0xc18] sm:$0xff]
        %v671 = vld [vmem:[%s233 + $0xc20] sm:$0xff]
        %v672 = vld [vmem:[%s233 + $0xc28] sm:$0xff]
        %v673 = vld [vmem:[%s233 + $0xc30] sm:$0xff]
        %v674 = vld [vmem:[%s233 + $0xc38] sm:$0xff]
        %v675 = vld [vmem:[%s233 + $0xc40] sm:$0xff]
        %v676 = vld [vmem:[%s233 + $0xc48] sm:$0xff]
        %v677 = vld [vmem:[%s233 + $0xc50] sm:$0xff]
        %v678 = vld [vmem:[%s233 + $0xc58] sm:$0xff]
        %v679 = vld [vmem:[%s233 + $0xc60] sm:$0xff]
        %v680 = vld [vmem:[%s233 + $0xc68] sm:$0xff]
        %v681 = vld [vmem:[%s233 + $0xc70] sm:$0xff]
        %v682 = vld [vmem:[%s233 + $0xc78] sm:$0xff]
        %v683 = vld [vmem:[%s233 + $0xc80] sm:$0xff]
        %v684 = vld [vmem:[%s233 + $0xc88] sm:$0xff]
        %v685 = vld [vmem:[%s233 + $0xc90] sm:$0xff]
        %v686 = vld [vmem:[%s233 + $0xc98] sm:$0xff]
        %v687 = vld [vmem:[%s233 + $0xca0] sm:$0xff]
        %v688 = vld [vmem:[%s233 + $0xca8] sm:$0xff]
        %v689 = vld [vmem:[%s233 + $0xcb0] sm:$0xff]
        %v690 = vld [vmem:[%s233 + $0xcb8] sm:$0xff]
        %v691 = vld [vmem:[%s233 + $0xcc0] sm:$0xff]
        %v692 = vld [vmem:[%s233 + $0xcc8] sm:$0xff]
        %v693 = vld [vmem:[%s233 + $0xcd0] sm:$0xff]
        %v694 = vld [vmem:[%s233 + $0xcd8] sm:$0xff]
        %v695 = vld [vmem:[%s233 + $0xce0] sm:$0xff]
        %v696 = vld [vmem:[%s233 + $0xce8] sm:$0xff]
        %v697 = vld [vmem:[%s233 + $0xcf0] sm:$0xff]
        %v698 = vld [vmem:[%s233 + $0xcf8] sm:$0xff]
        %v699 = vld [vmem:[%s233 + $0xd00] sm:$0xff]
        %v700 = vld [vmem:[%s233 + $0xd08] sm:$0xff]
        %v701 = vld [vmem:[%s233 + $0xd10] sm:$0xff]
        %v702 = vld [vmem:[%s233 + $0xd18] sm:$0xff]
        %v703 = vld [vmem:[%s233 + $0xd20] sm:$0xff]
        %v704 = vld [vmem:[%s233 + $0xd28] sm:$0xff]
        %v705 = vld [vmem:[%s233 + $0xd30] sm:$0xff]
        %v706 = vld [vmem:[%s233 + $0xd38] sm:$0xff]
        %v707 = vld [vmem:[%s233 + $0xd40] sm:$0xff]
        %v708 = vld [vmem:[%s233 + $0xd48] sm:$0xff]
        %v709 = vld [vmem:[%s233 + $0xd50] sm:$0xff]
        %v710 = vld [vmem:[%s233 + $0xd58] sm:$0xff]
        %v711 = vld [vmem:[%s233 + $0xd60] sm:$0xff]
        %v712 = vld [vmem:[%s233 + $0xd68] sm:$0xff]
        %v713 = vld [vmem:[%s233 + $0xd70] sm:$0xff]
        %v714 = vld [vmem:[%s233 + $0xd78] sm:$0xff]
        %v715 = vld [vmem:[%s233 + $0xd80] sm:$0xff]
        %v716 = vld [vmem:[%s233 + $0xd88] sm:$0xff]
        %v717 = vld [vmem:[%s233 + $0xd90] sm:$0xff]
        %v718 = vld [vmem:[%s233 + $0xd98] sm:$0xff]
        %v719 = vld [vmem:[%s233 + $0xda0] sm:$0xff]
        %v720 = vld [vmem:[%s233 + $0xda8] sm:$0xff]
        %v721 = vld [vmem:[%s233 + $0xdb0] sm:$0xff]
        %v722 = vld [vmem:[%s233 + $0xdb8] sm:$0xff]
        %v723 = vld [vmem:[%s233 + $0xdc0] sm:$0xff]
        %v724 = vld [vmem:[%s233 + $0xdc8] sm:$0xff]
        %v725 = vld [vmem:[%s233 + $0xdd0] sm:$0xff]
        %v726 = vld [vmem:[%s233 + $0xdd8] sm:$0xff]
        %v727 = vld [vmem:[%s233 + $0xde0] sm:$0xff]
        %v728 = vld [vmem:[%s233 + $0xde8] sm:$0xff]
        %v729 = vld [vmem:[%s233 + $0xdf0] sm:$0xff]
        %v730 = vld [vmem:[%s233 + $0xdf8] sm:$0xff]
        %v731 = vld [vmem:[%s233 + $0xe00] sm:$0xff]
        %v732 = vld [vmem:[%s233 + $0xe08] sm:$0xff]
        %v733 = vld [vmem:[%s233 + $0xe10] sm:$0xff]
        %v734 = vld [vmem:[%s233 + $0xe18] sm:$0xff]
        %v735 = vld [vmem:[%s233 + $0xe20] sm:$0xff]
        %v736 = vld [vmem:[%s233 + $0xe28] sm:$0xff]
        %v737 = vld [vmem:[%s233 + $0xe30] sm:$0xff]
        %v738 = vld [vmem:[%s233 + $0xe38] sm:$0xff]
        %v739 = vld [vmem:[%s233 + $0xe40] sm:$0xff]
        %v740 = vld [vmem:[%s233 + $0xe48] sm:$0xff]
        %v741 = vld [vmem:[%s233 + $0xe50] sm:$0xff]
        %v742 = vld [vmem:[%s233 + $0xe58] sm:$0xff]
        %v743 = vld [vmem:[%s233 + $0xe60] sm:$0xff]
        %v744 = vld [vmem:[%s233 + $0xe68] sm:$0xff]
        %v745 = vld [vmem:[%s233 + $0xe70] sm:$0xff]
        %v746 = vld [vmem:[%s233 + $0xe78] sm:$0xff]
        %v747 = vld [vmem:[%s233 + $0xe80] sm:$0xff]
        %v748 = vld [vmem:[%s233 + $0xe88] sm:$0xff]
        %v749 = vld [vmem:[%s233 + $0xe90] sm:$0xff]
        %v750 = vld [vmem:[%s233 + $0xe98] sm:$0xff]
        %v751 = vld [vmem:[%s233 + $0xea0] sm:$0xff]
        %v752 = vld [vmem:[%s233 + $0xea8] sm:$0xff]
        %v753 = vld [vmem:[%s233 + $0xeb0] sm:$0xff]
        %v754 = vld [vmem:[%s233 + $0xeb8] sm:$0xff]
        %v755 = vld [vmem:[%s233 + $0xec0] sm:$0xff]
        %v756 = vld [vmem:[%s233 + $0xec8] sm:$0xff]
        %v757 = vld [vmem:[%s233 + $0xed0] sm:$0xff]
        %v758 = vld [vmem:[%s233 + $0xed8] sm:$0xff]
        %v759 = vld [vmem:[%s233 + $0xee0] sm:$0xff]
        %v760 = vld [vmem:[%s233 + $0xee8] sm:$0xff]
        %v761 = vld [vmem:[%s233 + $0xef0] sm:$0xff]
        %v762 = vld [vmem:[%s233 + $0xef8] sm:$0xff]
        %v763 = vld [vmem:[%s233 + $0xf00] sm:$0xff]
        %v764 = vld [vmem:[%s233 + $0xf08] sm:$0xff]
        %v765 = vld [vmem:[%s233 + $0xf10] sm:$0xff]
        %v766 = vld [vmem:[%s233 + $0xf18] sm:$0xff]
        %v767 = vld [vmem:[%s233 + $0xf20] sm:$0xff]
        %v768 = vld [vmem:[%s233 + $0xf28] sm:$0xff]
        %v769 = vld [vmem:[%s233 + $0xf30] sm:$0xff]
        %v770 = vld [vmem:[%s233 + $0xf38] sm:$0xff]
        %v771 = vld [vmem:[%s233 + $0xf40] sm:$0xff]
        %v772 = vld [vmem:[%s233 + $0xf48] sm:$0xff]
        %v773 = vld [vmem:[%s233 + $0xf50] sm:$0xff]
        %v774 = vld [vmem:[%s233 + $0xf58] sm:$0xff]
        %v775 = vld [vmem:[%s233 + $0xf60] sm:$0xff]
        %v776 = vld [vmem:[%s233 + $0xf68] sm:$0xff]
        %v777 = vld [vmem:[%s233 + $0xf70] sm:$0xff]
        %v778 = vld [vmem:[%s233 + $0xf78] sm:$0xff]
        %v779 = vld [vmem:[%s233 + $0xf80] sm:$0xff]
        %v780 = vld [vmem:[%s233 + $0xf88] sm:$0xff]
        %v781 = vld [vmem:[%s233 + $0xf90] sm:$0xff]
        %v782 = vld [vmem:[%s233 + $0xf98] sm:$0xff]
        %v783 = vld [vmem:[%s233 + $0xfa0] sm:$0xff]
        %v784 = vld [vmem:[%s233 + $0xfa8] sm:$0xff]
        %v785 = vld [vmem:[%s233 + $0xfb0] sm:$0xff]
        %v786 = vld [vmem:[%s233 + $0xfb8] sm:$0xff]
        %v787 = vld [vmem:[%s233 + $0xfc0] sm:$0xff]
        %v788 = vld [vmem:[%s233 + $0xfc8] sm:$0xff]
        %v789 = vld [vmem:[%s233 + $0xfd0] sm:$0xff]
        %v790 = vld [vmem:[%s233 + $0xfd8] sm:$0xff]
        %v791 = vld [vmem:[%s233 + $0xfe0] sm:$0xff]
        %v792 = vld [vmem:[%s233 + $0xfe8] sm:$0xff]
        %v793 = vld [vmem:[%s233 + $0xff0] sm:$0xff]
        %v794 = vld [vmem:[%s233 + $0xff8] sm:$0xff]
        %v795 = vld [vmem:[%s233 + $0x1000] sm:$0xff]
        %v796 = vld [vmem:[%s233 + $0x1008] sm:$0xff]
        %v797 = vld [vmem:[%s233 + $0x1010] sm:$0xff]
        %v798 = vld [vmem:[%s233 + $0x1018] sm:$0xff]
        %v799 = vld [vmem:[%s233 + $0x1020] sm:$0xff]
        %v800 = vld [vmem:[%s233 + $0x1028] sm:$0xff]
        %v801 = vld [vmem:[%s233 + $0x1030] sm:$0xff]
        %v802 = vld [vmem:[%s233 + $0x1038] sm:$0xff]
        %v803 = vld [vmem:[%s233 + $0x1040] sm:$0xff]
        %v804 = vld [vmem:[%s233 + $0x1048] sm:$0xff]
        %v805 = vld [vmem:[%s233 + $0x1050] sm:$0xff]
        %v806 = vld [vmem:[%s233 + $0x1058] sm:$0xff]
        %v807 = vld [vmem:[%s233 + $0x1060] sm:$0xff]
        %v808 = vld [vmem:[%s233 + $0x1068] sm:$0xff]
        %v809 = vld [vmem:[%s233 + $0x1070] sm:$0xff]
        %v810 = vld [vmem:[%s233 + $0x1078] sm:$0xff]
        %v811 = vld [vmem:[%s233 + $0x1080] sm:$0xff]
        %v812 = vld [vmem:[%s233 + $0x1088] sm:$0xff]
        %v813 = vld [vmem:[%s233 + $0x1090] sm:$0xff]
        %v814 = vld [vmem:[%s233 + $0x1098] sm:$0xff]
        %v815 = vld [vmem:[%s233 + $0x10a0] sm:$0xff]
        %v816 = vld [vmem:[%s233 + $0x10a8] sm:$0xff]
        %v817 = vld [vmem:[%s233 + $0x10b0] sm:$0xff]
        %v818 = vld [vmem:[%s233 + $0x10b8] sm:$0xff]
        %v819 = vld [vmem:[%s233 + $0x10c0] sm:$0xff]
        %v820 = vld [vmem:[%s233 + $0x10c8] sm:$0xff]
        %v821 = vld [vmem:[%s233 + $0x10d0] sm:$0xff]
        %v822 = vld [vmem:[%s233 + $0x10d8] sm:$0xff]
        %v823 = vld [vmem:[%s233 + $0x10e0] sm:$0xff]
        %v824 = vld [vmem:[%s233 + $0x10e8] sm:$0xff]
        %v825 = vld [vmem:[%s233 + $0x10f0] sm:$0xff]
        %v826 = vld [vmem:[%s233 + $0x10f8] sm:$0xff]
        %v827 = vld [vmem:[%s233 + $0x1100] sm:$0xff]
        %v828 = vld [vmem:[%s233 + $0x1108] sm:$0xff]
        %v829 = vld [vmem:[%s233 + $0x1110] sm:$0xff]
        %v830 = vld [vmem:[%s233 + $0x1118] sm:$0xff]
        %v831 = vld [vmem:[%s233 + $0x1120] sm:$0xff]
        %v832 = vld [vmem:[%s233 + $0x1128] sm:$0xff]
        %v833 = vld [vmem:[%s233 + $0x1130] sm:$0xff]
        %v834 = vld [vmem:[%s233 + $0x1138] sm:$0xff]
        %v835 = vld [vmem:[%s233 + $0x1140] sm:$0xff]
        %v836 = vld [vmem:[%s233 + $0x1148] sm:$0xff]
        %v837 = vld [vmem:[%s233 + $0x1150] sm:$0xff]
        %v838 = vld [vmem:[%s233 + $0x1158] sm:$0xff]
        %v839 = vld [vmem:[%s233 + $0x1160] sm:$0xff]
        %v840 = vld [vmem:[%s233 + $0x1168] sm:$0xff]
        %v841 = vld [vmem:[%s233 + $0x1170] sm:$0xff]
        %v842 = vld [vmem:[%s233 + $0x1178] sm:$0xff]
        %v843 = vld [vmem:[%s233 + $0x1180] sm:$0xff]
        %v844 = vld [vmem:[%s233 + $0x1188] sm:$0xff]
        %v845 = vld [vmem:[%s233 + $0x1190] sm:$0xff]
        %v846 = vld [vmem:[%s233 + $0x1198] sm:$0xff]
        %v847 = vld [vmem:[%s233 + $0x11a0] sm:$0xff]
        %v848 = vld [vmem:[%s233 + $0x11a8] sm:$0xff]
        %v849 = vld [vmem:[%s233 + $0x11b0] sm:$0xff]
        %v850 = vld [vmem:[%s233 + $0x11b8] sm:$0xff]
        %v851 = vld [vmem:[%s233 + $0x11c0] sm:$0xff]
        %v852 = vld [vmem:[%s233 + $0x11c8] sm:$0xff]
        %v853 = vld [vmem:[%s233 + $0x11d0] sm:$0xff]
        %v854 = vld [vmem:[%s233 + $0x11d8] sm:$0xff]
        %v855 = vld [vmem:[%s233 + $0x11e0] sm:$0xff]
        %v856 = vld [vmem:[%s233 + $0x11e8] sm:$0xff]
        %v857 = vld [vmem:[%s233 + $0x11f0] sm:$0xff]
        %v858 = vld [vmem:[%s233 + $0x11f8] sm:$0xff]
        %v859 = vld [vmem:[%s233 + $0x1200] sm:$0xff]
        %v860 = vld [vmem:[%s233 + $0x1208] sm:$0xff]
        %v861 = vld [vmem:[%s233 + $0x1210] sm:$0xff]
        %v862 = vld [vmem:[%s233 + $0x1218] sm:$0xff]
        %v863 = vld [vmem:[%s233 + $0x1220] sm:$0xff]
        %v864 = vld [vmem:[%s233 + $0x1228] sm:$0xff]
        %v865 = vld [vmem:[%s233 + $0x1230] sm:$0xff]
        %v866 = vld [vmem:[%s233 + $0x1238] sm:$0xff]
        %v867 = vld [vmem:[%s233 + $0x1240] sm:$0xff]
        %v868 = vld [vmem:[%s233 + $0x1248] sm:$0xff]
        %v869 = vld [vmem:[%s233 + $0x1250] sm:$0xff]
        %v870 = vld [vmem:[%s233 + $0x1258] sm:$0xff]
        %v871 = vld [vmem:[%s233 + $0x1260] sm:$0xff]
        %v872 = vld [vmem:[%s233 + $0x1268] sm:$0xff]
        %v873 = vld [vmem:[%s233 + $0x1270] sm:$0xff]
        %v874 = vld [vmem:[%s233 + $0x1278] sm:$0xff]
        %v875 = vld [vmem:[%s233 + $0x1280] sm:$0xff]
        %v876 = vld [vmem:[%s233 + $0x1288] sm:$0xff]
        %v877 = vld [vmem:[%s233 + $0x1290] sm:$0xff]
        %v878 = vld [vmem:[%s233 + $0x1298] sm:$0xff]
        %v879 = vld [vmem:[%s233 + $0x12a0] sm:$0xff]
        %v880 = vld [vmem:[%s233 + $0x12a8] sm:$0xff]
        %v881 = vld [vmem:[%s233 + $0x12b0] sm:$0xff]
        %v882 = vld [vmem:[%s233 + $0x12b8] sm:$0xff]
        %v883 = vld [vmem:[%s233 + $0x12c0] sm:$0xff]
        %v884 = vld [vmem:[%s233 + $0x12c8] sm:$0xff]
        %v885 = vld [vmem:[%s233 + $0x12d0] sm:$0xff]
        %v886 = vld [vmem:[%s233 + $0x12d8] sm:$0xff]
        %v887 = vld [vmem:[%s233 + $0x12e0] sm:$0xff]
        %v888 = vld [vmem:[%s233 + $0x12e8] sm:$0xff]
        %v889 = vld [vmem:[%s233 + $0x12f0] sm:$0xff]
        %v890 = vld [vmem:[%s233 + $0x12f8] sm:$0xff]
        %v891 = vld [vmem:[%s233 + $0x1300] sm:$0xff]
        %v892 = vld [vmem:[%s233 + $0x1308] sm:$0xff]
        %v893 = vld [vmem:[%s233 + $0x1310] sm:$0xff]
        %v894 = vld [vmem:[%s233 + $0x1318] sm:$0xff]
        %v895 = vld [vmem:[%s233 + $0x1320] sm:$0xff]
        %v896 = vld [vmem:[%s233 + $0x1328] sm:$0xff]
        %v897 = vld [vmem:[%s233 + $0x1330] sm:$0xff]
        %v898 = vld [vmem:[%s233 + $0x1338] sm:$0xff]
        %v899 = vld [vmem:[%s233 + $0x1340] sm:$0xff]
        %v900 = vld [vmem:[%s233 + $0x1348] sm:$0xff]
        %v901 = vld [vmem:[%s233 + $0x1350] sm:$0xff]
        %v902 = vld [vmem:[%s233 + $0x1358] sm:$0xff]
        %v903 = vld [vmem:[%s233 + $0x1360] sm:$0xff]
        %v904 = vld [vmem:[%s233 + $0x1368] sm:$0xff]
        %v905 = vld [vmem:[%s233 + $0x1370] sm:$0xff]
        %v906 = vld [vmem:[%s233 + $0x1378] sm:$0xff]
        %v907 = vld [vmem:[%s233 + $0x1380] sm:$0xff]
        %v908 = vld [vmem:[%s233 + $0x1388] sm:$0xff]
        %v909 = vld [vmem:[%s233 + $0x1390] sm:$0xff]
        %v910 = vld [vmem:[%s233 + $0x1398] sm:$0xff]
        %v911 = vld [vmem:[%s233 + $0x13a0] sm:$0xff]
        %v912 = vld [vmem:[%s233 + $0x13a8] sm:$0xff]
        %v913 = vld [vmem:[%s233 + $0x13b0] sm:$0xff]
        %v914 = vld [vmem:[%s233 + $0x13b8] sm:$0xff]
        %v915 = vld [vmem:[%s233 + $0x13c0] sm:$0xff]
        %v916 = vld [vmem:[%s233 + $0x13c8] sm:$0xff]
        %v917 = vld [vmem:[%s233 + $0x13d0] sm:$0xff]
        %v918 = vld [vmem:[%s233 + $0x13d8] sm:$0xff]
        %v919 = vld [vmem:[%s233 + $0x13e0] sm:$0xff]
        %v920 = vld [vmem:[%s233 + $0x13e8] sm:$0xff]
        %v921 = vld [vmem:[%s233 + $0x13f0] sm:$0xff]
        %v922 = vld [vmem:[%s233 + $0x13f8] sm:$0xff]
        %v923 = vld [vmem:[%s233 + $0x1400] sm:$0xff]
        %v924 = vld [vmem:[%s233 + $0x1408] sm:$0xff]
        %v925 = vld [vmem:[%s233 + $0x1410] sm:$0xff]
        %v926 = vld [vmem:[%s233 + $0x1418] sm:$0xff]
        %v927 = vld [vmem:[%s233 + $0x1420] sm:$0xff]
        %v928 = vld [vmem:[%s233 + $0x1428] sm:$0xff]
        %v929 = vld [vmem:[%s233 + $0x1430] sm:$0xff]
        %v930 = vld [vmem:[%s233 + $0x1438] sm:$0xff]
        %v931 = vld [vmem:[%s233 + $0x1440] sm:$0xff]
        %v932 = vld [vmem:[%s233 + $0x1448] sm:$0xff]
        %v933 = vld [vmem:[%s233 + $0x1450] sm:$0xff]
        %v934 = vld [vmem:[%s233 + $0x1458] sm:$0xff]
        %v935 = vld [vmem:[%s233 + $0x1460] sm:$0xff]
        %v936 = vld [vmem:[%s233 + $0x1468] sm:$0xff]
        %v937 = vld [vmem:[%s233 + $0x1470] sm:$0xff]
        %v938 = vld [vmem:[%s233 + $0x1478] sm:$0xff]
        %v939 = vld [vmem:[%s233 + $0x1480] sm:$0xff]
        %v940 = vld [vmem:[%s233 + $0x1488] sm:$0xff]
        %v941 = vld [vmem:[%s233 + $0x1490] sm:$0xff]
        %v942 = vld [vmem:[%s233 + $0x1498] sm:$0xff]
        %v943 = vld [vmem:[%s233 + $0x14a0] sm:$0xff]
        %v944 = vld [vmem:[%s233 + $0x14a8] sm:$0xff]
        %v945 = vld [vmem:[%s233 + $0x14b0] sm:$0xff]
        %v946 = vld [vmem:[%s233 + $0x14b8] sm:$0xff]
        %v947 = vld [vmem:[%s233 + $0x14c0] sm:$0xff]
        %v948 = vld [vmem:[%s233 + $0x14c8] sm:$0xff]
        %v949 = vld [vmem:[%s233 + $0x14d0] sm:$0xff]
        %v950 = vld [vmem:[%s233 + $0x14d8] sm:$0xff]
        %v951 = vld [vmem:[%s233 + $0x14e0] sm:$0xff]
        %v952 = vld [vmem:[%s233 + $0x14e8] sm:$0xff]
        %v953 = vld [vmem:[%s233 + $0x14f0] sm:$0xff]
        %v954 = vld [vmem:[%s233 + $0x14f8] sm:$0xff]
        %v955 = vld [vmem:[%s233 + $0x1500] sm:$0xff]
        %v956 = vld [vmem:[%s233 + $0x1508] sm:$0xff]
        %v957 = vld [vmem:[%s233 + $0x1510] sm:$0xff]
        %v958 = vld [vmem:[%s233 + $0x1518] sm:$0xff]
        %v959 = vld [vmem:[%s233 + $0x1520] sm:$0xff]
        %v960 = vld [vmem:[%s233 + $0x1528] sm:$0xff]
        %v961 = vld [vmem:[%s233 + $0x1530] sm:$0xff]
        %v962 = vld [vmem:[%s233 + $0x1538] sm:$0xff]
        %v963 = vld [vmem:[%s233 + $0x1540] sm:$0xff]
        %v964 = vld [vmem:[%s233 + $0x1548] sm:$0xff]
        %v965 = vld [vmem:[%s233 + $0x1550] sm:$0xff]
        %v966 = vld [vmem:[%s233 + $0x1558] sm:$0xff]
        %v967 = vld [vmem:[%s233 + $0x1560] sm:$0xff]
        %v968 = vld [vmem:[%s233 + $0x1568] sm:$0xff]
        %v969 = vld [vmem:[%s233 + $0x1570] sm:$0xff]
        %v970 = vld [vmem:[%s233 + $0x1578] sm:$0xff]
        %v971 = vld [vmem:[%s233 + $0x1580] sm:$0xff]
        %v972 = vld [vmem:[%s233 + $0x1588] sm:$0xff]
        %v973 = vld [vmem:[%s233 + $0x1590] sm:$0xff]
        %v974 = vld [vmem:[%s233 + $0x1598] sm:$0xff]
        %v975 = vld [vmem:[%s233 + $0x15a0] sm:$0xff]
        %v976 = vld [vmem:[%s233 + $0x15a8] sm:$0xff]
        %v977 = vld [vmem:[%s233 + $0x15b0] sm:$0xff]
        %v978 = vld [vmem:[%s233 + $0x15b8] sm:$0xff]
        %v979 = vld [vmem:[%s233 + $0x15c0] sm:$0xff]
        %v980 = vld [vmem:[%s233 + $0x15c8] sm:$0xff]
        %v981 = vld [vmem:[%s233 + $0x15d0] sm:$0xff]
        %v982 = vld [vmem:[%s233 + $0x15d8] sm:$0xff]
        %v983 = vld [vmem:[%s233 + $0x15e0] sm:$0xff]
        %v984 = vld [vmem:[%s233 + $0x15e8] sm:$0xff]
        %v985 = vld [vmem:[%s233 + $0x15f0] sm:$0xff]
        %v986 = vld [vmem:[%s233 + $0x15f8] sm:$0xff]
        %v987 = vld [vmem:[%s233 + $0x1600] sm:$0xff]
        %v988 = vld [vmem:[%s233 + $0x1608] sm:$0xff]
        %v989 = vld [vmem:[%s233 + $0x1610] sm:$0xff]
        %v990 = vld [vmem:[%s233 + $0x1618] sm:$0xff]
        %v991 = vld [vmem:[%s233 + $0x1620] sm:$0xff]
        %v992 = vld [vmem:[%s233 + $0x1628] sm:$0xff]
        %v993 = vld [vmem:[%s233 + $0x1630] sm:$0xff]
        %v994 = vld [vmem:[%s233 + $0x1638] sm:$0xff]
        %v995 = vld [vmem:[%s233 + $0x1640] sm:$0xff]
        %v996 = vld [vmem:[%s233 + $0x1648] sm:$0xff]
        %v997 = vld [vmem:[%s233 + $0x1650] sm:$0xff]
        %v998 = vld [vmem:[%s233 + $0x1658] sm:$0xff]
        %v999 = vld [vmem:[%s233 + $0x1660] sm:$0xff]
        %v1000 = vld [vmem:[%s233 + $0x1668] sm:$0xff]
        %v1001 = vld [vmem:[%s233 + $0x1670] sm:$0xff]
        %v1002 = vld [vmem:[%s233 + $0x1678] sm:$0xff]
        %v1003 = vld [vmem:[%s233 + $0x1680] sm:$0xff]
        %v1004 = vld [vmem:[%s233 + $0x1688] sm:$0xff]
        %v1005 = vld [vmem:[%s233 + $0x1690] sm:$0xff]
        %v1006 = vld [vmem:[%s233 + $0x1698] sm:$0xff]
        %v1007 = vld [vmem:[%s233 + $0x16a0] sm:$0xff]
        %v1008 = vld [vmem:[%s233 + $0x16a8] sm:$0xff]
        %v1009 = vld [vmem:[%s233 + $0x16b0] sm:$0xff]
        %v1010 = vld [vmem:[%s233 + $0x16b8] sm:$0xff]
        %v1011 = vld [vmem:[%s233 + $0x16c0] sm:$0xff]
        %v1012 = vld [vmem:[%s233 + $0x16c8] sm:$0xff]
        %v1013 = vld [vmem:[%s233 + $0x16d0] sm:$0xff]
        %v1014 = vld [vmem:[%s233 + $0x16d8] sm:$0xff]
        %v1015 = vld [vmem:[%s233 + $0x16e0] sm:$0xff]
        %v1016 = vld [vmem:[%s233 + $0x16e8] sm:$0xff]
        %v1017 = vld [vmem:[%s233 + $0x16f0] sm:$0xff]
        %v1018 = vld [vmem:[%s233 + $0x16f8] sm:$0xff]
        %v1019 = vld [vmem:[%s233 + $0x1700] sm:$0xff]
        %v1020 = vld [vmem:[%s233 + $0x1708] sm:$0xff]
        %v1021 = vld [vmem:[%s233 + $0x1710] sm:$0xff]
        %v1022 = vld [vmem:[%s233 + $0x1718] sm:$0xff]
        %v1023 = vld [vmem:[%s233 + $0x1720] sm:$0xff]
        %v1024 = vld [vmem:[%s233 + $0x1728] sm:$0xff]
        %v1025 = vld [vmem:[%s233 + $0x1730] sm:$0xff]
        %v1026 = vld [vmem:[%s233 + $0x1738] sm:$0xff]
        %v1027 = vld [vmem:[%s233 + $0x1740] sm:$0xff]
        %v1028 = vld [vmem:[%s233 + $0x1748] sm:$0xff]
        %v1029 = vld [vmem:[%s233 + $0x1750] sm:$0xff]
        %v1030 = vld [vmem:[%s233 + $0x1758] sm:$0xff]
        %v1031 = vld [vmem:[%s233 + $0x1760] sm:$0xff]
        %v1032 = vld [vmem:[%s233 + $0x1768] sm:$0xff]
        %v1033 = vld [vmem:[%s233 + $0x1770] sm:$0xff]
        %v1034 = vld [vmem:[%s233 + $0x1778] sm:$0xff]
        %v1035 = vld [vmem:[%s233 + $0x1780] sm:$0xff]
        %v1036 = vld [vmem:[%s233 + $0x1788] sm:$0xff]
        %v1037 = vld [vmem:[%s233 + $0x1790] sm:$0xff]
        %v1038 = vld [vmem:[%s233 + $0x1798] sm:$0xff]
        %v1039 = vld [vmem:[%s233 + $0x17a0] sm:$0xff]
        %v1040 = vld [vmem:[%s233 + $0x17a8] sm:$0xff]
        %v1041 = vld [vmem:[%s233 + $0x17b0] sm:$0xff]
        %v1042 = vld [vmem:[%s233 + $0x17b8] sm:$0xff]
        %v1043 = vld [vmem:[%s233 + $0x17c0] sm:$0xff]
        %v1044 = vld [vmem:[%s233 + $0x17c8] sm:$0xff]
        %v1045 = vld [vmem:[%s233 + $0x17d0] sm:$0xff]
        %v1046 = vld [vmem:[%s233 + $0x17d8] sm:$0xff]
        %v1047 = vld [vmem:[%s233 + $0x17e0] sm:$0xff]
        %v1048 = vld [vmem:[%s233 + $0x17e8] sm:$0xff]
        %v1049 = vld [vmem:[%s233 + $0x17f0] sm:$0xff]
        %v1050 = vld [vmem:[%s233 + $0x17f8] sm:$0xff]
        %v1051 = vld [vmem:[%s233 + $0x1800] sm:$0xff]
        %v1052 = vld [vmem:[%s233 + $0x1808] sm:$0xff]
        %v1053 = vld [vmem:[%s233 + $0x1810] sm:$0xff]
        %v1054 = vld [vmem:[%s233 + $0x1818] sm:$0xff]
        %v1055 = vld [vmem:[%s233 + $0x1820] sm:$0xff]
        %v1056 = vld [vmem:[%s233 + $0x1828] sm:$0xff]
        %v1057 = vld [vmem:[%s233 + $0x1830] sm:$0xff]
        %v1058 = vld [vmem:[%s233 + $0x1838] sm:$0xff]
        %v1059 = vld [vmem:[%s233 + $0x1840] sm:$0xff]
        %v1060 = vld [vmem:[%s233 + $0x1848] sm:$0xff]
        %v1061 = vld [vmem:[%s233 + $0x1850] sm:$0xff]
        %v1062 = vld [vmem:[%s233 + $0x1858] sm:$0xff]
        %v1063 = vld [vmem:[%s233 + $0x1860] sm:$0xff]
        %v1064 = vld [vmem:[%s233 + $0x1868] sm:$0xff]
        %v1065 = vld [vmem:[%s233 + $0x1870] sm:$0xff]
        %v1066 = vld [vmem:[%s233 + $0x1878] sm:$0xff]
        %v1067 = vld [vmem:[%s233 + $0x1880] sm:$0xff]
        %v1068 = vld [vmem:[%s233 + $0x1888] sm:$0xff]
        %v1069 = vld [vmem:[%s233 + $0x1890] sm:$0xff]
        %v1070 = vld [vmem:[%s233 + $0x1898] sm:$0xff]
        %v1071 = vld [vmem:[%s233 + $0x18a0] sm:$0xff]
        %v1072 = vld [vmem:[%s233 + $0x18a8] sm:$0xff]
        %v1073 = vld [vmem:[%s233 + $0x18b0] sm:$0xff]
        %v1074 = vld [vmem:[%s233 + $0x18b8] sm:$0xff]
        %v1075 = vld [vmem:[%s233 + $0x18c0] sm:$0xff]
        %v1076 = vld [vmem:[%s233 + $0x18c8] sm:$0xff]
        %v1077 = vld [vmem:[%s233 + $0x18d0] sm:$0xff]
        %v1078 = vld [vmem:[%s233 + $0x18d8] sm:$0xff]
        %v1079 = vld [vmem:[%s233 + $0x18e0] sm:$0xff]
        %v1080 = vld [vmem:[%s233 + $0x18e8] sm:$0xff]
        %v1081 = vld [vmem:[%s233 + $0x18f0] sm:$0xff]
        %v1082 = vld [vmem:[%s233 + $0x18f8] sm:$0xff]
        %v1083 = vld [vmem:[%s233 + $0x1900] sm:$0xff]
        %v1084 = vld [vmem:[%s233 + $0x1908] sm:$0xff]
        %v1085 = vld [vmem:[%s233 + $0x1910] sm:$0xff]
        %v1086 = vld [vmem:[%s233 + $0x1918] sm:$0xff]
        %v1087 = vld [vmem:[%s233 + $0x1920] sm:$0xff]
        %v1088 = vld [vmem:[%s233 + $0x1928] sm:$0xff]
        %v1089 = vld [vmem:[%s233 + $0x1930] sm:$0xff]
        %v1090 = vld [vmem:[%s233 + $0x1938] sm:$0xff]
        %v1091 = vld [vmem:[%s233 + $0x1940] sm:$0xff]
        %v1092 = vld [vmem:[%s233 + $0x1948] sm:$0xff]
        %v1093 = vld [vmem:[%s233 + $0x1950] sm:$0xff]
        %v1094 = vld [vmem:[%s233 + $0x1958] sm:$0xff]
        %v1095 = vld [vmem:[%s233 + $0x1960] sm:$0xff]
        %v1096 = vld [vmem:[%s233 + $0x1968] sm:$0xff]
        %v1097 = vld [vmem:[%s233 + $0x1970] sm:$0xff]
        %v1098 = vld [vmem:[%s233 + $0x1978] sm:$0xff]
        %v1099 = vld [vmem:[%s233 + $0x1980] sm:$0xff]
        %v1100 = vld [vmem:[%s233 + $0x1988] sm:$0xff]
        %v1101 = vld [vmem:[%s233 + $0x1990] sm:$0xff]
        %v1102 = vld [vmem:[%s233 + $0x1998] sm:$0xff]
        %v1103 = vld [vmem:[%s233 + $0x19a0] sm:$0xff]
        %v1104 = vld [vmem:[%s233 + $0x19a8] sm:$0xff]
        %v1105 = vld [vmem:[%s233 + $0x19b0] sm:$0xff]
        %v1106 = vld [vmem:[%s233 + $0x19b8] sm:$0xff]
        %v1107 = vld [vmem:[%s233 + $0x19c0] sm:$0xff]
        %v1108 = vld [vmem:[%s233 + $0x19c8] sm:$0xff]
        %v1109 = vld [vmem:[%s233 + $0x19d0] sm:$0xff]
        %v1110 = vld [vmem:[%s233 + $0x19d8] sm:$0xff]
        %v1111 = vld [vmem:[%s233 + $0x19e0] sm:$0xff]
        %v1112 = vld [vmem:[%s233 + $0x19e8] sm:$0xff]
        %v1113 = vld [vmem:[%s233 + $0x19f0] sm:$0xff]
        %v1114 = vld [vmem:[%s233 + $0x19f8] sm:$0xff]
        %v1115 = vld [vmem:[%s233 + $0x1a00] sm:$0xff]
        %v1116 = vld [vmem:[%s233 + $0x1a08] sm:$0xff]
        %v1117 = vld [vmem:[%s233 + $0x1a10] sm:$0xff]
        %v1118 = vld [vmem:[%s233 + $0x1a18] sm:$0xff]
        %v1119 = vld [vmem:[%s233 + $0x1a20] sm:$0xff]
        %v1120 = vld [vmem:[%s233 + $0x1a28] sm:$0xff]
        %v1121 = vld [vmem:[%s233 + $0x1a30] sm:$0xff]
        %v1122 = vld [vmem:[%s233 + $0x1a38] sm:$0xff]
        %v1123 = vld [vmem:[%s233 + $0x1a40] sm:$0xff]
        %v1124 = vld [vmem:[%s233 + $0x1a48] sm:$0xff]
        %v1125 = vld [vmem:[%s233 + $0x1a50] sm:$0xff]
        %v1126 = vld [vmem:[%s233 + $0x1a58] sm:$0xff]
        %v1127 = vld [vmem:[%s233 + $0x1a60] sm:$0xff]
        %v1128 = vld [vmem:[%s233 + $0x1a68] sm:$0xff]
        %v1129 = vld [vmem:[%s233 + $0x1a70] sm:$0xff]
        %v1130 = vld [vmem:[%s233 + $0x1a78] sm:$0xff]
        %v1131 = vld [vmem:[%s233 + $0x1a80] sm:$0xff]
        %v1132 = vld [vmem:[%s233 + $0x1a88] sm:$0xff]
        %v1133 = vld [vmem:[%s233 + $0x1a90] sm:$0xff]
        %v1134 = vld [vmem:[%s233 + $0x1a98] sm:$0xff]
        %v1135 = vld [vmem:[%s233 + $0x1aa0] sm:$0xff]
        %v1136 = vld [vmem:[%s233 + $0x1aa8] sm:$0xff]
        %v1137 = vld [vmem:[%s233 + $0x1ab0] sm:$0xff]
        %v1138 = vld [vmem:[%s233 + $0x1ab8] sm:$0xff]
        %v1139 = vld [vmem:[%s233 + $0x1ac0] sm:$0xff]
        %v1140 = vld [vmem:[%s233 + $0x1ac8] sm:$0xff]
        %v1141 = vld [vmem:[%s233 + $0x1ad0] sm:$0xff]
        %v1142 = vld [vmem:[%s233 + $0x1ad8] sm:$0xff]
        %v1143 = vld [vmem:[%s233 + $0x1ae0] sm:$0xff]
        %v1144 = vld [vmem:[%s233 + $0x1ae8] sm:$0xff]
        %v1145 = vld [vmem:[%s233 + $0x1af0] sm:$0xff]
        %v1146 = vld [vmem:[%s233 + $0x1af8] sm:$0xff]
        %v1147 = vld [vmem:[%s233 + $0x1b00] sm:$0xff]
        %v1148 = vld [vmem:[%s233 + $0x1b08] sm:$0xff]
        %v1149 = vld [vmem:[%s233 + $0x1b10] sm:$0xff]
        %v1150 = vld [vmem:[%s233 + $0x1b18] sm:$0xff]
        %v1151 = vld [vmem:[%s233 + $0x1b20] sm:$0xff]
        %v1152 = vld [vmem:[%s233 + $0x1b28] sm:$0xff]
        %v1153 = vld [vmem:[%s233 + $0x1b30] sm:$0xff]
        %v1154 = vld [vmem:[%s233 + $0x1b38] sm:$0xff]
        %v1155 = vld [vmem:[%s233 + $0x1b40] sm:$0xff]
        %v1156 = vld [vmem:[%s233 + $0x1b48] sm:$0xff]
        %v1157 = vld [vmem:[%s233 + $0x1b50] sm:$0xff]
        %v1158 = vld [vmem:[%s233 + $0x1b58] sm:$0xff]
        %v1159 = vld [vmem:[%s233 + $0x1b60] sm:$0xff]
        %v1160 = vld [vmem:[%s233 + $0x1b68] sm:$0xff]
        %v1161 = vld [vmem:[%s233 + $0x1b70] sm:$0xff]
        %v1162 = vld [vmem:[%s233 + $0x1b78] sm:$0xff]
        %v1163 = vld [vmem:[%s233 + $0x1b80] sm:$0xff]
        %v1164 = vld [vmem:[%s233 + $0x1b88] sm:$0xff]
        %v1165 = vld [vmem:[%s233 + $0x1b90] sm:$0xff]
        %v1166 = vld [vmem:[%s233 + $0x1b98] sm:$0xff]
        %v1167 = vld [vmem:[%s233 + $0x1ba0] sm:$0xff]
        %v1168 = vld [vmem:[%s233 + $0x1ba8] sm:$0xff]
        %v1169 = vld [vmem:[%s233 + $0x1bb0] sm:$0xff]
        %v1170 = vld [vmem:[%s233 + $0x1bb8] sm:$0xff]
        %v1171 = vld [vmem:[%s233 + $0x1bc0] sm:$0xff]
        %v1172 = vld [vmem:[%s233 + $0x1bc8] sm:$0xff]
        %v1173 = vld [vmem:[%s233 + $0x1bd0] sm:$0xff]
        %v1174 = vld [vmem:[%s233 + $0x1bd8] sm:$0xff]
        %v1175 = vld [vmem:[%s233 + $0x1be0] sm:$0xff]
        %v1176 = vld [vmem:[%s233 + $0x1be8] sm:$0xff]
        %v1177 = vld [vmem:[%s233 + $0x1bf0] sm:$0xff]
        %v1178 = vld [vmem:[%s233 + $0x1bf8] sm:$0xff]
        %v1179 = vld [vmem:[%s233 + $0x1c00] sm:$0xff]
        %v1180 = vld [vmem:[%s233 + $0x1c08] sm:$0xff]
        %v1181 = vld [vmem:[%s233 + $0x1c10] sm:$0xff]
        %v1182 = vld [vmem:[%s233 + $0x1c18] sm:$0xff]
        %v1183 = vld [vmem:[%s233 + $0x1c20] sm:$0xff]
        %v1184 = vld [vmem:[%s233 + $0x1c28] sm:$0xff]
        %v1185 = vld [vmem:[%s233 + $0x1c30] sm:$0xff]
        %v1186 = vld [vmem:[%s233 + $0x1c38] sm:$0xff]
        %v1187 = vld [vmem:[%s233 + $0x1c40] sm:$0xff]
        %v1188 = vld [vmem:[%s233 + $0x1c48] sm:$0xff]
        %v1189 = vld [vmem:[%s233 + $0x1c50] sm:$0xff]
        %v1190 = vld [vmem:[%s233 + $0x1c58] sm:$0xff]
        %v1191 = vld [vmem:[%s233 + $0x1c60] sm:$0xff]
        %v1192 = vld [vmem:[%s233 + $0x1c68] sm:$0xff]
        %v1193 = vld [vmem:[%s233 + $0x1c70] sm:$0xff]
        %v1194 = vld [vmem:[%s233 + $0x1c78] sm:$0xff]
        %v1195 = vld [vmem:[%s233 + $0x1c80] sm:$0xff]
        %v1196 = vld [vmem:[%s233 + $0x1c88] sm:$0xff]
        %v1197 = vld [vmem:[%s233 + $0x1c90] sm:$0xff]
        %v1198 = vld [vmem:[%s233 + $0x1c98] sm:$0xff]
        %v1199 = vld [vmem:[%s233 + $0x1ca0] sm:$0xff]
        %v1200 = vld [vmem:[%s233 + $0x1ca8] sm:$0xff]
        %v1201 = vld [vmem:[%s233 + $0x1cb0] sm:$0xff]
        %v1202 = vld [vmem:[%s233 + $0x1cb8] sm:$0xff]
        %v1203 = vld [vmem:[%s233 + $0x1cc0] sm:$0xff]
        %v1204 = vld [vmem:[%s233 + $0x1cc8] sm:$0xff]
        %v1205 = vld [vmem:[%s233 + $0x1cd0] sm:$0xff]
        %v1206 = vld [vmem:[%s233 + $0x1cd8] sm:$0xff]
        %v1207 = vld [vmem:[%s233 + $0x1ce0] sm:$0xff]
        %v1208 = vld [vmem:[%s233 + $0x1ce8] sm:$0xff]
        %v1209 = vld [vmem:[%s233 + $0x1cf0] sm:$0xff]
        %v1210 = vld [vmem:[%s233 + $0x1cf8] sm:$0xff]
        %v1211 = vld [vmem:[%s233 + $0x1d00] sm:$0xff]
        %v1212 = vld [vmem:[%s233 + $0x1d08] sm:$0xff]
        %v1213 = vld [vmem:[%s233 + $0x1d10] sm:$0xff]
        %v1214 = vld [vmem:[%s233 + $0x1d18] sm:$0xff]
        %v1215 = vld [vmem:[%s233 + $0x1d20] sm:$0xff]
        %v1216 = vld [vmem:[%s233 + $0x1d28] sm:$0xff]
        %v1217 = vld [vmem:[%s233 + $0x1d30] sm:$0xff]
        %v1218 = vld [vmem:[%s233 + $0x1d38] sm:$0xff]
        %v1219 = vld [vmem:[%s233 + $0x1d40] sm:$0xff]
        %v1220 = vld [vmem:[%s233 + $0x1d48] sm:$0xff]
        %v1221 = vld [vmem:[%s233 + $0x1d50] sm:$0xff]
        %v1222 = vld [vmem:[%s233 + $0x1d58] sm:$0xff]
        %v1223 = vld [vmem:[%s233 + $0x1d60] sm:$0xff]
        %v1224 = vld [vmem:[%s233 + $0x1d68] sm:$0xff]
        %v1225 = vld [vmem:[%s233 + $0x1d70] sm:$0xff]
        %v1226 = vld [vmem:[%s233 + $0x1d78] sm:$0xff]
        %v1227 = vld [vmem:[%s233 + $0x1d80] sm:$0xff]
        %v1228 = vld [vmem:[%s233 + $0x1d88] sm:$0xff]
        %v1229 = vld [vmem:[%s233 + $0x1d90] sm:$0xff]
        %v1230 = vld [vmem:[%s233 + $0x1d98] sm:$0xff]
        %v1231 = vld [vmem:[%s233 + $0x1da0] sm:$0xff]
        %v1232 = vld [vmem:[%s233 + $0x1da8] sm:$0xff]
        %v1233 = vld [vmem:[%s233 + $0x1db0] sm:$0xff]
        %v1234 = vld [vmem:[%s233 + $0x1db8] sm:$0xff]
        %v1235 = vld [vmem:[%s233 + $0x1dc0] sm:$0xff]
        %v1236 = vld [vmem:[%s233 + $0x1dc8] sm:$0xff]
        %v1237 = vld [vmem:[%s233 + $0x1dd0] sm:$0xff]
        %v1238 = vld [vmem:[%s233 + $0x1dd8] sm:$0xff]
        %v1239 = vld [vmem:[%s233 + $0x1de0] sm:$0xff]
        %v1240 = vld [vmem:[%s233 + $0x1de8] sm:$0xff]
        %v1241 = vld [vmem:[%s233 + $0x1df0] sm:$0xff]
        %v1242 = vld [vmem:[%s233 + $0x1df8] sm:$0xff]
        %v1243 = vld [vmem:[%s233 + $0x1e00] sm:$0xff]
        %v1244 = vld [vmem:[%s233 + $0x1e08] sm:$0xff]
        %v1245 = vld [vmem:[%s233 + $0x1e10] sm:$0xff]
        %v1246 = vld [vmem:[%s233 + $0x1e18] sm:$0xff]
        %v1247 = vld [vmem:[%s233 + $0x1e20] sm:$0xff]
        %v1248 = vld [vmem:[%s233 + $0x1e28] sm:$0xff]
        %v1249 = vld [vmem:[%s233 + $0x1e30] sm:$0xff]
        %v1250 = vld [vmem:[%s233 + $0x1e38] sm:$0xff]
        %v1251 = vld [vmem:[%s233 + $0x1e40] sm:$0xff]
        %v1252 = vld [vmem:[%s233 + $0x1e48] sm:$0xff]
        %v1253 = vld [vmem:[%s233 + $0x1e50] sm:$0xff]
        %v1254 = vld [vmem:[%s233 + $0x1e58] sm:$0xff]
        %v1255 = vld [vmem:[%s233 + $0x1e60] sm:$0xff]
        %v1256 = vld [vmem:[%s233 + $0x1e68] sm:$0xff]
        %v1257 = vld [vmem:[%s233 + $0x1e70] sm:$0xff]
        %v1258 = vld [vmem:[%s233 + $0x1e78] sm:$0xff]
        %v1259 = vld [vmem:[%s233 + $0x1e80] sm:$0xff]
        %v1260 = vld [vmem:[%s233 + $0x1e88] sm:$0xff]
        %v1261 = vld [vmem:[%s233 + $0x1e90] sm:$0xff]
        %v1262 = vld [vmem:[%s233 + $0x1e98] sm:$0xff]
        %v1263 = vld [vmem:[%s233 + $0x1ea0] sm:$0xff]
        %v1264 = vld [vmem:[%s233 + $0x1ea8] sm:$0xff]
        %v1265 = vld [vmem:[%s233 + $0x1eb0] sm:$0xff]
        %v1266 = vld [vmem:[%s233 + $0x1eb8] sm:$0xff]
        %v1267 = vld [vmem:[%s233 + $0x1ec0] sm:$0xff]
        %v1268 = vld [vmem:[%s233 + $0x1ec8] sm:$0xff]
        %v1269 = vld [vmem:[%s233 + $0x1ed0] sm:$0xff]
        %v1270 = vld [vmem:[%s233 + $0x1ed8] sm:$0xff]
        %v1271 = vld [vmem:[%s233 + $0x1ee0] sm:$0xff]
        %v1272 = vld [vmem:[%s233 + $0x1ee8] sm:$0xff]
        %v1273 = vld [vmem:[%s233 + $0x1ef0] sm:$0xff]
        %v1274 = vld [vmem:[%s233 + $0x1ef8] sm:$0xff]
        %v1275 = vld [vmem:[%s233 + $0x1f00] sm:$0xff]
        %v1276 = vld [vmem:[%s233 + $0x1f08] sm:$0xff]
        %v1277 = vld [vmem:[%s233 + $0x1f10] sm:$0xff]
        %v1278 = vld [vmem:[%s233 + $0x1f18] sm:$0xff]
        %v1279 = vld [vmem:[%s233 + $0x1f20] sm:$0xff]
        %v1280 = vld [vmem:[%s233 + $0x1f28] sm:$0xff]
        %v1281 = vld [vmem:[%s233 + $0x1f30] sm:$0xff]
        %v1282 = vld [vmem:[%s233 + $0x1f38] sm:$0xff]
        %v1283 = vld [vmem:[%s233 + $0x1f40] sm:$0xff]
        %v1284 = vld [vmem:[%s233 + $0x1f48] sm:$0xff]
        %v1285 = vld [vmem:[%s233 + $0x1f50] sm:$0xff]
        %v1286 = vld [vmem:[%s233 + $0x1f58] sm:$0xff]
        %v1287 = vld [vmem:[%s233 + $0x1f60] sm:$0xff]
        %v1288 = vld [vmem:[%s233 + $0x1f68] sm:$0xff]
        %v1289 = vld [vmem:[%s233 + $0x1f70] sm:$0xff]
        %v1290 = vld [vmem:[%s233 + $0x1f78] sm:$0xff]
        %v1291 = vld [vmem:[%s233 + $0x1f80] sm:$0xff]
        %v1292 = vld [vmem:[%s233 + $0x1f88] sm:$0xff]
        %v1293 = vld [vmem:[%s233 + $0x1f90] sm:$0xff]
        %v1294 = vld [vmem:[%s233 + $0x1f98] sm:$0xff]
        %v1295 = vld [vmem:[%s233 + $0x1fa0] sm:$0xff]
        %v1296 = vld [vmem:[%s233 + $0x1fa8] sm:$0xff]
        %v1297 = vld [vmem:[%s233 + $0x1fb0] sm:$0xff]
        %v1298 = vld [vmem:[%s233 + $0x1fb8] sm:$0xff]
        %v1299 = vld [vmem:[%s233 + $0x1fc0] sm:$0xff]
        %v1300 = vld [vmem:[%s233 + $0x1fc8] sm:$0xff]
        %v1301 = vld [vmem:[%s233 + $0x1fd0] sm:$0xff]
        %v1302 = vld [vmem:[%s233 + $0x1fd8] sm:$0xff]
        %v1303 = vld [vmem:[%s233 + $0x1fe0] sm:$0xff]
        %v1304 = vld [vmem:[%s233 + $0x1fe8] sm:$0xff]
        %v1305 = vld [vmem:[%s233 + $0x1ff0] sm:$0xff]
        %v1306 = vld [vmem:[%s233 + $0x1ff8] sm:$0xff]
        %s1307 = sshra.s32 %s280, 7
        %s1308 = sand.u32 %s280, 127
        %s1309 = scalar_lea.vmem [#allocation7], %s1307
        %v1310 = vld [vmem:[%s1309] sm:$0xff]
        %v1311 = vld [vmem:[%s1309 + $0x8] sm:$0xff]
        %v1314 = vlaneseq
        %v1315 = vshrl.u32 %v1314, 7
        %v1316 = vsub.s32 0, %v1315
        %v1317 = vrot.slane %v1310, %v1316
        %v1318 = vlaneseq
        %v1319 = vshrl.u32 %v1318, 7
        %v1320 = vsub.s32 1, %v1319
        %v1321 = vrot.slane %v1310, %v1320
        %v1322 = vlaneseq
        %v1323 = vshrl.u32 %v1322, 7
        %v1324 = vsub.s32 2, %v1323
        %v1325 = vrot.slane %v1310, %v1324
        %v1326 = vlaneseq
        %v1327 = vshrl.u32 %v1326, 7
        %v1328 = vsub.s32 3, %v1327
        %v1329 = vrot.slane %v1310, %v1328
        %v1330 = vlaneseq
        %v1331 = vshrl.u32 %v1330, 7
        %v1332 = vsub.s32 4, %v1331
        %v1333 = vrot.slane %v1310, %v1332
        %v1334 = vlaneseq
        %v1335 = vshrl.u32 %v1334, 7
        %v1336 = vsub.s32 5, %v1335
        %v1337 = vrot.slane %v1310, %v1336
        %v1338 = vlaneseq
        %v1339 = vshrl.u32 %v1338, 7
        %v1340 = vsub.s32 6, %v1339
        %v1341 = vrot.slane %v1310, %v1340
        %v1342 = vlaneseq
        %v1343 = vshrl.u32 %v1342, 7
        %v1344 = vsub.s32 7, %v1343
        %v1345 = vrot.slane %v1310, %v1344
        %v1346 = vlaneseq
        %v1347 = vshrl.u32 %v1346, 7
        %v1348 = vsub.s32 0, %v1347
        %v1349 = vrot.slane %v1311, %v1348
        %v1350 = vlaneseq
        %v1351 = vshrl.u32 %v1350, 7
        %v1352 = vsub.s32 1, %v1351
        %v1353 = vrot.slane %v1311, %v1352
        %v1354 = vlaneseq
        %v1355 = vshrl.u32 %v1354, 7
        %v1356 = vsub.s32 2, %v1355
        %v1357 = vrot.slane %v1311, %v1356
        %v1358 = vlaneseq
        %v1359 = vshrl.u32 %v1358, 7
        %v1360 = vsub.s32 3, %v1359
        %v1361 = vrot.slane %v1311, %v1360
        %v1362 = vlaneseq
        %v1363 = vshrl.u32 %v1362, 7
        %v1364 = vsub.s32 4, %v1363
        %v1365 = vrot.slane %v1311, %v1364
        %v1366 = vlaneseq
        %v1367 = vshrl.u32 %v1366, 7
        %v1368 = vsub.s32 5, %v1367
        %v1369 = vrot.slane %v1311, %v1368
        %v1370 = vlaneseq
        %v1371 = vshrl.u32 %v1370, 7
        %v1372 = vsub.s32 6, %v1371
        %v1373 = vrot.slane %v1311, %v1372
        %v1374 = vlaneseq
        %v1375 = vshrl.u32 %v1374, 7
        %v1376 = vsub.s32 7, %v1375
        %v1377 = vrot.slane %v1311, %v1376
        %v1396 = vcombine.high %v281, %v281
        %v1398 = vunpack.c.l.s4 1983009808
        %v1399 = vunpack.c.0.s8 %v1398
        %v1400 = vlaneseq
        %v1401 = vshrl.u32 %v1400, 7
        %v1402 = vsub.s32 %v1399, %v1401
        %v1403 = vrot.slane %v281, %v1402
        %v1405 = vunpack.c.l.s4 1983009808
        %v1406 = vunpack.c.0.s8 %v1405
        %v1407 = vlaneseq
        %v1408 = vshrl.u32 %v1407, 7
        %v1409 = vsub.s32 %v1406, %v1408
        %v1410 = vrot.slane %v1396, %v1409
        %v1411 = vcombine.high %v1403, %v1403
        %v1412 = vcombine.high %v1410, %v1410
        %v1413 = vcombine.high %v282, %v282
        %v1415 = vunpack.c.l.s4 1983009808
        %v1416 = vunpack.c.0.s8 %v1415
        %v1417 = vlaneseq
        %v1418 = vshrl.u32 %v1417, 7
        %v1419 = vsub.s32 %v1416, %v1418
        %v1420 = vrot.slane %v282, %v1419
        %v1422 = vunpack.c.l.s4 1983009808
        %v1423 = vunpack.c.0.s8 %v1422
        %v1424 = vlaneseq
        %v1425 = vshrl.u32 %v1424, 7
        %v1426 = vsub.s32 %v1423, %v1425
        %v1427 = vrot.slane %v1413, %v1426
        %v1428 = vcombine.high %v1420, %v1420
        %v1429 = vcombine.high %v1427, %v1427
        %v2462 = vunpack.c.l.b16 %v283
        %v2463 = vunpack.c.h.b16 %v283
        %v2464 = vunpack.c.l.b16 %v284
        %v2465 = vunpack.c.h.b16 %v284
        %v2466 = vunpack.c.l.b16 %v285
        %v2467 = vunpack.c.h.b16 %v285
        %v2468 = vunpack.c.l.b16 %v286
        %v2469 = vunpack.c.h.b16 %v286
        %v2470 = vunpack.c.l.b16 %v287
        %v2471 = vunpack.c.h.b16 %v287
        %v2472 = vunpack.c.l.b16 %v288
        %v2473 = vunpack.c.h.b16 %v288
        %v2474 = vunpack.c.l.b16 %v289
        %v2475 = vunpack.c.h.b16 %v289
        %v2476 = vunpack.c.l.b16 %v290
        %v2477 = vunpack.c.h.b16 %v290
        %v2478 = vunpack.c.l.b16 %v291
        %v2479 = vunpack.c.h.b16 %v291
        %v2480 = vunpack.c.l.b16 %v292
        %v2481 = vunpack.c.h.b16 %v292
        %v2482 = vunpack.c.l.b16 %v293
        %v2483 = vunpack.c.h.b16 %v293
        %v2484 = vunpack.c.l.b16 %v294
        %v2485 = vunpack.c.h.b16 %v294
        %v2486 = vunpack.c.l.b16 %v295
        %v2487 = vunpack.c.h.b16 %v295
        %v2488 = vunpack.c.l.b16 %v296
        %v2489 = vunpack.c.h.b16 %v296
        %v2490 = vunpack.c.l.b16 %v297
        %v2491 = vunpack.c.h.b16 %v297
        %v2492 = vunpack.c.l.b16 %v298
        %v2493 = vunpack.c.h.b16 %v298
        %v2494 = vunpack.c.l.b16 %v299
        %v2495 = vunpack.c.h.b16 %v299
        %v2496 = vunpack.c.l.b16 %v300
        %v2497 = vunpack.c.h.b16 %v300
        %v2498 = vunpack.c.l.b16 %v301
        %v2499 = vunpack.c.h.b16 %v301
        %v2500 = vunpack.c.l.b16 %v302
        %v2501 = vunpack.c.h.b16 %v302
        %v2502 = vunpack.c.l.b16 %v303
        %v2503 = vunpack.c.h.b16 %v303
        %v2504 = vunpack.c.l.b16 %v304
        %v2505 = vunpack.c.h.b16 %v304
        %v2506 = vunpack.c.l.b16 %v305
        %v2507 = vunpack.c.h.b16 %v305
        %v2508 = vunpack.c.l.b16 %v306
        %v2509 = vunpack.c.h.b16 %v306
        %v2510 = vunpack.c.l.b16 %v307
        %v2511 = vunpack.c.h.b16 %v307
        %v2512 = vunpack.c.l.b16 %v308
        %v2513 = vunpack.c.h.b16 %v308
        %v2514 = vunpack.c.l.b16 %v309
        %v2515 = vunpack.c.h.b16 %v309
        %v2516 = vunpack.c.l.b16 %v310
        %v2517 = vunpack.c.h.b16 %v310
        %v2518 = vunpack.c.l.b16 %v311
        %v2519 = vunpack.c.h.b16 %v311
        %v2520 = vunpack.c.l.b16 %v312
        %v2521 = vunpack.c.h.b16 %v312
        %v2522 = vunpack.c.l.b16 %v313
        %v2523 = vunpack.c.h.b16 %v313
        %v2524 = vunpack.c.l.b16 %v314
        %v2525 = vunpack.c.h.b16 %v314
        %v2526 = vunpack.c.l.b16 %v315
        %v2527 = vunpack.c.h.b16 %v315
        %v2528 = vunpack.c.l.b16 %v316
        %v2529 = vunpack.c.h.b16 %v316
        %v2530 = vunpack.c.l.b16 %v317
        %v2531 = vunpack.c.h.b16 %v317
        %v2532 = vunpack.c.l.b16 %v318
        %v2533 = vunpack.c.h.b16 %v318
        %v2534 = vunpack.c.l.b16 %v319
        %v2535 = vunpack.c.h.b16 %v319
        %v2536 = vunpack.c.l.b16 %v320
        %v2537 = vunpack.c.h.b16 %v320
        %v2538 = vunpack.c.l.b16 %v321
        %v2539 = vunpack.c.h.b16 %v321
        %v2540 = vunpack.c.l.b16 %v322
        %v2541 = vunpack.c.h.b16 %v322
        %v2542 = vunpack.c.l.b16 %v323
        %v2543 = vunpack.c.h.b16 %v323
        %v2544 = vunpack.c.l.b16 %v324
        %v2545 = vunpack.c.h.b16 %v324
        %v2546 = vunpack.c.l.b16 %v325
        %v2547 = vunpack.c.h.b16 %v325
        %v2548 = vunpack.c.l.b16 %v326
        %v2549 = vunpack.c.h.b16 %v326
        %v2550 = vunpack.c.l.b16 %v327
        %v2551 = vunpack.c.h.b16 %v327
        %v2552 = vunpack.c.l.b16 %v328
        %v2553 = vunpack.c.h.b16 %v328
        %v2554 = vunpack.c.l.b16 %v329
        %v2555 = vunpack.c.h.b16 %v329
        %v2556 = vunpack.c.l.b16 %v330
        %v2557 = vunpack.c.h.b16 %v330
        %v2558 = vunpack.c.l.b16 %v331
        %v2559 = vunpack.c.h.b16 %v331
        %v2560 = vunpack.c.l.b16 %v332
        %v2561 = vunpack.c.h.b16 %v332
        %v2562 = vunpack.c.l.b16 %v333
        %v2563 = vunpack.c.h.b16 %v333
        %v2564 = vunpack.c.l.b16 %v334
        %v2565 = vunpack.c.h.b16 %v334
        %v2566 = vunpack.c.l.b16 %v335
        %v2567 = vunpack.c.h.b16 %v335
        %v2568 = vunpack.c.l.b16 %v336
        %v2569 = vunpack.c.h.b16 %v336
        %v2570 = vunpack.c.l.b16 %v337
        %v2571 = vunpack.c.h.b16 %v337
        %v2572 = vunpack.c.l.b16 %v338
        %v2573 = vunpack.c.h.b16 %v338
        %v2574 = vunpack.c.l.b16 %v339
        %v2575 = vunpack.c.h.b16 %v339
        %v2576 = vunpack.c.l.b16 %v340
        %v2577 = vunpack.c.h.b16 %v340
        %v2578 = vunpack.c.l.b16 %v341
        %v2579 = vunpack.c.h.b16 %v341
        %v2580 = vunpack.c.l.b16 %v342
        %v2581 = vunpack.c.h.b16 %v342
        %v2582 = vunpack.c.l.b16 %v343
        %v2583 = vunpack.c.h.b16 %v343
        %v2584 = vunpack.c.l.b16 %v344
        %v2585 = vunpack.c.h.b16 %v344
        %v2586 = vunpack.c.l.b16 %v345
        %v2587 = vunpack.c.h.b16 %v345
        %v2588 = vunpack.c.l.b16 %v346
        %v2589 = vunpack.c.h.b16 %v346
        %v2590 = vunpack.c.l.b16 %v347
        %v2591 = vunpack.c.h.b16 %v347
        %v2592 = vunpack.c.l.b16 %v348
        %v2593 = vunpack.c.h.b16 %v348
        %v2594 = vunpack.c.l.b16 %v349
        %v2595 = vunpack.c.h.b16 %v349
        %v2596 = vunpack.c.l.b16 %v350
        %v2597 = vunpack.c.h.b16 %v350
        %v2598 = vunpack.c.l.b16 %v351
        %v2599 = vunpack.c.h.b16 %v351
        %v2600 = vunpack.c.l.b16 %v352
        %v2601 = vunpack.c.h.b16 %v352
        %v2602 = vunpack.c.l.b16 %v353
        %v2603 = vunpack.c.h.b16 %v353
        %v2604 = vunpack.c.l.b16 %v354
        %v2605 = vunpack.c.h.b16 %v354
        %v2606 = vunpack.c.l.b16 %v355
        %v2607 = vunpack.c.h.b16 %v355
        %v2608 = vunpack.c.l.b16 %v356
        %v2609 = vunpack.c.h.b16 %v356
        %v2610 = vunpack.c.l.b16 %v357
        %v2611 = vunpack.c.h.b16 %v357
        %v2612 = vunpack.c.l.b16 %v358
        %v2613 = vunpack.c.h.b16 %v358
        %v2614 = vunpack.c.l.b16 %v359
        %v2615 = vunpack.c.h.b16 %v359
        %v2616 = vunpack.c.l.b16 %v360
        %v2617 = vunpack.c.h.b16 %v360
        %v2618 = vunpack.c.l.b16 %v361
        %v2619 = vunpack.c.h.b16 %v361
        %v2620 = vunpack.c.l.b16 %v362
        %v2621 = vunpack.c.h.b16 %v362
        %v2622 = vunpack.c.l.b16 %v363
        %v2623 = vunpack.c.h.b16 %v363
        %v2624 = vunpack.c.l.b16 %v364
        %v2625 = vunpack.c.h.b16 %v364
        %v2626 = vunpack.c.l.b16 %v365
        %v2627 = vunpack.c.h.b16 %v365
        %v2628 = vunpack.c.l.b16 %v366
        %v2629 = vunpack.c.h.b16 %v366
        %v2630 = vunpack.c.l.b16 %v367
        %v2631 = vunpack.c.h.b16 %v367
        %v2632 = vunpack.c.l.b16 %v368
        %v2633 = vunpack.c.h.b16 %v368
        %v2634 = vunpack.c.l.b16 %v369
        %v2635 = vunpack.c.h.b16 %v369
        %v2636 = vunpack.c.l.b16 %v370
        %v2637 = vunpack.c.h.b16 %v370
        %v2638 = vunpack.c.l.b16 %v371
        %v2639 = vunpack.c.h.b16 %v371
        %v2640 = vunpack.c.l.b16 %v372
        %v2641 = vunpack.c.h.b16 %v372
        %v2642 = vunpack.c.l.b16 %v373
        %v2643 = vunpack.c.h.b16 %v373
        %v2644 = vunpack.c.l.b16 %v374
        %v2645 = vunpack.c.h.b16 %v374
        %v2646 = vunpack.c.l.b16 %v375
        %v2647 = vunpack.c.h.b16 %v375
        %v2648 = vunpack.c.l.b16 %v376
        %v2649 = vunpack.c.h.b16 %v376
        %v2650 = vunpack.c.l.b16 %v377
        %v2651 = vunpack.c.h.b16 %v377
        %v2652 = vunpack.c.l.b16 %v378
        %v2653 = vunpack.c.h.b16 %v378
        %v2654 = vunpack.c.l.b16 %v379
        %v2655 = vunpack.c.h.b16 %v379
        %v2656 = vunpack.c.l.b16 %v380
        %v2657 = vunpack.c.h.b16 %v380
        %v2658 = vunpack.c.l.b16 %v381
        %v2659 = vunpack.c.h.b16 %v381
        %v2660 = vunpack.c.l.b16 %v382
        %v2661 = vunpack.c.h.b16 %v382
        %v2662 = vunpack.c.l.b16 %v383
        %v2663 = vunpack.c.h.b16 %v383
        %v2664 = vunpack.c.l.b16 %v384
        %v2665 = vunpack.c.h.b16 %v384
        %v2666 = vunpack.c.l.b16 %v385
        %v2667 = vunpack.c.h.b16 %v385
        %v2668 = vunpack.c.l.b16 %v386
        %v2669 = vunpack.c.h.b16 %v386
        %v2670 = vunpack.c.l.b16 %v387
        %v2671 = vunpack.c.h.b16 %v387
        %v2672 = vunpack.c.l.b16 %v388
        %v2673 = vunpack.c.h.b16 %v388
        %v2674 = vunpack.c.l.b16 %v389
        %v2675 = vunpack.c.h.b16 %v389
        %v2676 = vunpack.c.l.b16 %v390
        %v2677 = vunpack.c.h.b16 %v390
        %v2678 = vunpack.c.l.b16 %v391
        %v2679 = vunpack.c.h.b16 %v391
        %v2680 = vunpack.c.l.b16 %v392
        %v2681 = vunpack.c.h.b16 %v392
        %v2682 = vunpack.c.l.b16 %v393
        %v2683 = vunpack.c.h.b16 %v393
        %v2684 = vunpack.c.l.b16 %v394
        %v2685 = vunpack.c.h.b16 %v394
        %v2686 = vunpack.c.l.b16 %v395
        %v2687 = vunpack.c.h.b16 %v395
        %v2688 = vunpack.c.l.b16 %v396
        %v2689 = vunpack.c.h.b16 %v396
        %v2690 = vunpack.c.l.b16 %v397
        %v2691 = vunpack.c.h.b16 %v397
        %v2692 = vunpack.c.l.b16 %v398
        %v2693 = vunpack.c.h.b16 %v398
        %v2694 = vunpack.c.l.b16 %v399
        %v2695 = vunpack.c.h.b16 %v399
        %v2696 = vunpack.c.l.b16 %v400
        %v2697 = vunpack.c.h.b16 %v400
        %v2698 = vunpack.c.l.b16 %v401
        %v2699 = vunpack.c.h.b16 %v401
        %v2700 = vunpack.c.l.b16 %v402
        %v2701 = vunpack.c.h.b16 %v402
        %v2702 = vunpack.c.l.b16 %v403
        %v2703 = vunpack.c.h.b16 %v403
        %v2704 = vunpack.c.l.b16 %v404
        %v2705 = vunpack.c.h.b16 %v404
        %v2706 = vunpack.c.l.b16 %v405
        %v2707 = vunpack.c.h.b16 %v405
        %v2708 = vunpack.c.l.b16 %v406
        %v2709 = vunpack.c.h.b16 %v406
        %v2710 = vunpack.c.l.b16 %v407
        %v2711 = vunpack.c.h.b16 %v407
        %v2712 = vunpack.c.l.b16 %v408
        %v2713 = vunpack.c.h.b16 %v408
        %v2714 = vunpack.c.l.b16 %v409
        %v2715 = vunpack.c.h.b16 %v409
        %v2716 = vunpack.c.l.b16 %v410
        %v2717 = vunpack.c.h.b16 %v410
        %v2718 = vunpack.c.l.b16 %v411
        %v2719 = vunpack.c.h.b16 %v411
        %v2720 = vunpack.c.l.b16 %v412
        %v2721 = vunpack.c.h.b16 %v412
        %v2722 = vunpack.c.l.b16 %v413
        %v2723 = vunpack.c.h.b16 %v413
        %v2724 = vunpack.c.l.b16 %v414
        %v2725 = vunpack.c.h.b16 %v414
        %v2726 = vunpack.c.l.b16 %v415
        %v2727 = vunpack.c.h.b16 %v415
        %v2728 = vunpack.c.l.b16 %v416
        %v2729 = vunpack.c.h.b16 %v416
        %v2730 = vunpack.c.l.b16 %v417
        %v2731 = vunpack.c.h.b16 %v417
        %v2732 = vunpack.c.l.b16 %v418
        %v2733 = vunpack.c.h.b16 %v418
        %v2734 = vunpack.c.l.b16 %v419
        %v2735 = vunpack.c.h.b16 %v419
        %v2736 = vunpack.c.l.b16 %v420
        %v2737 = vunpack.c.h.b16 %v420
        %v2738 = vunpack.c.l.b16 %v421
        %v2739 = vunpack.c.h.b16 %v421
        %v2740 = vunpack.c.l.b16 %v422
        %v2741 = vunpack.c.h.b16 %v422
        %v2742 = vunpack.c.l.b16 %v423
        %v2743 = vunpack.c.h.b16 %v423
        %v2744 = vunpack.c.l.b16 %v424
        %v2745 = vunpack.c.h.b16 %v424
        %v2746 = vunpack.c.l.b16 %v425
        %v2747 = vunpack.c.h.b16 %v425
        %v2748 = vunpack.c.l.b16 %v426
        %v2749 = vunpack.c.h.b16 %v426
        %v2750 = vunpack.c.l.b16 %v427
        %v2751 = vunpack.c.h.b16 %v427
        %v2752 = vunpack.c.l.b16 %v428
        %v2753 = vunpack.c.h.b16 %v428
        %v2754 = vunpack.c.l.b16 %v429
        %v2755 = vunpack.c.h.b16 %v429
        %v2756 = vunpack.c.l.b16 %v430
        %v2757 = vunpack.c.h.b16 %v430
        %v2758 = vunpack.c.l.b16 %v431
        %v2759 = vunpack.c.h.b16 %v431
        %v2760 = vunpack.c.l.b16 %v432
        %v2761 = vunpack.c.h.b16 %v432
        %v2762 = vunpack.c.l.b16 %v433
        %v2763 = vunpack.c.h.b16 %v433
        %v2764 = vunpack.c.l.b16 %v434
        %v2765 = vunpack.c.h.b16 %v434
        %v2766 = vunpack.c.l.b16 %v435
        %v2767 = vunpack.c.h.b16 %v435
        %v2768 = vunpack.c.l.b16 %v436
        %v2769 = vunpack.c.h.b16 %v436
        %v2770 = vunpack.c.l.b16 %v437
        %v2771 = vunpack.c.h.b16 %v437
        %v2772 = vunpack.c.l.b16 %v438
        %v2773 = vunpack.c.h.b16 %v438
        %v2774 = vunpack.c.l.b16 %v439
        %v2775 = vunpack.c.h.b16 %v439
        %v2776 = vunpack.c.l.b16 %v440
        %v2777 = vunpack.c.h.b16 %v440
        %v2778 = vunpack.c.l.b16 %v441
        %v2779 = vunpack.c.h.b16 %v441
        %v2780 = vunpack.c.l.b16 %v442
        %v2781 = vunpack.c.h.b16 %v442
        %v2782 = vunpack.c.l.b16 %v443
        %v2783 = vunpack.c.h.b16 %v443
        %v2784 = vunpack.c.l.b16 %v444
        %v2785 = vunpack.c.h.b16 %v444
        %v2786 = vunpack.c.l.b16 %v445
        %v2787 = vunpack.c.h.b16 %v445
        %v2788 = vunpack.c.l.b16 %v446
        %v2789 = vunpack.c.h.b16 %v446
        %v2790 = vunpack.c.l.b16 %v447
        %v2791 = vunpack.c.h.b16 %v447
        %v2792 = vunpack.c.l.b16 %v448
        %v2793 = vunpack.c.h.b16 %v448
        %v2794 = vunpack.c.l.b16 %v449
        %v2795 = vunpack.c.h.b16 %v449
        %v2796 = vunpack.c.l.b16 %v450
        %v2797 = vunpack.c.h.b16 %v450
        %v2798 = vunpack.c.l.b16 %v451
        %v2799 = vunpack.c.h.b16 %v451
        %v2800 = vunpack.c.l.b16 %v452
        %v2801 = vunpack.c.h.b16 %v452
        %v2802 = vunpack.c.l.b16 %v453
        %v2803 = vunpack.c.h.b16 %v453
        %v2804 = vunpack.c.l.b16 %v454
        %v2805 = vunpack.c.h.b16 %v454
        %v2806 = vunpack.c.l.b16 %v455
        %v2807 = vunpack.c.h.b16 %v455
        %v2808 = vunpack.c.l.b16 %v456
        %v2809 = vunpack.c.h.b16 %v456
        %v2810 = vunpack.c.l.b16 %v457
        %v2811 = vunpack.c.h.b16 %v457
        %v2812 = vunpack.c.l.b16 %v458
        %v2813 = vunpack.c.h.b16 %v458
        %v2814 = vunpack.c.l.b16 %v459
        %v2815 = vunpack.c.h.b16 %v459
        %v2816 = vunpack.c.l.b16 %v460
        %v2817 = vunpack.c.h.b16 %v460
        %v2818 = vunpack.c.l.b16 %v461
        %v2819 = vunpack.c.h.b16 %v461
        %v2820 = vunpack.c.l.b16 %v462
        %v2821 = vunpack.c.h.b16 %v462
        %v2822 = vunpack.c.l.b16 %v463
        %v2823 = vunpack.c.h.b16 %v463
        %v2824 = vunpack.c.l.b16 %v464
        %v2825 = vunpack.c.h.b16 %v464
        %v2826 = vunpack.c.l.b16 %v465
        %v2827 = vunpack.c.h.b16 %v465
        %v2828 = vunpack.c.l.b16 %v466
        %v2829 = vunpack.c.h.b16 %v466
        %v2830 = vunpack.c.l.b16 %v467
        %v2831 = vunpack.c.h.b16 %v467
        %v2832 = vunpack.c.l.b16 %v468
        %v2833 = vunpack.c.h.b16 %v468
        %v2834 = vunpack.c.l.b16 %v469
        %v2835 = vunpack.c.h.b16 %v469
        %v2836 = vunpack.c.l.b16 %v470
        %v2837 = vunpack.c.h.b16 %v470
        %v2838 = vunpack.c.l.b16 %v471
        %v2839 = vunpack.c.h.b16 %v471
        %v2840 = vunpack.c.l.b16 %v472
        %v2841 = vunpack.c.h.b16 %v472
        %v2842 = vunpack.c.l.b16 %v473
        %v2843 = vunpack.c.h.b16 %v473
        %v2844 = vunpack.c.l.b16 %v474
        %v2845 = vunpack.c.h.b16 %v474
        %v2846 = vunpack.c.l.b16 %v475
        %v2847 = vunpack.c.h.b16 %v475
        %v2848 = vunpack.c.l.b16 %v476
        %v2849 = vunpack.c.h.b16 %v476
        %v2850 = vunpack.c.l.b16 %v477
        %v2851 = vunpack.c.h.b16 %v477
        %v2852 = vunpack.c.l.b16 %v478
        %v2853 = vunpack.c.h.b16 %v478
        %v2854 = vunpack.c.l.b16 %v479
        %v2855 = vunpack.c.h.b16 %v479
        %v2856 = vunpack.c.l.b16 %v480
        %v2857 = vunpack.c.h.b16 %v480
        %v2858 = vunpack.c.l.b16 %v481
        %v2859 = vunpack.c.h.b16 %v481
        %v2860 = vunpack.c.l.b16 %v482
        %v2861 = vunpack.c.h.b16 %v482
        %v2862 = vunpack.c.l.b16 %v483
        %v2863 = vunpack.c.h.b16 %v483
        %v2864 = vunpack.c.l.b16 %v484
        %v2865 = vunpack.c.h.b16 %v484
        %v2866 = vunpack.c.l.b16 %v485
        %v2867 = vunpack.c.h.b16 %v485
        %v2868 = vunpack.c.l.b16 %v486
        %v2869 = vunpack.c.h.b16 %v486
        %v2870 = vunpack.c.l.b16 %v487
        %v2871 = vunpack.c.h.b16 %v487
        %v2872 = vunpack.c.l.b16 %v488
        %v2873 = vunpack.c.h.b16 %v488
        %v2874 = vunpack.c.l.b16 %v489
        %v2875 = vunpack.c.h.b16 %v489
        %v2876 = vunpack.c.l.b16 %v490
        %v2877 = vunpack.c.h.b16 %v490
        %v2878 = vunpack.c.l.b16 %v491
        %v2879 = vunpack.c.h.b16 %v491
        %v2880 = vunpack.c.l.b16 %v492
        %v2881 = vunpack.c.h.b16 %v492
        %v2882 = vunpack.c.l.b16 %v493
        %v2883 = vunpack.c.h.b16 %v493
        %v2884 = vunpack.c.l.b16 %v494
        %v2885 = vunpack.c.h.b16 %v494
        %v2886 = vunpack.c.l.b16 %v495
        %v2887 = vunpack.c.h.b16 %v495
        %v2888 = vunpack.c.l.b16 %v496
        %v2889 = vunpack.c.h.b16 %v496
        %v2890 = vunpack.c.l.b16 %v497
        %v2891 = vunpack.c.h.b16 %v497
        %v2892 = vunpack.c.l.b16 %v498
        %v2893 = vunpack.c.h.b16 %v498
        %v2894 = vunpack.c.l.b16 %v499
        %v2895 = vunpack.c.h.b16 %v499
        %v2896 = vunpack.c.l.b16 %v500
        %v2897 = vunpack.c.h.b16 %v500
        %v2898 = vunpack.c.l.b16 %v501
        %v2899 = vunpack.c.h.b16 %v501
        %v2900 = vunpack.c.l.b16 %v502
        %v2901 = vunpack.c.h.b16 %v502
        %v2902 = vunpack.c.l.b16 %v503
        %v2903 = vunpack.c.h.b16 %v503
        %v2904 = vunpack.c.l.b16 %v504
        %v2905 = vunpack.c.h.b16 %v504
        %v2906 = vunpack.c.l.b16 %v505
        %v2907 = vunpack.c.h.b16 %v505
        %v2908 = vunpack.c.l.b16 %v506
        %v2909 = vunpack.c.h.b16 %v506
        %v2910 = vunpack.c.l.b16 %v507
        %v2911 = vunpack.c.h.b16 %v507
        %v2912 = vunpack.c.l.b16 %v508
        %v2913 = vunpack.c.h.b16 %v508
        %v2914 = vunpack.c.l.b16 %v509
        %v2915 = vunpack.c.h.b16 %v509
        %v2916 = vunpack.c.l.b16 %v510
        %v2917 = vunpack.c.h.b16 %v510
        %v2918 = vunpack.c.l.b16 %v511
        %v2919 = vunpack.c.h.b16 %v511
        %v2920 = vunpack.c.l.b16 %v512
        %v2921 = vunpack.c.h.b16 %v512
        %v2922 = vunpack.c.l.b16 %v513
        %v2923 = vunpack.c.h.b16 %v513
        %v2924 = vunpack.c.l.b16 %v514
        %v2925 = vunpack.c.h.b16 %v514
        %v2926 = vunpack.c.l.b16 %v515
        %v2927 = vunpack.c.h.b16 %v515
        %v2928 = vunpack.c.l.b16 %v516
        %v2929 = vunpack.c.h.b16 %v516
        %v2930 = vunpack.c.l.b16 %v517
        %v2931 = vunpack.c.h.b16 %v517
        %v2932 = vunpack.c.l.b16 %v518
        %v2933 = vunpack.c.h.b16 %v518
        %v2934 = vunpack.c.l.b16 %v519
        %v2935 = vunpack.c.h.b16 %v519
        %v2936 = vunpack.c.l.b16 %v520
        %v2937 = vunpack.c.h.b16 %v520
        %v2938 = vunpack.c.l.b16 %v521
        %v2939 = vunpack.c.h.b16 %v521
        %v2940 = vunpack.c.l.b16 %v522
        %v2941 = vunpack.c.h.b16 %v522
        %v2942 = vunpack.c.l.b16 %v523
        %v2943 = vunpack.c.h.b16 %v523
        %v2944 = vunpack.c.l.b16 %v524
        %v2945 = vunpack.c.h.b16 %v524
        %v2946 = vunpack.c.l.b16 %v525
        %v2947 = vunpack.c.h.b16 %v525
        %v2948 = vunpack.c.l.b16 %v526
        %v2949 = vunpack.c.h.b16 %v526
        %v2950 = vunpack.c.l.b16 %v527
        %v2951 = vunpack.c.h.b16 %v527
        %v2952 = vunpack.c.l.b16 %v528
        %v2953 = vunpack.c.h.b16 %v528
        %v2954 = vunpack.c.l.b16 %v529
        %v2955 = vunpack.c.h.b16 %v529
        %v2956 = vunpack.c.l.b16 %v530
        %v2957 = vunpack.c.h.b16 %v530
        %v2958 = vunpack.c.l.b16 %v531
        %v2959 = vunpack.c.h.b16 %v531
        %v2960 = vunpack.c.l.b16 %v532
        %v2961 = vunpack.c.h.b16 %v532
        %v2962 = vunpack.c.l.b16 %v533
        %v2963 = vunpack.c.h.b16 %v533
        %v2964 = vunpack.c.l.b16 %v534
        %v2965 = vunpack.c.h.b16 %v534
        %v2966 = vunpack.c.l.b16 %v535
        %v2967 = vunpack.c.h.b16 %v535
        %v2968 = vunpack.c.l.b16 %v536
        %v2969 = vunpack.c.h.b16 %v536
        %v2970 = vunpack.c.l.b16 %v537
        %v2971 = vunpack.c.h.b16 %v537
        %v2972 = vunpack.c.l.b16 %v538
        %v2973 = vunpack.c.h.b16 %v538
        %v2974 = vunpack.c.l.b16 %v539
        %v2975 = vunpack.c.h.b16 %v539
        %v2976 = vunpack.c.l.b16 %v540
        %v2977 = vunpack.c.h.b16 %v540
        %v2978 = vunpack.c.l.b16 %v541
        %v2979 = vunpack.c.h.b16 %v541
        %v2980 = vunpack.c.l.b16 %v542
        %v2981 = vunpack.c.h.b16 %v542
        %v2982 = vunpack.c.l.b16 %v543
        %v2983 = vunpack.c.h.b16 %v543
        %v2984 = vunpack.c.l.b16 %v544
        %v2985 = vunpack.c.h.b16 %v544
        %v2986 = vunpack.c.l.b16 %v545
        %v2987 = vunpack.c.h.b16 %v545
        %v2988 = vunpack.c.l.b16 %v546
        %v2989 = vunpack.c.h.b16 %v546
        %v2990 = vunpack.c.l.b16 %v547
        %v2991 = vunpack.c.h.b16 %v547
        %v2992 = vunpack.c.l.b16 %v548
        %v2993 = vunpack.c.h.b16 %v548
        %v2994 = vunpack.c.l.b16 %v549
        %v2995 = vunpack.c.h.b16 %v549
        %v2996 = vunpack.c.l.b16 %v550
        %v2997 = vunpack.c.h.b16 %v550
        %v2998 = vunpack.c.l.b16 %v551
        %v2999 = vunpack.c.h.b16 %v551
        %v3000 = vunpack.c.l.b16 %v552
        %v3001 = vunpack.c.h.b16 %v552
        %v3002 = vunpack.c.l.b16 %v553
        %v3003 = vunpack.c.h.b16 %v553
        %v3004 = vunpack.c.l.b16 %v554
        %v3005 = vunpack.c.h.b16 %v554
        %v3006 = vunpack.c.l.b16 %v555
        %v3007 = vunpack.c.h.b16 %v555
        %v3008 = vunpack.c.l.b16 %v556
        %v3009 = vunpack.c.h.b16 %v556
        %v3010 = vunpack.c.l.b16 %v557
        %v3011 = vunpack.c.h.b16 %v557
        %v3012 = vunpack.c.l.b16 %v558
        %v3013 = vunpack.c.h.b16 %v558
        %v3014 = vunpack.c.l.b16 %v559
        %v3015 = vunpack.c.h.b16 %v559
        %v3016 = vunpack.c.l.b16 %v560
        %v3017 = vunpack.c.h.b16 %v560
        %v3018 = vunpack.c.l.b16 %v561
        %v3019 = vunpack.c.h.b16 %v561
        %v3020 = vunpack.c.l.b16 %v562
        %v3021 = vunpack.c.h.b16 %v562
        %v3022 = vunpack.c.l.b16 %v563
        %v3023 = vunpack.c.h.b16 %v563
        %v3024 = vunpack.c.l.b16 %v564
        %v3025 = vunpack.c.h.b16 %v564
        %v3026 = vunpack.c.l.b16 %v565
        %v3027 = vunpack.c.h.b16 %v565
        %v3028 = vunpack.c.l.b16 %v566
        %v3029 = vunpack.c.h.b16 %v566
        %v3030 = vunpack.c.l.b16 %v567
        %v3031 = vunpack.c.h.b16 %v567
        %v3032 = vunpack.c.l.b16 %v568
        %v3033 = vunpack.c.h.b16 %v568
        %v3034 = vunpack.c.l.b16 %v569
        %v3035 = vunpack.c.h.b16 %v569
        %v3036 = vunpack.c.l.b16 %v570
        %v3037 = vunpack.c.h.b16 %v570
        %v3038 = vunpack.c.l.b16 %v571
        %v3039 = vunpack.c.h.b16 %v571
        %v3040 = vunpack.c.l.b16 %v572
        %v3041 = vunpack.c.h.b16 %v572
        %v3042 = vunpack.c.l.b16 %v573
        %v3043 = vunpack.c.h.b16 %v573
        %v3044 = vunpack.c.l.b16 %v574
        %v3045 = vunpack.c.h.b16 %v574
        %v3046 = vunpack.c.l.b16 %v575
        %v3047 = vunpack.c.h.b16 %v575
        %v3048 = vunpack.c.l.b16 %v576
        %v3049 = vunpack.c.h.b16 %v576
        %v3050 = vunpack.c.l.b16 %v577
        %v3051 = vunpack.c.h.b16 %v577
        %v3052 = vunpack.c.l.b16 %v578
        %v3053 = vunpack.c.h.b16 %v578
        %v3054 = vunpack.c.l.b16 %v579
        %v3055 = vunpack.c.h.b16 %v579
        %v3056 = vunpack.c.l.b16 %v580
        %v3057 = vunpack.c.h.b16 %v580
        %v3058 = vunpack.c.l.b16 %v581
        %v3059 = vunpack.c.h.b16 %v581
        %v3060 = vunpack.c.l.b16 %v582
        %v3061 = vunpack.c.h.b16 %v582
        %v3062 = vunpack.c.l.b16 %v583
        %v3063 = vunpack.c.h.b16 %v583
        %v3064 = vunpack.c.l.b16 %v584
        %v3065 = vunpack.c.h.b16 %v584
        %v3066 = vunpack.c.l.b16 %v585
        %v3067 = vunpack.c.h.b16 %v585
        %v3068 = vunpack.c.l.b16 %v586
        %v3069 = vunpack.c.h.b16 %v586
        %v3070 = vunpack.c.l.b16 %v587
        %v3071 = vunpack.c.h.b16 %v587
        %v3072 = vunpack.c.l.b16 %v588
        %v3073 = vunpack.c.h.b16 %v588
        %v3074 = vunpack.c.l.b16 %v589
        %v3075 = vunpack.c.h.b16 %v589
        %v3076 = vunpack.c.l.b16 %v590
        %v3077 = vunpack.c.h.b16 %v590
        %v3078 = vunpack.c.l.b16 %v591
        %v3079 = vunpack.c.h.b16 %v591
        %v3080 = vunpack.c.l.b16 %v592
        %v3081 = vunpack.c.h.b16 %v592
        %v3082 = vunpack.c.l.b16 %v593
        %v3083 = vunpack.c.h.b16 %v593
        %v3084 = vunpack.c.l.b16 %v594
        %v3085 = vunpack.c.h.b16 %v594
        %v3086 = vunpack.c.l.b16 %v595
        %v3087 = vunpack.c.h.b16 %v595
        %v3088 = vunpack.c.l.b16 %v596
        %v3089 = vunpack.c.h.b16 %v596
        %v3090 = vunpack.c.l.b16 %v597
        %v3091 = vunpack.c.h.b16 %v597
        %v3092 = vunpack.c.l.b16 %v598
        %v3093 = vunpack.c.h.b16 %v598
        %v3094 = vunpack.c.l.b16 %v599
        %v3095 = vunpack.c.h.b16 %v599
        %v3096 = vunpack.c.l.b16 %v600
        %v3097 = vunpack.c.h.b16 %v600
        %v3098 = vunpack.c.l.b16 %v601
        %v3099 = vunpack.c.h.b16 %v601
        %v3100 = vunpack.c.l.b16 %v602
        %v3101 = vunpack.c.h.b16 %v602
        %v3102 = vunpack.c.l.b16 %v603
        %v3103 = vunpack.c.h.b16 %v603
        %v3104 = vunpack.c.l.b16 %v604
        %v3105 = vunpack.c.h.b16 %v604
        %v3106 = vunpack.c.l.b16 %v605
        %v3107 = vunpack.c.h.b16 %v605
        %v3108 = vunpack.c.l.b16 %v606
        %v3109 = vunpack.c.h.b16 %v606
        %v3110 = vunpack.c.l.b16 %v607
        %v3111 = vunpack.c.h.b16 %v607
        %v3112 = vunpack.c.l.b16 %v608
        %v3113 = vunpack.c.h.b16 %v608
        %v3114 = vunpack.c.l.b16 %v609
        %v3115 = vunpack.c.h.b16 %v609
        %v3116 = vunpack.c.l.b16 %v610
        %v3117 = vunpack.c.h.b16 %v610
        %v3118 = vunpack.c.l.b16 %v611
        %v3119 = vunpack.c.h.b16 %v611
        %v3120 = vunpack.c.l.b16 %v612
        %v3121 = vunpack.c.h.b16 %v612
        %v3122 = vunpack.c.l.b16 %v613
        %v3123 = vunpack.c.h.b16 %v613
        %v3124 = vunpack.c.l.b16 %v614
        %v3125 = vunpack.c.h.b16 %v614
        %v3126 = vunpack.c.l.b16 %v615
        %v3127 = vunpack.c.h.b16 %v615
        %v3128 = vunpack.c.l.b16 %v616
        %v3129 = vunpack.c.h.b16 %v616
        %v3130 = vunpack.c.l.b16 %v617
        %v3131 = vunpack.c.h.b16 %v617
        %v3132 = vunpack.c.l.b16 %v618
        %v3133 = vunpack.c.h.b16 %v618
        %v3134 = vunpack.c.l.b16 %v619
        %v3135 = vunpack.c.h.b16 %v619
        %v3136 = vunpack.c.l.b16 %v620
        %v3137 = vunpack.c.h.b16 %v620
        %v3138 = vunpack.c.l.b16 %v621
        %v3139 = vunpack.c.h.b16 %v621
        %v3140 = vunpack.c.l.b16 %v622
        %v3141 = vunpack.c.h.b16 %v622
        %v3142 = vunpack.c.l.b16 %v623
        %v3143 = vunpack.c.h.b16 %v623
        %v3144 = vunpack.c.l.b16 %v624
        %v3145 = vunpack.c.h.b16 %v624
        %v3146 = vunpack.c.l.b16 %v625
        %v3147 = vunpack.c.h.b16 %v625
        %v3148 = vunpack.c.l.b16 %v626
        %v3149 = vunpack.c.h.b16 %v626
        %v3150 = vunpack.c.l.b16 %v627
        %v3151 = vunpack.c.h.b16 %v627
        %v3152 = vunpack.c.l.b16 %v628
        %v3153 = vunpack.c.h.b16 %v628
        %v3154 = vunpack.c.l.b16 %v629
        %v3155 = vunpack.c.h.b16 %v629
        %v3156 = vunpack.c.l.b16 %v630
        %v3157 = vunpack.c.h.b16 %v630
        %v3158 = vunpack.c.l.b16 %v631
        %v3159 = vunpack.c.h.b16 %v631
        %v3160 = vunpack.c.l.b16 %v632
        %v3161 = vunpack.c.h.b16 %v632
        %v3162 = vunpack.c.l.b16 %v633
        %v3163 = vunpack.c.h.b16 %v633
        %v3164 = vunpack.c.l.b16 %v634
        %v3165 = vunpack.c.h.b16 %v634
        %v3166 = vunpack.c.l.b16 %v635
        %v3167 = vunpack.c.h.b16 %v635
        %v3168 = vunpack.c.l.b16 %v636
        %v3169 = vunpack.c.h.b16 %v636
        %v3170 = vunpack.c.l.b16 %v637
        %v3171 = vunpack.c.h.b16 %v637
        %v3172 = vunpack.c.l.b16 %v638
        %v3173 = vunpack.c.h.b16 %v638
        %v3174 = vunpack.c.l.b16 %v639
        %v3175 = vunpack.c.h.b16 %v639
        %v3176 = vunpack.c.l.b16 %v640
        %v3177 = vunpack.c.h.b16 %v640
        %v3178 = vunpack.c.l.b16 %v641
        %v3179 = vunpack.c.h.b16 %v641
        %v3180 = vunpack.c.l.b16 %v642
        %v3181 = vunpack.c.h.b16 %v642
        %v3182 = vunpack.c.l.b16 %v643
        %v3183 = vunpack.c.h.b16 %v643
        %v3184 = vunpack.c.l.b16 %v644
        %v3185 = vunpack.c.h.b16 %v644
        %v3186 = vunpack.c.l.b16 %v645
        %v3187 = vunpack.c.h.b16 %v645
        %v3188 = vunpack.c.l.b16 %v646
        %v3189 = vunpack.c.h.b16 %v646
        %v3190 = vunpack.c.l.b16 %v647
        %v3191 = vunpack.c.h.b16 %v647
        %v3192 = vunpack.c.l.b16 %v648
        %v3193 = vunpack.c.h.b16 %v648
        %v3194 = vunpack.c.l.b16 %v649
        %v3195 = vunpack.c.h.b16 %v649
        %v3196 = vunpack.c.l.b16 %v650
        %v3197 = vunpack.c.h.b16 %v650
        %v3198 = vunpack.c.l.b16 %v651
        %v3199 = vunpack.c.h.b16 %v651
        %v3200 = vunpack.c.l.b16 %v652
        %v3201 = vunpack.c.h.b16 %v652
        %v3202 = vunpack.c.l.b16 %v653
        %v3203 = vunpack.c.h.b16 %v653
        %v3204 = vunpack.c.l.b16 %v654
        %v3205 = vunpack.c.h.b16 %v654
        %v3206 = vunpack.c.l.b16 %v655
        %v3207 = vunpack.c.h.b16 %v655
        %v3208 = vunpack.c.l.b16 %v656
        %v3209 = vunpack.c.h.b16 %v656
        %v3210 = vunpack.c.l.b16 %v657
        %v3211 = vunpack.c.h.b16 %v657
        %v3212 = vunpack.c.l.b16 %v658
        %v3213 = vunpack.c.h.b16 %v658
        %v3214 = vunpack.c.l.b16 %v659
        %v3215 = vunpack.c.h.b16 %v659
        %v3216 = vunpack.c.l.b16 %v660
        %v3217 = vunpack.c.h.b16 %v660
        %v3218 = vunpack.c.l.b16 %v661
        %v3219 = vunpack.c.h.b16 %v661
        %v3220 = vunpack.c.l.b16 %v662
        %v3221 = vunpack.c.h.b16 %v662
        %v3222 = vunpack.c.l.b16 %v663
        %v3223 = vunpack.c.h.b16 %v663
        %v3224 = vunpack.c.l.b16 %v664
        %v3225 = vunpack.c.h.b16 %v664
        %v3226 = vunpack.c.l.b16 %v665
        %v3227 = vunpack.c.h.b16 %v665
        %v3228 = vunpack.c.l.b16 %v666
        %v3229 = vunpack.c.h.b16 %v666
        %v3230 = vunpack.c.l.b16 %v667
        %v3231 = vunpack.c.h.b16 %v667
        %v3232 = vunpack.c.l.b16 %v668
        %v3233 = vunpack.c.h.b16 %v668
        %v3234 = vunpack.c.l.b16 %v669
        %v3235 = vunpack.c.h.b16 %v669
        %v3236 = vunpack.c.l.b16 %v670
        %v3237 = vunpack.c.h.b16 %v670
        %v3238 = vunpack.c.l.b16 %v671
        %v3239 = vunpack.c.h.b16 %v671
        %v3240 = vunpack.c.l.b16 %v672
        %v3241 = vunpack.c.h.b16 %v672
        %v3242 = vunpack.c.l.b16 %v673
        %v3243 = vunpack.c.h.b16 %v673
        %v3244 = vunpack.c.l.b16 %v674
        %v3245 = vunpack.c.h.b16 %v674
        %v3246 = vunpack.c.l.b16 %v675
        %v3247 = vunpack.c.h.b16 %v675
        %v3248 = vunpack.c.l.b16 %v676
        %v3249 = vunpack.c.h.b16 %v676
        %v3250 = vunpack.c.l.b16 %v677
        %v3251 = vunpack.c.h.b16 %v677
        %v3252 = vunpack.c.l.b16 %v678
        %v3253 = vunpack.c.h.b16 %v678
        %v3254 = vunpack.c.l.b16 %v679
        %v3255 = vunpack.c.h.b16 %v679
        %v3256 = vunpack.c.l.b16 %v680
        %v3257 = vunpack.c.h.b16 %v680
        %v3258 = vunpack.c.l.b16 %v681
        %v3259 = vunpack.c.h.b16 %v681
        %v3260 = vunpack.c.l.b16 %v682
        %v3261 = vunpack.c.h.b16 %v682
        %v3262 = vunpack.c.l.b16 %v683
        %v3263 = vunpack.c.h.b16 %v683
        %v3264 = vunpack.c.l.b16 %v684
        %v3265 = vunpack.c.h.b16 %v684
        %v3266 = vunpack.c.l.b16 %v685
        %v3267 = vunpack.c.h.b16 %v685
        %v3268 = vunpack.c.l.b16 %v686
        %v3269 = vunpack.c.h.b16 %v686
        %v3270 = vunpack.c.l.b16 %v687
        %v3271 = vunpack.c.h.b16 %v687
        %v3272 = vunpack.c.l.b16 %v688
        %v3273 = vunpack.c.h.b16 %v688
        %v3274 = vunpack.c.l.b16 %v689
        %v3275 = vunpack.c.h.b16 %v689
        %v3276 = vunpack.c.l.b16 %v690
        %v3277 = vunpack.c.h.b16 %v690
        %v3278 = vunpack.c.l.b16 %v691
        %v3279 = vunpack.c.h.b16 %v691
        %v3280 = vunpack.c.l.b16 %v692
        %v3281 = vunpack.c.h.b16 %v692
        %v3282 = vunpack.c.l.b16 %v693
        %v3283 = vunpack.c.h.b16 %v693
        %v3284 = vunpack.c.l.b16 %v694
        %v3285 = vunpack.c.h.b16 %v694
        %v3286 = vunpack.c.l.b16 %v695
        %v3287 = vunpack.c.h.b16 %v695
        %v3288 = vunpack.c.l.b16 %v696
        %v3289 = vunpack.c.h.b16 %v696
        %v3290 = vunpack.c.l.b16 %v697
        %v3291 = vunpack.c.h.b16 %v697
        %v3292 = vunpack.c.l.b16 %v698
        %v3293 = vunpack.c.h.b16 %v698
        %v3294 = vunpack.c.l.b16 %v699
        %v3295 = vunpack.c.h.b16 %v699
        %v3296 = vunpack.c.l.b16 %v700
        %v3297 = vunpack.c.h.b16 %v700
        %v3298 = vunpack.c.l.b16 %v701
        %v3299 = vunpack.c.h.b16 %v701
        %v3300 = vunpack.c.l.b16 %v702
        %v3301 = vunpack.c.h.b16 %v702
        %v3302 = vunpack.c.l.b16 %v703
        %v3303 = vunpack.c.h.b16 %v703
        %v3304 = vunpack.c.l.b16 %v704
        %v3305 = vunpack.c.h.b16 %v704
        %v3306 = vunpack.c.l.b16 %v705
        %v3307 = vunpack.c.h.b16 %v705
        %v3308 = vunpack.c.l.b16 %v706
        %v3309 = vunpack.c.h.b16 %v706
        %v3310 = vunpack.c.l.b16 %v707
        %v3311 = vunpack.c.h.b16 %v707
        %v3312 = vunpack.c.l.b16 %v708
        %v3313 = vunpack.c.h.b16 %v708
        %v3314 = vunpack.c.l.b16 %v709
        %v3315 = vunpack.c.h.b16 %v709
        %v3316 = vunpack.c.l.b16 %v710
        %v3317 = vunpack.c.h.b16 %v710
        %v3318 = vunpack.c.l.b16 %v711
        %v3319 = vunpack.c.h.b16 %v711
        %v3320 = vunpack.c.l.b16 %v712
        %v3321 = vunpack.c.h.b16 %v712
        %v3322 = vunpack.c.l.b16 %v713
        %v3323 = vunpack.c.h.b16 %v713
        %v3324 = vunpack.c.l.b16 %v714
        %v3325 = vunpack.c.h.b16 %v714
        %v3326 = vunpack.c.l.b16 %v715
        %v3327 = vunpack.c.h.b16 %v715
        %v3328 = vunpack.c.l.b16 %v716
        %v3329 = vunpack.c.h.b16 %v716
        %v3330 = vunpack.c.l.b16 %v717
        %v3331 = vunpack.c.h.b16 %v717
        %v3332 = vunpack.c.l.b16 %v718
        %v3333 = vunpack.c.h.b16 %v718
        %v3334 = vunpack.c.l.b16 %v719
        %v3335 = vunpack.c.h.b16 %v719
        %v3336 = vunpack.c.l.b16 %v720
        %v3337 = vunpack.c.h.b16 %v720
        %v3338 = vunpack.c.l.b16 %v721
        %v3339 = vunpack.c.h.b16 %v721
        %v3340 = vunpack.c.l.b16 %v722
        %v3341 = vunpack.c.h.b16 %v722
        %v3342 = vunpack.c.l.b16 %v723
        %v3343 = vunpack.c.h.b16 %v723
        %v3344 = vunpack.c.l.b16 %v724
        %v3345 = vunpack.c.h.b16 %v724
        %v3346 = vunpack.c.l.b16 %v725
        %v3347 = vunpack.c.h.b16 %v725
        %v3348 = vunpack.c.l.b16 %v726
        %v3349 = vunpack.c.h.b16 %v726
        %v3350 = vunpack.c.l.b16 %v727
        %v3351 = vunpack.c.h.b16 %v727
        %v3352 = vunpack.c.l.b16 %v728
        %v3353 = vunpack.c.h.b16 %v728
        %v3354 = vunpack.c.l.b16 %v729
        %v3355 = vunpack.c.h.b16 %v729
        %v3356 = vunpack.c.l.b16 %v730
        %v3357 = vunpack.c.h.b16 %v730
        %v3358 = vunpack.c.l.b16 %v731
        %v3359 = vunpack.c.h.b16 %v731
        %v3360 = vunpack.c.l.b16 %v732
        %v3361 = vunpack.c.h.b16 %v732
        %v3362 = vunpack.c.l.b16 %v733
        %v3363 = vunpack.c.h.b16 %v733
        %v3364 = vunpack.c.l.b16 %v734
        %v3365 = vunpack.c.h.b16 %v734
        %v3366 = vunpack.c.l.b16 %v735
        %v3367 = vunpack.c.h.b16 %v735
        %v3368 = vunpack.c.l.b16 %v736
        %v3369 = vunpack.c.h.b16 %v736
        %v3370 = vunpack.c.l.b16 %v737
        %v3371 = vunpack.c.h.b16 %v737
        %v3372 = vunpack.c.l.b16 %v738
        %v3373 = vunpack.c.h.b16 %v738
        %v3374 = vunpack.c.l.b16 %v739
        %v3375 = vunpack.c.h.b16 %v739
        %v3376 = vunpack.c.l.b16 %v740
        %v3377 = vunpack.c.h.b16 %v740
        %v3378 = vunpack.c.l.b16 %v741
        %v3379 = vunpack.c.h.b16 %v741
        %v3380 = vunpack.c.l.b16 %v742
        %v3381 = vunpack.c.h.b16 %v742
        %v3382 = vunpack.c.l.b16 %v743
        %v3383 = vunpack.c.h.b16 %v743
        %v3384 = vunpack.c.l.b16 %v744
        %v3385 = vunpack.c.h.b16 %v744
        %v3386 = vunpack.c.l.b16 %v745
        %v3387 = vunpack.c.h.b16 %v745
        %v3388 = vunpack.c.l.b16 %v746
        %v3389 = vunpack.c.h.b16 %v746
        %v3390 = vunpack.c.l.b16 %v747
        %v3391 = vunpack.c.h.b16 %v747
        %v3392 = vunpack.c.l.b16 %v748
        %v3393 = vunpack.c.h.b16 %v748
        %v3394 = vunpack.c.l.b16 %v749
        %v3395 = vunpack.c.h.b16 %v749
        %v3396 = vunpack.c.l.b16 %v750
        %v3397 = vunpack.c.h.b16 %v750
        %v3398 = vunpack.c.l.b16 %v751
        %v3399 = vunpack.c.h.b16 %v751
        %v3400 = vunpack.c.l.b16 %v752
        %v3401 = vunpack.c.h.b16 %v752
        %v3402 = vunpack.c.l.b16 %v753
        %v3403 = vunpack.c.h.b16 %v753
        %v3404 = vunpack.c.l.b16 %v754
        %v3405 = vunpack.c.h.b16 %v754
        %v3406 = vunpack.c.l.b16 %v755
        %v3407 = vunpack.c.h.b16 %v755
        %v3408 = vunpack.c.l.b16 %v756
        %v3409 = vunpack.c.h.b16 %v756
        %v3410 = vunpack.c.l.b16 %v757
        %v3411 = vunpack.c.h.b16 %v757
        %v3412 = vunpack.c.l.b16 %v758
        %v3413 = vunpack.c.h.b16 %v758
        %v3414 = vunpack.c.l.b16 %v759
        %v3415 = vunpack.c.h.b16 %v759
        %v3416 = vunpack.c.l.b16 %v760
        %v3417 = vunpack.c.h.b16 %v760
        %v3418 = vunpack.c.l.b16 %v761
        %v3419 = vunpack.c.h.b16 %v761
        %v3420 = vunpack.c.l.b16 %v762
        %v3421 = vunpack.c.h.b16 %v762
        %v3422 = vunpack.c.l.b16 %v763
        %v3423 = vunpack.c.h.b16 %v763
        %v3424 = vunpack.c.l.b16 %v764
        %v3425 = vunpack.c.h.b16 %v764
        %v3426 = vunpack.c.l.b16 %v765
        %v3427 = vunpack.c.h.b16 %v765
        %v3428 = vunpack.c.l.b16 %v766
        %v3429 = vunpack.c.h.b16 %v766
        %v3430 = vunpack.c.l.b16 %v767
        %v3431 = vunpack.c.h.b16 %v767
        %v3432 = vunpack.c.l.b16 %v768
        %v3433 = vunpack.c.h.b16 %v768
        %v3434 = vunpack.c.l.b16 %v769
        %v3435 = vunpack.c.h.b16 %v769
        %v3436 = vunpack.c.l.b16 %v770
        %v3437 = vunpack.c.h.b16 %v770
        %v3438 = vunpack.c.l.b16 %v771
        %v3439 = vunpack.c.h.b16 %v771
        %v3440 = vunpack.c.l.b16 %v772
        %v3441 = vunpack.c.h.b16 %v772
        %v3442 = vunpack.c.l.b16 %v773
        %v3443 = vunpack.c.h.b16 %v773
        %v3444 = vunpack.c.l.b16 %v774
        %v3445 = vunpack.c.h.b16 %v774
        %v3446 = vunpack.c.l.b16 %v775
        %v3447 = vunpack.c.h.b16 %v775
        %v3448 = vunpack.c.l.b16 %v776
        %v3449 = vunpack.c.h.b16 %v776
        %v3450 = vunpack.c.l.b16 %v777
        %v3451 = vunpack.c.h.b16 %v777
        %v3452 = vunpack.c.l.b16 %v778
        %v3453 = vunpack.c.h.b16 %v778
        %v3454 = vunpack.c.l.b16 %v779
        %v3455 = vunpack.c.h.b16 %v779
        %v3456 = vunpack.c.l.b16 %v780
        %v3457 = vunpack.c.h.b16 %v780
        %v3458 = vunpack.c.l.b16 %v781
        %v3459 = vunpack.c.h.b16 %v781
        %v3460 = vunpack.c.l.b16 %v782
        %v3461 = vunpack.c.h.b16 %v782
        %v3462 = vunpack.c.l.b16 %v783
        %v3463 = vunpack.c.h.b16 %v783
        %v3464 = vunpack.c.l.b16 %v784
        %v3465 = vunpack.c.h.b16 %v784
        %v3466 = vunpack.c.l.b16 %v785
        %v3467 = vunpack.c.h.b16 %v785
        %v3468 = vunpack.c.l.b16 %v786
        %v3469 = vunpack.c.h.b16 %v786
        %v3470 = vunpack.c.l.b16 %v787
        %v3471 = vunpack.c.h.b16 %v787
        %v3472 = vunpack.c.l.b16 %v788
        %v3473 = vunpack.c.h.b16 %v788
        %v3474 = vunpack.c.l.b16 %v789
        %v3475 = vunpack.c.h.b16 %v789
        %v3476 = vunpack.c.l.b16 %v790
        %v3477 = vunpack.c.h.b16 %v790
        %v3478 = vunpack.c.l.b16 %v791
        %v3479 = vunpack.c.h.b16 %v791
        %v3480 = vunpack.c.l.b16 %v792
        %v3481 = vunpack.c.h.b16 %v792
        %v3482 = vunpack.c.l.b16 %v793
        %v3483 = vunpack.c.h.b16 %v793
        %v3484 = vunpack.c.l.b16 %v794
        %v3485 = vunpack.c.h.b16 %v794
        %v3486 = vunpack.c.l.b16 %v795
        %v3487 = vunpack.c.h.b16 %v795
        %v3488 = vunpack.c.l.b16 %v796
        %v3489 = vunpack.c.h.b16 %v796
        %v3490 = vunpack.c.l.b16 %v797
        %v3491 = vunpack.c.h.b16 %v797
        %v3492 = vunpack.c.l.b16 %v798
        %v3493 = vunpack.c.h.b16 %v798
        %v3494 = vunpack.c.l.b16 %v799
        %v3495 = vunpack.c.h.b16 %v799
        %v3496 = vunpack.c.l.b16 %v800
        %v3497 = vunpack.c.h.b16 %v800
        %v3498 = vunpack.c.l.b16 %v801
        %v3499 = vunpack.c.h.b16 %v801
        %v3500 = vunpack.c.l.b16 %v802
        %v3501 = vunpack.c.h.b16 %v802
        %v3502 = vunpack.c.l.b16 %v803
        %v3503 = vunpack.c.h.b16 %v803
        %v3504 = vunpack.c.l.b16 %v804
        %v3505 = vunpack.c.h.b16 %v804
        %v3506 = vunpack.c.l.b16 %v805
        %v3507 = vunpack.c.h.b16 %v805
        %v3508 = vunpack.c.l.b16 %v806
        %v3509 = vunpack.c.h.b16 %v806
        %v3510 = vunpack.c.l.b16 %v807
        %v3511 = vunpack.c.h.b16 %v807
        %v3512 = vunpack.c.l.b16 %v808
        %v3513 = vunpack.c.h.b16 %v808
        %v3514 = vunpack.c.l.b16 %v809
        %v3515 = vunpack.c.h.b16 %v809
        %v3516 = vunpack.c.l.b16 %v810
        %v3517 = vunpack.c.h.b16 %v810
        %v3518 = vunpack.c.l.b16 %v811
        %v3519 = vunpack.c.h.b16 %v811
        %v3520 = vunpack.c.l.b16 %v812
        %v3521 = vunpack.c.h.b16 %v812
        %v3522 = vunpack.c.l.b16 %v813
        %v3523 = vunpack.c.h.b16 %v813
        %v3524 = vunpack.c.l.b16 %v814
        %v3525 = vunpack.c.h.b16 %v814
        %v3526 = vunpack.c.l.b16 %v815
        %v3527 = vunpack.c.h.b16 %v815
        %v3528 = vunpack.c.l.b16 %v816
        %v3529 = vunpack.c.h.b16 %v816
        %v3530 = vunpack.c.l.b16 %v817
        %v3531 = vunpack.c.h.b16 %v817
        %v3532 = vunpack.c.l.b16 %v818
        %v3533 = vunpack.c.h.b16 %v818
        %v3534 = vunpack.c.l.b16 %v819
        %v3535 = vunpack.c.h.b16 %v819
        %v3536 = vunpack.c.l.b16 %v820
        %v3537 = vunpack.c.h.b16 %v820
        %v3538 = vunpack.c.l.b16 %v821
        %v3539 = vunpack.c.h.b16 %v821
        %v3540 = vunpack.c.l.b16 %v822
        %v3541 = vunpack.c.h.b16 %v822
        %v3542 = vunpack.c.l.b16 %v823
        %v3543 = vunpack.c.h.b16 %v823
        %v3544 = vunpack.c.l.b16 %v824
        %v3545 = vunpack.c.h.b16 %v824
        %v3546 = vunpack.c.l.b16 %v825
        %v3547 = vunpack.c.h.b16 %v825
        %v3548 = vunpack.c.l.b16 %v826
        %v3549 = vunpack.c.h.b16 %v826
        %v3550 = vunpack.c.l.b16 %v827
        %v3551 = vunpack.c.h.b16 %v827
        %v3552 = vunpack.c.l.b16 %v828
        %v3553 = vunpack.c.h.b16 %v828
        %v3554 = vunpack.c.l.b16 %v829
        %v3555 = vunpack.c.h.b16 %v829
        %v3556 = vunpack.c.l.b16 %v830
        %v3557 = vunpack.c.h.b16 %v830
        %v3558 = vunpack.c.l.b16 %v831
        %v3559 = vunpack.c.h.b16 %v831
        %v3560 = vunpack.c.l.b16 %v832
        %v3561 = vunpack.c.h.b16 %v832
        %v3562 = vunpack.c.l.b16 %v833
        %v3563 = vunpack.c.h.b16 %v833
        %v3564 = vunpack.c.l.b16 %v834
        %v3565 = vunpack.c.h.b16 %v834
        %v3566 = vunpack.c.l.b16 %v835
        %v3567 = vunpack.c.h.b16 %v835
        %v3568 = vunpack.c.l.b16 %v836
        %v3569 = vunpack.c.h.b16 %v836
        %v3570 = vunpack.c.l.b16 %v837
        %v3571 = vunpack.c.h.b16 %v837
        %v3572 = vunpack.c.l.b16 %v838
        %v3573 = vunpack.c.h.b16 %v838
        %v3574 = vunpack.c.l.b16 %v839
        %v3575 = vunpack.c.h.b16 %v839
        %v3576 = vunpack.c.l.b16 %v840
        %v3577 = vunpack.c.h.b16 %v840
        %v3578 = vunpack.c.l.b16 %v841
        %v3579 = vunpack.c.h.b16 %v841
        %v3580 = vunpack.c.l.b16 %v842
        %v3581 = vunpack.c.h.b16 %v842
        %v3582 = vunpack.c.l.b16 %v843
        %v3583 = vunpack.c.h.b16 %v843
        %v3584 = vunpack.c.l.b16 %v844
        %v3585 = vunpack.c.h.b16 %v844
        %v3586 = vunpack.c.l.b16 %v845
        %v3587 = vunpack.c.h.b16 %v845
        %v3588 = vunpack.c.l.b16 %v846
        %v3589 = vunpack.c.h.b16 %v846
        %v3590 = vunpack.c.l.b16 %v847
        %v3591 = vunpack.c.h.b16 %v847
        %v3592 = vunpack.c.l.b16 %v848
        %v3593 = vunpack.c.h.b16 %v848
        %v3594 = vunpack.c.l.b16 %v849
        %v3595 = vunpack.c.h.b16 %v849
        %v3596 = vunpack.c.l.b16 %v850
        %v3597 = vunpack.c.h.b16 %v850
        %v3598 = vunpack.c.l.b16 %v851
        %v3599 = vunpack.c.h.b16 %v851
        %v3600 = vunpack.c.l.b16 %v852
        %v3601 = vunpack.c.h.b16 %v852
        %v3602 = vunpack.c.l.b16 %v853
        %v3603 = vunpack.c.h.b16 %v853
        %v3604 = vunpack.c.l.b16 %v854
        %v3605 = vunpack.c.h.b16 %v854
        %v3606 = vunpack.c.l.b16 %v855
        %v3607 = vunpack.c.h.b16 %v855
        %v3608 = vunpack.c.l.b16 %v856
        %v3609 = vunpack.c.h.b16 %v856
        %v3610 = vunpack.c.l.b16 %v857
        %v3611 = vunpack.c.h.b16 %v857
        %v3612 = vunpack.c.l.b16 %v858
        %v3613 = vunpack.c.h.b16 %v858
        %v3614 = vunpack.c.l.b16 %v859
        %v3615 = vunpack.c.h.b16 %v859
        %v3616 = vunpack.c.l.b16 %v860
        %v3617 = vunpack.c.h.b16 %v860
        %v3618 = vunpack.c.l.b16 %v861
        %v3619 = vunpack.c.h.b16 %v861
        %v3620 = vunpack.c.l.b16 %v862
        %v3621 = vunpack.c.h.b16 %v862
        %v3622 = vunpack.c.l.b16 %v863
        %v3623 = vunpack.c.h.b16 %v863
        %v3624 = vunpack.c.l.b16 %v864
        %v3625 = vunpack.c.h.b16 %v864
        %v3626 = vunpack.c.l.b16 %v865
        %v3627 = vunpack.c.h.b16 %v865
        %v3628 = vunpack.c.l.b16 %v866
        %v3629 = vunpack.c.h.b16 %v866
        %v3630 = vunpack.c.l.b16 %v867
        %v3631 = vunpack.c.h.b16 %v867
        %v3632 = vunpack.c.l.b16 %v868
        %v3633 = vunpack.c.h.b16 %v868
        %v3634 = vunpack.c.l.b16 %v869
        %v3635 = vunpack.c.h.b16 %v869
        %v3636 = vunpack.c.l.b16 %v870
        %v3637 = vunpack.c.h.b16 %v870
        %v3638 = vunpack.c.l.b16 %v871
        %v3639 = vunpack.c.h.b16 %v871
        %v3640 = vunpack.c.l.b16 %v872
        %v3641 = vunpack.c.h.b16 %v872
        %v3642 = vunpack.c.l.b16 %v873
        %v3643 = vunpack.c.h.b16 %v873
        %v3644 = vunpack.c.l.b16 %v874
        %v3645 = vunpack.c.h.b16 %v874
        %v3646 = vunpack.c.l.b16 %v875
        %v3647 = vunpack.c.h.b16 %v875
        %v3648 = vunpack.c.l.b16 %v876
        %v3649 = vunpack.c.h.b16 %v876
        %v3650 = vunpack.c.l.b16 %v877
        %v3651 = vunpack.c.h.b16 %v877
        %v3652 = vunpack.c.l.b16 %v878
        %v3653 = vunpack.c.h.b16 %v878
        %v3654 = vunpack.c.l.b16 %v879
        %v3655 = vunpack.c.h.b16 %v879
        %v3656 = vunpack.c.l.b16 %v880
        %v3657 = vunpack.c.h.b16 %v880
        %v3658 = vunpack.c.l.b16 %v881
        %v3659 = vunpack.c.h.b16 %v881
        %v3660 = vunpack.c.l.b16 %v882
        %v3661 = vunpack.c.h.b16 %v882
        %v3662 = vunpack.c.l.b16 %v883
        %v3663 = vunpack.c.h.b16 %v883
        %v3664 = vunpack.c.l.b16 %v884
        %v3665 = vunpack.c.h.b16 %v884
        %v3666 = vunpack.c.l.b16 %v885
        %v3667 = vunpack.c.h.b16 %v885
        %v3668 = vunpack.c.l.b16 %v886
        %v3669 = vunpack.c.h.b16 %v886
        %v3670 = vunpack.c.l.b16 %v887
        %v3671 = vunpack.c.h.b16 %v887
        %v3672 = vunpack.c.l.b16 %v888
        %v3673 = vunpack.c.h.b16 %v888
        %v3674 = vunpack.c.l.b16 %v889
        %v3675 = vunpack.c.h.b16 %v889
        %v3676 = vunpack.c.l.b16 %v890
        %v3677 = vunpack.c.h.b16 %v890
        %v3678 = vunpack.c.l.b16 %v891
        %v3679 = vunpack.c.h.b16 %v891
        %v3680 = vunpack.c.l.b16 %v892
        %v3681 = vunpack.c.h.b16 %v892
        %v3682 = vunpack.c.l.b16 %v893
        %v3683 = vunpack.c.h.b16 %v893
        %v3684 = vunpack.c.l.b16 %v894
        %v3685 = vunpack.c.h.b16 %v894
        %v3686 = vunpack.c.l.b16 %v895
        %v3687 = vunpack.c.h.b16 %v895
        %v3688 = vunpack.c.l.b16 %v896
        %v3689 = vunpack.c.h.b16 %v896
        %v3690 = vunpack.c.l.b16 %v897
        %v3691 = vunpack.c.h.b16 %v897
        %v3692 = vunpack.c.l.b16 %v898
        %v3693 = vunpack.c.h.b16 %v898
        %v3694 = vunpack.c.l.b16 %v899
        %v3695 = vunpack.c.h.b16 %v899
        %v3696 = vunpack.c.l.b16 %v900
        %v3697 = vunpack.c.h.b16 %v900
        %v3698 = vunpack.c.l.b16 %v901
        %v3699 = vunpack.c.h.b16 %v901
        %v3700 = vunpack.c.l.b16 %v902
        %v3701 = vunpack.c.h.b16 %v902
        %v3702 = vunpack.c.l.b16 %v903
        %v3703 = vunpack.c.h.b16 %v903
        %v3704 = vunpack.c.l.b16 %v904
        %v3705 = vunpack.c.h.b16 %v904
        %v3706 = vunpack.c.l.b16 %v905
        %v3707 = vunpack.c.h.b16 %v905
        %v3708 = vunpack.c.l.b16 %v906
        %v3709 = vunpack.c.h.b16 %v906
        %v3710 = vunpack.c.l.b16 %v907
        %v3711 = vunpack.c.h.b16 %v907
        %v3712 = vunpack.c.l.b16 %v908
        %v3713 = vunpack.c.h.b16 %v908
        %v3714 = vunpack.c.l.b16 %v909
        %v3715 = vunpack.c.h.b16 %v909
        %v3716 = vunpack.c.l.b16 %v910
        %v3717 = vunpack.c.h.b16 %v910
        %v3718 = vunpack.c.l.b16 %v911
        %v3719 = vunpack.c.h.b16 %v911
        %v3720 = vunpack.c.l.b16 %v912
        %v3721 = vunpack.c.h.b16 %v912
        %v3722 = vunpack.c.l.b16 %v913
        %v3723 = vunpack.c.h.b16 %v913
        %v3724 = vunpack.c.l.b16 %v914
        %v3725 = vunpack.c.h.b16 %v914
        %v3726 = vunpack.c.l.b16 %v915
        %v3727 = vunpack.c.h.b16 %v915
        %v3728 = vunpack.c.l.b16 %v916
        %v3729 = vunpack.c.h.b16 %v916
        %v3730 = vunpack.c.l.b16 %v917
        %v3731 = vunpack.c.h.b16 %v917
        %v3732 = vunpack.c.l.b16 %v918
        %v3733 = vunpack.c.h.b16 %v918
        %v3734 = vunpack.c.l.b16 %v919
        %v3735 = vunpack.c.h.b16 %v919
        %v3736 = vunpack.c.l.b16 %v920
        %v3737 = vunpack.c.h.b16 %v920
        %v3738 = vunpack.c.l.b16 %v921
        %v3739 = vunpack.c.h.b16 %v921
        %v3740 = vunpack.c.l.b16 %v922
        %v3741 = vunpack.c.h.b16 %v922
        %v3742 = vunpack.c.l.b16 %v923
        %v3743 = vunpack.c.h.b16 %v923
        %v3744 = vunpack.c.l.b16 %v924
        %v3745 = vunpack.c.h.b16 %v924
        %v3746 = vunpack.c.l.b16 %v925
        %v3747 = vunpack.c.h.b16 %v925
        %v3748 = vunpack.c.l.b16 %v926
        %v3749 = vunpack.c.h.b16 %v926
        %v3750 = vunpack.c.l.b16 %v927
        %v3751 = vunpack.c.h.b16 %v927
        %v3752 = vunpack.c.l.b16 %v928
        %v3753 = vunpack.c.h.b16 %v928
        %v3754 = vunpack.c.l.b16 %v929
        %v3755 = vunpack.c.h.b16 %v929
        %v3756 = vunpack.c.l.b16 %v930
        %v3757 = vunpack.c.h.b16 %v930
        %v3758 = vunpack.c.l.b16 %v931
        %v3759 = vunpack.c.h.b16 %v931
        %v3760 = vunpack.c.l.b16 %v932
        %v3761 = vunpack.c.h.b16 %v932
        %v3762 = vunpack.c.l.b16 %v933
        %v3763 = vunpack.c.h.b16 %v933
        %v3764 = vunpack.c.l.b16 %v934
        %v3765 = vunpack.c.h.b16 %v934
        %v3766 = vunpack.c.l.b16 %v935
        %v3767 = vunpack.c.h.b16 %v935
        %v3768 = vunpack.c.l.b16 %v936
        %v3769 = vunpack.c.h.b16 %v936
        %v3770 = vunpack.c.l.b16 %v937
        %v3771 = vunpack.c.h.b16 %v937
        %v3772 = vunpack.c.l.b16 %v938
        %v3773 = vunpack.c.h.b16 %v938
        %v3774 = vunpack.c.l.b16 %v939
        %v3775 = vunpack.c.h.b16 %v939
        %v3776 = vunpack.c.l.b16 %v940
        %v3777 = vunpack.c.h.b16 %v940
        %v3778 = vunpack.c.l.b16 %v941
        %v3779 = vunpack.c.h.b16 %v941
        %v3780 = vunpack.c.l.b16 %v942
        %v3781 = vunpack.c.h.b16 %v942
        %v3782 = vunpack.c.l.b16 %v943
        %v3783 = vunpack.c.h.b16 %v943
        %v3784 = vunpack.c.l.b16 %v944
        %v3785 = vunpack.c.h.b16 %v944
        %v3786 = vunpack.c.l.b16 %v945
        %v3787 = vunpack.c.h.b16 %v945
        %v3788 = vunpack.c.l.b16 %v946
        %v3789 = vunpack.c.h.b16 %v946
        %v3790 = vunpack.c.l.b16 %v947
        %v3791 = vunpack.c.h.b16 %v947
        %v3792 = vunpack.c.l.b16 %v948
        %v3793 = vunpack.c.h.b16 %v948
        %v3794 = vunpack.c.l.b16 %v949
        %v3795 = vunpack.c.h.b16 %v949
        %v3796 = vunpack.c.l.b16 %v950
        %v3797 = vunpack.c.h.b16 %v950
        %v3798 = vunpack.c.l.b16 %v951
        %v3799 = vunpack.c.h.b16 %v951
        %v3800 = vunpack.c.l.b16 %v952
        %v3801 = vunpack.c.h.b16 %v952
        %v3802 = vunpack.c.l.b16 %v953
        %v3803 = vunpack.c.h.b16 %v953
        %v3804 = vunpack.c.l.b16 %v954
        %v3805 = vunpack.c.h.b16 %v954
        %v3806 = vunpack.c.l.b16 %v955
        %v3807 = vunpack.c.h.b16 %v955
        %v3808 = vunpack.c.l.b16 %v956
        %v3809 = vunpack.c.h.b16 %v956
        %v3810 = vunpack.c.l.b16 %v957
        %v3811 = vunpack.c.h.b16 %v957
        %v3812 = vunpack.c.l.b16 %v958
        %v3813 = vunpack.c.h.b16 %v958
        %v3814 = vunpack.c.l.b16 %v959
        %v3815 = vunpack.c.h.b16 %v959
        %v3816 = vunpack.c.l.b16 %v960
        %v3817 = vunpack.c.h.b16 %v960
        %v3818 = vunpack.c.l.b16 %v961
        %v3819 = vunpack.c.h.b16 %v961
        %v3820 = vunpack.c.l.b16 %v962
        %v3821 = vunpack.c.h.b16 %v962
        %v3822 = vunpack.c.l.b16 %v963
        %v3823 = vunpack.c.h.b16 %v963
        %v3824 = vunpack.c.l.b16 %v964
        %v3825 = vunpack.c.h.b16 %v964
        %v3826 = vunpack.c.l.b16 %v965
        %v3827 = vunpack.c.h.b16 %v965
        %v3828 = vunpack.c.l.b16 %v966
        %v3829 = vunpack.c.h.b16 %v966
        %v3830 = vunpack.c.l.b16 %v967
        %v3831 = vunpack.c.h.b16 %v967
        %v3832 = vunpack.c.l.b16 %v968
        %v3833 = vunpack.c.h.b16 %v968
        %v3834 = vunpack.c.l.b16 %v969
        %v3835 = vunpack.c.h.b16 %v969
        %v3836 = vunpack.c.l.b16 %v970
        %v3837 = vunpack.c.h.b16 %v970
        %v3838 = vunpack.c.l.b16 %v971
        %v3839 = vunpack.c.h.b16 %v971
        %v3840 = vunpack.c.l.b16 %v972
        %v3841 = vunpack.c.h.b16 %v972
        %v3842 = vunpack.c.l.b16 %v973
        %v3843 = vunpack.c.h.b16 %v973
        %v3844 = vunpack.c.l.b16 %v974
        %v3845 = vunpack.c.h.b16 %v974
        %v3846 = vunpack.c.l.b16 %v975
        %v3847 = vunpack.c.h.b16 %v975
        %v3848 = vunpack.c.l.b16 %v976
        %v3849 = vunpack.c.h.b16 %v976
        %v3850 = vunpack.c.l.b16 %v977
        %v3851 = vunpack.c.h.b16 %v977
        %v3852 = vunpack.c.l.b16 %v978
        %v3853 = vunpack.c.h.b16 %v978
        %v3854 = vunpack.c.l.b16 %v979
        %v3855 = vunpack.c.h.b16 %v979
        %v3856 = vunpack.c.l.b16 %v980
        %v3857 = vunpack.c.h.b16 %v980
        %v3858 = vunpack.c.l.b16 %v981
        %v3859 = vunpack.c.h.b16 %v981
        %v3860 = vunpack.c.l.b16 %v982
        %v3861 = vunpack.c.h.b16 %v982
        %v3862 = vunpack.c.l.b16 %v983
        %v3863 = vunpack.c.h.b16 %v983
        %v3864 = vunpack.c.l.b16 %v984
        %v3865 = vunpack.c.h.b16 %v984
        %v3866 = vunpack.c.l.b16 %v985
        %v3867 = vunpack.c.h.b16 %v985
        %v3868 = vunpack.c.l.b16 %v986
        %v3869 = vunpack.c.h.b16 %v986
        %v3870 = vunpack.c.l.b16 %v987
        %v3871 = vunpack.c.h.b16 %v987
        %v3872 = vunpack.c.l.b16 %v988
        %v3873 = vunpack.c.h.b16 %v988
        %v3874 = vunpack.c.l.b16 %v989
        %v3875 = vunpack.c.h.b16 %v989
        %v3876 = vunpack.c.l.b16 %v990
        %v3877 = vunpack.c.h.b16 %v990
        %v3878 = vunpack.c.l.b16 %v991
        %v3879 = vunpack.c.h.b16 %v991
        %v3880 = vunpack.c.l.b16 %v992
        %v3881 = vunpack.c.h.b16 %v992
        %v3882 = vunpack.c.l.b16 %v993
        %v3883 = vunpack.c.h.b16 %v993
        %v3884 = vunpack.c.l.b16 %v994
        %v3885 = vunpack.c.h.b16 %v994
        %v3886 = vunpack.c.l.b16 %v995
        %v3887 = vunpack.c.h.b16 %v995
        %v3888 = vunpack.c.l.b16 %v996
        %v3889 = vunpack.c.h.b16 %v996
        %v3890 = vunpack.c.l.b16 %v997
        %v3891 = vunpack.c.h.b16 %v997
        %v3892 = vunpack.c.l.b16 %v998
        %v3893 = vunpack.c.h.b16 %v998
        %v3894 = vunpack.c.l.b16 %v999
        %v3895 = vunpack.c.h.b16 %v999
        %v3896 = vunpack.c.l.b16 %v1000
        %v3897 = vunpack.c.h.b16 %v1000
        %v3898 = vunpack.c.l.b16 %v1001
        %v3899 = vunpack.c.h.b16 %v1001
        %v3900 = vunpack.c.l.b16 %v1002
        %v3901 = vunpack.c.h.b16 %v1002
        %v3902 = vunpack.c.l.b16 %v1003
        %v3903 = vunpack.c.h.b16 %v1003
        %v3904 = vunpack.c.l.b16 %v1004
        %v3905 = vunpack.c.h.b16 %v1004
        %v3906 = vunpack.c.l.b16 %v1005
        %v3907 = vunpack.c.h.b16 %v1005
        %v3908 = vunpack.c.l.b16 %v1006
        %v3909 = vunpack.c.h.b16 %v1006
        %v3910 = vunpack.c.l.b16 %v1007
        %v3911 = vunpack.c.h.b16 %v1007
        %v3912 = vunpack.c.l.b16 %v1008
        %v3913 = vunpack.c.h.b16 %v1008
        %v3914 = vunpack.c.l.b16 %v1009
        %v3915 = vunpack.c.h.b16 %v1009
        %v3916 = vunpack.c.l.b16 %v1010
        %v3917 = vunpack.c.h.b16 %v1010
        %v3918 = vunpack.c.l.b16 %v1011
        %v3919 = vunpack.c.h.b16 %v1011
        %v3920 = vunpack.c.l.b16 %v1012
        %v3921 = vunpack.c.h.b16 %v1012
        %v3922 = vunpack.c.l.b16 %v1013
        %v3923 = vunpack.c.h.b16 %v1013
        %v3924 = vunpack.c.l.b16 %v1014
        %v3925 = vunpack.c.h.b16 %v1014
        %v3926 = vunpack.c.l.b16 %v1015
        %v3927 = vunpack.c.h.b16 %v1015
        %v3928 = vunpack.c.l.b16 %v1016
        %v3929 = vunpack.c.h.b16 %v1016
        %v3930 = vunpack.c.l.b16 %v1017
        %v3931 = vunpack.c.h.b16 %v1017
        %v3932 = vunpack.c.l.b16 %v1018
        %v3933 = vunpack.c.h.b16 %v1018
        %v3934 = vunpack.c.l.b16 %v1019
        %v3935 = vunpack.c.h.b16 %v1019
        %v3936 = vunpack.c.l.b16 %v1020
        %v3937 = vunpack.c.h.b16 %v1020
        %v3938 = vunpack.c.l.b16 %v1021
        %v3939 = vunpack.c.h.b16 %v1021
        %v3940 = vunpack.c.l.b16 %v1022
        %v3941 = vunpack.c.h.b16 %v1022
        %v3942 = vunpack.c.l.b16 %v1023
        %v3943 = vunpack.c.h.b16 %v1023
        %v3944 = vunpack.c.l.b16 %v1024
        %v3945 = vunpack.c.h.b16 %v1024
        %v3946 = vunpack.c.l.b16 %v1025
        %v3947 = vunpack.c.h.b16 %v1025
        %v3948 = vunpack.c.l.b16 %v1026
        %v3949 = vunpack.c.h.b16 %v1026
        %v3950 = vunpack.c.l.b16 %v1027
        %v3951 = vunpack.c.h.b16 %v1027
        %v3952 = vunpack.c.l.b16 %v1028
        %v3953 = vunpack.c.h.b16 %v1028
        %v3954 = vunpack.c.l.b16 %v1029
        %v3955 = vunpack.c.h.b16 %v1029
        %v3956 = vunpack.c.l.b16 %v1030
        %v3957 = vunpack.c.h.b16 %v1030
        %v3958 = vunpack.c.l.b16 %v1031
        %v3959 = vunpack.c.h.b16 %v1031
        %v3960 = vunpack.c.l.b16 %v1032
        %v3961 = vunpack.c.h.b16 %v1032
        %v3962 = vunpack.c.l.b16 %v1033
        %v3963 = vunpack.c.h.b16 %v1033
        %v3964 = vunpack.c.l.b16 %v1034
        %v3965 = vunpack.c.h.b16 %v1034
        %v3966 = vunpack.c.l.b16 %v1035
        %v3967 = vunpack.c.h.b16 %v1035
        %v3968 = vunpack.c.l.b16 %v1036
        %v3969 = vunpack.c.h.b16 %v1036
        %v3970 = vunpack.c.l.b16 %v1037
        %v3971 = vunpack.c.h.b16 %v1037
        %v3972 = vunpack.c.l.b16 %v1038
        %v3973 = vunpack.c.h.b16 %v1038
        %v3974 = vunpack.c.l.b16 %v1039
        %v3975 = vunpack.c.h.b16 %v1039
        %v3976 = vunpack.c.l.b16 %v1040
        %v3977 = vunpack.c.h.b16 %v1040
        %v3978 = vunpack.c.l.b16 %v1041
        %v3979 = vunpack.c.h.b16 %v1041
        %v3980 = vunpack.c.l.b16 %v1042
        %v3981 = vunpack.c.h.b16 %v1042
        %v3982 = vunpack.c.l.b16 %v1043
        %v3983 = vunpack.c.h.b16 %v1043
        %v3984 = vunpack.c.l.b16 %v1044
        %v3985 = vunpack.c.h.b16 %v1044
        %v3986 = vunpack.c.l.b16 %v1045
        %v3987 = vunpack.c.h.b16 %v1045
        %v3988 = vunpack.c.l.b16 %v1046
        %v3989 = vunpack.c.h.b16 %v1046
        %v3990 = vunpack.c.l.b16 %v1047
        %v3991 = vunpack.c.h.b16 %v1047
        %v3992 = vunpack.c.l.b16 %v1048
        %v3993 = vunpack.c.h.b16 %v1048
        %v3994 = vunpack.c.l.b16 %v1049
        %v3995 = vunpack.c.h.b16 %v1049
        %v3996 = vunpack.c.l.b16 %v1050
        %v3997 = vunpack.c.h.b16 %v1050
        %v3998 = vunpack.c.l.b16 %v1051
        %v3999 = vunpack.c.h.b16 %v1051
        %v4000 = vunpack.c.l.b16 %v1052
        %v4001 = vunpack.c.h.b16 %v1052
        %v4002 = vunpack.c.l.b16 %v1053
        %v4003 = vunpack.c.h.b16 %v1053
        %v4004 = vunpack.c.l.b16 %v1054
        %v4005 = vunpack.c.h.b16 %v1054
        %v4006 = vunpack.c.l.b16 %v1055
        %v4007 = vunpack.c.h.b16 %v1055
        %v4008 = vunpack.c.l.b16 %v1056
        %v4009 = vunpack.c.h.b16 %v1056
        %v4010 = vunpack.c.l.b16 %v1057
        %v4011 = vunpack.c.h.b16 %v1057
        %v4012 = vunpack.c.l.b16 %v1058
        %v4013 = vunpack.c.h.b16 %v1058
        %v4014 = vunpack.c.l.b16 %v1059
        %v4015 = vunpack.c.h.b16 %v1059
        %v4016 = vunpack.c.l.b16 %v1060
        %v4017 = vunpack.c.h.b16 %v1060
        %v4018 = vunpack.c.l.b16 %v1061
        %v4019 = vunpack.c.h.b16 %v1061
        %v4020 = vunpack.c.l.b16 %v1062
        %v4021 = vunpack.c.h.b16 %v1062
        %v4022 = vunpack.c.l.b16 %v1063
        %v4023 = vunpack.c.h.b16 %v1063
        %v4024 = vunpack.c.l.b16 %v1064
        %v4025 = vunpack.c.h.b16 %v1064
        %v4026 = vunpack.c.l.b16 %v1065
        %v4027 = vunpack.c.h.b16 %v1065
        %v4028 = vunpack.c.l.b16 %v1066
        %v4029 = vunpack.c.h.b16 %v1066
        %v4030 = vunpack.c.l.b16 %v1067
        %v4031 = vunpack.c.h.b16 %v1067
        %v4032 = vunpack.c.l.b16 %v1068
        %v4033 = vunpack.c.h.b16 %v1068
        %v4034 = vunpack.c.l.b16 %v1069
        %v4035 = vunpack.c.h.b16 %v1069
        %v4036 = vunpack.c.l.b16 %v1070
        %v4037 = vunpack.c.h.b16 %v1070
        %v4038 = vunpack.c.l.b16 %v1071
        %v4039 = vunpack.c.h.b16 %v1071
        %v4040 = vunpack.c.l.b16 %v1072
        %v4041 = vunpack.c.h.b16 %v1072
        %v4042 = vunpack.c.l.b16 %v1073
        %v4043 = vunpack.c.h.b16 %v1073
        %v4044 = vunpack.c.l.b16 %v1074
        %v4045 = vunpack.c.h.b16 %v1074
        %v4046 = vunpack.c.l.b16 %v1075
        %v4047 = vunpack.c.h.b16 %v1075
        %v4048 = vunpack.c.l.b16 %v1076
        %v4049 = vunpack.c.h.b16 %v1076
        %v4050 = vunpack.c.l.b16 %v1077
        %v4051 = vunpack.c.h.b16 %v1077
        %v4052 = vunpack.c.l.b16 %v1078
        %v4053 = vunpack.c.h.b16 %v1078
        %v4054 = vunpack.c.l.b16 %v1079
        %v4055 = vunpack.c.h.b16 %v1079
        %v4056 = vunpack.c.l.b16 %v1080
        %v4057 = vunpack.c.h.b16 %v1080
        %v4058 = vunpack.c.l.b16 %v1081
        %v4059 = vunpack.c.h.b16 %v1081
        %v4060 = vunpack.c.l.b16 %v1082
        %v4061 = vunpack.c.h.b16 %v1082
        %v4062 = vunpack.c.l.b16 %v1083
        %v4063 = vunpack.c.h.b16 %v1083
        %v4064 = vunpack.c.l.b16 %v1084
        %v4065 = vunpack.c.h.b16 %v1084
        %v4066 = vunpack.c.l.b16 %v1085
        %v4067 = vunpack.c.h.b16 %v1085
        %v4068 = vunpack.c.l.b16 %v1086
        %v4069 = vunpack.c.h.b16 %v1086
        %v4070 = vunpack.c.l.b16 %v1087
        %v4071 = vunpack.c.h.b16 %v1087
        %v4072 = vunpack.c.l.b16 %v1088
        %v4073 = vunpack.c.h.b16 %v1088
        %v4074 = vunpack.c.l.b16 %v1089
        %v4075 = vunpack.c.h.b16 %v1089
        %v4076 = vunpack.c.l.b16 %v1090
        %v4077 = vunpack.c.h.b16 %v1090
        %v4078 = vunpack.c.l.b16 %v1091
        %v4079 = vunpack.c.h.b16 %v1091
        %v4080 = vunpack.c.l.b16 %v1092
        %v4081 = vunpack.c.h.b16 %v1092
        %v4082 = vunpack.c.l.b16 %v1093
        %v4083 = vunpack.c.h.b16 %v1093
        %v4084 = vunpack.c.l.b16 %v1094
        %v4085 = vunpack.c.h.b16 %v1094
        %v4086 = vunpack.c.l.b16 %v1095
        %v4087 = vunpack.c.h.b16 %v1095
        %v4088 = vunpack.c.l.b16 %v1096
        %v4089 = vunpack.c.h.b16 %v1096
        %v4090 = vunpack.c.l.b16 %v1097
        %v4091 = vunpack.c.h.b16 %v1097
        %v4092 = vunpack.c.l.b16 %v1098
        %v4093 = vunpack.c.h.b16 %v1098
        %v4094 = vunpack.c.l.b16 %v1099
        %v4095 = vunpack.c.h.b16 %v1099
        %v4096 = vunpack.c.l.b16 %v1100
        %v4097 = vunpack.c.h.b16 %v1100
        %v4098 = vunpack.c.l.b16 %v1101
        %v4099 = vunpack.c.h.b16 %v1101
        %v4100 = vunpack.c.l.b16 %v1102
        %v4101 = vunpack.c.h.b16 %v1102
        %v4102 = vunpack.c.l.b16 %v1103
        %v4103 = vunpack.c.h.b16 %v1103
        %v4104 = vunpack.c.l.b16 %v1104
        %v4105 = vunpack.c.h.b16 %v1104
        %v4106 = vunpack.c.l.b16 %v1105
        %v4107 = vunpack.c.h.b16 %v1105
        %v4108 = vunpack.c.l.b16 %v1106
        %v4109 = vunpack.c.h.b16 %v1106
        %v4110 = vunpack.c.l.b16 %v1107
        %v4111 = vunpack.c.h.b16 %v1107
        %v4112 = vunpack.c.l.b16 %v1108
        %v4113 = vunpack.c.h.b16 %v1108
        %v4114 = vunpack.c.l.b16 %v1109
        %v4115 = vunpack.c.h.b16 %v1109
        %v4116 = vunpack.c.l.b16 %v1110
        %v4117 = vunpack.c.h.b16 %v1110
        %v4118 = vunpack.c.l.b16 %v1111
        %v4119 = vunpack.c.h.b16 %v1111
        %v4120 = vunpack.c.l.b16 %v1112
        %v4121 = vunpack.c.h.b16 %v1112
        %v4122 = vunpack.c.l.b16 %v1113
        %v4123 = vunpack.c.h.b16 %v1113
        %v4124 = vunpack.c.l.b16 %v1114
        %v4125 = vunpack.c.h.b16 %v1114
        %v4126 = vunpack.c.l.b16 %v1115
        %v4127 = vunpack.c.h.b16 %v1115
        %v4128 = vunpack.c.l.b16 %v1116
        %v4129 = vunpack.c.h.b16 %v1116
        %v4130 = vunpack.c.l.b16 %v1117
        %v4131 = vunpack.c.h.b16 %v1117
        %v4132 = vunpack.c.l.b16 %v1118
        %v4133 = vunpack.c.h.b16 %v1118
        %v4134 = vunpack.c.l.b16 %v1119
        %v4135 = vunpack.c.h.b16 %v1119
        %v4136 = vunpack.c.l.b16 %v1120
        %v4137 = vunpack.c.h.b16 %v1120
        %v4138 = vunpack.c.l.b16 %v1121
        %v4139 = vunpack.c.h.b16 %v1121
        %v4140 = vunpack.c.l.b16 %v1122
        %v4141 = vunpack.c.h.b16 %v1122
        %v4142 = vunpack.c.l.b16 %v1123
        %v4143 = vunpack.c.h.b16 %v1123
        %v4144 = vunpack.c.l.b16 %v1124
        %v4145 = vunpack.c.h.b16 %v1124
        %v4146 = vunpack.c.l.b16 %v1125
        %v4147 = vunpack.c.h.b16 %v1125
        %v4148 = vunpack.c.l.b16 %v1126
        %v4149 = vunpack.c.h.b16 %v1126
        %v4150 = vunpack.c.l.b16 %v1127
        %v4151 = vunpack.c.h.b16 %v1127
        %v4152 = vunpack.c.l.b16 %v1128
        %v4153 = vunpack.c.h.b16 %v1128
        %v4154 = vunpack.c.l.b16 %v1129
        %v4155 = vunpack.c.h.b16 %v1129
        %v4156 = vunpack.c.l.b16 %v1130
        %v4157 = vunpack.c.h.b16 %v1130
        %v4158 = vunpack.c.l.b16 %v1131
        %v4159 = vunpack.c.h.b16 %v1131
        %v4160 = vunpack.c.l.b16 %v1132
        %v4161 = vunpack.c.h.b16 %v1132
        %v4162 = vunpack.c.l.b16 %v1133
        %v4163 = vunpack.c.h.b16 %v1133
        %v4164 = vunpack.c.l.b16 %v1134
        %v4165 = vunpack.c.h.b16 %v1134
        %v4166 = vunpack.c.l.b16 %v1135
        %v4167 = vunpack.c.h.b16 %v1135
        %v4168 = vunpack.c.l.b16 %v1136
        %v4169 = vunpack.c.h.b16 %v1136
        %v4170 = vunpack.c.l.b16 %v1137
        %v4171 = vunpack.c.h.b16 %v1137
        %v4172 = vunpack.c.l.b16 %v1138
        %v4173 = vunpack.c.h.b16 %v1138
        %v4174 = vunpack.c.l.b16 %v1139
        %v4175 = vunpack.c.h.b16 %v1139
        %v4176 = vunpack.c.l.b16 %v1140
        %v4177 = vunpack.c.h.b16 %v1140
        %v4178 = vunpack.c.l.b16 %v1141
        %v4179 = vunpack.c.h.b16 %v1141
        %v4180 = vunpack.c.l.b16 %v1142
        %v4181 = vunpack.c.h.b16 %v1142
        %v4182 = vunpack.c.l.b16 %v1143
        %v4183 = vunpack.c.h.b16 %v1143
        %v4184 = vunpack.c.l.b16 %v1144
        %v4185 = vunpack.c.h.b16 %v1144
        %v4186 = vunpack.c.l.b16 %v1145
        %v4187 = vunpack.c.h.b16 %v1145
        %v4188 = vunpack.c.l.b16 %v1146
        %v4189 = vunpack.c.h.b16 %v1146
        %v4190 = vunpack.c.l.b16 %v1147
        %v4191 = vunpack.c.h.b16 %v1147
        %v4192 = vunpack.c.l.b16 %v1148
        %v4193 = vunpack.c.h.b16 %v1148
        %v4194 = vunpack.c.l.b16 %v1149
        %v4195 = vunpack.c.h.b16 %v1149
        %v4196 = vunpack.c.l.b16 %v1150
        %v4197 = vunpack.c.h.b16 %v1150
        %v4198 = vunpack.c.l.b16 %v1151
        %v4199 = vunpack.c.h.b16 %v1151
        %v4200 = vunpack.c.l.b16 %v1152
        %v4201 = vunpack.c.h.b16 %v1152
        %v4202 = vunpack.c.l.b16 %v1153
        %v4203 = vunpack.c.h.b16 %v1153
        %v4204 = vunpack.c.l.b16 %v1154
        %v4205 = vunpack.c.h.b16 %v1154
        %v4206 = vunpack.c.l.b16 %v1155
        %v4207 = vunpack.c.h.b16 %v1155
        %v4208 = vunpack.c.l.b16 %v1156
        %v4209 = vunpack.c.h.b16 %v1156
        %v4210 = vunpack.c.l.b16 %v1157
        %v4211 = vunpack.c.h.b16 %v1157
        %v4212 = vunpack.c.l.b16 %v1158
        %v4213 = vunpack.c.h.b16 %v1158
        %v4214 = vunpack.c.l.b16 %v1159
        %v4215 = vunpack.c.h.b16 %v1159
        %v4216 = vunpack.c.l.b16 %v1160
        %v4217 = vunpack.c.h.b16 %v1160
        %v4218 = vunpack.c.l.b16 %v1161
        %v4219 = vunpack.c.h.b16 %v1161
        %v4220 = vunpack.c.l.b16 %v1162
        %v4221 = vunpack.c.h.b16 %v1162
        %v4222 = vunpack.c.l.b16 %v1163
        %v4223 = vunpack.c.h.b16 %v1163
        %v4224 = vunpack.c.l.b16 %v1164
        %v4225 = vunpack.c.h.b16 %v1164
        %v4226 = vunpack.c.l.b16 %v1165
        %v4227 = vunpack.c.h.b16 %v1165
        %v4228 = vunpack.c.l.b16 %v1166
        %v4229 = vunpack.c.h.b16 %v1166
        %v4230 = vunpack.c.l.b16 %v1167
        %v4231 = vunpack.c.h.b16 %v1167
        %v4232 = vunpack.c.l.b16 %v1168
        %v4233 = vunpack.c.h.b16 %v1168
        %v4234 = vunpack.c.l.b16 %v1169
        %v4235 = vunpack.c.h.b16 %v1169
        %v4236 = vunpack.c.l.b16 %v1170
        %v4237 = vunpack.c.h.b16 %v1170
        %v4238 = vunpack.c.l.b16 %v1171
        %v4239 = vunpack.c.h.b16 %v1171
        %v4240 = vunpack.c.l.b16 %v1172
        %v4241 = vunpack.c.h.b16 %v1172
        %v4242 = vunpack.c.l.b16 %v1173
        %v4243 = vunpack.c.h.b16 %v1173
        %v4244 = vunpack.c.l.b16 %v1174
        %v4245 = vunpack.c.h.b16 %v1174
        %v4246 = vunpack.c.l.b16 %v1175
        %v4247 = vunpack.c.h.b16 %v1175
        %v4248 = vunpack.c.l.b16 %v1176
        %v4249 = vunpack.c.h.b16 %v1176
        %v4250 = vunpack.c.l.b16 %v1177
        %v4251 = vunpack.c.h.b16 %v1177
        %v4252 = vunpack.c.l.b16 %v1178
        %v4253 = vunpack.c.h.b16 %v1178
        %v4254 = vunpack.c.l.b16 %v1179
        %v4255 = vunpack.c.h.b16 %v1179
        %v4256 = vunpack.c.l.b16 %v1180
        %v4257 = vunpack.c.h.b16 %v1180
        %v4258 = vunpack.c.l.b16 %v1181
        %v4259 = vunpack.c.h.b16 %v1181
        %v4260 = vunpack.c.l.b16 %v1182
        %v4261 = vunpack.c.h.b16 %v1182
        %v4262 = vunpack.c.l.b16 %v1183
        %v4263 = vunpack.c.h.b16 %v1183
        %v4264 = vunpack.c.l.b16 %v1184
        %v4265 = vunpack.c.h.b16 %v1184
        %v4266 = vunpack.c.l.b16 %v1185
        %v4267 = vunpack.c.h.b16 %v1185
        %v4268 = vunpack.c.l.b16 %v1186
        %v4269 = vunpack.c.h.b16 %v1186
        %v4270 = vunpack.c.l.b16 %v1187
        %v4271 = vunpack.c.h.b16 %v1187
        %v4272 = vunpack.c.l.b16 %v1188
        %v4273 = vunpack.c.h.b16 %v1188
        %v4274 = vunpack.c.l.b16 %v1189
        %v4275 = vunpack.c.h.b16 %v1189
        %v4276 = vunpack.c.l.b16 %v1190
        %v4277 = vunpack.c.h.b16 %v1190
        %v4278 = vunpack.c.l.b16 %v1191
        %v4279 = vunpack.c.h.b16 %v1191
        %v4280 = vunpack.c.l.b16 %v1192
        %v4281 = vunpack.c.h.b16 %v1192
        %v4282 = vunpack.c.l.b16 %v1193
        %v4283 = vunpack.c.h.b16 %v1193
        %v4284 = vunpack.c.l.b16 %v1194
        %v4285 = vunpack.c.h.b16 %v1194
        %v4286 = vunpack.c.l.b16 %v1195
        %v4287 = vunpack.c.h.b16 %v1195
        %v4288 = vunpack.c.l.b16 %v1196
        %v4289 = vunpack.c.h.b16 %v1196
        %v4290 = vunpack.c.l.b16 %v1197
        %v4291 = vunpack.c.h.b16 %v1197
        %v4292 = vunpack.c.l.b16 %v1198
        %v4293 = vunpack.c.h.b16 %v1198
        %v4294 = vunpack.c.l.b16 %v1199
        %v4295 = vunpack.c.h.b16 %v1199
        %v4296 = vunpack.c.l.b16 %v1200
        %v4297 = vunpack.c.h.b16 %v1200
        %v4298 = vunpack.c.l.b16 %v1201
        %v4299 = vunpack.c.h.b16 %v1201
        %v4300 = vunpack.c.l.b16 %v1202
        %v4301 = vunpack.c.h.b16 %v1202
        %v4302 = vunpack.c.l.b16 %v1203
        %v4303 = vunpack.c.h.b16 %v1203
        %v4304 = vunpack.c.l.b16 %v1204
        %v4305 = vunpack.c.h.b16 %v1204
        %v4306 = vunpack.c.l.b16 %v1205
        %v4307 = vunpack.c.h.b16 %v1205
        %v4308 = vunpack.c.l.b16 %v1206
        %v4309 = vunpack.c.h.b16 %v1206
        %v4310 = vunpack.c.l.b16 %v1207
        %v4311 = vunpack.c.h.b16 %v1207
        %v4312 = vunpack.c.l.b16 %v1208
        %v4313 = vunpack.c.h.b16 %v1208
        %v4314 = vunpack.c.l.b16 %v1209
        %v4315 = vunpack.c.h.b16 %v1209
        %v4316 = vunpack.c.l.b16 %v1210
        %v4317 = vunpack.c.h.b16 %v1210
        %v4318 = vunpack.c.l.b16 %v1211
        %v4319 = vunpack.c.h.b16 %v1211
        %v4320 = vunpack.c.l.b16 %v1212
        %v4321 = vunpack.c.h.b16 %v1212
        %v4322 = vunpack.c.l.b16 %v1213
        %v4323 = vunpack.c.h.b16 %v1213
        %v4324 = vunpack.c.l.b16 %v1214
        %v4325 = vunpack.c.h.b16 %v1214
        %v4326 = vunpack.c.l.b16 %v1215
        %v4327 = vunpack.c.h.b16 %v1215
        %v4328 = vunpack.c.l.b16 %v1216
        %v4329 = vunpack.c.h.b16 %v1216
        %v4330 = vunpack.c.l.b16 %v1217
        %v4331 = vunpack.c.h.b16 %v1217
        %v4332 = vunpack.c.l.b16 %v1218
        %v4333 = vunpack.c.h.b16 %v1218
        %v4334 = vunpack.c.l.b16 %v1219
        %v4335 = vunpack.c.h.b16 %v1219
        %v4336 = vunpack.c.l.b16 %v1220
        %v4337 = vunpack.c.h.b16 %v1220
        %v4338 = vunpack.c.l.b16 %v1221
        %v4339 = vunpack.c.h.b16 %v1221
        %v4340 = vunpack.c.l.b16 %v1222
        %v4341 = vunpack.c.h.b16 %v1222
        %v4342 = vunpack.c.l.b16 %v1223
        %v4343 = vunpack.c.h.b16 %v1223
        %v4344 = vunpack.c.l.b16 %v1224
        %v4345 = vunpack.c.h.b16 %v1224
        %v4346 = vunpack.c.l.b16 %v1225
        %v4347 = vunpack.c.h.b16 %v1225
        %v4348 = vunpack.c.l.b16 %v1226
        %v4349 = vunpack.c.h.b16 %v1226
        %v4350 = vunpack.c.l.b16 %v1227
        %v4351 = vunpack.c.h.b16 %v1227
        %v4352 = vunpack.c.l.b16 %v1228
        %v4353 = vunpack.c.h.b16 %v1228
        %v4354 = vunpack.c.l.b16 %v1229
        %v4355 = vunpack.c.h.b16 %v1229
        %v4356 = vunpack.c.l.b16 %v1230
        %v4357 = vunpack.c.h.b16 %v1230
        %v4358 = vunpack.c.l.b16 %v1231
        %v4359 = vunpack.c.h.b16 %v1231
        %v4360 = vunpack.c.l.b16 %v1232
        %v4361 = vunpack.c.h.b16 %v1232
        %v4362 = vunpack.c.l.b16 %v1233
        %v4363 = vunpack.c.h.b16 %v1233
        %v4364 = vunpack.c.l.b16 %v1234
        %v4365 = vunpack.c.h.b16 %v1234
        %v4366 = vunpack.c.l.b16 %v1235
        %v4367 = vunpack.c.h.b16 %v1235
        %v4368 = vunpack.c.l.b16 %v1236
        %v4369 = vunpack.c.h.b16 %v1236
        %v4370 = vunpack.c.l.b16 %v1237
        %v4371 = vunpack.c.h.b16 %v1237
        %v4372 = vunpack.c.l.b16 %v1238
        %v4373 = vunpack.c.h.b16 %v1238
        %v4374 = vunpack.c.l.b16 %v1239
        %v4375 = vunpack.c.h.b16 %v1239
        %v4376 = vunpack.c.l.b16 %v1240
        %v4377 = vunpack.c.h.b16 %v1240
        %v4378 = vunpack.c.l.b16 %v1241
        %v4379 = vunpack.c.h.b16 %v1241
        %v4380 = vunpack.c.l.b16 %v1242
        %v4381 = vunpack.c.h.b16 %v1242
        %v4382 = vunpack.c.l.b16 %v1243
        %v4383 = vunpack.c.h.b16 %v1243
        %v4384 = vunpack.c.l.b16 %v1244
        %v4385 = vunpack.c.h.b16 %v1244
        %v4386 = vunpack.c.l.b16 %v1245
        %v4387 = vunpack.c.h.b16 %v1245
        %v4388 = vunpack.c.l.b16 %v1246
        %v4389 = vunpack.c.h.b16 %v1246
        %v4390 = vunpack.c.l.b16 %v1247
        %v4391 = vunpack.c.h.b16 %v1247
        %v4392 = vunpack.c.l.b16 %v1248
        %v4393 = vunpack.c.h.b16 %v1248
        %v4394 = vunpack.c.l.b16 %v1249
        %v4395 = vunpack.c.h.b16 %v1249
        %v4396 = vunpack.c.l.b16 %v1250
        %v4397 = vunpack.c.h.b16 %v1250
        %v4398 = vunpack.c.l.b16 %v1251
        %v4399 = vunpack.c.h.b16 %v1251
        %v4400 = vunpack.c.l.b16 %v1252
        %v4401 = vunpack.c.h.b16 %v1252
        %v4402 = vunpack.c.l.b16 %v1253
        %v4403 = vunpack.c.h.b16 %v1253
        %v4404 = vunpack.c.l.b16 %v1254
        %v4405 = vunpack.c.h.b16 %v1254
        %v4406 = vunpack.c.l.b16 %v1255
        %v4407 = vunpack.c.h.b16 %v1255
        %v4408 = vunpack.c.l.b16 %v1256
        %v4409 = vunpack.c.h.b16 %v1256
        %v4410 = vunpack.c.l.b16 %v1257
        %v4411 = vunpack.c.h.b16 %v1257
        %v4412 = vunpack.c.l.b16 %v1258
        %v4413 = vunpack.c.h.b16 %v1258
        %v4414 = vunpack.c.l.b16 %v1259
        %v4415 = vunpack.c.h.b16 %v1259
        %v4416 = vunpack.c.l.b16 %v1260
        %v4417 = vunpack.c.h.b16 %v1260
        %v4418 = vunpack.c.l.b16 %v1261
        %v4419 = vunpack.c.h.b16 %v1261
        %v4420 = vunpack.c.l.b16 %v1262
        %v4421 = vunpack.c.h.b16 %v1262
        %v4422 = vunpack.c.l.b16 %v1263
        %v4423 = vunpack.c.h.b16 %v1263
        %v4424 = vunpack.c.l.b16 %v1264
        %v4425 = vunpack.c.h.b16 %v1264
        %v4426 = vunpack.c.l.b16 %v1265
        %v4427 = vunpack.c.h.b16 %v1265
        %v4428 = vunpack.c.l.b16 %v1266
        %v4429 = vunpack.c.h.b16 %v1266
        %v4430 = vunpack.c.l.b16 %v1267
        %v4431 = vunpack.c.h.b16 %v1267
        %v4432 = vunpack.c.l.b16 %v1268
        %v4433 = vunpack.c.h.b16 %v1268
        %v4434 = vunpack.c.l.b16 %v1269
        %v4435 = vunpack.c.h.b16 %v1269
        %v4436 = vunpack.c.l.b16 %v1270
        %v4437 = vunpack.c.h.b16 %v1270
        %v4438 = vunpack.c.l.b16 %v1271
        %v4439 = vunpack.c.h.b16 %v1271
        %v4440 = vunpack.c.l.b16 %v1272
        %v4441 = vunpack.c.h.b16 %v1272
        %v4442 = vunpack.c.l.b16 %v1273
        %v4443 = vunpack.c.h.b16 %v1273
        %v4444 = vunpack.c.l.b16 %v1274
        %v4445 = vunpack.c.h.b16 %v1274
        %v4446 = vunpack.c.l.b16 %v1275
        %v4447 = vunpack.c.h.b16 %v1275
        %v4448 = vunpack.c.l.b16 %v1276
        %v4449 = vunpack.c.h.b16 %v1276
        %v4450 = vunpack.c.l.b16 %v1277
        %v4451 = vunpack.c.h.b16 %v1277
        %v4452 = vunpack.c.l.b16 %v1278
        %v4453 = vunpack.c.h.b16 %v1278
        %v4454 = vunpack.c.l.b16 %v1279
        %v4455 = vunpack.c.h.b16 %v1279
        %v4456 = vunpack.c.l.b16 %v1280
        %v4457 = vunpack.c.h.b16 %v1280
        %v4458 = vunpack.c.l.b16 %v1281
        %v4459 = vunpack.c.h.b16 %v1281
        %v4460 = vunpack.c.l.b16 %v1282
        %v4461 = vunpack.c.h.b16 %v1282
        %v4462 = vunpack.c.l.b16 %v1283
        %v4463 = vunpack.c.h.b16 %v1283
        %v4464 = vunpack.c.l.b16 %v1284
        %v4465 = vunpack.c.h.b16 %v1284
        %v4466 = vunpack.c.l.b16 %v1285
        %v4467 = vunpack.c.h.b16 %v1285
        %v4468 = vunpack.c.l.b16 %v1286
        %v4469 = vunpack.c.h.b16 %v1286
        %v4470 = vunpack.c.l.b16 %v1287
        %v4471 = vunpack.c.h.b16 %v1287
        %v4472 = vunpack.c.l.b16 %v1288
        %v4473 = vunpack.c.h.b16 %v1288
        %v4474 = vunpack.c.l.b16 %v1289
        %v4475 = vunpack.c.h.b16 %v1289
        %v4476 = vunpack.c.l.b16 %v1290
        %v4477 = vunpack.c.h.b16 %v1290
        %v4478 = vunpack.c.l.b16 %v1291
        %v4479 = vunpack.c.h.b16 %v1291
        %v4480 = vunpack.c.l.b16 %v1292
        %v4481 = vunpack.c.h.b16 %v1292
        %v4482 = vunpack.c.l.b16 %v1293
        %v4483 = vunpack.c.h.b16 %v1293
        %v4484 = vunpack.c.l.b16 %v1294
        %v4485 = vunpack.c.h.b16 %v1294
        %v4486 = vunpack.c.l.b16 %v1295
        %v4487 = vunpack.c.h.b16 %v1295
        %v4488 = vunpack.c.l.b16 %v1296
        %v4489 = vunpack.c.h.b16 %v1296
        %v4490 = vunpack.c.l.b16 %v1297
        %v4491 = vunpack.c.h.b16 %v1297
        %v4492 = vunpack.c.l.b16 %v1298
        %v4493 = vunpack.c.h.b16 %v1298
        %v4494 = vunpack.c.l.b16 %v1299
        %v4495 = vunpack.c.h.b16 %v1299
        %v4496 = vunpack.c.l.b16 %v1300
        %v4497 = vunpack.c.h.b16 %v1300
        %v4498 = vunpack.c.l.b16 %v1301
        %v4499 = vunpack.c.h.b16 %v1301
        %v4500 = vunpack.c.l.b16 %v1302
        %v4501 = vunpack.c.h.b16 %v1302
        %v4502 = vunpack.c.l.b16 %v1303
        %v4503 = vunpack.c.h.b16 %v1303
        %v4504 = vunpack.c.l.b16 %v1304
        %v4505 = vunpack.c.h.b16 %v1304
        %v4506 = vunpack.c.l.b16 %v1305
        %v4507 = vunpack.c.h.b16 %v1305
        %v4508 = vunpack.c.l.b16 %v1306
        %v4509 = vunpack.c.h.b16 %v1306
        %v4510 = vpack.c.b16 %v2478, %v2462
        %v4511 = vpack.c.b16 %v2479, %v2463
        %v4512 = vpack.c.b16 %v2480, %v2464
        %v4513 = vpack.c.b16 %v2481, %v2465
        %v4514 = vpack.c.b16 %v2482, %v2466
        %v4515 = vpack.c.b16 %v2483, %v2467
        %v4516 = vpack.c.b16 %v2484, %v2468
        %v4517 = vpack.c.b16 %v2485, %v2469
        %v4518 = vpack.c.b16 %v2486, %v2470
        %v4519 = vpack.c.b16 %v2487, %v2471
        %v4520 = vpack.c.b16 %v2488, %v2472
        %v4521 = vpack.c.b16 %v2489, %v2473
        %v4522 = vpack.c.b16 %v2490, %v2474
        %v4523 = vpack.c.b16 %v2491, %v2475
        %v4524 = vpack.c.b16 %v2492, %v2476
        %v4525 = vpack.c.b16 %v2493, %v2477
        %v4526 = vpack.c.b16 %v2510, %v2494
        %v4527 = vpack.c.b16 %v2511, %v2495
        %v4528 = vpack.c.b16 %v2512, %v2496
        %v4529 = vpack.c.b16 %v2513, %v2497
        %v4530 = vpack.c.b16 %v2514, %v2498
        %v4531 = vpack.c.b16 %v2515, %v2499
        %v4532 = vpack.c.b16 %v2516, %v2500
        %v4533 = vpack.c.b16 %v2517, %v2501
        %v4534 = vpack.c.b16 %v2518, %v2502
        %v4535 = vpack.c.b16 %v2519, %v2503
        %v4536 = vpack.c.b16 %v2520, %v2504
        %v4537 = vpack.c.b16 %v2521, %v2505
        %v4538 = vpack.c.b16 %v2522, %v2506
        %v4539 = vpack.c.b16 %v2523, %v2507
        %v4540 = vpack.c.b16 %v2524, %v2508
        %v4541 = vpack.c.b16 %v2525, %v2509
        %v4542 = vpack.c.b16 %v2542, %v2526
        %v4543 = vpack.c.b16 %v2543, %v2527
        %v4544 = vpack.c.b16 %v2544, %v2528
        %v4545 = vpack.c.b16 %v2545, %v2529
        %v4546 = vpack.c.b16 %v2546, %v2530
        %v4547 = vpack.c.b16 %v2547, %v2531
        %v4548 = vpack.c.b16 %v2548, %v2532
        %v4549 = vpack.c.b16 %v2549, %v2533
        %v4550 = vpack.c.b16 %v2550, %v2534
        %v4551 = vpack.c.b16 %v2551, %v2535
        %v4552 = vpack.c.b16 %v2552, %v2536
        %v4553 = vpack.c.b16 %v2553, %v2537
        %v4554 = vpack.c.b16 %v2554, %v2538
        %v4555 = vpack.c.b16 %v2555, %v2539
        %v4556 = vpack.c.b16 %v2556, %v2540
        %v4557 = vpack.c.b16 %v2557, %v2541
        %v4558 = vpack.c.b16 %v2574, %v2558
        %v4559 = vpack.c.b16 %v2575, %v2559
        %v4560 = vpack.c.b16 %v2576, %v2560
        %v4561 = vpack.c.b16 %v2577, %v2561
        %v4562 = vpack.c.b16 %v2578, %v2562
        %v4563 = vpack.c.b16 %v2579, %v2563
        %v4564 = vpack.c.b16 %v2580, %v2564
        %v4565 = vpack.c.b16 %v2581, %v2565
        %v4566 = vpack.c.b16 %v2582, %v2566
        %v4567 = vpack.c.b16 %v2583, %v2567
        %v4568 = vpack.c.b16 %v2584, %v2568
        %v4569 = vpack.c.b16 %v2585, %v2569
        %v4570 = vpack.c.b16 %v2586, %v2570
        %v4571 = vpack.c.b16 %v2587, %v2571
        %v4572 = vpack.c.b16 %v2588, %v2572
        %v4573 = vpack.c.b16 %v2589, %v2573
        %v4574 = vpack.c.b16 %v2606, %v2590
        %v4575 = vpack.c.b16 %v2607, %v2591
        %v4576 = vpack.c.b16 %v2608, %v2592
        %v4577 = vpack.c.b16 %v2609, %v2593
        %v4578 = vpack.c.b16 %v2610, %v2594
        %v4579 = vpack.c.b16 %v2611, %v2595
        %v4580 = vpack.c.b16 %v2612, %v2596
        %v4581 = vpack.c.b16 %v2613, %v2597
        %v4582 = vpack.c.b16 %v2614, %v2598
        %v4583 = vpack.c.b16 %v2615, %v2599
        %v4584 = vpack.c.b16 %v2616, %v2600
        %v4585 = vpack.c.b16 %v2617, %v2601
        %v4586 = vpack.c.b16 %v2618, %v2602
        %v4587 = vpack.c.b16 %v2619, %v2603
        %v4588 = vpack.c.b16 %v2620, %v2604
        %v4589 = vpack.c.b16 %v2621, %v2605
        %v4590 = vpack.c.b16 %v2638, %v2622
        %v4591 = vpack.c.b16 %v2639, %v2623
        %v4592 = vpack.c.b16 %v2640, %v2624
        %v4593 = vpack.c.b16 %v2641, %v2625
        %v4594 = vpack.c.b16 %v2642, %v2626
        %v4595 = vpack.c.b16 %v2643, %v2627
        %v4596 = vpack.c.b16 %v2644, %v2628
        %v4597 = vpack.c.b16 %v2645, %v2629
        %v4598 = vpack.c.b16 %v2646, %v2630
        %v4599 = vpack.c.b16 %v2647, %v2631
        %v4600 = vpack.c.b16 %v2648, %v2632
        %v4601 = vpack.c.b16 %v2649, %v2633
        %v4602 = vpack.c.b16 %v2650, %v2634
        %v4603 = vpack.c.b16 %v2651, %v2635
        %v4604 = vpack.c.b16 %v2652, %v2636
        %v4605 = vpack.c.b16 %v2653, %v2637
        %v4606 = vpack.c.b16 %v2670, %v2654
        %v4607 = vpack.c.b16 %v2671, %v2655
        %v4608 = vpack.c.b16 %v2672, %v2656
        %v4609 = vpack.c.b16 %v2673, %v2657
        %v4610 = vpack.c.b16 %v2674, %v2658
        %v4611 = vpack.c.b16 %v2675, %v2659
        %v4612 = vpack.c.b16 %v2676, %v2660
        %v4613 = vpack.c.b16 %v2677, %v2661
        %v4614 = vpack.c.b16 %v2678, %v2662
        %v4615 = vpack.c.b16 %v2679, %v2663
        %v4616 = vpack.c.b16 %v2680, %v2664
        %v4617 = vpack.c.b16 %v2681, %v2665
        %v4618 = vpack.c.b16 %v2682, %v2666
        %v4619 = vpack.c.b16 %v2683, %v2667
        %v4620 = vpack.c.b16 %v2684, %v2668
        %v4621 = vpack.c.b16 %v2685, %v2669
        %v4622 = vpack.c.b16 %v2702, %v2686
        %v4623 = vpack.c.b16 %v2703, %v2687
        %v4624 = vpack.c.b16 %v2704, %v2688
        %v4625 = vpack.c.b16 %v2705, %v2689
        %v4626 = vpack.c.b16 %v2706, %v2690
        %v4627 = vpack.c.b16 %v2707, %v2691
        %v4628 = vpack.c.b16 %v2708, %v2692
        %v4629 = vpack.c.b16 %v2709, %v2693
        %v4630 = vpack.c.b16 %v2710, %v2694
        %v4631 = vpack.c.b16 %v2711, %v2695
        %v4632 = vpack.c.b16 %v2712, %v2696
        %v4633 = vpack.c.b16 %v2713, %v2697
        %v4634 = vpack.c.b16 %v2714, %v2698
        %v4635 = vpack.c.b16 %v2715, %v2699
        %v4636 = vpack.c.b16 %v2716, %v2700
        %v4637 = vpack.c.b16 %v2717, %v2701
        %v4638 = vpack.c.b16 %v2734, %v2718
        %v4639 = vpack.c.b16 %v2735, %v2719
        %v4640 = vpack.c.b16 %v2736, %v2720
        %v4641 = vpack.c.b16 %v2737, %v2721
        %v4642 = vpack.c.b16 %v2738, %v2722
        %v4643 = vpack.c.b16 %v2739, %v2723
        %v4644 = vpack.c.b16 %v2740, %v2724
        %v4645 = vpack.c.b16 %v2741, %v2725
        %v4646 = vpack.c.b16 %v2742, %v2726
        %v4647 = vpack.c.b16 %v2743, %v2727
        %v4648 = vpack.c.b16 %v2744, %v2728
        %v4649 = vpack.c.b16 %v2745, %v2729
        %v4650 = vpack.c.b16 %v2746, %v2730
        %v4651 = vpack.c.b16 %v2747, %v2731
        %v4652 = vpack.c.b16 %v2748, %v2732
        %v4653 = vpack.c.b16 %v2749, %v2733
        %v4654 = vpack.c.b16 %v2766, %v2750
        %v4655 = vpack.c.b16 %v2767, %v2751
        %v4656 = vpack.c.b16 %v2768, %v2752
        %v4657 = vpack.c.b16 %v2769, %v2753
        %v4658 = vpack.c.b16 %v2770, %v2754
        %v4659 = vpack.c.b16 %v2771, %v2755
        %v4660 = vpack.c.b16 %v2772, %v2756
        %v4661 = vpack.c.b16 %v2773, %v2757
        %v4662 = vpack.c.b16 %v2774, %v2758
        %v4663 = vpack.c.b16 %v2775, %v2759
        %v4664 = vpack.c.b16 %v2776, %v2760
        %v4665 = vpack.c.b16 %v2777, %v2761
        %v4666 = vpack.c.b16 %v2778, %v2762
        %v4667 = vpack.c.b16 %v2779, %v2763
        %v4668 = vpack.c.b16 %v2780, %v2764
        %v4669 = vpack.c.b16 %v2781, %v2765
        %v4670 = vpack.c.b16 %v2798, %v2782
        %v4671 = vpack.c.b16 %v2799, %v2783
        %v4672 = vpack.c.b16 %v2800, %v2784
        %v4673 = vpack.c.b16 %v2801, %v2785
        %v4674 = vpack.c.b16 %v2802, %v2786
        %v4675 = vpack.c.b16 %v2803, %v2787
        %v4676 = vpack.c.b16 %v2804, %v2788
        %v4677 = vpack.c.b16 %v2805, %v2789
        %v4678 = vpack.c.b16 %v2806, %v2790
        %v4679 = vpack.c.b16 %v2807, %v2791
        %v4680 = vpack.c.b16 %v2808, %v2792
        %v4681 = vpack.c.b16 %v2809, %v2793
        %v4682 = vpack.c.b16 %v2810, %v2794
        %v4683 = vpack.c.b16 %v2811, %v2795
        %v4684 = vpack.c.b16 %v2812, %v2796
        %v4685 = vpack.c.b16 %v2813, %v2797
        %v4686 = vpack.c.b16 %v2830, %v2814
        %v4687 = vpack.c.b16 %v2831, %v2815
        %v4688 = vpack.c.b16 %v2832, %v2816
        %v4689 = vpack.c.b16 %v2833, %v2817
        %v4690 = vpack.c.b16 %v2834, %v2818
        %v4691 = vpack.c.b16 %v2835, %v2819
        %v4692 = vpack.c.b16 %v2836, %v2820
        %v4693 = vpack.c.b16 %v2837, %v2821
        %v4694 = vpack.c.b16 %v2838, %v2822
        %v4695 = vpack.c.b16 %v2839, %v2823
        %v4696 = vpack.c.b16 %v2840, %v2824
        %v4697 = vpack.c.b16 %v2841, %v2825
        %v4698 = vpack.c.b16 %v2842, %v2826
        %v4699 = vpack.c.b16 %v2843, %v2827
        %v4700 = vpack.c.b16 %v2844, %v2828
        %v4701 = vpack.c.b16 %v2845, %v2829
        %v4702 = vpack.c.b16 %v2862, %v2846
        %v4703 = vpack.c.b16 %v2863, %v2847
        %v4704 = vpack.c.b16 %v2864, %v2848
        %v4705 = vpack.c.b16 %v2865, %v2849
        %v4706 = vpack.c.b16 %v2866, %v2850
        %v4707 = vpack.c.b16 %v2867, %v2851
        %v4708 = vpack.c.b16 %v2868, %v2852
        %v4709 = vpack.c.b16 %v2869, %v2853
        %v4710 = vpack.c.b16 %v2870, %v2854
        %v4711 = vpack.c.b16 %v2871, %v2855
        %v4712 = vpack.c.b16 %v2872, %v2856
        %v4713 = vpack.c.b16 %v2873, %v2857
        %v4714 = vpack.c.b16 %v2874, %v2858
        %v4715 = vpack.c.b16 %v2875, %v2859
        %v4716 = vpack.c.b16 %v2876, %v2860
        %v4717 = vpack.c.b16 %v2877, %v2861
        %v4718 = vpack.c.b16 %v2894, %v2878
        %v4719 = vpack.c.b16 %v2895, %v2879
        %v4720 = vpack.c.b16 %v2896, %v2880
        %v4721 = vpack.c.b16 %v2897, %v2881
        %v4722 = vpack.c.b16 %v2898, %v2882
        %v4723 = vpack.c.b16 %v2899, %v2883
        %v4724 = vpack.c.b16 %v2900, %v2884
        %v4725 = vpack.c.b16 %v2901, %v2885
        %v4726 = vpack.c.b16 %v2902, %v2886
        %v4727 = vpack.c.b16 %v2903, %v2887
        %v4728 = vpack.c.b16 %v2904, %v2888
        %v4729 = vpack.c.b16 %v2905, %v2889
        %v4730 = vpack.c.b16 %v2906, %v2890
        %v4731 = vpack.c.b16 %v2907, %v2891
        %v4732 = vpack.c.b16 %v2908, %v2892
        %v4733 = vpack.c.b16 %v2909, %v2893
        %v4734 = vpack.c.b16 %v2926, %v2910
        %v4735 = vpack.c.b16 %v2927, %v2911
        %v4736 = vpack.c.b16 %v2928, %v2912
        %v4737 = vpack.c.b16 %v2929, %v2913
        %v4738 = vpack.c.b16 %v2930, %v2914
        %v4739 = vpack.c.b16 %v2931, %v2915
        %v4740 = vpack.c.b16 %v2932, %v2916
        %v4741 = vpack.c.b16 %v2933, %v2917
        %v4742 = vpack.c.b16 %v2934, %v2918
        %v4743 = vpack.c.b16 %v2935, %v2919
        %v4744 = vpack.c.b16 %v2936, %v2920
        %v4745 = vpack.c.b16 %v2937, %v2921
        %v4746 = vpack.c.b16 %v2938, %v2922
        %v4747 = vpack.c.b16 %v2939, %v2923
        %v4748 = vpack.c.b16 %v2940, %v2924
        %v4749 = vpack.c.b16 %v2941, %v2925
        %v4750 = vpack.c.b16 %v2958, %v2942
        %v4751 = vpack.c.b16 %v2959, %v2943
        %v4752 = vpack.c.b16 %v2960, %v2944
        %v4753 = vpack.c.b16 %v2961, %v2945
        %v4754 = vpack.c.b16 %v2962, %v2946
        %v4755 = vpack.c.b16 %v2963, %v2947
        %v4756 = vpack.c.b16 %v2964, %v2948
        %v4757 = vpack.c.b16 %v2965, %v2949
        %v4758 = vpack.c.b16 %v2966, %v2950
        %v4759 = vpack.c.b16 %v2967, %v2951
        %v4760 = vpack.c.b16 %v2968, %v2952
        %v4761 = vpack.c.b16 %v2969, %v2953
        %v4762 = vpack.c.b16 %v2970, %v2954
        %v4763 = vpack.c.b16 %v2971, %v2955
        %v4764 = vpack.c.b16 %v2972, %v2956
        %v4765 = vpack.c.b16 %v2973, %v2957
        %v4766 = vpack.c.b16 %v2990, %v2974
        %v4767 = vpack.c.b16 %v2991, %v2975
        %v4768 = vpack.c.b16 %v2992, %v2976
        %v4769 = vpack.c.b16 %v2993, %v2977
        %v4770 = vpack.c.b16 %v2994, %v2978
        %v4771 = vpack.c.b16 %v2995, %v2979
        %v4772 = vpack.c.b16 %v2996, %v2980
        %v4773 = vpack.c.b16 %v2997, %v2981
        %v4774 = vpack.c.b16 %v2998, %v2982
        %v4775 = vpack.c.b16 %v2999, %v2983
        %v4776 = vpack.c.b16 %v3000, %v2984
        %v4777 = vpack.c.b16 %v3001, %v2985
        %v4778 = vpack.c.b16 %v3002, %v2986
        %v4779 = vpack.c.b16 %v3003, %v2987
        %v4780 = vpack.c.b16 %v3004, %v2988
        %v4781 = vpack.c.b16 %v3005, %v2989
        %v4782 = vpack.c.b16 %v3022, %v3006
        %v4783 = vpack.c.b16 %v3023, %v3007
        %v4784 = vpack.c.b16 %v3024, %v3008
        %v4785 = vpack.c.b16 %v3025, %v3009
        %v4786 = vpack.c.b16 %v3026, %v3010
        %v4787 = vpack.c.b16 %v3027, %v3011
        %v4788 = vpack.c.b16 %v3028, %v3012
        %v4789 = vpack.c.b16 %v3029, %v3013
        %v4790 = vpack.c.b16 %v3030, %v3014
        %v4791 = vpack.c.b16 %v3031, %v3015
        %v4792 = vpack.c.b16 %v3032, %v3016
        %v4793 = vpack.c.b16 %v3033, %v3017
        %v4794 = vpack.c.b16 %v3034, %v3018
        %v4795 = vpack.c.b16 %v3035, %v3019
        %v4796 = vpack.c.b16 %v3036, %v3020
        %v4797 = vpack.c.b16 %v3037, %v3021
        %v4798 = vpack.c.b16 %v3054, %v3038
        %v4799 = vpack.c.b16 %v3055, %v3039
        %v4800 = vpack.c.b16 %v3056, %v3040
        %v4801 = vpack.c.b16 %v3057, %v3041
        %v4802 = vpack.c.b16 %v3058, %v3042
        %v4803 = vpack.c.b16 %v3059, %v3043
        %v4804 = vpack.c.b16 %v3060, %v3044
        %v4805 = vpack.c.b16 %v3061, %v3045
        %v4806 = vpack.c.b16 %v3062, %v3046
        %v4807 = vpack.c.b16 %v3063, %v3047
        %v4808 = vpack.c.b16 %v3064, %v3048
        %v4809 = vpack.c.b16 %v3065, %v3049
        %v4810 = vpack.c.b16 %v3066, %v3050
        %v4811 = vpack.c.b16 %v3067, %v3051
        %v4812 = vpack.c.b16 %v3068, %v3052
        %v4813 = vpack.c.b16 %v3069, %v3053
        %v4814 = vpack.c.b16 %v3086, %v3070
        %v4815 = vpack.c.b16 %v3087, %v3071
        %v4816 = vpack.c.b16 %v3088, %v3072
        %v4817 = vpack.c.b16 %v3089, %v3073
        %v4818 = vpack.c.b16 %v3090, %v3074
        %v4819 = vpack.c.b16 %v3091, %v3075
        %v4820 = vpack.c.b16 %v3092, %v3076
        %v4821 = vpack.c.b16 %v3093, %v3077
        %v4822 = vpack.c.b16 %v3094, %v3078
        %v4823 = vpack.c.b16 %v3095, %v3079
        %v4824 = vpack.c.b16 %v3096, %v3080
        %v4825 = vpack.c.b16 %v3097, %v3081
        %v4826 = vpack.c.b16 %v3098, %v3082
        %v4827 = vpack.c.b16 %v3099, %v3083
        %v4828 = vpack.c.b16 %v3100, %v3084
        %v4829 = vpack.c.b16 %v3101, %v3085
        %v4830 = vpack.c.b16 %v3118, %v3102
        %v4831 = vpack.c.b16 %v3119, %v3103
        %v4832 = vpack.c.b16 %v3120, %v3104
        %v4833 = vpack.c.b16 %v3121, %v3105
        %v4834 = vpack.c.b16 %v3122, %v3106
        %v4835 = vpack.c.b16 %v3123, %v3107
        %v4836 = vpack.c.b16 %v3124, %v3108
        %v4837 = vpack.c.b16 %v3125, %v3109
        %v4838 = vpack.c.b16 %v3126, %v3110
        %v4839 = vpack.c.b16 %v3127, %v3111
        %v4840 = vpack.c.b16 %v3128, %v3112
        %v4841 = vpack.c.b16 %v3129, %v3113
        %v4842 = vpack.c.b16 %v3130, %v3114
        %v4843 = vpack.c.b16 %v3131, %v3115
        %v4844 = vpack.c.b16 %v3132, %v3116
        %v4845 = vpack.c.b16 %v3133, %v3117
        %v4846 = vpack.c.b16 %v3150, %v3134
        %v4847 = vpack.c.b16 %v3151, %v3135
        %v4848 = vpack.c.b16 %v3152, %v3136
        %v4849 = vpack.c.b16 %v3153, %v3137
        %v4850 = vpack.c.b16 %v3154, %v3138
        %v4851 = vpack.c.b16 %v3155, %v3139
        %v4852 = vpack.c.b16 %v3156, %v3140
        %v4853 = vpack.c.b16 %v3157, %v3141
        %v4854 = vpack.c.b16 %v3158, %v3142
        %v4855 = vpack.c.b16 %v3159, %v3143
        %v4856 = vpack.c.b16 %v3160, %v3144
        %v4857 = vpack.c.b16 %v3161, %v3145
        %v4858 = vpack.c.b16 %v3162, %v3146
        %v4859 = vpack.c.b16 %v3163, %v3147
        %v4860 = vpack.c.b16 %v3164, %v3148
        %v4861 = vpack.c.b16 %v3165, %v3149
        %v4862 = vpack.c.b16 %v3182, %v3166
        %v4863 = vpack.c.b16 %v3183, %v3167
        %v4864 = vpack.c.b16 %v3184, %v3168
        %v4865 = vpack.c.b16 %v3185, %v3169
        %v4866 = vpack.c.b16 %v3186, %v3170
        %v4867 = vpack.c.b16 %v3187, %v3171
        %v4868 = vpack.c.b16 %v3188, %v3172
        %v4869 = vpack.c.b16 %v3189, %v3173
        %v4870 = vpack.c.b16 %v3190, %v3174
        %v4871 = vpack.c.b16 %v3191, %v3175
        %v4872 = vpack.c.b16 %v3192, %v3176
        %v4873 = vpack.c.b16 %v3193, %v3177
        %v4874 = vpack.c.b16 %v3194, %v3178
        %v4875 = vpack.c.b16 %v3195, %v3179
        %v4876 = vpack.c.b16 %v3196, %v3180
        %v4877 = vpack.c.b16 %v3197, %v3181
        %v4878 = vpack.c.b16 %v3214, %v3198
        %v4879 = vpack.c.b16 %v3215, %v3199
        %v4880 = vpack.c.b16 %v3216, %v3200
        %v4881 = vpack.c.b16 %v3217, %v3201
        %v4882 = vpack.c.b16 %v3218, %v3202
        %v4883 = vpack.c.b16 %v3219, %v3203
        %v4884 = vpack.c.b16 %v3220, %v3204
        %v4885 = vpack.c.b16 %v3221, %v3205
        %v4886 = vpack.c.b16 %v3222, %v3206
        %v4887 = vpack.c.b16 %v3223, %v3207
        %v4888 = vpack.c.b16 %v3224, %v3208
        %v4889 = vpack.c.b16 %v3225, %v3209
        %v4890 = vpack.c.b16 %v3226, %v3210
        %v4891 = vpack.c.b16 %v3227, %v3211
        %v4892 = vpack.c.b16 %v3228, %v3212
        %v4893 = vpack.c.b16 %v3229, %v3213
        %v4894 = vpack.c.b16 %v3246, %v3230
        %v4895 = vpack.c.b16 %v3247, %v3231
        %v4896 = vpack.c.b16 %v3248, %v3232
        %v4897 = vpack.c.b16 %v3249, %v3233
        %v4898 = vpack.c.b16 %v3250, %v3234
        %v4899 = vpack.c.b16 %v3251, %v3235
        %v4900 = vpack.c.b16 %v3252, %v3236
        %v4901 = vpack.c.b16 %v3253, %v3237
        %v4902 = vpack.c.b16 %v3254, %v3238
        %v4903 = vpack.c.b16 %v3255, %v3239
        %v4904 = vpack.c.b16 %v3256, %v3240
        %v4905 = vpack.c.b16 %v3257, %v3241
        %v4906 = vpack.c.b16 %v3258, %v3242
        %v4907 = vpack.c.b16 %v3259, %v3243
        %v4908 = vpack.c.b16 %v3260, %v3244
        %v4909 = vpack.c.b16 %v3261, %v3245
        %v4910 = vpack.c.b16 %v3278, %v3262
        %v4911 = vpack.c.b16 %v3279, %v3263
        %v4912 = vpack.c.b16 %v3280, %v3264
        %v4913 = vpack.c.b16 %v3281, %v3265
        %v4914 = vpack.c.b16 %v3282, %v3266
        %v4915 = vpack.c.b16 %v3283, %v3267
        %v4916 = vpack.c.b16 %v3284, %v3268
        %v4917 = vpack.c.b16 %v3285, %v3269
        %v4918 = vpack.c.b16 %v3286, %v3270
        %v4919 = vpack.c.b16 %v3287, %v3271
        %v4920 = vpack.c.b16 %v3288, %v3272
        %v4921 = vpack.c.b16 %v3289, %v3273
        %v4922 = vpack.c.b16 %v3290, %v3274
        %v4923 = vpack.c.b16 %v3291, %v3275
        %v4924 = vpack.c.b16 %v3292, %v3276
        %v4925 = vpack.c.b16 %v3293, %v3277
        %v4926 = vpack.c.b16 %v3310, %v3294
        %v4927 = vpack.c.b16 %v3311, %v3295
        %v4928 = vpack.c.b16 %v3312, %v3296
        %v4929 = vpack.c.b16 %v3313, %v3297
        %v4930 = vpack.c.b16 %v3314, %v3298
        %v4931 = vpack.c.b16 %v3315, %v3299
        %v4932 = vpack.c.b16 %v3316, %v3300
        %v4933 = vpack.c.b16 %v3317, %v3301
        %v4934 = vpack.c.b16 %v3318, %v3302
        %v4935 = vpack.c.b16 %v3319, %v3303
        %v4936 = vpack.c.b16 %v3320, %v3304
        %v4937 = vpack.c.b16 %v3321, %v3305
        %v4938 = vpack.c.b16 %v3322, %v3306
        %v4939 = vpack.c.b16 %v3323, %v3307
        %v4940 = vpack.c.b16 %v3324, %v3308
        %v4941 = vpack.c.b16 %v3325, %v3309
        %v4942 = vpack.c.b16 %v3342, %v3326
        %v4943 = vpack.c.b16 %v3343, %v3327
        %v4944 = vpack.c.b16 %v3344, %v3328
        %v4945 = vpack.c.b16 %v3345, %v3329
        %v4946 = vpack.c.b16 %v3346, %v3330
        %v4947 = vpack.c.b16 %v3347, %v3331
        %v4948 = vpack.c.b16 %v3348, %v3332
        %v4949 = vpack.c.b16 %v3349, %v3333
        %v4950 = vpack.c.b16 %v3350, %v3334
        %v4951 = vpack.c.b16 %v3351, %v3335
        %v4952 = vpack.c.b16 %v3352, %v3336
        %v4953 = vpack.c.b16 %v3353, %v3337
        %v4954 = vpack.c.b16 %v3354, %v3338
        %v4955 = vpack.c.b16 %v3355, %v3339
        %v4956 = vpack.c.b16 %v3356, %v3340
        %v4957 = vpack.c.b16 %v3357, %v3341
        %v4958 = vpack.c.b16 %v3374, %v3358
        %v4959 = vpack.c.b16 %v3375, %v3359
        %v4960 = vpack.c.b16 %v3376, %v3360
        %v4961 = vpack.c.b16 %v3377, %v3361
        %v4962 = vpack.c.b16 %v3378, %v3362
        %v4963 = vpack.c.b16 %v3379, %v3363
        %v4964 = vpack.c.b16 %v3380, %v3364
        %v4965 = vpack.c.b16 %v3381, %v3365
        %v4966 = vpack.c.b16 %v3382, %v3366
        %v4967 = vpack.c.b16 %v3383, %v3367
        %v4968 = vpack.c.b16 %v3384, %v3368
        %v4969 = vpack.c.b16 %v3385, %v3369
        %v4970 = vpack.c.b16 %v3386, %v3370
        %v4971 = vpack.c.b16 %v3387, %v3371
        %v4972 = vpack.c.b16 %v3388, %v3372
        %v4973 = vpack.c.b16 %v3389, %v3373
        %v4974 = vpack.c.b16 %v3406, %v3390
        %v4975 = vpack.c.b16 %v3407, %v3391
        %v4976 = vpack.c.b16 %v3408, %v3392
        %v4977 = vpack.c.b16 %v3409, %v3393
        %v4978 = vpack.c.b16 %v3410, %v3394
        %v4979 = vpack.c.b16 %v3411, %v3395
        %v4980 = vpack.c.b16 %v3412, %v3396
        %v4981 = vpack.c.b16 %v3413, %v3397
        %v4982 = vpack.c.b16 %v3414, %v3398
        %v4983 = vpack.c.b16 %v3415, %v3399
        %v4984 = vpack.c.b16 %v3416, %v3400
        %v4985 = vpack.c.b16 %v3417, %v3401
        %v4986 = vpack.c.b16 %v3418, %v3402
        %v4987 = vpack.c.b16 %v3419, %v3403
        %v4988 = vpack.c.b16 %v3420, %v3404
        %v4989 = vpack.c.b16 %v3421, %v3405
        %v4990 = vpack.c.b16 %v3438, %v3422
        %v4991 = vpack.c.b16 %v3439, %v3423
        %v4992 = vpack.c.b16 %v3440, %v3424
        %v4993 = vpack.c.b16 %v3441, %v3425
        %v4994 = vpack.c.b16 %v3442, %v3426
        %v4995 = vpack.c.b16 %v3443, %v3427
        %v4996 = vpack.c.b16 %v3444, %v3428
        %v4997 = vpack.c.b16 %v3445, %v3429
        %v4998 = vpack.c.b16 %v3446, %v3430
        %v4999 = vpack.c.b16 %v3447, %v3431
        %v5000 = vpack.c.b16 %v3448, %v3432
        %v5001 = vpack.c.b16 %v3449, %v3433
        %v5002 = vpack.c.b16 %v3450, %v3434
        %v5003 = vpack.c.b16 %v3451, %v3435
        %v5004 = vpack.c.b16 %v3452, %v3436
        %v5005 = vpack.c.b16 %v3453, %v3437
        %v5006 = vpack.c.b16 %v3470, %v3454
        %v5007 = vpack.c.b16 %v3471, %v3455
        %v5008 = vpack.c.b16 %v3472, %v3456
        %v5009 = vpack.c.b16 %v3473, %v3457
        %v5010 = vpack.c.b16 %v3474, %v3458
        %v5011 = vpack.c.b16 %v3475, %v3459
        %v5012 = vpack.c.b16 %v3476, %v3460
        %v5013 = vpack.c.b16 %v3477, %v3461
        %v5014 = vpack.c.b16 %v3478, %v3462
        %v5015 = vpack.c.b16 %v3479, %v3463
        %v5016 = vpack.c.b16 %v3480, %v3464
        %v5017 = vpack.c.b16 %v3481, %v3465
        %v5018 = vpack.c.b16 %v3482, %v3466
        %v5019 = vpack.c.b16 %v3483, %v3467
        %v5020 = vpack.c.b16 %v3484, %v3468
        %v5021 = vpack.c.b16 %v3485, %v3469
        %v5022 = vpack.c.b16 %v3502, %v3486
        %v5023 = vpack.c.b16 %v3503, %v3487
        %v5024 = vpack.c.b16 %v3504, %v3488
        %v5025 = vpack.c.b16 %v3505, %v3489
        %v5026 = vpack.c.b16 %v3506, %v3490
        %v5027 = vpack.c.b16 %v3507, %v3491
        %v5028 = vpack.c.b16 %v3508, %v3492
        %v5029 = vpack.c.b16 %v3509, %v3493
        %v5030 = vpack.c.b16 %v3510, %v3494
        %v5031 = vpack.c.b16 %v3511, %v3495
        %v5032 = vpack.c.b16 %v3512, %v3496
        %v5033 = vpack.c.b16 %v3513, %v3497
        %v5034 = vpack.c.b16 %v3514, %v3498
        %v5035 = vpack.c.b16 %v3515, %v3499
        %v5036 = vpack.c.b16 %v3516, %v3500
        %v5037 = vpack.c.b16 %v3517, %v3501
        %v5038 = vpack.c.b16 %v3534, %v3518
        %v5039 = vpack.c.b16 %v3535, %v3519
        %v5040 = vpack.c.b16 %v3536, %v3520
        %v5041 = vpack.c.b16 %v3537, %v3521
        %v5042 = vpack.c.b16 %v3538, %v3522
        %v5043 = vpack.c.b16 %v3539, %v3523
        %v5044 = vpack.c.b16 %v3540, %v3524
        %v5045 = vpack.c.b16 %v3541, %v3525
        %v5046 = vpack.c.b16 %v3542, %v3526
        %v5047 = vpack.c.b16 %v3543, %v3527
        %v5048 = vpack.c.b16 %v3544, %v3528
        %v5049 = vpack.c.b16 %v3545, %v3529
        %v5050 = vpack.c.b16 %v3546, %v3530
        %v5051 = vpack.c.b16 %v3547, %v3531
        %v5052 = vpack.c.b16 %v3548, %v3532
        %v5053 = vpack.c.b16 %v3549, %v3533
        %v5054 = vpack.c.b16 %v3566, %v3550
        %v5055 = vpack.c.b16 %v3567, %v3551
        %v5056 = vpack.c.b16 %v3568, %v3552
        %v5057 = vpack.c.b16 %v3569, %v3553
        %v5058 = vpack.c.b16 %v3570, %v3554
        %v5059 = vpack.c.b16 %v3571, %v3555
        %v5060 = vpack.c.b16 %v3572, %v3556
        %v5061 = vpack.c.b16 %v3573, %v3557
        %v5062 = vpack.c.b16 %v3574, %v3558
        %v5063 = vpack.c.b16 %v3575, %v3559
        %v5064 = vpack.c.b16 %v3576, %v3560
        %v5065 = vpack.c.b16 %v3577, %v3561
        %v5066 = vpack.c.b16 %v3578, %v3562
        %v5067 = vpack.c.b16 %v3579, %v3563
        %v5068 = vpack.c.b16 %v3580, %v3564
        %v5069 = vpack.c.b16 %v3581, %v3565
        %v5070 = vpack.c.b16 %v3598, %v3582
        %v5071 = vpack.c.b16 %v3599, %v3583
        %v5072 = vpack.c.b16 %v3600, %v3584
        %v5073 = vpack.c.b16 %v3601, %v3585
        %v5074 = vpack.c.b16 %v3602, %v3586
        %v5075 = vpack.c.b16 %v3603, %v3587
        %v5076 = vpack.c.b16 %v3604, %v3588
        %v5077 = vpack.c.b16 %v3605, %v3589
        %v5078 = vpack.c.b16 %v3606, %v3590
        %v5079 = vpack.c.b16 %v3607, %v3591
        %v5080 = vpack.c.b16 %v3608, %v3592
        %v5081 = vpack.c.b16 %v3609, %v3593
        %v5082 = vpack.c.b16 %v3610, %v3594
        %v5083 = vpack.c.b16 %v3611, %v3595
        %v5084 = vpack.c.b16 %v3612, %v3596
        %v5085 = vpack.c.b16 %v3613, %v3597
        %v5086 = vpack.c.b16 %v3630, %v3614
        %v5087 = vpack.c.b16 %v3631, %v3615
        %v5088 = vpack.c.b16 %v3632, %v3616
        %v5089 = vpack.c.b16 %v3633, %v3617
        %v5090 = vpack.c.b16 %v3634, %v3618
        %v5091 = vpack.c.b16 %v3635, %v3619
        %v5092 = vpack.c.b16 %v3636, %v3620
        %v5093 = vpack.c.b16 %v3637, %v3621
        %v5094 = vpack.c.b16 %v3638, %v3622
        %v5095 = vpack.c.b16 %v3639, %v3623
        %v5096 = vpack.c.b16 %v3640, %v3624
        %v5097 = vpack.c.b16 %v3641, %v3625
        %v5098 = vpack.c.b16 %v3642, %v3626
        %v5099 = vpack.c.b16 %v3643, %v3627
        %v5100 = vpack.c.b16 %v3644, %v3628
        %v5101 = vpack.c.b16 %v3645, %v3629
        %v5102 = vpack.c.b16 %v3662, %v3646
        %v5103 = vpack.c.b16 %v3663, %v3647
        %v5104 = vpack.c.b16 %v3664, %v3648
        %v5105 = vpack.c.b16 %v3665, %v3649
        %v5106 = vpack.c.b16 %v3666, %v3650
        %v5107 = vpack.c.b16 %v3667, %v3651
        %v5108 = vpack.c.b16 %v3668, %v3652
        %v5109 = vpack.c.b16 %v3669, %v3653
        %v5110 = vpack.c.b16 %v3670, %v3654
        %v5111 = vpack.c.b16 %v3671, %v3655
        %v5112 = vpack.c.b16 %v3672, %v3656
        %v5113 = vpack.c.b16 %v3673, %v3657
        %v5114 = vpack.c.b16 %v3674, %v3658
        %v5115 = vpack.c.b16 %v3675, %v3659
        %v5116 = vpack.c.b16 %v3676, %v3660
        %v5117 = vpack.c.b16 %v3677, %v3661
        %v5118 = vpack.c.b16 %v3694, %v3678
        %v5119 = vpack.c.b16 %v3695, %v3679
        %v5120 = vpack.c.b16 %v3696, %v3680
        %v5121 = vpack.c.b16 %v3697, %v3681
        %v5122 = vpack.c.b16 %v3698, %v3682
        %v5123 = vpack.c.b16 %v3699, %v3683
        %v5124 = vpack.c.b16 %v3700, %v3684
        %v5125 = vpack.c.b16 %v3701, %v3685
        %v5126 = vpack.c.b16 %v3702, %v3686
        %v5127 = vpack.c.b16 %v3703, %v3687
        %v5128 = vpack.c.b16 %v3704, %v3688
        %v5129 = vpack.c.b16 %v3705, %v3689
        %v5130 = vpack.c.b16 %v3706, %v3690
        %v5131 = vpack.c.b16 %v3707, %v3691
        %v5132 = vpack.c.b16 %v3708, %v3692
        %v5133 = vpack.c.b16 %v3709, %v3693
        %v5134 = vpack.c.b16 %v3726, %v3710
        %v5135 = vpack.c.b16 %v3727, %v3711
        %v5136 = vpack.c.b16 %v3728, %v3712
        %v5137 = vpack.c.b16 %v3729, %v3713
        %v5138 = vpack.c.b16 %v3730, %v3714
        %v5139 = vpack.c.b16 %v3731, %v3715
        %v5140 = vpack.c.b16 %v3732, %v3716
        %v5141 = vpack.c.b16 %v3733, %v3717
        %v5142 = vpack.c.b16 %v3734, %v3718
        %v5143 = vpack.c.b16 %v3735, %v3719
        %v5144 = vpack.c.b16 %v3736, %v3720
        %v5145 = vpack.c.b16 %v3737, %v3721
        %v5146 = vpack.c.b16 %v3738, %v3722
        %v5147 = vpack.c.b16 %v3739, %v3723
        %v5148 = vpack.c.b16 %v3740, %v3724
        %v5149 = vpack.c.b16 %v3741, %v3725
        %v5150 = vpack.c.b16 %v3758, %v3742
        %v5151 = vpack.c.b16 %v3759, %v3743
        %v5152 = vpack.c.b16 %v3760, %v3744
        %v5153 = vpack.c.b16 %v3761, %v3745
        %v5154 = vpack.c.b16 %v3762, %v3746
        %v5155 = vpack.c.b16 %v3763, %v3747
        %v5156 = vpack.c.b16 %v3764, %v3748
        %v5157 = vpack.c.b16 %v3765, %v3749
        %v5158 = vpack.c.b16 %v3766, %v3750
        %v5159 = vpack.c.b16 %v3767, %v3751
        %v5160 = vpack.c.b16 %v3768, %v3752
        %v5161 = vpack.c.b16 %v3769, %v3753
        %v5162 = vpack.c.b16 %v3770, %v3754
        %v5163 = vpack.c.b16 %v3771, %v3755
        %v5164 = vpack.c.b16 %v3772, %v3756
        %v5165 = vpack.c.b16 %v3773, %v3757
        %v5166 = vpack.c.b16 %v3790, %v3774
        %v5167 = vpack.c.b16 %v3791, %v3775
        %v5168 = vpack.c.b16 %v3792, %v3776
        %v5169 = vpack.c.b16 %v3793, %v3777
        %v5170 = vpack.c.b16 %v3794, %v3778
        %v5171 = vpack.c.b16 %v3795, %v3779
        %v5172 = vpack.c.b16 %v3796, %v3780
        %v5173 = vpack.c.b16 %v3797, %v3781
        %v5174 = vpack.c.b16 %v3798, %v3782
        %v5175 = vpack.c.b16 %v3799, %v3783
        %v5176 = vpack.c.b16 %v3800, %v3784
        %v5177 = vpack.c.b16 %v3801, %v3785
        %v5178 = vpack.c.b16 %v3802, %v3786
        %v5179 = vpack.c.b16 %v3803, %v3787
        %v5180 = vpack.c.b16 %v3804, %v3788
        %v5181 = vpack.c.b16 %v3805, %v3789
        %v5182 = vpack.c.b16 %v3822, %v3806
        %v5183 = vpack.c.b16 %v3823, %v3807
        %v5184 = vpack.c.b16 %v3824, %v3808
        %v5185 = vpack.c.b16 %v3825, %v3809
        %v5186 = vpack.c.b16 %v3826, %v3810
        %v5187 = vpack.c.b16 %v3827, %v3811
        %v5188 = vpack.c.b16 %v3828, %v3812
        %v5189 = vpack.c.b16 %v3829, %v3813
        %v5190 = vpack.c.b16 %v3830, %v3814
        %v5191 = vpack.c.b16 %v3831, %v3815
        %v5192 = vpack.c.b16 %v3832, %v3816
        %v5193 = vpack.c.b16 %v3833, %v3817
        %v5194 = vpack.c.b16 %v3834, %v3818
        %v5195 = vpack.c.b16 %v3835, %v3819
        %v5196 = vpack.c.b16 %v3836, %v3820
        %v5197 = vpack.c.b16 %v3837, %v3821
        %v5198 = vpack.c.b16 %v3854, %v3838
        %v5199 = vpack.c.b16 %v3855, %v3839
        %v5200 = vpack.c.b16 %v3856, %v3840
        %v5201 = vpack.c.b16 %v3857, %v3841
        %v5202 = vpack.c.b16 %v3858, %v3842
        %v5203 = vpack.c.b16 %v3859, %v3843
        %v5204 = vpack.c.b16 %v3860, %v3844
        %v5205 = vpack.c.b16 %v3861, %v3845
        %v5206 = vpack.c.b16 %v3862, %v3846
        %v5207 = vpack.c.b16 %v3863, %v3847
        %v5208 = vpack.c.b16 %v3864, %v3848
        %v5209 = vpack.c.b16 %v3865, %v3849
        %v5210 = vpack.c.b16 %v3866, %v3850
        %v5211 = vpack.c.b16 %v3867, %v3851
        %v5212 = vpack.c.b16 %v3868, %v3852
        %v5213 = vpack.c.b16 %v3869, %v3853
        %v5214 = vpack.c.b16 %v3886, %v3870
        %v5215 = vpack.c.b16 %v3887, %v3871
        %v5216 = vpack.c.b16 %v3888, %v3872
        %v5217 = vpack.c.b16 %v3889, %v3873
        %v5218 = vpack.c.b16 %v3890, %v3874
        %v5219 = vpack.c.b16 %v3891, %v3875
        %v5220 = vpack.c.b16 %v3892, %v3876
        %v5221 = vpack.c.b16 %v3893, %v3877
        %v5222 = vpack.c.b16 %v3894, %v3878
        %v5223 = vpack.c.b16 %v3895, %v3879
        %v5224 = vpack.c.b16 %v3896, %v3880
        %v5225 = vpack.c.b16 %v3897, %v3881
        %v5226 = vpack.c.b16 %v3898, %v3882
        %v5227 = vpack.c.b16 %v3899, %v3883
        %v5228 = vpack.c.b16 %v3900, %v3884
        %v5229 = vpack.c.b16 %v3901, %v3885
        %v5230 = vpack.c.b16 %v3918, %v3902
        %v5231 = vpack.c.b16 %v3919, %v3903
        %v5232 = vpack.c.b16 %v3920, %v3904
        %v5233 = vpack.c.b16 %v3921, %v3905
        %v5234 = vpack.c.b16 %v3922, %v3906
        %v5235 = vpack.c.b16 %v3923, %v3907
        %v5236 = vpack.c.b16 %v3924, %v3908
        %v5237 = vpack.c.b16 %v3925, %v3909
        %v5238 = vpack.c.b16 %v3926, %v3910
        %v5239 = vpack.c.b16 %v3927, %v3911
        %v5240 = vpack.c.b16 %v3928, %v3912
        %v5241 = vpack.c.b16 %v3929, %v3913
        %v5242 = vpack.c.b16 %v3930, %v3914
        %v5243 = vpack.c.b16 %v3931, %v3915
        %v5244 = vpack.c.b16 %v3932, %v3916
        %v5245 = vpack.c.b16 %v3933, %v3917
        %v5246 = vpack.c.b16 %v3950, %v3934
        %v5247 = vpack.c.b16 %v3951, %v3935
        %v5248 = vpack.c.b16 %v3952, %v3936
        %v5249 = vpack.c.b16 %v3953, %v3937
        %v5250 = vpack.c.b16 %v3954, %v3938
        %v5251 = vpack.c.b16 %v3955, %v3939
        %v5252 = vpack.c.b16 %v3956, %v3940
        %v5253 = vpack.c.b16 %v3957, %v3941
        %v5254 = vpack.c.b16 %v3958, %v3942
        %v5255 = vpack.c.b16 %v3959, %v3943
        %v5256 = vpack.c.b16 %v3960, %v3944
        %v5257 = vpack.c.b16 %v3961, %v3945
        %v5258 = vpack.c.b16 %v3962, %v3946
        %v5259 = vpack.c.b16 %v3963, %v3947
        %v5260 = vpack.c.b16 %v3964, %v3948
        %v5261 = vpack.c.b16 %v3965, %v3949
        %v5262 = vpack.c.b16 %v3982, %v3966
        %v5263 = vpack.c.b16 %v3983, %v3967
        %v5264 = vpack.c.b16 %v3984, %v3968
        %v5265 = vpack.c.b16 %v3985, %v3969
        %v5266 = vpack.c.b16 %v3986, %v3970
        %v5267 = vpack.c.b16 %v3987, %v3971
        %v5268 = vpack.c.b16 %v3988, %v3972
        %v5269 = vpack.c.b16 %v3989, %v3973
        %v5270 = vpack.c.b16 %v3990, %v3974
        %v5271 = vpack.c.b16 %v3991, %v3975
        %v5272 = vpack.c.b16 %v3992, %v3976
        %v5273 = vpack.c.b16 %v3993, %v3977
        %v5274 = vpack.c.b16 %v3994, %v3978
        %v5275 = vpack.c.b16 %v3995, %v3979
        %v5276 = vpack.c.b16 %v3996, %v3980
        %v5277 = vpack.c.b16 %v3997, %v3981
        %v5278 = vpack.c.b16 %v4014, %v3998
        %v5279 = vpack.c.b16 %v4015, %v3999
        %v5280 = vpack.c.b16 %v4016, %v4000
        %v5281 = vpack.c.b16 %v4017, %v4001
        %v5282 = vpack.c.b16 %v4018, %v4002
        %v5283 = vpack.c.b16 %v4019, %v4003
        %v5284 = vpack.c.b16 %v4020, %v4004
        %v5285 = vpack.c.b16 %v4021, %v4005
        %v5286 = vpack.c.b16 %v4022, %v4006
        %v5287 = vpack.c.b16 %v4023, %v4007
        %v5288 = vpack.c.b16 %v4024, %v4008
        %v5289 = vpack.c.b16 %v4025, %v4009
        %v5290 = vpack.c.b16 %v4026, %v4010
        %v5291 = vpack.c.b16 %v4027, %v4011
        %v5292 = vpack.c.b16 %v4028, %v4012
        %v5293 = vpack.c.b16 %v4029, %v4013
        %v5294 = vpack.c.b16 %v4046, %v4030
        %v5295 = vpack.c.b16 %v4047, %v4031
        %v5296 = vpack.c.b16 %v4048, %v4032
        %v5297 = vpack.c.b16 %v4049, %v4033
        %v5298 = vpack.c.b16 %v4050, %v4034
        %v5299 = vpack.c.b16 %v4051, %v4035
        %v5300 = vpack.c.b16 %v4052, %v4036
        %v5301 = vpack.c.b16 %v4053, %v4037
        %v5302 = vpack.c.b16 %v4054, %v4038
        %v5303 = vpack.c.b16 %v4055, %v4039
        %v5304 = vpack.c.b16 %v4056, %v4040
        %v5305 = vpack.c.b16 %v4057, %v4041
        %v5306 = vpack.c.b16 %v4058, %v4042
        %v5307 = vpack.c.b16 %v4059, %v4043
        %v5308 = vpack.c.b16 %v4060, %v4044
        %v5309 = vpack.c.b16 %v4061, %v4045
        %v5310 = vpack.c.b16 %v4078, %v4062
        %v5311 = vpack.c.b16 %v4079, %v4063
        %v5312 = vpack.c.b16 %v4080, %v4064
        %v5313 = vpack.c.b16 %v4081, %v4065
        %v5314 = vpack.c.b16 %v4082, %v4066
        %v5315 = vpack.c.b16 %v4083, %v4067
        %v5316 = vpack.c.b16 %v4084, %v4068
        %v5317 = vpack.c.b16 %v4085, %v4069
        %v5318 = vpack.c.b16 %v4086, %v4070
        %v5319 = vpack.c.b16 %v4087, %v4071
        %v5320 = vpack.c.b16 %v4088, %v4072
        %v5321 = vpack.c.b16 %v4089, %v4073
        %v5322 = vpack.c.b16 %v4090, %v4074
        %v5323 = vpack.c.b16 %v4091, %v4075
        %v5324 = vpack.c.b16 %v4092, %v4076
        %v5325 = vpack.c.b16 %v4093, %v4077
        %v5326 = vpack.c.b16 %v4110, %v4094
        %v5327 = vpack.c.b16 %v4111, %v4095
        %v5328 = vpack.c.b16 %v4112, %v4096
        %v5329 = vpack.c.b16 %v4113, %v4097
        %v5330 = vpack.c.b16 %v4114, %v4098
        %v5331 = vpack.c.b16 %v4115, %v4099
        %v5332 = vpack.c.b16 %v4116, %v4100
        %v5333 = vpack.c.b16 %v4117, %v4101
        %v5334 = vpack.c.b16 %v4118, %v4102
        %v5335 = vpack.c.b16 %v4119, %v4103
        %v5336 = vpack.c.b16 %v4120, %v4104
        %v5337 = vpack.c.b16 %v4121, %v4105
        %v5338 = vpack.c.b16 %v4122, %v4106
        %v5339 = vpack.c.b16 %v4123, %v4107
        %v5340 = vpack.c.b16 %v4124, %v4108
        %v5341 = vpack.c.b16 %v4125, %v4109
        %v5342 = vpack.c.b16 %v4142, %v4126
        %v5343 = vpack.c.b16 %v4143, %v4127
        %v5344 = vpack.c.b16 %v4144, %v4128
        %v5345 = vpack.c.b16 %v4145, %v4129
        %v5346 = vpack.c.b16 %v4146, %v4130
        %v5347 = vpack.c.b16 %v4147, %v4131
        %v5348 = vpack.c.b16 %v4148, %v4132
        %v5349 = vpack.c.b16 %v4149, %v4133
        %v5350 = vpack.c.b16 %v4150, %v4134
        %v5351 = vpack.c.b16 %v4151, %v4135
        %v5352 = vpack.c.b16 %v4152, %v4136
        %v5353 = vpack.c.b16 %v4153, %v4137
        %v5354 = vpack.c.b16 %v4154, %v4138
        %v5355 = vpack.c.b16 %v4155, %v4139
        %v5356 = vpack.c.b16 %v4156, %v4140
        %v5357 = vpack.c.b16 %v4157, %v4141
        %v5358 = vpack.c.b16 %v4174, %v4158
        %v5359 = vpack.c.b16 %v4175, %v4159
        %v5360 = vpack.c.b16 %v4176, %v4160
        %v5361 = vpack.c.b16 %v4177, %v4161
        %v5362 = vpack.c.b16 %v4178, %v4162
        %v5363 = vpack.c.b16 %v4179, %v4163
        %v5364 = vpack.c.b16 %v4180, %v4164
        %v5365 = vpack.c.b16 %v4181, %v4165
        %v5366 = vpack.c.b16 %v4182, %v4166
        %v5367 = vpack.c.b16 %v4183, %v4167
        %v5368 = vpack.c.b16 %v4184, %v4168
        %v5369 = vpack.c.b16 %v4185, %v4169
        %v5370 = vpack.c.b16 %v4186, %v4170
        %v5371 = vpack.c.b16 %v4187, %v4171
        %v5372 = vpack.c.b16 %v4188, %v4172
        %v5373 = vpack.c.b16 %v4189, %v4173
        %v5374 = vpack.c.b16 %v4206, %v4190
        %v5375 = vpack.c.b16 %v4207, %v4191
        %v5376 = vpack.c.b16 %v4208, %v4192
        %v5377 = vpack.c.b16 %v4209, %v4193
        %v5378 = vpack.c.b16 %v4210, %v4194
        %v5379 = vpack.c.b16 %v4211, %v4195
        %v5380 = vpack.c.b16 %v4212, %v4196
        %v5381 = vpack.c.b16 %v4213, %v4197
        %v5382 = vpack.c.b16 %v4214, %v4198
        %v5383 = vpack.c.b16 %v4215, %v4199
        %v5384 = vpack.c.b16 %v4216, %v4200
        %v5385 = vpack.c.b16 %v4217, %v4201
        %v5386 = vpack.c.b16 %v4218, %v4202
        %v5387 = vpack.c.b16 %v4219, %v4203
        %v5388 = vpack.c.b16 %v4220, %v4204
        %v5389 = vpack.c.b16 %v4221, %v4205
        %v5390 = vpack.c.b16 %v4238, %v4222
        %v5391 = vpack.c.b16 %v4239, %v4223
        %v5392 = vpack.c.b16 %v4240, %v4224
        %v5393 = vpack.c.b16 %v4241, %v4225
        %v5394 = vpack.c.b16 %v4242, %v4226
        %v5395 = vpack.c.b16 %v4243, %v4227
        %v5396 = vpack.c.b16 %v4244, %v4228
        %v5397 = vpack.c.b16 %v4245, %v4229
        %v5398 = vpack.c.b16 %v4246, %v4230
        %v5399 = vpack.c.b16 %v4247, %v4231
        %v5400 = vpack.c.b16 %v4248, %v4232
        %v5401 = vpack.c.b16 %v4249, %v4233
        %v5402 = vpack.c.b16 %v4250, %v4234
        %v5403 = vpack.c.b16 %v4251, %v4235
        %v5404 = vpack.c.b16 %v4252, %v4236
        %v5405 = vpack.c.b16 %v4253, %v4237
        %v5406 = vpack.c.b16 %v4270, %v4254
        %v5407 = vpack.c.b16 %v4271, %v4255
        %v5408 = vpack.c.b16 %v4272, %v4256
        %v5409 = vpack.c.b16 %v4273, %v4257
        %v5410 = vpack.c.b16 %v4274, %v4258
        %v5411 = vpack.c.b16 %v4275, %v4259
        %v5412 = vpack.c.b16 %v4276, %v4260
        %v5413 = vpack.c.b16 %v4277, %v4261
        %v5414 = vpack.c.b16 %v4278, %v4262
        %v5415 = vpack.c.b16 %v4279, %v4263
        %v5416 = vpack.c.b16 %v4280, %v4264
        %v5417 = vpack.c.b16 %v4281, %v4265
        %v5418 = vpack.c.b16 %v4282, %v4266
        %v5419 = vpack.c.b16 %v4283, %v4267
        %v5420 = vpack.c.b16 %v4284, %v4268
        %v5421 = vpack.c.b16 %v4285, %v4269
        %v5422 = vpack.c.b16 %v4302, %v4286
        %v5423 = vpack.c.b16 %v4303, %v4287
        %v5424 = vpack.c.b16 %v4304, %v4288
        %v5425 = vpack.c.b16 %v4305, %v4289
        %v5426 = vpack.c.b16 %v4306, %v4290
        %v5427 = vpack.c.b16 %v4307, %v4291
        %v5428 = vpack.c.b16 %v4308, %v4292
        %v5429 = vpack.c.b16 %v4309, %v4293
        %v5430 = vpack.c.b16 %v4310, %v4294
        %v5431 = vpack.c.b16 %v4311, %v4295
        %v5432 = vpack.c.b16 %v4312, %v4296
        %v5433 = vpack.c.b16 %v4313, %v4297
        %v5434 = vpack.c.b16 %v4314, %v4298
        %v5435 = vpack.c.b16 %v4315, %v4299
        %v5436 = vpack.c.b16 %v4316, %v4300
        %v5437 = vpack.c.b16 %v4317, %v4301
        %v5438 = vpack.c.b16 %v4334, %v4318
        %v5439 = vpack.c.b16 %v4335, %v4319
        %v5440 = vpack.c.b16 %v4336, %v4320
        %v5441 = vpack.c.b16 %v4337, %v4321
        %v5442 = vpack.c.b16 %v4338, %v4322
        %v5443 = vpack.c.b16 %v4339, %v4323
        %v5444 = vpack.c.b16 %v4340, %v4324
        %v5445 = vpack.c.b16 %v4341, %v4325
        %v5446 = vpack.c.b16 %v4342, %v4326
        %v5447 = vpack.c.b16 %v4343, %v4327
        %v5448 = vpack.c.b16 %v4344, %v4328
        %v5449 = vpack.c.b16 %v4345, %v4329
        %v5450 = vpack.c.b16 %v4346, %v4330
        %v5451 = vpack.c.b16 %v4347, %v4331
        %v5452 = vpack.c.b16 %v4348, %v4332
        %v5453 = vpack.c.b16 %v4349, %v4333
        %v5454 = vpack.c.b16 %v4366, %v4350
        %v5455 = vpack.c.b16 %v4367, %v4351
        %v5456 = vpack.c.b16 %v4368, %v4352
        %v5457 = vpack.c.b16 %v4369, %v4353
        %v5458 = vpack.c.b16 %v4370, %v4354
        %v5459 = vpack.c.b16 %v4371, %v4355
        %v5460 = vpack.c.b16 %v4372, %v4356
        %v5461 = vpack.c.b16 %v4373, %v4357
        %v5462 = vpack.c.b16 %v4374, %v4358
        %v5463 = vpack.c.b16 %v4375, %v4359
        %v5464 = vpack.c.b16 %v4376, %v4360
        %v5465 = vpack.c.b16 %v4377, %v4361
        %v5466 = vpack.c.b16 %v4378, %v4362
        %v5467 = vpack.c.b16 %v4379, %v4363
        %v5468 = vpack.c.b16 %v4380, %v4364
        %v5469 = vpack.c.b16 %v4381, %v4365
        %v5470 = vpack.c.b16 %v4398, %v4382
        %v5471 = vpack.c.b16 %v4399, %v4383
        %v5472 = vpack.c.b16 %v4400, %v4384
        %v5473 = vpack.c.b16 %v4401, %v4385
        %v5474 = vpack.c.b16 %v4402, %v4386
        %v5475 = vpack.c.b16 %v4403, %v4387
        %v5476 = vpack.c.b16 %v4404, %v4388
        %v5477 = vpack.c.b16 %v4405, %v4389
        %v5478 = vpack.c.b16 %v4406, %v4390
        %v5479 = vpack.c.b16 %v4407, %v4391
        %v5480 = vpack.c.b16 %v4408, %v4392
        %v5481 = vpack.c.b16 %v4409, %v4393
        %v5482 = vpack.c.b16 %v4410, %v4394
        %v5483 = vpack.c.b16 %v4411, %v4395
        %v5484 = vpack.c.b16 %v4412, %v4396
        %v5485 = vpack.c.b16 %v4413, %v4397
        %v5486 = vpack.c.b16 %v4430, %v4414
        %v5487 = vpack.c.b16 %v4431, %v4415
        %v5488 = vpack.c.b16 %v4432, %v4416
        %v5489 = vpack.c.b16 %v4433, %v4417
        %v5490 = vpack.c.b16 %v4434, %v4418
        %v5491 = vpack.c.b16 %v4435, %v4419
        %v5492 = vpack.c.b16 %v4436, %v4420
        %v5493 = vpack.c.b16 %v4437, %v4421
        %v5494 = vpack.c.b16 %v4438, %v4422
        %v5495 = vpack.c.b16 %v4439, %v4423
        %v5496 = vpack.c.b16 %v4440, %v4424
        %v5497 = vpack.c.b16 %v4441, %v4425
        %v5498 = vpack.c.b16 %v4442, %v4426
        %v5499 = vpack.c.b16 %v4443, %v4427
        %v5500 = vpack.c.b16 %v4444, %v4428
        %v5501 = vpack.c.b16 %v4445, %v4429
        %v5502 = vpack.c.b16 %v4462, %v4446
        %v5503 = vpack.c.b16 %v4463, %v4447
        %v5504 = vpack.c.b16 %v4464, %v4448
        %v5505 = vpack.c.b16 %v4465, %v4449
        %v5506 = vpack.c.b16 %v4466, %v4450
        %v5507 = vpack.c.b16 %v4467, %v4451
        %v5508 = vpack.c.b16 %v4468, %v4452
        %v5509 = vpack.c.b16 %v4469, %v4453
        %v5510 = vpack.c.b16 %v4470, %v4454
        %v5511 = vpack.c.b16 %v4471, %v4455
        %v5512 = vpack.c.b16 %v4472, %v4456
        %v5513 = vpack.c.b16 %v4473, %v4457
        %v5514 = vpack.c.b16 %v4474, %v4458
        %v5515 = vpack.c.b16 %v4475, %v4459
        %v5516 = vpack.c.b16 %v4476, %v4460
        %v5517 = vpack.c.b16 %v4477, %v4461
        %v5518 = vpack.c.b16 %v4494, %v4478
        %v5519 = vpack.c.b16 %v4495, %v4479
        %v5520 = vpack.c.b16 %v4496, %v4480
        %v5521 = vpack.c.b16 %v4497, %v4481
        %v5522 = vpack.c.b16 %v4498, %v4482
        %v5523 = vpack.c.b16 %v4499, %v4483
        %v5524 = vpack.c.b16 %v4500, %v4484
        %v5525 = vpack.c.b16 %v4501, %v4485
        %v5526 = vpack.c.b16 %v4502, %v4486
        %v5527 = vpack.c.b16 %v4503, %v4487
        %v5528 = vpack.c.b16 %v4504, %v4488
        %v5529 = vpack.c.b16 %v4505, %v4489
        %v5530 = vpack.c.b16 %v4506, %v4490
        %v5531 = vpack.c.b16 %v4507, %v4491
        %v5532 = vpack.c.b16 %v4508, %v4492
        %v5533 = vpack.c.b16 %v4509, %v4493
        %6558 = vmatprep.subr.bf16.mxu0 %v4511
        %6559 = vmatpush1.bf16.msra.mxu0 %v4510
        %6560 = vmatprep.subr.bf16.mxu0 %v4527
        %6561 = vmatpush1.bf16.msra.mxu0 %v4526
        %6562 = vmatprep.subr.bf16.mxu0 %v4543
        %6563 = vmatpush1.bf16.msra.mxu0 %v4542
        %6564 = vmatprep.subr.bf16.mxu0 %v4559
        %6565 = vmatpush1.bf16.msra.mxu0 %v4558
        %6566 = vmatprep.subr.bf16.mxu0 %v4575
        %6567 = vmatpush1.bf16.msra.mxu0 %v4574
        %6568 = vmatprep.subr.bf16.mxu0 %v4591
        %6569 = vmatpush1.bf16.msra.mxu0 %v4590
        %6570 = vmatprep.subr.bf16.mxu0 %v4607
        %6571 = vmatpush1.bf16.msra.mxu0 %v4606
        %6572 = vmatprep.subr.bf16.mxu0 %v4623
        %6573 = vmatpush1.bf16.msra.mxu0 %v4622
        %6574 = vmatprep.subr.bf16.mxu0 %v4639
        %6575 = vmatpush1.bf16.msra.mxu0 %v4638
        %6576 = vmatprep.subr.bf16.mxu0 %v4655
        %6577 = vmatpush1.bf16.msra.mxu0 %v4654
        %6578 = vmatprep.subr.bf16.mxu0 %v4671
        %6579 = vmatpush1.bf16.msra.mxu0 %v4670
        %6580 = vmatprep.subr.bf16.mxu0 %v4687
        %6581 = vmatpush1.bf16.msra.mxu0 %v4686
        %6582 = vmatprep.subr.bf16.mxu0 %v4703
        %6583 = vmatpush1.bf16.msra.mxu0 %v4702
        %6584 = vmatprep.subr.bf16.mxu0 %v4719
        %6585 = vmatpush1.bf16.msra.mxu0 %v4718
        %6586 = vmatprep.subr.bf16.mxu0 %v4735
        %6587 = vmatpush1.bf16.msra.mxu0 %v4734
        %6588 = vmatprep.subr.bf16.mxu0 %v4751
        %6589 = vmatpush1.bf16.msra.mxu0 %v4750
        %6590 = vmatprep.mubr.bf16.mxu0 %v1411
        %6591 = vmatmul.mubr.bf16.gmra.mrb[0].mxu0 %v1403
        %v6592 = vpop.f32.mrb[0].mxu0
        %v6593 = vadd.f32 %v1317, %v6592
        %v6594 = vpop.f32.mrb[0].mxu0
        %v6595 = vadd.f32 %v1321, %v6594
        %v6596 = vpop.f32.mrb[0].mxu0
        %v6597 = vpop.f32.mrb[0].mxu0
        %6598 = vdwg.mxu0
        %6599 = vmatprep.subr.bf16.mxu0 %v4767
        %6600 = vmatpush1.bf16.msra.mxu0 %v4766
        %6601 = vmatprep.subr.bf16.mxu0 %v4783
        %6602 = vmatpush1.bf16.msra.mxu0 %v4782
        %6603 = vmatprep.subr.bf16.mxu0 %v4799
        %6604 = vmatpush1.bf16.msra.mxu0 %v4798
        %6605 = vmatprep.subr.bf16.mxu0 %v4815
        %6606 = vmatpush1.bf16.msra.mxu0 %v4814
        %6607 = vmatprep.subr.bf16.mxu0 %v4831
        %6608 = vmatpush1.bf16.msra.mxu0 %v4830
        %6609 = vmatprep.subr.bf16.mxu0 %v4847
        %6610 = vmatpush1.bf16.msra.mxu0 %v4846
        %6611 = vmatprep.subr.bf16.mxu0 %v4863
        %6612 = vmatpush1.bf16.msra.mxu0 %v4862
        %6613 = vmatprep.subr.bf16.mxu0 %v4879
        %6614 = vmatpush1.bf16.msra.mxu0 %v4878
        %6615 = vmatprep.subr.bf16.mxu0 %v4895
        %6616 = vmatpush1.bf16.msra.mxu0 %v4894
        %6617 = vmatprep.subr.bf16.mxu0 %v4911
        %6618 = vmatpush1.bf16.msra.mxu0 %v4910
        %6619 = vmatprep.subr.bf16.mxu0 %v4927
        %6620 = vmatpush1.bf16.msra.mxu0 %v4926
        %6621 = vmatprep.subr.bf16.mxu0 %v4943
        %6622 = vmatpush1.bf16.msra.mxu0 %v4942
        %6623 = vmatprep.subr.bf16.mxu0 %v4959
        %6624 = vmatpush1.bf16.msra.mxu0 %v4958
        %6625 = vmatprep.subr.bf16.mxu0 %v4975
        %6626 = vmatpush1.bf16.msra.mxu0 %v4974
        %6627 = vmatprep.subr.bf16.mxu0 %v4991
        %6628 = vmatpush1.bf16.msra.mxu0 %v4990
        %6629 = vmatprep.subr.bf16.mxu0 %v5007
        %6630 = vmatpush1.bf16.msra.mxu0 %v5006
        %6631 = vmatprep.mubr.bf16.mxu0 %v1412
        %6632 = vmatmul.mubr.bf16.gmra.mrb[0].mxu0 %v1410
        %v6633 = vpop.f32.mrb[0].mxu0
        %v6634 = vadd.f32 %v6593, %v6633
        %v6635 = vpop.f32.mrb[0].mxu0
        %v6636 = vadd.f32 %v6595, %v6635
        %v6637 = vpop.f32.mrb[0].mxu0
        %v6638 = vpop.f32.mrb[0].mxu0
        %6639 = vdwg.mxu0
        %6640 = vmatprep.subr.bf16.mxu0 %v5023
        %6641 = vmatpush1.bf16.msra.mxu0 %v5022
        %6642 = vmatprep.subr.bf16.mxu0 %v5039
        %6643 = vmatpush1.bf16.msra.mxu0 %v5038
        %6644 = vmatprep.subr.bf16.mxu0 %v5055
        %6645 = vmatpush1.bf16.msra.mxu0 %v5054
        %6646 = vmatprep.subr.bf16.mxu0 %v5071
        %6647 = vmatpush1.bf16.msra.mxu0 %v5070
        %6648 = vmatprep.subr.bf16.mxu0 %v5087
        %6649 = vmatpush1.bf16.msra.mxu0 %v5086
        %6650 = vmatprep.subr.bf16.mxu0 %v5103
        %6651 = vmatpush1.bf16.msra.mxu0 %v5102
        %6652 = vmatprep.subr.bf16.mxu0 %v5119
        %6653 = vmatpush1.bf16.msra.mxu0 %v5118
        %6654 = vmatprep.subr.bf16.mxu0 %v5135
        %6655 = vmatpush1.bf16.msra.mxu0 %v5134
        %6656 = vmatprep.subr.bf16.mxu0 %v5151
        %6657 = vmatpush1.bf16.msra.mxu0 %v5150
        %6658 = vmatprep.subr.bf16.mxu0 %v5167
        %6659 = vmatpush1.bf16.msra.mxu0 %v5166
        %6660 = vmatprep.subr.bf16.mxu0 %v5183
        %6661 = vmatpush1.bf16.msra.mxu0 %v5182
        %6662 = vmatprep.subr.bf16.mxu0 %v5199
        %6663 = vmatpush1.bf16.msra.mxu0 %v5198
        %6664 = vmatprep.subr.bf16.mxu0 %v5215
        %6665 = vmatpush1.bf16.msra.mxu0 %v5214
        %6666 = vmatprep.subr.bf16.mxu0 %v5231
        %6667 = vmatpush1.bf16.msra.mxu0 %v5230
        %6668 = vmatprep.subr.bf16.mxu0 %v5247
        %6669 = vmatpush1.bf16.msra.mxu0 %v5246
        %6670 = vmatprep.subr.bf16.mxu0 %v5263
        %6671 = vmatpush1.bf16.msra.mxu0 %v5262
        %6672 = vmatprep.mubr.bf16.mxu0 %v1428
        %6673 = vmatmul.mubr.bf16.gmra.mrb[0].mxu0 %v1420
        %v6674 = vpop.f32.mrb[0].mxu0
        %v6675 = vadd.f32 %v6634, %v6674
        %v6676 = vpop.f32.mrb[0].mxu0
        %v6677 = vadd.f32 %v6636, %v6676
        %v6678 = vpop.f32.mrb[0].mxu0
        %v6679 = vpop.f32.mrb[0].mxu0
        %6680 = vdwg.mxu0
        %6681 = vmatprep.subr.bf16.mxu0 %v5279
        %6682 = vmatpush1.bf16.msra.mxu0 %v5278
        %6683 = vmatprep.subr.bf16.mxu0 %v5295
        %6684 = vmatpush1.bf16.msra.mxu0 %v5294
        %6685 = vmatprep.subr.bf16.mxu0 %v5311
        %6686 = vmatpush1.bf16.msra.mxu0 %v5310
        %6687 = vmatprep.subr.bf16.mxu0 %v5327
        %6688 = vmatpush1.bf16.msra.mxu0 %v5326
        %6689 = vmatprep.subr.bf16.mxu0 %v5343
        %6690 = vmatpush1.bf16.msra.mxu0 %v5342
        %6691 = vmatprep.subr.bf16.mxu0 %v5359
        %6692 = vmatpush1.bf16.msra.mxu0 %v5358
        %6693 = vmatprep.subr.bf16.mxu0 %v5375
        %6694 = vmatpush1.bf16.msra.mxu0 %v5374
        %6695 = vmatprep.subr.bf16.mxu0 %v5391
        %6696 = vmatpush1.bf16.msra.mxu0 %v5390
        %6697 = vmatprep.subr.bf16.mxu0 %v5407
        %6698 = vmatpush1.bf16.msra.mxu0 %v5406
        %6699 = vmatprep.subr.bf16.mxu0 %v5423
        %6700 = vmatpush1.bf16.msra.mxu0 %v5422
        %6701 = vmatprep.subr.bf16.mxu0 %v5439
        %6702 = vmatpush1.bf16.msra.mxu0 %v5438
        %6703 = vmatprep.subr.bf16.mxu0 %v5455
        %6704 = vmatpush1.bf16.msra.mxu0 %v5454
        %6705 = vmatprep.subr.bf16.mxu0 %v5471
        %6706 = vmatpush1.bf16.msra.mxu0 %v5470
        %6707 = vmatprep.subr.bf16.mxu0 %v5487
        %6708 = vmatpush1.bf16.msra.mxu0 %v5486
        %6709 = vmatprep.subr.bf16.mxu0 %v5503
        %6710 = vmatpush1.bf16.msra.mxu0 %v5502
        %6711 = vmatprep.subr.bf16.mxu0 %v5519
        %6712 = vmatpush1.bf16.msra.mxu0 %v5518
        %6713 = vmatprep.mubr.bf16.mxu0 %v1429
        %6714 = vmatmul.mubr.bf16.gmra.mrb[0].mxu0 %v1427
        %v6715 = vpop.f32.mrb[0].mxu0
        %v6716 = vadd.f32 %v6675, %v6715
        %v6717 = vpop.f32.mrb[0].mxu0
        %v6718 = vadd.f32 %v6677, %v6717
        %v6719 = vpop.f32.mrb[0].mxu0
        %v6720 = vpop.f32.mrb[0].mxu0
        %6721 = vdwg.mxu0
        %6722 = vmatprep.subr.bf16.mxu0 %v4513
        %6723 = vmatpush1.bf16.msra.mxu0 %v4512
        %6724 = vmatprep.subr.bf16.mxu0 %v4529
        %6725 = vmatpush1.bf16.msra.mxu0 %v4528
        %6726 = vmatprep.subr.bf16.mxu0 %v4545
        %6727 = vmatpush1.bf16.msra.mxu0 %v4544
        %6728 = vmatprep.subr.bf16.mxu0 %v4561
        %6729 = vmatpush1.bf16.msra.mxu0 %v4560
        %6730 = vmatprep.subr.bf16.mxu0 %v4577
        %6731 = vmatpush1.bf16.msra.mxu0 %v4576
        %6732 = vmatprep.subr.bf16.mxu0 %v4593
        %6733 = vmatpush1.bf16.msra.mxu0 %v4592
        %6734 = vmatprep.subr.bf16.mxu0 %v4609
        %6735 = vmatpush1.bf16.msra.mxu0 %v4608
        %6736 = vmatprep.subr.bf16.mxu0 %v4625
        %6737 = vmatpush1.bf16.msra.mxu0 %v4624
        %6738 = vmatprep.subr.bf16.mxu0 %v4641
        %6739 = vmatpush1.bf16.msra.mxu0 %v4640
        %6740 = vmatprep.subr.bf16.mxu0 %v4657
        %6741 = vmatpush1.bf16.msra.mxu0 %v4656
        %6742 = vmatprep.subr.bf16.mxu0 %v4673
        %6743 = vmatpush1.bf16.msra.mxu0 %v4672
        %6744 = vmatprep.subr.bf16.mxu0 %v4689
        %6745 = vmatpush1.bf16.msra.mxu0 %v4688
        %6746 = vmatprep.subr.bf16.mxu0 %v4705
        %6747 = vmatpush1.bf16.msra.mxu0 %v4704
        %6748 = vmatprep.subr.bf16.mxu0 %v4721
        %6749 = vmatpush1.bf16.msra.mxu0 %v4720
        %6750 = vmatprep.subr.bf16.mxu0 %v4737
        %6751 = vmatpush1.bf16.msra.mxu0 %v4736
        %6752 = vmatprep.subr.bf16.mxu0 %v4753
        %6753 = vmatpush1.bf16.msra.mxu0 %v4752
        %6754 = vmatprep.mubr.bf16.mxu0 %v1411
        %6755 = vmatmul.mubr.bf16.gmra.mrb[0].mxu0 %v1403
        %v6756 = vpop.f32.mrb[0].mxu0
        %v6757 = vadd.f32 %v1325, %v6756
        %v6758 = vpop.f32.mrb[0].mxu0
        %v6759 = vadd.f32 %v1329, %v6758
        %v6760 = vpop.f32.mrb[0].mxu0
        %v6761 = vpop.f32.mrb[0].mxu0
        %6762 = vdwg.mxu0
        %6763 = vmatprep.subr.bf16.mxu0 %v4769
        %6764 = vmatpush1.bf16.msra.mxu0 %v4768
        %6765 = vmatprep.subr.bf16.mxu0 %v4785
        %6766 = vmatpush1.bf16.msra.mxu0 %v4784
        %6767 = vmatprep.subr.bf16.mxu0 %v4801
        %6768 = vmatpush1.bf16.msra.mxu0 %v4800
        %6769 = vmatprep.subr.bf16.mxu0 %v4817
        %6770 = vmatpush1.bf16.msra.mxu0 %v4816
        %6771 = vmatprep.subr.bf16.mxu0 %v4833
        %6772 = vmatpush1.bf16.msra.mxu0 %v4832
        %6773 = vmatprep.subr.bf16.mxu0 %v4849
        %6774 = vmatpush1.bf16.msra.mxu0 %v4848
        %6775 = vmatprep.subr.bf16.mxu0 %v4865
        %6776 = vmatpush1.bf16.msra.mxu0 %v4864
        %6777 = vmatprep.subr.bf16.mxu0 %v4881
        %6778 = vmatpush1.bf16.msra.mxu0 %v4880
        %6779 = vmatprep.subr.bf16.mxu0 %v4897
        %6780 = vmatpush1.bf16.msra.mxu0 %v4896
        %6781 = vmatprep.subr.bf16.mxu0 %v4913
        %6782 = vmatpush1.bf16.msra.mxu0 %v4912
        %6783 = vmatprep.subr.bf16.mxu0 %v4929
        %6784 = vmatpush1.bf16.msra.mxu0 %v4928
        %6785 = vmatprep.subr.bf16.mxu0 %v4945
        %6786 = vmatpush1.bf16.msra.mxu0 %v4944
        %6787 = vmatprep.subr.bf16.mxu0 %v4961
        %6788 = vmatpush1.bf16.msra.mxu0 %v4960
        %6789 = vmatprep.subr.bf16.mxu0 %v4977
        %6790 = vmatpush1.bf16.msra.mxu0 %v4976
        %6791 = vmatprep.subr.bf16.mxu0 %v4993
        %6792 = vmatpush1.bf16.msra.mxu0 %v4992
        %6793 = vmatprep.subr.bf16.mxu0 %v5009
        %6794 = vmatpush1.bf16.msra.mxu0 %v5008
        %6795 = vmatprep.mubr.bf16.mxu0 %v1412
        %6796 = vmatmul.mubr.bf16.gmra.mrb[0].mxu0 %v1410
        %v6797 = vpop.f32.mrb[0].mxu0
        %v6798 = vadd.f32 %v6757, %v6797
        %v6799 = vpop.f32.mrb[0].mxu0
        %v6800 = vadd.f32 %v6759, %v6799
        %v6801 = vpop.f32.mrb[0].mxu0
        %v6802 = vpop.f32.mrb[0].mxu0
        %6803 = vdwg.mxu0
        %6804 = vmatprep.subr.bf16.mxu0 %v5025
        %6805 = vmatpush1.bf16.msra.mxu0 %v5024
        %6806 = vmatprep.subr.bf16.mxu0 %v5041
        %6807 = vmatpush1.bf16.msra.mxu0 %v5040
        %6808 = vmatprep.subr.bf16.mxu0 %v5057
        %6809 = vmatpush1.bf16.msra.mxu0 %v5056
        %6810 = vmatprep.subr.bf16.mxu0 %v5073
        %6811 = vmatpush1.bf16.msra.mxu0 %v5072
        %6812 = vmatprep.subr.bf16.mxu0 %v5089
        %6813 = vmatpush1.bf16.msra.mxu0 %v5088
        %6814 = vmatprep.subr.bf16.mxu0 %v5105
        %6815 = vmatpush1.bf16.msra.mxu0 %v5104
        %6816 = vmatprep.subr.bf16.mxu0 %v5121
        %6817 = vmatpush1.bf16.msra.mxu0 %v5120
        %6818 = vmatprep.subr.bf16.mxu0 %v5137
        %6819 = vmatpush1.bf16.msra.mxu0 %v5136
        %6820 = vmatprep.subr.bf16.mxu0 %v5153
        %6821 = vmatpush1.bf16.msra.mxu0 %v5152
        %6822 = vmatprep.subr.bf16.mxu0 %v5169
        %6823 = vmatpush1.bf16.msra.mxu0 %v5168
        %6824 = vmatprep.subr.bf16.mxu0 %v5185
        %6825 = vmatpush1.bf16.msra.mxu0 %v5184
        %6826 = vmatprep.subr.bf16.mxu0 %v5201
        %6827 = vmatpush1.bf16.msra.mxu0 %v5200
        %6828 = vmatprep.subr.bf16.mxu0 %v5217
        %6829 = vmatpush1.bf16.msra.mxu0 %v5216
        %6830 = vmatprep.subr.bf16.mxu0 %v5233
        %6831 = vmatpush1.bf16.msra.mxu0 %v5232
        %6832 = vmatprep.subr.bf16.mxu0 %v5249
        %6833 = vmatpush1.bf16.msra.mxu0 %v5248
        %6834 = vmatprep.subr.bf16.mxu0 %v5265
        %6835 = vmatpush1.bf16.msra.mxu0 %v5264
        %6836 = vmatprep.mubr.bf16.mxu0 %v1428
        %6837 = vmatmul.mubr.bf16.gmra.mrb[0].mxu0 %v1420
        %v6838 = vpop.f32.mrb[0].mxu0
        %v6839 = vadd.f32 %v6798, %v6838
        %v6840 = vpop.f32.mrb[0].mxu0
        %v6841 = vadd.f32 %v6800, %v6840
        %v6842 = vpop.f32.mrb[0].mxu0
        %v6843 = vpop.f32.mrb[0].mxu0
        %6844 = vdwg.mxu0
        %6845 = vmatprep.subr.bf16.mxu0 %v5281
        %6846 = vmatpush1.bf16.msra.mxu0 %v5280
        %6847 = vmatprep.subr.bf16.mxu0 %v5297
        %6848 = vmatpush1.bf16.msra.mxu0 %v5296
        %6849 = vmatprep.subr.bf16.mxu0 %v5313
        %6850 = vmatpush1.bf16.msra.mxu0 %v5312
        %6851 = vmatprep.subr.bf16.mxu0 %v5329
        %6852 = vmatpush1.bf16.msra.mxu0 %v5328
        %6853 = vmatprep.subr.bf16.mxu0 %v5345
        %6854 = vmatpush1.bf16.msra.mxu0 %v5344
        %6855 = vmatprep.subr.bf16.mxu0 %v5361
        %6856 = vmatpush1.bf16.msra.mxu0 %v5360
        %6857 = vmatprep.subr.bf16.mxu0 %v5377
        %6858 = vmatpush1.bf16.msra.mxu0 %v5376
        %6859 = vmatprep.subr.bf16.mxu0 %v5393
        %6860 = vmatpush1.bf16.msra.mxu0 %v5392
        %6861 = vmatprep.subr.bf16.mxu0 %v5409
        %6862 = vmatpush1.bf16.msra.mxu0 %v5408
        %6863 = vmatprep.subr.bf16.mxu0 %v5425
        %6864 = vmatpush1.bf16.msra.mxu0 %v5424
        %6865 = vmatprep.subr.bf16.mxu0 %v5441
        %6866 = vmatpush1.bf16.msra.mxu0 %v5440
        %6867 = vmatprep.subr.bf16.mxu0 %v5457
        %6868 = vmatpush1.bf16.msra.mxu0 %v5456
        %6869 = vmatprep.subr.bf16.mxu0 %v5473
        %6870 = vmatpush1.bf16.msra.mxu0 %v5472
        %6871 = vmatprep.subr.bf16.mxu0 %v5489
        %6872 = vmatpush1.bf16.msra.mxu0 %v5488
        %6873 = vmatprep.subr.bf16.mxu0 %v5505
        %6874 = vmatpush1.bf16.msra.mxu0 %v5504
        %6875 = vmatprep.subr.bf16.mxu0 %v5521
        %6876 = vmatpush1.bf16.msra.mxu0 %v5520
        %6877 = vmatprep.mubr.bf16.mxu0 %v1429
        %6878 = vmatmul.mubr.bf16.gmra.mrb[0].mxu0 %v1427
        %v6879 = vpop.f32.mrb[0].mxu0
        %v6880 = vadd.f32 %v6839, %v6879
        %v6881 = vpop.f32.mrb[0].mxu0
        %v6882 = vadd.f32 %v6841, %v6881
        %v6883 = vpop.f32.mrb[0].mxu0
        %v6884 = vpop.f32.mrb[0].mxu0
        %6885 = vdwg.mxu0
        %6886 = vmatprep.subr.bf16.mxu0 %v4515
        %6887 = vmatpush1.bf16.msra.mxu0 %v4514
        %6888 = vmatprep.subr.bf16.mxu0 %v4531
        %6889 = vmatpush1.bf16.msra.mxu0 %v4530
        %6890 = vmatprep.subr.bf16.mxu0 %v4547
        %6891 = vmatpush1.bf16.msra.mxu0 %v4546
        %6892 = vmatprep.subr.bf16.mxu0 %v4563
        %6893 = vmatpush1.bf16.msra.mxu0 %v4562
        %6894 = vmatprep.subr.bf16.mxu0 %v4579
        %6895 = vmatpush1.bf16.msra.mxu0 %v4578
        %6896 = vmatprep.subr.bf16.mxu0 %v4595
        %6897 = vmatpush1.bf16.msra.mxu0 %v4594
        %6898 = vmatprep.subr.bf16.mxu0 %v4611
        %6899 = vmatpush1.bf16.msra.mxu0 %v4610
        %6900 = vmatprep.subr.bf16.mxu0 %v4627
        %6901 = vmatpush1.bf16.msra.mxu0 %v4626
        %6902 = vmatprep.subr.bf16.mxu0 %v4643
        %6903 = vmatpush1.bf16.msra.mxu0 %v4642
        %6904 = vmatprep.subr.bf16.mxu0 %v4659
        %6905 = vmatpush1.bf16.msra.mxu0 %v4658
        %6906 = vmatprep.subr.bf16.mxu0 %v4675
        %6907 = vmatpush1.bf16.msra.mxu0 %v4674
        %6908 = vmatprep.subr.bf16.mxu0 %v4691
        %6909 = vmatpush1.bf16.msra.mxu0 %v4690
        %6910 = vmatprep.subr.bf16.mxu0 %v4707
        %6911 = vmatpush1.bf16.msra.mxu0 %v4706
        %6912 = vmatprep.subr.bf16.mxu0 %v4723
        %6913 = vmatpush1.bf16.msra.mxu0 %v4722
        %6914 = vmatprep.subr.bf16.mxu0 %v4739
        %6915 = vmatpush1.bf16.msra.mxu0 %v4738
        %6916 = vmatprep.subr.bf16.mxu0 %v4755
        %6917 = vmatpush1.bf16.msra.mxu0 %v4754
        %6918 = vmatprep.mubr.bf16.mxu0 %v1411
        %6919 = vmatmul.mubr.bf16.gmra.mrb[0].mxu0 %v1403
        %v6920 = vpop.f32.mrb[0].mxu0
        %v6921 = vadd.f32 %v1333, %v6920
        %v6922 = vpop.f32.mrb[0].mxu0
        %v6923 = vadd.f32 %v1337, %v6922
        %v6924 = vpop.f32.mrb[0].mxu0
        %v6925 = vpop.f32.mrb[0].mxu0
        %6926 = vdwg.mxu0
        %6927 = vmatprep.subr.bf16.mxu0 %v4771
        %6928 = vmatpush1.bf16.msra.mxu0 %v4770
        %6929 = vmatprep.subr.bf16.mxu0 %v4787
        %6930 = vmatpush1.bf16.msra.mxu0 %v4786
        %6931 = vmatprep.subr.bf16.mxu0 %v4803
        %6932 = vmatpush1.bf16.msra.mxu0 %v4802
        %6933 = vmatprep.subr.bf16.mxu0 %v4819
        %6934 = vmatpush1.bf16.msra.mxu0 %v4818
        %6935 = vmatprep.subr.bf16.mxu0 %v4835
        %6936 = vmatpush1.bf16.msra.mxu0 %v4834
        %6937 = vmatprep.subr.bf16.mxu0 %v4851
        %6938 = vmatpush1.bf16.msra.mxu0 %v4850
        %6939 = vmatprep.subr.bf16.mxu0 %v4867
        %6940 = vmatpush1.bf16.msra.mxu0 %v4866
        %6941 = vmatprep.subr.bf16.mxu0 %v4883
        %6942 = vmatpush1.bf16.msra.mxu0 %v4882
        %6943 = vmatprep.subr.bf16.mxu0 %v4899
        %6944 = vmatpush1.bf16.msra.mxu0 %v4898
        %6945 = vmatprep.subr.bf16.mxu0 %v4915
        %6946 = vmatpush1.bf16.msra.mxu0 %v4914
        %6947 = vmatprep.subr.bf16.mxu0 %v4931
        %6948 = vmatpush1.bf16.msra.mxu0 %v4930
        %6949 = vmatprep.subr.bf16.mxu0 %v4947
        %6950 = vmatpush1.bf16.msra.mxu0 %v4946
        %6951 = vmatprep.subr.bf16.mxu0 %v4963
        %6952 = vmatpush1.bf16.msra.mxu0 %v4962
        %6953 = vmatprep.subr.bf16.mxu0 %v4979
        %6954 = vmatpush1.bf16.msra.mxu0 %v4978
        %6955 = vmatprep.subr.bf16.mxu0 %v4995
        %6956 = vmatpush1.bf16.msra.mxu0 %v4994
        %6957 = vmatprep.subr.bf16.mxu0 %v5011
        %6958 = vmatpush1.bf16.msra.mxu0 %v5010
        %6959 = vmatprep.mubr.bf16.mxu0 %v1412
        %6960 = vmatmul.mubr.bf16.gmra.mrb[0].mxu0 %v1410
        %v6961 = vpop.f32.mrb[0].mxu0
        %v6962 = vadd.f32 %v6921, %v6961
        %v6963 = vpop.f32.mrb[0].mxu0
        %v6964 = vadd.f32 %v6923, %v6963
        %v6965 = vpop.f32.mrb[0].mxu0
        %v6966 = vpop.f32.mrb[0].mxu0
        %6967 = vdwg.mxu0
        %6968 = vmatprep.subr.bf16.mxu0 %v5027
        %6969 = vmatpush1.bf16.msra.mxu0 %v5026
        %6970 = vmatprep.subr.bf16.mxu0 %v5043
        %6971 = vmatpush1.bf16.msra.mxu0 %v5042
        %6972 = vmatprep.subr.bf16.mxu0 %v5059
        %6973 = vmatpush1.bf16.msra.mxu0 %v5058
        %6974 = vmatprep.subr.bf16.mxu0 %v5075
        %6975 = vmatpush1.bf16.msra.mxu0 %v5074
        %6976 = vmatprep.subr.bf16.mxu0 %v5091
        %6977 = vmatpush1.bf16.msra.mxu0 %v5090
        %6978 = vmatprep.subr.bf16.mxu0 %v5107
        %6979 = vmatpush1.bf16.msra.mxu0 %v5106
        %6980 = vmatprep.subr.bf16.mxu0 %v5123
        %6981 = vmatpush1.bf16.msra.mxu0 %v5122
        %6982 = vmatprep.subr.bf16.mxu0 %v5139
        %6983 = vmatpush1.bf16.msra.mxu0 %v5138
        %6984 = vmatprep.subr.bf16.mxu0 %v5155
        %6985 = vmatpush1.bf16.msra.mxu0 %v5154
        %6986 = vmatprep.subr.bf16.mxu0 %v5171
        %6987 = vmatpush1.bf16.msra.mxu0 %v5170
        %6988 = vmatprep.subr.bf16.mxu0 %v5187
        %6989 = vmatpush1.bf16.msra.mxu0 %v5186
        %6990 = vmatprep.subr.bf16.mxu0 %v5203
        %6991 = vmatpush1.bf16.msra.mxu0 %v5202
        %6992 = vmatprep.subr.bf16.mxu0 %v5219
        %6993 = vmatpush1.bf16.msra.mxu0 %v5218
        %6994 = vmatprep.subr.bf16.mxu0 %v5235
        %6995 = vmatpush1.bf16.msra.mxu0 %v5234
        %6996 = vmatprep.subr.bf16.mxu0 %v5251
        %6997 = vmatpush1.bf16.msra.mxu0 %v5250
        %6998 = vmatprep.subr.bf16.mxu0 %v5267
        %6999 = vmatpush1.bf16.msra.mxu0 %v5266
        %7000 = vmatprep.mubr.bf16.mxu0 %v1428
        %7001 = vmatmul.mubr.bf16.gmra.mrb[0].mxu0 %v1420
        %v7002 = vpop.f32.mrb[0].mxu0
        %v7003 = vadd.f32 %v6962, %v7002
        %v7004 = vpop.f32.mrb[0].mxu0
        %v7005 = vadd.f32 %v6964, %v7004
        %v7006 = vpop.f32.mrb[0].mxu0
        %v7007 = vpop.f32.mrb[0].mxu0
        %7008 = vdwg.mxu0
        %7009 = vmatprep.subr.bf16.mxu0 %v5283
        %7010 = vmatpush1.bf16.msra.mxu0 %v5282
        %7011 = vmatprep.subr.bf16.mxu0 %v5299
        %7012 = vmatpush1.bf16.msra.mxu0 %v5298
        %7013 = vmatprep.subr.bf16.mxu0 %v5315
        %7014 = vmatpush1.bf16.msra.mxu0 %v5314
        %7015 = vmatprep.subr.bf16.mxu0 %v5331
        %7016 = vmatpush1.bf16.msra.mxu0 %v5330
        %7017 = vmatprep.subr.bf16.mxu0 %v5347
        %7018 = vmatpush1.bf16.msra.mxu0 %v5346
        %7019 = vmatprep.subr.bf16.mxu0 %v5363
        %7020 = vmatpush1.bf16.msra.mxu0 %v5362
        %7021 = vmatprep.subr.bf16.mxu0 %v5379
        %7022 = vmatpush1.bf16.msra.mxu0 %v5378
        %7023 = vmatprep.subr.bf16.mxu0 %v5395
        %7024 = vmatpush1.bf16.msra.mxu0 %v5394
        %7025 = vmatprep.subr.bf16.mxu0 %v5411
        %7026 = vmatpush1.bf16.msra.mxu0 %v5410
        %7027 = vmatprep.subr.bf16.mxu0 %v5427
        %7028 = vmatpush1.bf16.msra.mxu0 %v5426
        %7029 = vmatprep.subr.bf16.mxu0 %v5443
        %7030 = vmatpush1.bf16.msra.mxu0 %v5442
        %7031 = vmatprep.subr.bf16.mxu0 %v5459
        %7032 = vmatpush1.bf16.msra.mxu0 %v5458
        %7033 = vmatprep.subr.bf16.mxu0 %v5475
        %7034 = vmatpush1.bf16.msra.mxu0 %v5474
        %7035 = vmatprep.subr.bf16.mxu0 %v5491
        %7036 = vmatpush1.bf16.msra.mxu0 %v5490
        %7037 = vmatprep.subr.bf16.mxu0 %v5507
        %7038 = vmatpush1.bf16.msra.mxu0 %v5506
        %7039 = vmatprep.subr.bf16.mxu0 %v5523
        %7040 = vmatpush1.bf16.msra.mxu0 %v5522
        %7041 = vmatprep.mubr.bf16.mxu0 %v1429
        %7042 = vmatmul.mubr.bf16.gmra.mrb[0].mxu0 %v1427
        %v7043 = vpop.f32.mrb[0].mxu0
        %v7044 = vadd.f32 %v7003, %v7043
        %v7045 = vpop.f32.mrb[0].mxu0
        %v7046 = vadd.f32 %v7005, %v7045
        %v7047 = vpop.f32.mrb[0].mxu0
        %v7048 = vpop.f32.mrb[0].mxu0
        %7049 = vdwg.mxu0
        %7050 = vmatprep.subr.bf16.mxu0 %v4517
        %7051 = vmatpush1.bf16.msra.mxu0 %v4516
        %7052 = vmatprep.subr.bf16.mxu0 %v4533
        %7053 = vmatpush1.bf16.msra.mxu0 %v4532
        %7054 = vmatprep.subr.bf16.mxu0 %v4549
        %7055 = vmatpush1.bf16.msra.mxu0 %v4548
        %7056 = vmatprep.subr.bf16.mxu0 %v4565
        %7057 = vmatpush1.bf16.msra.mxu0 %v4564
        %7058 = vmatprep.subr.bf16.mxu0 %v4581
        %7059 = vmatpush1.bf16.msra.mxu0 %v4580
        %7060 = vmatprep.subr.bf16.mxu0 %v4597
        %7061 = vmatpush1.bf16.msra.mxu0 %v4596
        %7062 = vmatprep.subr.bf16.mxu0 %v4613
        %7063 = vmatpush1.bf16.msra.mxu0 %v4612
        %7064 = vmatprep.subr.bf16.mxu0 %v4629
        %7065 = vmatpush1.bf16.msra.mxu0 %v4628
        %7066 = vmatprep.subr.bf16.mxu0 %v4645
        %7067 = vmatpush1.bf16.msra.mxu0 %v4644
        %7068 = vmatprep.subr.bf16.mxu0 %v4661
        %7069 = vmatpush1.bf16.msra.mxu0 %v4660
        %7070 = vmatprep.subr.bf16.mxu0 %v4677
        %7071 = vmatpush1.bf16.msra.mxu0 %v4676
        %7072 = vmatprep.subr.bf16.mxu0 %v4693
        %7073 = vmatpush1.bf16.msra.mxu0 %v4692
        %7074 = vmatprep.subr.bf16.mxu0 %v4709
        %7075 = vmatpush1.bf16.msra.mxu0 %v4708
        %7076 = vmatprep.subr.bf16.mxu0 %v4725
        %7077 = vmatpush1.bf16.msra.mxu0 %v4724
        %7078 = vmatprep.subr.bf16.mxu0 %v4741
        %7079 = vmatpush1.bf16.msra.mxu0 %v4740
        %7080 = vmatprep.subr.bf16.mxu0 %v4757
        %7081 = vmatpush1.bf16.msra.mxu0 %v4756
        %7082 = vmatprep.mubr.bf16.mxu0 %v1411
        %7083 = vmatmul.mubr.bf16.gmra.mrb[0].mxu0 %v1403
        %v7084 = vpop.f32.mrb[0].mxu0
        %v7085 = vadd.f32 %v1341, %v7084
        %v7086 = vpop.f32.mrb[0].mxu0
        %v7087 = vadd.f32 %v1345, %v7086
        %v7088 = vpop.f32.mrb[0].mxu0
        %v7089 = vpop.f32.mrb[0].mxu0
        %7090 = vdwg.mxu0
        %7091 = vmatprep.subr.bf16.mxu0 %v4773
        %7092 = vmatpush1.bf16.msra.mxu0 %v4772
        %7093 = vmatprep.subr.bf16.mxu0 %v4789
        %7094 = vmatpush1.bf16.msra.mxu0 %v4788
        %7095 = vmatprep.subr.bf16.mxu0 %v4805
        %7096 = vmatpush1.bf16.msra.mxu0 %v4804
        %7097 = vmatprep.subr.bf16.mxu0 %v4821
        %7098 = vmatpush1.bf16.msra.mxu0 %v4820
        %7099 = vmatprep.subr.bf16.mxu0 %v4837
        %7100 = vmatpush1.bf16.msra.mxu0 %v4836
        %7101 = vmatprep.subr.bf16.mxu0 %v4853
        %7102 = vmatpush1.bf16.msra.mxu0 %v4852
        %7103 = vmatprep.subr.bf16.mxu0 %v4869
        %7104 = vmatpush1.bf16.msra.mxu0 %v4868
        %7105 = vmatprep.subr.bf16.mxu0 %v4885
        %7106 = vmatpush1.bf16.msra.mxu0 %v4884
        %7107 = vmatprep.subr.bf16.mxu0 %v4901
        %7108 = vmatpush1.bf16.msra.mxu0 %v4900
        %7109 = vmatprep.subr.bf16.mxu0 %v4917
        %7110 = vmatpush1.bf16.msra.mxu0 %v4916
        %7111 = vmatprep.subr.bf16.mxu0 %v4933
        %7112 = vmatpush1.bf16.msra.mxu0 %v4932
        %7113 = vmatprep.subr.bf16.mxu0 %v4949
        %7114 = vmatpush1.bf16.msra.mxu0 %v4948
        %7115 = vmatprep.subr.bf16.mxu0 %v4965
        %7116 = vmatpush1.bf16.msra.mxu0 %v4964
        %7117 = vmatprep.subr.bf16.mxu0 %v4981
        %7118 = vmatpush1.bf16.msra.mxu0 %v4980
        %7119 = vmatprep.subr.bf16.mxu0 %v4997
        %7120 = vmatpush1.bf16.msra.mxu0 %v4996
        %7121 = vmatprep.subr.bf16.mxu0 %v5013
        %7122 = vmatpush1.bf16.msra.mxu0 %v5012
        %7123 = vmatprep.mubr.bf16.mxu0 %v1412
        %7124 = vmatmul.mubr.bf16.gmra.mrb[0].mxu0 %v1410
        %v7125 = vpop.f32.mrb[0].mxu0
        %v7126 = vadd.f32 %v7085, %v7125
        %v7127 = vpop.f32.mrb[0].mxu0
        %v7128 = vadd.f32 %v7087, %v7127
        %v7129 = vpop.f32.mrb[0].mxu0
        %v7130 = vpop.f32.mrb[0].mxu0
        %7131 = vdwg.mxu0
        %7132 = vmatprep.subr.bf16.mxu0 %v5029
        %7133 = vmatpush1.bf16.msra.mxu0 %v5028
        %7134 = vmatprep.subr.bf16.mxu0 %v5045
        %7135 = vmatpush1.bf16.msra.mxu0 %v5044
        %7136 = vmatprep.subr.bf16.mxu0 %v5061
        %7137 = vmatpush1.bf16.msra.mxu0 %v5060
        %7138 = vmatprep.subr.bf16.mxu0 %v5077
        %7139 = vmatpush1.bf16.msra.mxu0 %v5076
        %7140 = vmatprep.subr.bf16.mxu0 %v5093
        %7141 = vmatpush1.bf16.msra.mxu0 %v5092
        %7142 = vmatprep.subr.bf16.mxu0 %v5109
        %7143 = vmatpush1.bf16.msra.mxu0 %v5108
        %7144 = vmatprep.subr.bf16.mxu0 %v5125
        %7145 = vmatpush1.bf16.msra.mxu0 %v5124
        %7146 = vmatprep.subr.bf16.mxu0 %v5141
        %7147 = vmatpush1.bf16.msra.mxu0 %v5140
        %7148 = vmatprep.subr.bf16.mxu0 %v5157
        %7149 = vmatpush1.bf16.msra.mxu0 %v5156
        %7150 = vmatprep.subr.bf16.mxu0 %v5173
        %7151 = vmatpush1.bf16.msra.mxu0 %v5172
        %7152 = vmatprep.subr.bf16.mxu0 %v5189
        %7153 = vmatpush1.bf16.msra.mxu0 %v5188
        %7154 = vmatprep.subr.bf16.mxu0 %v5205
        %7155 = vmatpush1.bf16.msra.mxu0 %v5204
        %7156 = vmatprep.subr.bf16.mxu0 %v5221
        %7157 = vmatpush1.bf16.msra.mxu0 %v5220
        %7158 = vmatprep.subr.bf16.mxu0 %v5237
        %7159 = vmatpush1.bf16.msra.mxu0 %v5236
        %7160 = vmatprep.subr.bf16.mxu0 %v5253
        %7161 = vmatpush1.bf16.msra.mxu0 %v5252
        %7162 = vmatprep.subr.bf16.mxu0 %v5269
        %7163 = vmatpush1.bf16.msra.mxu0 %v5268
        %7164 = vmatprep.mubr.bf16.mxu0 %v1428
        %7165 = vmatmul.mubr.bf16.gmra.mrb[0].mxu0 %v1420
        %v7166 = vpop.f32.mrb[0].mxu0
        %v7167 = vadd.f32 %v7126, %v7166
        %v7168 = vpop.f32.mrb[0].mxu0
        %v7169 = vadd.f32 %v7128, %v7168
        %v7170 = vpop.f32.mrb[0].mxu0
        %v7171 = vpop.f32.mrb[0].mxu0
        %7172 = vdwg.mxu0
        %7173 = vmatprep.subr.bf16.mxu0 %v5285
        %7174 = vmatpush1.bf16.msra.mxu0 %v5284
        %7175 = vmatprep.subr.bf16.mxu0 %v5301
        %7176 = vmatpush1.bf16.msra.mxu0 %v5300
        %7177 = vmatprep.subr.bf16.mxu0 %v5317
        %7178 = vmatpush1.bf16.msra.mxu0 %v5316
        %7179 = vmatprep.subr.bf16.mxu0 %v5333
        %7180 = vmatpush1.bf16.msra.mxu0 %v5332
        %7181 = vmatprep.subr.bf16.mxu0 %v5349
        %7182 = vmatpush1.bf16.msra.mxu0 %v5348
        %7183 = vmatprep.subr.bf16.mxu0 %v5365
        %7184 = vmatpush1.bf16.msra.mxu0 %v5364
        %7185 = vmatprep.subr.bf16.mxu0 %v5381
        %7186 = vmatpush1.bf16.msra.mxu0 %v5380
        %7187 = vmatprep.subr.bf16.mxu0 %v5397
        %7188 = vmatpush1.bf16.msra.mxu0 %v5396
        %7189 = vmatprep.subr.bf16.mxu0 %v5413
        %7190 = vmatpush1.bf16.msra.mxu0 %v5412
        %7191 = vmatprep.subr.bf16.mxu0 %v5429
        %7192 = vmatpush1.bf16.msra.mxu0 %v5428
        %7193 = vmatprep.subr.bf16.mxu0 %v5445
        %7194 = vmatpush1.bf16.msra.mxu0 %v5444
        %7195 = vmatprep.subr.bf16.mxu0 %v5461
        %7196 = vmatpush1.bf16.msra.mxu0 %v5460
        %7197 = vmatprep.subr.bf16.mxu0 %v5477
        %7198 = vmatpush1.bf16.msra.mxu0 %v5476
        %7199 = vmatprep.subr.bf16.mxu0 %v5493
        %7200 = vmatpush1.bf16.msra.mxu0 %v5492
        %7201 = vmatprep.subr.bf16.mxu0 %v5509
        %7202 = vmatpush1.bf16.msra.mxu0 %v5508
        %7203 = vmatprep.subr.bf16.mxu0 %v5525
        %7204 = vmatpush1.bf16.msra.mxu0 %v5524
        %7205 = vmatprep.mubr.bf16.mxu0 %v1429
        %7206 = vmatmul.mubr.bf16.gmra.mrb[0].mxu0 %v1427
        %v7207 = vpop.f32.mrb[0].mxu0
        %v7208 = vadd.f32 %v7167, %v7207
        %v7209 = vpop.f32.mrb[0].mxu0
        %v7210 = vadd.f32 %v7169, %v7209
        %v7211 = vpop.f32.mrb[0].mxu0
        %v7212 = vpop.f32.mrb[0].mxu0
        %7213 = vdwg.mxu0
        %7214 = vmatprep.subr.bf16.mxu0 %v4519
        %7215 = vmatpush1.bf16.msra.mxu0 %v4518
        %7216 = vmatprep.subr.bf16.mxu0 %v4535
        %7217 = vmatpush1.bf16.msra.mxu0 %v4534
        %7218 = vmatprep.subr.bf16.mxu0 %v4551
        %7219 = vmatpush1.bf16.msra.mxu0 %v4550
        %7220 = vmatprep.subr.bf16.mxu0 %v4567
        %7221 = vmatpush1.bf16.msra.mxu0 %v4566
        %7222 = vmatprep.subr.bf16.mxu0 %v4583
        %7223 = vmatpush1.bf16.msra.mxu0 %v4582
        %7224 = vmatprep.subr.bf16.mxu0 %v4599
        %7225 = vmatpush1.bf16.msra.mxu0 %v4598
        %7226 = vmatprep.subr.bf16.mxu0 %v4615
        %7227 = vmatpush1.bf16.msra.mxu0 %v4614
        %7228 = vmatprep.subr.bf16.mxu0 %v4631
        %7229 = vmatpush1.bf16.msra.mxu0 %v4630
        %7230 = vmatprep.subr.bf16.mxu0 %v4647
        %7231 = vmatpush1.bf16.msra.mxu0 %v4646
        %7232 = vmatprep.subr.bf16.mxu0 %v4663
        %7233 = vmatpush1.bf16.msra.mxu0 %v4662
        %7234 = vmatprep.subr.bf16.mxu0 %v4679
        %7235 = vmatpush1.bf16.msra.mxu0 %v4678
        %7236 = vmatprep.subr.bf16.mxu0 %v4695
        %7237 = vmatpush1.bf16.msra.mxu0 %v4694
        %7238 = vmatprep.subr.bf16.mxu0 %v4711
        %7239 = vmatpush1.bf16.msra.mxu0 %v4710
        %7240 = vmatprep.subr.bf16.mxu0 %v4727
        %7241 = vmatpush1.bf16.msra.mxu0 %v4726
        %7242 = vmatprep.subr.bf16.mxu0 %v4743
        %7243 = vmatpush1.bf16.msra.mxu0 %v4742
        %7244 = vmatprep.subr.bf16.mxu0 %v4759
        %7245 = vmatpush1.bf16.msra.mxu0 %v4758
        %7246 = vmatprep.mubr.bf16.mxu0 %v1411
        %7247 = vmatmul.mubr.bf16.gmra.mrb[0].mxu0 %v1403
        %v7248 = vpop.f32.mrb[0].mxu0
        %v7249 = vadd.f32 %v1349, %v7248
        %v7250 = vpop.f32.mrb[0].mxu0
        %v7251 = vadd.f32 %v1353, %v7250
        %v7252 = vpop.f32.mrb[0].mxu0
        %v7253 = vpop.f32.mrb[0].mxu0
        %7254 = vdwg.mxu0
        %7255 = vmatprep.subr.bf16.mxu0 %v4775
        %7256 = vmatpush1.bf16.msra.mxu0 %v4774
        %7257 = vmatprep.subr.bf16.mxu0 %v4791
        %7258 = vmatpush1.bf16.msra.mxu0 %v4790
        %7259 = vmatprep.subr.bf16.mxu0 %v4807
        %7260 = vmatpush1.bf16.msra.mxu0 %v4806
        %7261 = vmatprep.subr.bf16.mxu0 %v4823
        %7262 = vmatpush1.bf16.msra.mxu0 %v4822
        %7263 = vmatprep.subr.bf16.mxu0 %v4839
        %7264 = vmatpush1.bf16.msra.mxu0 %v4838
        %7265 = vmatprep.subr.bf16.mxu0 %v4855
        %7266 = vmatpush1.bf16.msra.mxu0 %v4854
        %7267 = vmatprep.subr.bf16.mxu0 %v4871
        %7268 = vmatpush1.bf16.msra.mxu0 %v4870
        %7269 = vmatprep.subr.bf16.mxu0 %v4887
        %7270 = vmatpush1.bf16.msra.mxu0 %v4886
        %7271 = vmatprep.subr.bf16.mxu0 %v4903
        %7272 = vmatpush1.bf16.msra.mxu0 %v4902
        %7273 = vmatprep.subr.bf16.mxu0 %v4919
        %7274 = vmatpush1.bf16.msra.mxu0 %v4918
        %7275 = vmatprep.subr.bf16.mxu0 %v4935
        %7276 = vmatpush1.bf16.msra.mxu0 %v4934
        %7277 = vmatprep.subr.bf16.mxu0 %v4951
        %7278 = vmatpush1.bf16.msra.mxu0 %v4950
        %7279 = vmatprep.subr.bf16.mxu0 %v4967
        %7280 = vmatpush1.bf16.msra.mxu0 %v4966
        %7281 = vmatprep.subr.bf16.mxu0 %v4983
        %7282 = vmatpush1.bf16.msra.mxu0 %v4982
        %7283 = vmatprep.subr.bf16.mxu0 %v4999
        %7284 = vmatpush1.bf16.msra.mxu0 %v4998
        %7285 = vmatprep.subr.bf16.mxu0 %v5015
        %7286 = vmatpush1.bf16.msra.mxu0 %v5014
        %7287 = vmatprep.mubr.bf16.mxu0 %v1412
        %7288 = vmatmul.mubr.bf16.gmra.mrb[0].mxu0 %v1410
        %v7289 = vpop.f32.mrb[0].mxu0
        %v7290 = vadd.f32 %v7249, %v7289
        %v7291 = vpop.f32.mrb[0].mxu0
        %v7292 = vadd.f32 %v7251, %v7291
        %v7293 = vpop.f32.mrb[0].mxu0
        %v7294 = vpop.f32.mrb[0].mxu0
        %7295 = vdwg.mxu0
        %7296 = vmatprep.subr.bf16.mxu0 %v5031
        %7297 = vmatpush1.bf16.msra.mxu0 %v5030
        %7298 = vmatprep.subr.bf16.mxu0 %v5047
        %7299 = vmatpush1.bf16.msra.mxu0 %v5046
        %7300 = vmatprep.subr.bf16.mxu0 %v5063
        %7301 = vmatpush1.bf16.msra.mxu0 %v5062
        %7302 = vmatprep.subr.bf16.mxu0 %v5079
        %7303 = vmatpush1.bf16.msra.mxu0 %v5078
        %7304 = vmatprep.subr.bf16.mxu0 %v5095
        %7305 = vmatpush1.bf16.msra.mxu0 %v5094
        %7306 = vmatprep.subr.bf16.mxu0 %v5111
        %7307 = vmatpush1.bf16.msra.mxu0 %v5110
        %7308 = vmatprep.subr.bf16.mxu0 %v5127
        %7309 = vmatpush1.bf16.msra.mxu0 %v5126
        %7310 = vmatprep.subr.bf16.mxu0 %v5143
        %7311 = vmatpush1.bf16.msra.mxu0 %v5142
        %7312 = vmatprep.subr.bf16.mxu0 %v5159
        %7313 = vmatpush1.bf16.msra.mxu0 %v5158
        %7314 = vmatprep.subr.bf16.mxu0 %v5175
        %7315 = vmatpush1.bf16.msra.mxu0 %v5174
        %7316 = vmatprep.subr.bf16.mxu0 %v5191
        %7317 = vmatpush1.bf16.msra.mxu0 %v5190
        %7318 = vmatprep.subr.bf16.mxu0 %v5207
        %7319 = vmatpush1.bf16.msra.mxu0 %v5206
        %7320 = vmatprep.subr.bf16.mxu0 %v5223
        %7321 = vmatpush1.bf16.msra.mxu0 %v5222
        %7322 = vmatprep.subr.bf16.mxu0 %v5239
        %7323 = vmatpush1.bf16.msra.mxu0 %v5238
        %7324 = vmatprep.subr.bf16.mxu0 %v5255
        %7325 = vmatpush1.bf16.msra.mxu0 %v5254
        %7326 = vmatprep.subr.bf16.mxu0 %v5271
        %7327 = vmatpush1.bf16.msra.mxu0 %v5270
        %7328 = vmatprep.mubr.bf16.mxu0 %v1428
        %7329 = vmatmul.mubr.bf16.gmra.mrb[0].mxu0 %v1420
        %v7330 = vpop.f32.mrb[0].mxu0
        %v7331 = vadd.f32 %v7290, %v7330
        %v7332 = vpop.f32.mrb[0].mxu0
        %v7333 = vadd.f32 %v7292, %v7332
        %v7334 = vpop.f32.mrb[0].mxu0
        %v7335 = vpop.f32.mrb[0].mxu0
        %7336 = vdwg.mxu0
        %7337 = vmatprep.subr.bf16.mxu0 %v5287
        %7338 = vmatpush1.bf16.msra.mxu0 %v5286
        %7339 = vmatprep.subr.bf16.mxu0 %v5303
        %7340 = vmatpush1.bf16.msra.mxu0 %v5302
        %7341 = vmatprep.subr.bf16.mxu0 %v5319
        %7342 = vmatpush1.bf16.msra.mxu0 %v5318
        %7343 = vmatprep.subr.bf16.mxu0 %v5335
        %7344 = vmatpush1.bf16.msra.mxu0 %v5334
        %7345 = vmatprep.subr.bf16.mxu0 %v5351
        %7346 = vmatpush1.bf16.msra.mxu0 %v5350
        %7347 = vmatprep.subr.bf16.mxu0 %v5367
        %7348 = vmatpush1.bf16.msra.mxu0 %v5366
        %7349 = vmatprep.subr.bf16.mxu0 %v5383
        %7350 = vmatpush1.bf16.msra.mxu0 %v5382
        %7351 = vmatprep.subr.bf16.mxu0 %v5399
        %7352 = vmatpush1.bf16.msra.mxu0 %v5398
        %7353 = vmatprep.subr.bf16.mxu0 %v5415
        %7354 = vmatpush1.bf16.msra.mxu0 %v5414
        %7355 = vmatprep.subr.bf16.mxu0 %v5431
        %7356 = vmatpush1.bf16.msra.mxu0 %v5430
        %7357 = vmatprep.subr.bf16.mxu0 %v5447
        %7358 = vmatpush1.bf16.msra.mxu0 %v5446
        %7359 = vmatprep.subr.bf16.mxu0 %v5463
        %7360 = vmatpush1.bf16.msra.mxu0 %v5462
        %7361 = vmatprep.subr.bf16.mxu0 %v5479
        %7362 = vmatpush1.bf16.msra.mxu0 %v5478
        %7363 = vmatprep.subr.bf16.mxu0 %v5495
        %7364 = vmatpush1.bf16.msra.mxu0 %v5494
        %7365 = vmatprep.subr.bf16.mxu0 %v5511
        %7366 = vmatpush1.bf16.msra.mxu0 %v5510
        %7367 = vmatprep.subr.bf16.mxu0 %v5527
        %7368 = vmatpush1.bf16.msra.mxu0 %v5526
        %7369 = vmatprep.mubr.bf16.mxu0 %v1429
        %7370 = vmatmul.mubr.bf16.gmra.mrb[0].mxu0 %v1427
        %v7371 = vpop.f32.mrb[0].mxu0
        %v7372 = vadd.f32 %v7331, %v7371
        %v7373 = vpop.f32.mrb[0].mxu0
        %v7374 = vadd.f32 %v7333, %v7373
        %v7375 = vpop.f32.mrb[0].mxu0
        %v7376 = vpop.f32.mrb[0].mxu0
        %7377 = vdwg.mxu0
        %7378 = vmatprep.subr.bf16.mxu0 %v4521
        %7379 = vmatpush1.bf16.msra.mxu0 %v4520
        %7380 = vmatprep.subr.bf16.mxu0 %v4537
        %7381 = vmatpush1.bf16.msra.mxu0 %v4536
        %7382 = vmatprep.subr.bf16.mxu0 %v4553
        %7383 = vmatpush1.bf16.msra.mxu0 %v4552
        %7384 = vmatprep.subr.bf16.mxu0 %v4569
        %7385 = vmatpush1.bf16.msra.mxu0 %v4568
        %7386 = vmatprep.subr.bf16.mxu0 %v4585
        %7387 = vmatpush1.bf16.msra.mxu0 %v4584
        %7388 = vmatprep.subr.bf16.mxu0 %v4601
        %7389 = vmatpush1.bf16.msra.mxu0 %v4600
        %7390 = vmatprep.subr.bf16.mxu0 %v4617
        %7391 = vmatpush1.bf16.msra.mxu0 %v4616
        %7392 = vmatprep.subr.bf16.mxu0 %v4633
        %7393 = vmatpush1.bf16.msra.mxu0 %v4632
        %7394 = vmatprep.subr.bf16.mxu0 %v4649
        %7395 = vmatpush1.bf16.msra.mxu0 %v4648
        %7396 = vmatprep.subr.bf16.mxu0 %v4665
        %7397 = vmatpush1.bf16.msra.mxu0 %v4664
        %7398 = vmatprep.subr.bf16.mxu0 %v4681
        %7399 = vmatpush1.bf16.msra.mxu0 %v4680
        %7400 = vmatprep.subr.bf16.mxu0 %v4697
        %7401 = vmatpush1.bf16.msra.mxu0 %v4696
        %7402 = vmatprep.subr.bf16.mxu0 %v4713
        %7403 = vmatpush1.bf16.msra.mxu0 %v4712
        %7404 = vmatprep.subr.bf16.mxu0 %v4729
        %7405 = vmatpush1.bf16.msra.mxu0 %v4728
        %7406 = vmatprep.subr.bf16.mxu0 %v4745
        %7407 = vmatpush1.bf16.msra.mxu0 %v4744
        %7408 = vmatprep.subr.bf16.mxu0 %v4761
        %7409 = vmatpush1.bf16.msra.mxu0 %v4760
        %7410 = vmatprep.mubr.bf16.mxu0 %v1411
        %7411 = vmatmul.mubr.bf16.gmra.mrb[0].mxu0 %v1403
        %v7412 = vpop.f32.mrb[0].mxu0
        %v7413 = vadd.f32 %v1357, %v7412
        %v7414 = vpop.f32.mrb[0].mxu0
        %v7415 = vadd.f32 %v1361, %v7414
        %v7416 = vpop.f32.mrb[0].mxu0
        %v7417 = vpop.f32.mrb[0].mxu0
        %7418 = vdwg.mxu0
        %7419 = vmatprep.subr.bf16.mxu0 %v4777
        %7420 = vmatpush1.bf16.msra.mxu0 %v4776
        %7421 = vmatprep.subr.bf16.mxu0 %v4793
        %7422 = vmatpush1.bf16.msra.mxu0 %v4792
        %7423 = vmatprep.subr.bf16.mxu0 %v4809
        %7424 = vmatpush1.bf16.msra.mxu0 %v4808
        %7425 = vmatprep.subr.bf16.mxu0 %v4825
        %7426 = vmatpush1.bf16.msra.mxu0 %v4824
        %7427 = vmatprep.subr.bf16.mxu0 %v4841
        %7428 = vmatpush1.bf16.msra.mxu0 %v4840
        %7429 = vmatprep.subr.bf16.mxu0 %v4857
        %7430 = vmatpush1.bf16.msra.mxu0 %v4856
        %7431 = vmatprep.subr.bf16.mxu0 %v4873
        %7432 = vmatpush1.bf16.msra.mxu0 %v4872
        %7433 = vmatprep.subr.bf16.mxu0 %v4889
        %7434 = vmatpush1.bf16.msra.mxu0 %v4888
        %7435 = vmatprep.subr.bf16.mxu0 %v4905
        %7436 = vmatpush1.bf16.msra.mxu0 %v4904
        %7437 = vmatprep.subr.bf16.mxu0 %v4921
        %7438 = vmatpush1.bf16.msra.mxu0 %v4920
        %7439 = vmatprep.subr.bf16.mxu0 %v4937
        %7440 = vmatpush1.bf16.msra.mxu0 %v4936
        %7441 = vmatprep.subr.bf16.mxu0 %v4953
        %7442 = vmatpush1.bf16.msra.mxu0 %v4952
        %7443 = vmatprep.subr.bf16.mxu0 %v4969
        %7444 = vmatpush1.bf16.msra.mxu0 %v4968
        %7445 = vmatprep.subr.bf16.mxu0 %v4985
        %7446 = vmatpush1.bf16.msra.mxu0 %v4984
        %7447 = vmatprep.subr.bf16.mxu0 %v5001
        %7448 = vmatpush1.bf16.msra.mxu0 %v5000
        %7449 = vmatprep.subr.bf16.mxu0 %v5017
        %7450 = vmatpush1.bf16.msra.mxu0 %v5016
        %7451 = vmatprep.mubr.bf16.mxu0 %v1412
        %7452 = vmatmul.mubr.bf16.gmra.mrb[0].mxu0 %v1410
        %v7453 = vpop.f32.mrb[0].mxu0
        %v7454 = vadd.f32 %v7413, %v7453
        %v7455 = vpop.f32.mrb[0].mxu0
        %v7456 = vadd.f32 %v7415, %v7455
        %v7457 = vpop.f32.mrb[0].mxu0
        %v7458 = vpop.f32.mrb[0].mxu0
        %7459 = vdwg.mxu0
        %7460 = vmatprep.subr.bf16.mxu0 %v5033
        %7461 = vmatpush1.bf16.msra.mxu0 %v5032
        %7462 = vmatprep.subr.bf16.mxu0 %v5049
        %7463 = vmatpush1.bf16.msra.mxu0 %v5048
        %7464 = vmatprep.subr.bf16.mxu0 %v5065
        %7465 = vmatpush1.bf16.msra.mxu0 %v5064
        %7466 = vmatprep.subr.bf16.mxu0 %v5081
        %7467 = vmatpush1.bf16.msra.mxu0 %v5080
        %7468 = vmatprep.subr.bf16.mxu0 %v5097
        %7469 = vmatpush1.bf16.msra.mxu0 %v5096
        %7470 = vmatprep.subr.bf16.mxu0 %v5113
        %7471 = vmatpush1.bf16.msra.mxu0 %v5112
        %7472 = vmatprep.subr.bf16.mxu0 %v5129
        %7473 = vmatpush1.bf16.msra.mxu0 %v5128
        %7474 = vmatprep.subr.bf16.mxu0 %v5145
        %7475 = vmatpush1.bf16.msra.mxu0 %v5144
        %7476 = vmatprep.subr.bf16.mxu0 %v5161
        %7477 = vmatpush1.bf16.msra.mxu0 %v5160
        %7478 = vmatprep.subr.bf16.mxu0 %v5177
        %7479 = vmatpush1.bf16.msra.mxu0 %v5176
        %7480 = vmatprep.subr.bf16.mxu0 %v5193
        %7481 = vmatpush1.bf16.msra.mxu0 %v5192
        %7482 = vmatprep.subr.bf16.mxu0 %v5209
        %7483 = vmatpush1.bf16.msra.mxu0 %v5208
        %7484 = vmatprep.subr.bf16.mxu0 %v5225
        %7485 = vmatpush1.bf16.msra.mxu0 %v5224
        %7486 = vmatprep.subr.bf16.mxu0 %v5241
        %7487 = vmatpush1.bf16.msra.mxu0 %v5240
        %7488 = vmatprep.subr.bf16.mxu0 %v5257
        %7489 = vmatpush1.bf16.msra.mxu0 %v5256
        %7490 = vmatprep.subr.bf16.mxu0 %v5273
        %7491 = vmatpush1.bf16.msra.mxu0 %v5272
        %7492 = vmatprep.mubr.bf16.mxu0 %v1428
        %7493 = vmatmul.mubr.bf16.gmra.mrb[0].mxu0 %v1420
        %v7494 = vpop.f32.mrb[0].mxu0
        %v7495 = vadd.f32 %v7454, %v7494
        %v7496 = vpop.f32.mrb[0].mxu0
        %v7497 = vadd.f32 %v7456, %v7496
        %v7498 = vpop.f32.mrb[0].mxu0
        %v7499 = vpop.f32.mrb[0].mxu0
        %7500 = vdwg.mxu0
        %7501 = vmatprep.subr.bf16.mxu0 %v5289
        %7502 = vmatpush1.bf16.msra.mxu0 %v5288
        %7503 = vmatprep.subr.bf16.mxu0 %v5305
        %7504 = vmatpush1.bf16.msra.mxu0 %v5304
        %7505 = vmatprep.subr.bf16.mxu0 %v5321
        %7506 = vmatpush1.bf16.msra.mxu0 %v5320
        %7507 = vmatprep.subr.bf16.mxu0 %v5337
        %7508 = vmatpush1.bf16.msra.mxu0 %v5336
        %7509 = vmatprep.subr.bf16.mxu0 %v5353
        %7510 = vmatpush1.bf16.msra.mxu0 %v5352
        %7511 = vmatprep.subr.bf16.mxu0 %v5369
        %7512 = vmatpush1.bf16.msra.mxu0 %v5368
        %7513 = vmatprep.subr.bf16.mxu0 %v5385
        %7514 = vmatpush1.bf16.msra.mxu0 %v5384
        %7515 = vmatprep.subr.bf16.mxu0 %v5401
        %7516 = vmatpush1.bf16.msra.mxu0 %v5400
        %7517 = vmatprep.subr.bf16.mxu0 %v5417
        %7518 = vmatpush1.bf16.msra.mxu0 %v5416
        %7519 = vmatprep.subr.bf16.mxu0 %v5433
        %7520 = vmatpush1.bf16.msra.mxu0 %v5432
        %7521 = vmatprep.subr.bf16.mxu0 %v5449
        %7522 = vmatpush1.bf16.msra.mxu0 %v5448
        %7523 = vmatprep.subr.bf16.mxu0 %v5465
        %7524 = vmatpush1.bf16.msra.mxu0 %v5464
        %7525 = vmatprep.subr.bf16.mxu0 %v5481
        %7526 = vmatpush1.bf16.msra.mxu0 %v5480
        %7527 = vmatprep.subr.bf16.mxu0 %v5497
        %7528 = vmatpush1.bf16.msra.mxu0 %v5496
        %7529 = vmatprep.subr.bf16.mxu0 %v5513
        %7530 = vmatpush1.bf16.msra.mxu0 %v5512
        %7531 = vmatprep.subr.bf16.mxu0 %v5529
        %7532 = vmatpush1.bf16.msra.mxu0 %v5528
        %7533 = vmatprep.mubr.bf16.mxu0 %v1429
        %7534 = vmatmul.mubr.bf16.gmra.mrb[0].mxu0 %v1427
        %v7535 = vpop.f32.mrb[0].mxu0
        %v7536 = vadd.f32 %v7495, %v7535
        %v7537 = vpop.f32.mrb[0].mxu0
        %v7538 = vadd.f32 %v7497, %v7537
        %v7539 = vpop.f32.mrb[0].mxu0
        %v7540 = vpop.f32.mrb[0].mxu0
        %7541 = vdwg.mxu0
        %7542 = vmatprep.subr.bf16.mxu0 %v4523
        %7543 = vmatpush1.bf16.msra.mxu0 %v4522
        %7544 = vmatprep.subr.bf16.mxu0 %v4539
        %7545 = vmatpush1.bf16.msra.mxu0 %v4538
        %7546 = vmatprep.subr.bf16.mxu0 %v4555
        %7547 = vmatpush1.bf16.msra.mxu0 %v4554
        %7548 = vmatprep.subr.bf16.mxu0 %v4571
        %7549 = vmatpush1.bf16.msra.mxu0 %v4570
        %7550 = vmatprep.subr.bf16.mxu0 %v4587
        %7551 = vmatpush1.bf16.msra.mxu0 %v4586
        %7552 = vmatprep.subr.bf16.mxu0 %v4603
        %7553 = vmatpush1.bf16.msra.mxu0 %v4602
        %7554 = vmatprep.subr.bf16.mxu0 %v4619
        %7555 = vmatpush1.bf16.msra.mxu0 %v4618
        %7556 = vmatprep.subr.bf16.mxu0 %v4635
        %7557 = vmatpush1.bf16.msra.mxu0 %v4634
        %7558 = vmatprep.subr.bf16.mxu0 %v4651
        %7559 = vmatpush1.bf16.msra.mxu0 %v4650
        %7560 = vmatprep.subr.bf16.mxu0 %v4667
        %7561 = vmatpush1.bf16.msra.mxu0 %v4666
        %7562 = vmatprep.subr.bf16.mxu0 %v4683
        %7563 = vmatpush1.bf16.msra.mxu0 %v4682
        %7564 = vmatprep.subr.bf16.mxu0 %v4699
        %7565 = vmatpush1.bf16.msra.mxu0 %v4698
        %7566 = vmatprep.subr.bf16.mxu0 %v4715
        %7567 = vmatpush1.bf16.msra.mxu0 %v4714
        %7568 = vmatprep.subr.bf16.mxu0 %v4731
        %7569 = vmatpush1.bf16.msra.mxu0 %v4730
        %7570 = vmatprep.subr.bf16.mxu0 %v4747
        %7571 = vmatpush1.bf16.msra.mxu0 %v4746
        %7572 = vmatprep.subr.bf16.mxu0 %v4763
        %7573 = vmatpush1.bf16.msra.mxu0 %v4762
        %7574 = vmatprep.mubr.bf16.mxu0 %v1411
        %7575 = vmatmul.mubr.bf16.gmra.mrb[0].mxu0 %v1403
        %v7576 = vpop.f32.mrb[0].mxu0
        %v7577 = vadd.f32 %v1365, %v7576
        %v7578 = vpop.f32.mrb[0].mxu0
        %v7579 = vadd.f32 %v1369, %v7578
        %v7580 = vpop.f32.mrb[0].mxu0
        %v7581 = vpop.f32.mrb[0].mxu0
        %7582 = vdwg.mxu0
        %7583 = vmatprep.subr.bf16.mxu0 %v4779
        %7584 = vmatpush1.bf16.msra.mxu0 %v4778
        %7585 = vmatprep.subr.bf16.mxu0 %v4795
        %7586 = vmatpush1.bf16.msra.mxu0 %v4794
        %7587 = vmatprep.subr.bf16.mxu0 %v4811
        %7588 = vmatpush1.bf16.msra.mxu0 %v4810
        %7589 = vmatprep.subr.bf16.mxu0 %v4827
        %7590 = vmatpush1.bf16.msra.mxu0 %v4826
        %7591 = vmatprep.subr.bf16.mxu0 %v4843
        %7592 = vmatpush1.bf16.msra.mxu0 %v4842
        %7593 = vmatprep.subr.bf16.mxu0 %v4859
        %7594 = vmatpush1.bf16.msra.mxu0 %v4858
        %7595 = vmatprep.subr.bf16.mxu0 %v4875
        %7596 = vmatpush1.bf16.msra.mxu0 %v4874
        %7597 = vmatprep.subr.bf16.mxu0 %v4891
        %7598 = vmatpush1.bf16.msra.mxu0 %v4890
        %7599 = vmatprep.subr.bf16.mxu0 %v4907
        %7600 = vmatpush1.bf16.msra.mxu0 %v4906
        %7601 = vmatprep.subr.bf16.mxu0 %v4923
        %7602 = vmatpush1.bf16.msra.mxu0 %v4922
        %7603 = vmatprep.subr.bf16.mxu0 %v4939
        %7604 = vmatpush1.bf16.msra.mxu0 %v4938
        %7605 = vmatprep.subr.bf16.mxu0 %v4955
        %7606 = vmatpush1.bf16.msra.mxu0 %v4954
        %7607 = vmatprep.subr.bf16.mxu0 %v4971
        %7608 = vmatpush1.bf16.msra.mxu0 %v4970
        %7609 = vmatprep.subr.bf16.mxu0 %v4987
        %7610 = vmatpush1.bf16.msra.mxu0 %v4986
        %7611 = vmatprep.subr.bf16.mxu0 %v5003
        %7612 = vmatpush1.bf16.msra.mxu0 %v5002
        %7613 = vmatprep.subr.bf16.mxu0 %v5019
        %7614 = vmatpush1.bf16.msra.mxu0 %v5018
        %7615 = vmatprep.mubr.bf16.mxu0 %v1412
        %7616 = vmatmul.mubr.bf16.gmra.mrb[0].mxu0 %v1410
        %v7617 = vpop.f32.mrb[0].mxu0
        %v7618 = vadd.f32 %v7577, %v7617
        %v7619 = vpop.f32.mrb[0].mxu0
        %v7620 = vadd.f32 %v7579, %v7619
        %v7621 = vpop.f32.mrb[0].mxu0
        %v7622 = vpop.f32.mrb[0].mxu0
        %7623 = vdwg.mxu0
        %7624 = vmatprep.subr.bf16.mxu0 %v5035
        %7625 = vmatpush1.bf16.msra.mxu0 %v5034
        %7626 = vmatprep.subr.bf16.mxu0 %v5051
        %7627 = vmatpush1.bf16.msra.mxu0 %v5050
        %7628 = vmatprep.subr.bf16.mxu0 %v5067
        %7629 = vmatpush1.bf16.msra.mxu0 %v5066
        %7630 = vmatprep.subr.bf16.mxu0 %v5083
        %7631 = vmatpush1.bf16.msra.mxu0 %v5082
        %7632 = vmatprep.subr.bf16.mxu0 %v5099
        %7633 = vmatpush1.bf16.msra.mxu0 %v5098
        %7634 = vmatprep.subr.bf16.mxu0 %v5115
        %7635 = vmatpush1.bf16.msra.mxu0 %v5114
        %7636 = vmatprep.subr.bf16.mxu0 %v5131
        %7637 = vmatpush1.bf16.msra.mxu0 %v5130
        %7638 = vmatprep.subr.bf16.mxu0 %v5147
        %7639 = vmatpush1.bf16.msra.mxu0 %v5146
        %7640 = vmatprep.subr.bf16.mxu0 %v5163
        %7641 = vmatpush1.bf16.msra.mxu0 %v5162
        %7642 = vmatprep.subr.bf16.mxu0 %v5179
        %7643 = vmatpush1.bf16.msra.mxu0 %v5178
        %7644 = vmatprep.subr.bf16.mxu0 %v5195
        %7645 = vmatpush1.bf16.msra.mxu0 %v5194
        %7646 = vmatprep.subr.bf16.mxu0 %v5211
        %7647 = vmatpush1.bf16.msra.mxu0 %v5210
        %7648 = vmatprep.subr.bf16.mxu0 %v5227
        %7649 = vmatpush1.bf16.msra.mxu0 %v5226
        %7650 = vmatprep.subr.bf16.mxu0 %v5243
        %7651 = vmatpush1.bf16.msra.mxu0 %v5242
        %7652 = vmatprep.subr.bf16.mxu0 %v5259
        %7653 = vmatpush1.bf16.msra.mxu0 %v5258
        %7654 = vmatprep.subr.bf16.mxu0 %v5275
        %7655 = vmatpush1.bf16.msra.mxu0 %v5274
        %7656 = vmatprep.mubr.bf16.mxu0 %v1428
        %7657 = vmatmul.mubr.bf16.gmra.mrb[0].mxu0 %v1420
        %v7658 = vpop.f32.mrb[0].mxu0
        %v7659 = vadd.f32 %v7618, %v7658
        %v7660 = vpop.f32.mrb[0].mxu0
        %v7661 = vadd.f32 %v7620, %v7660
        %v7662 = vpop.f32.mrb[0].mxu0
        %v7663 = vpop.f32.mrb[0].mxu0
        %7664 = vdwg.mxu0
        %7665 = vmatprep.subr.bf16.mxu0 %v5291
        %7666 = vmatpush1.bf16.msra.mxu0 %v5290
        %7667 = vmatprep.subr.bf16.mxu0 %v5307
        %7668 = vmatpush1.bf16.msra.mxu0 %v5306
        %7669 = vmatprep.subr.bf16.mxu0 %v5323
        %7670 = vmatpush1.bf16.msra.mxu0 %v5322
        %7671 = vmatprep.subr.bf16.mxu0 %v5339
        %7672 = vmatpush1.bf16.msra.mxu0 %v5338
        %7673 = vmatprep.subr.bf16.mxu0 %v5355
        %7674 = vmatpush1.bf16.msra.mxu0 %v5354
        %7675 = vmatprep.subr.bf16.mxu0 %v5371
        %7676 = vmatpush1.bf16.msra.mxu0 %v5370
        %7677 = vmatprep.subr.bf16.mxu0 %v5387
        %7678 = vmatpush1.bf16.msra.mxu0 %v5386
        %7679 = vmatprep.subr.bf16.mxu0 %v5403
        %7680 = vmatpush1.bf16.msra.mxu0 %v5402
        %7681 = vmatprep.subr.bf16.mxu0 %v5419
        %7682 = vmatpush1.bf16.msra.mxu0 %v5418
        %7683 = vmatprep.subr.bf16.mxu0 %v5435
        %7684 = vmatpush1.bf16.msra.mxu0 %v5434
        %7685 = vmatprep.subr.bf16.mxu0 %v5451
        %7686 = vmatpush1.bf16.msra.mxu0 %v5450
        %7687 = vmatprep.subr.bf16.mxu0 %v5467
        %7688 = vmatpush1.bf16.msra.mxu0 %v5466
        %7689 = vmatprep.subr.bf16.mxu0 %v5483
        %7690 = vmatpush1.bf16.msra.mxu0 %v5482
        %7691 = vmatprep.subr.bf16.mxu0 %v5499
        %7692 = vmatpush1.bf16.msra.mxu0 %v5498
        %7693 = vmatprep.subr.bf16.mxu0 %v5515
        %7694 = vmatpush1.bf16.msra.mxu0 %v5514
        %7695 = vmatprep.subr.bf16.mxu0 %v5531
        %7696 = vmatpush1.bf16.msra.mxu0 %v5530
        %7697 = vmatprep.mubr.bf16.mxu0 %v1429
        %7698 = vmatmul.mubr.bf16.gmra.mrb[0].mxu0 %v1427
        %v7699 = vpop.f32.mrb[0].mxu0
        %v7700 = vadd.f32 %v7659, %v7699
        %v7701 = vpop.f32.mrb[0].mxu0
        %v7702 = vadd.f32 %v7661, %v7701
        %v7703 = vpop.f32.mrb[0].mxu0
        %v7704 = vpop.f32.mrb[0].mxu0
        %7705 = vdwg.mxu0
        %7706 = vmatprep.subr.bf16.mxu0 %v4525
        %7707 = vmatpush1.bf16.msra.mxu0 %v4524
        %7708 = vmatprep.subr.bf16.mxu0 %v4541
        %7709 = vmatpush1.bf16.msra.mxu0 %v4540
        %7710 = vmatprep.subr.bf16.mxu0 %v4557
        %7711 = vmatpush1.bf16.msra.mxu0 %v4556
        %7712 = vmatprep.subr.bf16.mxu0 %v4573
        %7713 = vmatpush1.bf16.msra.mxu0 %v4572
        %7714 = vmatprep.subr.bf16.mxu0 %v4589
        %7715 = vmatpush1.bf16.msra.mxu0 %v4588
        %7716 = vmatprep.subr.bf16.mxu0 %v4605
        %7717 = vmatpush1.bf16.msra.mxu0 %v4604
        %7718 = vmatprep.subr.bf16.mxu0 %v4621
        %7719 = vmatpush1.bf16.msra.mxu0 %v4620
        %7720 = vmatprep.subr.bf16.mxu0 %v4637
        %7721 = vmatpush1.bf16.msra.mxu0 %v4636
        %7722 = vmatprep.subr.bf16.mxu0 %v4653
        %7723 = vmatpush1.bf16.msra.mxu0 %v4652
        %7724 = vmatprep.subr.bf16.mxu0 %v4669
        %7725 = vmatpush1.bf16.msra.mxu0 %v4668
        %7726 = vmatprep.subr.bf16.mxu0 %v4685
        %7727 = vmatpush1.bf16.msra.mxu0 %v4684
        %7728 = vmatprep.subr.bf16.mxu0 %v4701
        %7729 = vmatpush1.bf16.msra.mxu0 %v4700
        %7730 = vmatprep.subr.bf16.mxu0 %v4717
        %7731 = vmatpush1.bf16.msra.mxu0 %v4716
        %7732 = vmatprep.subr.bf16.mxu0 %v4733
        %7733 = vmatpush1.bf16.msra.mxu0 %v4732
        %7734 = vmatprep.subr.bf16.mxu0 %v4749
        %7735 = vmatpush1.bf16.msra.mxu0 %v4748
        %7736 = vmatprep.subr.bf16.mxu0 %v4765
        %7737 = vmatpush1.bf16.msra.mxu0 %v4764
        %7738 = vmatprep.mubr.bf16.mxu0 %v1411
        %7739 = vmatmul.mubr.bf16.gmra.mrb[0].mxu0 %v1403
        %v7740 = vpop.f32.mrb[0].mxu0
        %v7741 = vadd.f32 %v1373, %v7740
        %v7742 = vpop.f32.mrb[0].mxu0
        %v7743 = vadd.f32 %v1377, %v7742
        %v7744 = vpop.f32.mrb[0].mxu0
        %v7745 = vpop.f32.mrb[0].mxu0
        %7746 = vdwg.mxu0
        %7747 = vmatprep.subr.bf16.mxu0 %v4781
        %7748 = vmatpush1.bf16.msra.mxu0 %v4780
        %7749 = vmatprep.subr.bf16.mxu0 %v4797
        %7750 = vmatpush1.bf16.msra.mxu0 %v4796
        %7751 = vmatprep.subr.bf16.mxu0 %v4813
        %7752 = vmatpush1.bf16.msra.mxu0 %v4812
        %7753 = vmatprep.subr.bf16.mxu0 %v4829
        %7754 = vmatpush1.bf16.msra.mxu0 %v4828
        %7755 = vmatprep.subr.bf16.mxu0 %v4845
        %7756 = vmatpush1.bf16.msra.mxu0 %v4844
        %7757 = vmatprep.subr.bf16.mxu0 %v4861
        %7758 = vmatpush1.bf16.msra.mxu0 %v4860
        %7759 = vmatprep.subr.bf16.mxu0 %v4877
        %7760 = vmatpush1.bf16.msra.mxu0 %v4876
        %7761 = vmatprep.subr.bf16.mxu0 %v4893
        %7762 = vmatpush1.bf16.msra.mxu0 %v4892
        %7763 = vmatprep.subr.bf16.mxu0 %v4909
        %7764 = vmatpush1.bf16.msra.mxu0 %v4908
        %7765 = vmatprep.subr.bf16.mxu0 %v4925
        %7766 = vmatpush1.bf16.msra.mxu0 %v4924
        %7767 = vmatprep.subr.bf16.mxu0 %v4941
        %7768 = vmatpush1.bf16.msra.mxu0 %v4940
        %7769 = vmatprep.subr.bf16.mxu0 %v4957
        %7770 = vmatpush1.bf16.msra.mxu0 %v4956
        %7771 = vmatprep.subr.bf16.mxu0 %v4973
        %7772 = vmatpush1.bf16.msra.mxu0 %v4972
        %7773 = vmatprep.subr.bf16.mxu0 %v4989
        %7774 = vmatpush1.bf16.msra.mxu0 %v4988
        %7775 = vmatprep.subr.bf16.mxu0 %v5005
        %7776 = vmatpush1.bf16.msra.mxu0 %v5004
        %7777 = vmatprep.subr.bf16.mxu0 %v5021
        %7778 = vmatpush1.bf16.msra.mxu0 %v5020
        %7779 = vmatprep.mubr.bf16.mxu0 %v1412
        %7780 = vmatmul.mubr.bf16.gmra.mrb[0].mxu0 %v1410
        %v7781 = vpop.f32.mrb[0].mxu0
        %v7782 = vadd.f32 %v7741, %v7781
        %v7783 = vpop.f32.mrb[0].mxu0
        %v7784 = vadd.f32 %v7743, %v7783
        %v7785 = vpop.f32.mrb[0].mxu0
        %v7786 = vpop.f32.mrb[0].mxu0
        %7787 = vdwg.mxu0
        %7788 = vmatprep.subr.bf16.mxu0 %v5037
        %7789 = vmatpush1.bf16.msra.mxu0 %v5036
        %7790 = vmatprep.subr.bf16.mxu0 %v5053
        %7791 = vmatpush1.bf16.msra.mxu0 %v5052
        %7792 = vmatprep.subr.bf16.mxu0 %v5069
        %7793 = vmatpush1.bf16.msra.mxu0 %v5068
        %7794 = vmatprep.subr.bf16.mxu0 %v5085
        %7795 = vmatpush1.bf16.msra.mxu0 %v5084
        %7796 = vmatprep.subr.bf16.mxu0 %v5101
        %7797 = vmatpush1.bf16.msra.mxu0 %v5100
        %7798 = vmatprep.subr.bf16.mxu0 %v5117
        %7799 = vmatpush1.bf16.msra.mxu0 %v5116
        %7800 = vmatprep.subr.bf16.mxu0 %v5133
        %7801 = vmatpush1.bf16.msra.mxu0 %v5132
        %7802 = vmatprep.subr.bf16.mxu0 %v5149
        %7803 = vmatpush1.bf16.msra.mxu0 %v5148
        %7804 = vmatprep.subr.bf16.mxu0 %v5165
        %7805 = vmatpush1.bf16.msra.mxu0 %v5164
        %7806 = vmatprep.subr.bf16.mxu0 %v5181
        %7807 = vmatpush1.bf16.msra.mxu0 %v5180
        %7808 = vmatprep.subr.bf16.mxu0 %v5197
        %7809 = vmatpush1.bf16.msra.mxu0 %v5196
        %7810 = vmatprep.subr.bf16.mxu0 %v5213
        %7811 = vmatpush1.bf16.msra.mxu0 %v5212
        %7812 = vmatprep.subr.bf16.mxu0 %v5229
        %7813 = vmatpush1.bf16.msra.mxu0 %v5228
        %7814 = vmatprep.subr.bf16.mxu0 %v5245
        %7815 = vmatpush1.bf16.msra.mxu0 %v5244
        %7816 = vmatprep.subr.bf16.mxu0 %v5261
        %7817 = vmatpush1.bf16.msra.mxu0 %v5260
        %7818 = vmatprep.subr.bf16.mxu0 %v5277
        %7819 = vmatpush1.bf16.msra.mxu0 %v5276
        %7820 = vmatprep.mubr.bf16.mxu0 %v1428
        %7821 = vmatmul.mubr.bf16.gmra.mrb[0].mxu0 %v1420
        %v7822 = vpop.f32.mrb[0].mxu0
        %v7823 = vadd.f32 %v7782, %v7822
        %v7824 = vpop.f32.mrb[0].mxu0
        %v7825 = vadd.f32 %v7784, %v7824
        %v7826 = vpop.f32.mrb[0].mxu0
        %v7827 = vpop.f32.mrb[0].mxu0
        %7828 = vdwg.mxu0
        %7829 = vmatprep.subr.bf16.mxu0 %v5293
        %7830 = vmatpush1.bf16.msra.mxu0 %v5292
        %7831 = vmatprep.subr.bf16.mxu0 %v5309
        %7832 = vmatpush1.bf16.msra.mxu0 %v5308
        %7833 = vmatprep.subr.bf16.mxu0 %v5325
        %7834 = vmatpush1.bf16.msra.mxu0 %v5324
        %7835 = vmatprep.subr.bf16.mxu0 %v5341
        %7836 = vmatpush1.bf16.msra.mxu0 %v5340
        %7837 = vmatprep.subr.bf16.mxu0 %v5357
        %7838 = vmatpush1.bf16.msra.mxu0 %v5356
        %7839 = vmatprep.subr.bf16.mxu0 %v5373
        %7840 = vmatpush1.bf16.msra.mxu0 %v5372
        %7841 = vmatprep.subr.bf16.mxu0 %v5389
        %7842 = vmatpush1.bf16.msra.mxu0 %v5388
        %7843 = vmatprep.subr.bf16.mxu0 %v5405
        %7844 = vmatpush1.bf16.msra.mxu0 %v5404
        %7845 = vmatprep.subr.bf16.mxu0 %v5421
        %7846 = vmatpush1.bf16.msra.mxu0 %v5420
        %7847 = vmatprep.subr.bf16.mxu0 %v5437
        %7848 = vmatpush1.bf16.msra.mxu0 %v5436
        %7849 = vmatprep.subr.bf16.mxu0 %v5453
        %7850 = vmatpush1.bf16.msra.mxu0 %v5452
        %7851 = vmatprep.subr.bf16.mxu0 %v5469
        %7852 = vmatpush1.bf16.msra.mxu0 %v5468
        %7853 = vmatprep.subr.bf16.mxu0 %v5485
        %7854 = vmatpush1.bf16.msra.mxu0 %v5484
        %7855 = vmatprep.subr.bf16.mxu0 %v5501
        %7856 = vmatpush1.bf16.msra.mxu0 %v5500
        %7857 = vmatprep.subr.bf16.mxu0 %v5517
        %7858 = vmatpush1.bf16.msra.mxu0 %v5516
        %7859 = vmatprep.subr.bf16.mxu0 %v5533
        %7860 = vmatpush1.bf16.msra.mxu0 %v5532
        %7861 = vmatprep.mubr.bf16.mxu0 %v1429
        %7862 = vmatmul.mubr.bf16.gmra.mrb[0].mxu0 %v1427
        %v7863 = vpop.f32.mrb[0].mxu0
        %v7864 = vadd.f32 %v7823, %v7863
        %v7865 = vpop.f32.mrb[0].mxu0
        %v7866 = vadd.f32 %v7825, %v7865
        %v7867 = vpop.f32.mrb[0].mxu0
        %v7868 = vpop.f32.mrb[0].mxu0
        %7869 = vdwg.mxu0
        %v7870 = vmax.f32 %v6716, 0.0
        %v7871 = vmax.f32 %v6718, 0.0
        %v7872 = vmax.f32 %v6880, 0.0
        %v7873 = vmax.f32 %v6882, 0.0
        %v7874 = vmax.f32 %v7044, 0.0
        %v7875 = vmax.f32 %v7046, 0.0
        %v7876 = vmax.f32 %v7208, 0.0
        %v7877 = vmax.f32 %v7210, 0.0
        %v7878 = vmax.f32 %v7372, 0.0
        %v7879 = vmax.f32 %v7374, 0.0
        %v7880 = vmax.f32 %v7536, 0.0
        %v7881 = vmax.f32 %v7538, 0.0
        %v7882 = vmax.f32 %v7700, 0.0
        %v7883 = vmax.f32 %v7702, 0.0
        %v7884 = vmax.f32 %v7864, 0.0
        %v7885 = vmax.f32 %v7866, 0.0
        %v7902 = vrot.slane %v7870, 2
        %v7903 = vrot.slane %v7871, 2
        %v7904 = vrot.slane %v7872, 2
        %v7905 = vrot.slane %v7873, 2
        %v7906 = vrot.slane %v7874, 2
        %v7907 = vrot.slane %v7875, 2
        %v7908 = vrot.slane %v7876, 2
        %v7909 = vrot.slane %v7877, 2
        %v7910 = vrot.slane %v7878, 2
        %v7911 = vrot.slane %v7879, 2
        %v7912 = vrot.slane %v7880, 2
        %v7913 = vrot.slane %v7881, 2
        %v7914 = vrot.slane %v7882, 2
        %v7915 = vrot.slane %v7883, 2
        %v7916 = vrot.slane %v7884, 2
        %v7917 = vrot.slane %v7885, 2
        %v7934 = vsub.f32 %v7870, %v7902
        %v7935 = vsub.f32 %v7871, %v7903
        %v7936 = vsub.f32 %v7872, %v7904
        %v7937 = vsub.f32 %v7873, %v7905
        %v7938 = vsub.f32 %v7874, %v7906
        %v7939 = vsub.f32 %v7875, %v7907
        %v7940 = vsub.f32 %v7876, %v7908
        %v7941 = vsub.f32 %v7877, %v7909
        %v7942 = vsub.f32 %v7878, %v7910
        %v7943 = vsub.f32 %v7879, %v7911
        %v7944 = vsub.f32 %v7880, %v7912
        %v7945 = vsub.f32 %v7881, %v7913
        %v7946 = vsub.f32 %v7882, %v7914
        %v7947 = vsub.f32 %v7883, %v7915
        %v7948 = vsub.f32 %v7884, %v7916
        %v7949 = vsub.f32 %v7885, %v7917
        %v7950 = vand.u32 2147483647, %v7934
        %v7951 = vand.u32 2147483647, %v7935
        %v7952 = vand.u32 2147483647, %v7936
        %v7953 = vand.u32 2147483647, %v7937
        %v7954 = vand.u32 2147483647, %v7938
        %v7955 = vand.u32 2147483647, %v7939
        %v7956 = vand.u32 2147483647, %v7940
        %v7957 = vand.u32 2147483647, %v7941
        %v7958 = vand.u32 2147483647, %v7942
        %v7959 = vand.u32 2147483647, %v7943
        %v7960 = vand.u32 2147483647, %v7944
        %v7961 = vand.u32 2147483647, %v7945
        %v7962 = vand.u32 2147483647, %v7946
        %v7963 = vand.u32 2147483647, %v7947
        %v7964 = vand.u32 2147483647, %v7948
        %v7965 = vand.u32 2147483647, %v7949
        %v7966 = vld [vmem:[#allocation2] sm:$0xff]
        %v7967 = vld [vmem:[#allocation2 + $0x8] sm:$0xff]
        %v7968 = vld [vmem:[#allocation2 + $0x10] sm:$0xff]
        %v7969 = vld [vmem:[#allocation2 + $0x18] sm:$0xff]
        %s7970 = scalar_lea.vmem [#allocation8], %s1307
        %v7971 = vld [vmem:[%s7970] sm:$0xff]
        %v7972 = vld [vmem:[%s7970 + $0x8] sm:$0xff]
        %v7975 = vlaneseq
        %v7976 = vshrl.u32 %v7975, 7
        %v7977 = vsub.s32 0, %v7976
        %v7978 = vrot.slane %v7971, %v7977
        %v7979 = vlaneseq
        %v7980 = vshrl.u32 %v7979, 7
        %v7981 = vsub.s32 1, %v7980
        %v7982 = vrot.slane %v7971, %v7981
        %v7983 = vlaneseq
        %v7984 = vshrl.u32 %v7983, 7
        %v7985 = vsub.s32 2, %v7984
        %v7986 = vrot.slane %v7971, %v7985
        %v7987 = vlaneseq
        %v7988 = vshrl.u32 %v7987, 7
        %v7989 = vsub.s32 3, %v7988
        %v7990 = vrot.slane %v7971, %v7989
        %v7991 = vlaneseq
        %v7992 = vshrl.u32 %v7991, 7
        %v7993 = vsub.s32 4, %v7992
        %v7994 = vrot.slane %v7971, %v7993
        %v7995 = vlaneseq
        %v7996 = vshrl.u32 %v7995, 7
        %v7997 = vsub.s32 5, %v7996
        %v7998 = vrot.slane %v7971, %v7997
        %v7999 = vlaneseq
        %v8000 = vshrl.u32 %v7999, 7
        %v8001 = vsub.s32 6, %v8000
        %v8002 = vrot.slane %v7971, %v8001
        %v8003 = vlaneseq
        %v8004 = vshrl.u32 %v8003, 7
        %v8005 = vsub.s32 7, %v8004
        %v8006 = vrot.slane %v7971, %v8005
        %v8007 = vlaneseq
        %v8008 = vshrl.u32 %v8007, 7
        %v8009 = vsub.s32 0, %v8008
        %v8010 = vrot.slane %v7972, %v8009
        %v8011 = vlaneseq
        %v8012 = vshrl.u32 %v8011, 7
        %v8013 = vsub.s32 1, %v8012
        %v8014 = vrot.slane %v7972, %v8013
        %v8015 = vlaneseq
        %v8016 = vshrl.u32 %v8015, 7
        %v8017 = vsub.s32 2, %v8016
        %v8018 = vrot.slane %v7972, %v8017
        %v8019 = vlaneseq
        %v8020 = vshrl.u32 %v8019, 7
        %v8021 = vsub.s32 3, %v8020
        %v8022 = vrot.slane %v7972, %v8021
        %v8023 = vlaneseq
        %v8024 = vshrl.u32 %v8023, 7
        %v8025 = vsub.s32 4, %v8024
        %v8026 = vrot.slane %v7972, %v8025
        %v8027 = vlaneseq
        %v8028 = vshrl.u32 %v8027, 7
        %v8029 = vsub.s32 5, %v8028
        %v8030 = vrot.slane %v7972, %v8029
        %v8031 = vlaneseq
        %v8032 = vshrl.u32 %v8031, 7
        %v8033 = vsub.s32 6, %v8032
        %v8034 = vrot.slane %v7972, %v8033
        %v8035 = vlaneseq
        %v8036 = vshrl.u32 %v8035, 7
        %v8037 = vsub.s32 7, %v8036
        %v8038 = vrot.slane %v7972, %v8037
        %v8055 = vmul.f32 %v7950, %v7978
        %v8056 = vmul.f32 %v7951, %v7982
        %v8057 = vmul.f32 %v7952, %v7986
        %v8058 = vmul.f32 %v7953, %v7990
        %v8059 = vmul.f32 %v7954, %v7994
        %v8060 = vmul.f32 %v7955, %v7998
        %v8061 = vmul.f32 %v7956, %v8002
        %v8062 = vmul.f32 %v7957, %v8006
        %v8063 = vmul.f32 %v7958, %v8010
        %v8064 = vmul.f32 %v7959, %v8014
        %v8065 = vmul.f32 %v7960, %v8018
        %v8066 = vmul.f32 %v7961, %v8022
        %v8067 = vmul.f32 %v7962, %v8026
        %v8068 = vmul.f32 %v7963, %v8030
        %v8069 = vmul.f32 %v7964, %v8034
        %v8070 = vmul.f32 %v7965, %v8038
        %v8087 = vcombine.low %v8055, %v8056
        %v8088 = vcombine.low %v8057, %v8058
        %v8090 = vunpack.c.l.s4 1983009808
        %v8091 = vunpack.c.0.s8 %v8090
        %v8092 = vlaneseq
        %v8093 = vshrl.u32 %v8092, 7
        %v8094 = vsub.s32 %v8091, %v8093
        %v8095 = vrot.slane %v8087, %v8094
        %v8097 = vunpack.c.l.s4 1983009808
        %v8098 = vunpack.c.0.s8 %v8097
        %v8099 = vlaneseq
        %v8100 = vshrl.u32 %v8099, 7
        %v8101 = vsub.s32 %v8098, %v8100
        %v8102 = vrot.slane %v8088, %v8101
        %v8103 = vcombine.low %v8095, %v8102
        %v8104 = vcombine.low %v8059, %v8060
        %v8105 = vcombine.low %v8061, %v8062
        %v8107 = vunpack.c.l.s4 1983009808
        %v8108 = vunpack.c.0.s8 %v8107
        %v8109 = vlaneseq
        %v8110 = vshrl.u32 %v8109, 7
        %v8111 = vsub.s32 %v8108, %v8110
        %v8112 = vrot.slane %v8104, %v8111
        %v8114 = vunpack.c.l.s4 1983009808
        %v8115 = vunpack.c.0.s8 %v8114
        %v8116 = vlaneseq
        %v8117 = vshrl.u32 %v8116, 7
        %v8118 = vsub.s32 %v8115, %v8117
        %v8119 = vrot.slane %v8105, %v8118
        %v8120 = vcombine.low %v8112, %v8119
        %v8121 = vcombine.low %v8063, %v8064
        %v8122 = vcombine.low %v8065, %v8066
        %v8124 = vunpack.c.l.s4 1983009808
        %v8125 = vunpack.c.0.s8 %v8124
        %v8126 = vlaneseq
        %v8127 = vshrl.u32 %v8126, 7
        %v8128 = vsub.s32 %v8125, %v8127
        %v8129 = vrot.slane %v8121, %v8128
        %v8131 = vunpack.c.l.s4 1983009808
        %v8132 = vunpack.c.0.s8 %v8131
        %v8133 = vlaneseq
        %v8134 = vshrl.u32 %v8133, 7
        %v8135 = vsub.s32 %v8132, %v8134
        %v8136 = vrot.slane %v8122, %v8135
        %v8137 = vcombine.low %v8129, %v8136
        %v8138 = vcombine.low %v8067, %v8068
        %v8139 = vcombine.low %v8069, %v8070
        %v8141 = vunpack.c.l.s4 1983009808
        %v8142 = vunpack.c.0.s8 %v8141
        %v8143 = vlaneseq
        %v8144 = vshrl.u32 %v8143, 7
        %v8145 = vsub.s32 %v8142, %v8144
        %v8146 = vrot.slane %v8138, %v8145
        %v8148 = vunpack.c.l.s4 1983009808
        %v8149 = vunpack.c.0.s8 %v8148
        %v8150 = vlaneseq
        %v8151 = vshrl.u32 %v8150, 7
        %v8152 = vsub.s32 %v8149, %v8151
        %v8153 = vrot.slane %v8139, %v8152
        %v8154 = vcombine.low %v8146, %v8153
        %v8159 = vadd.f32 %v7966, %v8103
        %v8160 = vadd.f32 %v7967, %v8120
        %v8161 = vadd.f32 %v7968, %v8137
        %v8162 = vadd.f32 %v7969, %v8154
        %8163 = vst [vmem:[#allocation2] sm:$0xff] %v8159
        %8164 = vst [vmem:[#allocation2 + $0x8] sm:$0xff] %v8160
        %8165 = vst [vmem:[#allocation2 + $0x10] sm:$0xff] %v8161
        %8166 = vst [vmem:[#allocation2 + $0x18] sm:$0xff] %v8162
        // Predicated region
        $region57: #{tpu_custom_call.1} parent=35 // pred_check
          %p8167 = pneg %p271
        $region58: #{tpu_custom_call.1} parent=35 // pred_check_branch
          %8169 = sbr.rel (%p8167) target = $region60
        $region59: #{tpu_custom_call.1} parent=35 // pred_region
          %v8170 = vld [vmem:[#allocation2] sm:$0xff]
          %v8171 = vld [vmem:[#allocation2 + $0x8] sm:$0xff]
          %v8172 = vld [vmem:[#allocation2 + $0x10] sm:$0xff]
          %v8173 = vld [vmem:[#allocation2 + $0x18] sm:$0xff]
          %v8178 = vcombine.high %v8170, %v8170
          %v8180 = vunpack.c.l.s4 1983009808
          %v8181 = vunpack.c.0.s8 %v8180
          %v8182 = vlaneseq
          %v8183 = vshrl.u32 %v8182, 7
          %v8184 = vsub.s32 %v8181, %v8183
          %v8185 = vrot.slane %v8170, %v8184
          %v8187 = vunpack.c.l.s4 1983009808
          %v8188 = vunpack.c.0.s8 %v8187
          %v8189 = vlaneseq
          %v8190 = vshrl.u32 %v8189, 7
          %v8191 = vsub.s32 %v8188, %v8190
          %v8192 = vrot.slane %v8178, %v8191
          %v8193 = vcombine.high %v8185, %v8185
          %v8194 = vcombine.high %v8192, %v8192
          %v8195 = vcombine.high %v8171, %v8171
          %v8197 = vunpack.c.l.s4 1983009808
          %v8198 = vunpack.c.0.s8 %v8197
          %v8199 = vlaneseq
          %v8200 = vshrl.u32 %v8199, 7
          %v8201 = vsub.s32 %v8198, %v8200
          %v8202 = vrot.slane %v8171, %v8201
          %v8204 = vunpack.c.l.s4 1983009808
          %v8205 = vunpack.c.0.s8 %v8204
          %v8206 = vlaneseq
          %v8207 = vshrl.u32 %v8206, 7
          %v8208 = vsub.s32 %v8205, %v8207
          %v8209 = vrot.slane %v8195, %v8208
          %v8210 = vcombine.high %v8202, %v8202
          %v8211 = vcombine.high %v8209, %v8209
          %v8212 = vcombine.high %v8172, %v8172
          %v8214 = vunpack.c.l.s4 1983009808
          %v8215 = vunpack.c.0.s8 %v8214
          %v8216 = vlaneseq
          %v8217 = vshrl.u32 %v8216, 7
          %v8218 = vsub.s32 %v8215, %v8217
          %v8219 = vrot.slane %v8172, %v8218
          %v8221 = vunpack.c.l.s4 1983009808
          %v8222 = vunpack.c.0.s8 %v8221
          %v8223 = vlaneseq
          %v8224 = vshrl.u32 %v8223, 7
          %v8225 = vsub.s32 %v8222, %v8224
          %v8226 = vrot.slane %v8212, %v8225
          %v8227 = vcombine.high %v8219, %v8219
          %v8228 = vcombine.high %v8226, %v8226
          %v8229 = vcombine.high %v8173, %v8173
          %v8231 = vunpack.c.l.s4 1983009808
          %v8232 = vunpack.c.0.s8 %v8231
          %v8233 = vlaneseq
          %v8234 = vshrl.u32 %v8233, 7
          %v8235 = vsub.s32 %v8232, %v8234
          %v8236 = vrot.slane %v8173, %v8235
          %v8238 = vunpack.c.l.s4 1983009808
          %v8239 = vunpack.c.0.s8 %v8238
          %v8240 = vlaneseq
          %v8241 = vshrl.u32 %v8240, 7
          %v8242 = vsub.s32 %v8239, %v8241
          %v8243 = vrot.slane %v8229, %v8242
          %v8244 = vcombine.high %v8236, %v8236
          %v8245 = vcombine.high %v8243, %v8243
          %vm8262 = vcmask 1041408
          %v8263 = vsel %vm8262, %v8185, 0.0
          %v8264 = vsel %vm8262, %v8193, 0.0
          %v8265 = vadd.f32 %v8263, %v8264
          %v8266 = vsel %vm8262, %v8192, 0.0
          %v8267 = vadd.f32 %v8265, %v8266
          %v8268 = vsel %vm8262, %v8194, 0.0
          %v8269 = vadd.f32 %v8267, %v8268
          %v8270 = vsel %vm8262, %v8202, 0.0
          %v8271 = vadd.f32 %v8269, %v8270
          %v8272 = vsel %vm8262, %v8210, 0.0
          %v8273 = vadd.f32 %v8271, %v8272
          %v8274 = vsel %vm8262, %v8209, 0.0
          %v8275 = vadd.f32 %v8273, %v8274
          %v8276 = vsel %vm8262, %v8211, 0.0
          %v8277 = vadd.f32 %v8275, %v8276
          %v8278 = vsel %vm8262, %v8219, 0.0
          %v8279 = vadd.f32 %v8277, %v8278
          %v8280 = vsel %vm8262, %v8227, 0.0
          %v8281 = vadd.f32 %v8279, %v8280
          %v8282 = vsel %vm8262, %v8226, 0.0
          %v8283 = vadd.f32 %v8281, %v8282
          %v8284 = vsel %vm8262, %v8228, 0.0
          %v8285 = vadd.f32 %v8283, %v8284
          %v8286 = vsel %vm8262, %v8236, 0.0
          %v8287 = vadd.f32 %v8285, %v8286
          %v8288 = vsel %vm8262, %v8244, 0.0
          %v8289 = vadd.f32 %v8287, %v8288
          %v8290 = vsel %vm8262, %v8243, 0.0
          %v8291 = vadd.f32 %v8289, %v8290
          %v8292 = vsel %vm8262, %v8245, 0.0
          %v8293 = vadd.f32 %v8291, %v8292
          %8294 = vadd.xlane.f32.xlu0 %v8293
          %v8295 = vpop.xlane.xlu0 %8294
          %vm8296 = vcmask 1024
          %8297 = vst.msk [vmem:[%s270] sm:$0x3] %vm8296, %v8295
        $region60: #{tpu_custom_call.1} parent=35 // pred_fallthru
          _
        %p8298 = scmp.lt.s32.totalorder %s24, 1
        %s8299 = scalar_select %p8298, %s24, 1
        %s8300 = smul.addr %s8299, 2
        %s8301 = scalar_lea.vmem %s4, %s8300
        // Predicated region
        $region61: #{tpu_custom_call.1} parent=35 // pred_check
          %p8302 = pneg %p141
        $region62: #{tpu_custom_call.1} parent=35 // pred_check_branch
          %8304 = sbr.rel (%p8302) target = $region64
        $region63: #{tpu_custom_call.1} parent=35 // pred_region
          _
        $region64: #{tpu_custom_call.1} parent=35 // pred_fallthru
          _
      $region36: #{tpu_custom_call.1} parent=5 // pred_fallthru
        _
      %p8305 = scmp.le.s32.totalorder 2, %s15
      // Predicated region
      $region65: #{tpu_custom_call.1} parent=5 // pred_check
        %p8306 = pneg %p8305
      $region66: #{tpu_custom_call.1} parent=5 // pred_check_branch
        %8308 = sbr.rel (%p8306) target = $region68
      $region67: #{tpu_custom_call.1} parent=5 // pred_region
        %s8309 = ssub.s32 %s15, 2
        // Predicated region
        $region69: #{tpu_custom_call.1} parent=67 // pred_check
          %p8310 = pneg %p147
        $region70: #{tpu_custom_call.1} parent=67 // pred_check_branch
          %8312 = sbr.rel (%p8310) target = $region72
        $region71: #{tpu_custom_call.1} parent=67 // pred_region
          %p8313 = scmp.lt.s32.totalorder %s26, 1
          %s8314 = scalar_select %p8313, %s26, 1
          %s8315 = smul.addr %s8314, 2
          %s8316 = scalar_lea.vmem %s4, %s8315
        $region72: #{tpu_custom_call.1} parent=67 // pred_fallthru
          _
      $region68: #{tpu_custom_call.1} parent=5 // pred_fallthru
        _
    $region6: #{tpu_custom_call.1} parent=1 // loop_footer
      %s19 = sadd.s32 1, %s15
    $region7: #{tpu_custom_call.1} parent=1 // loop_footer_branch
      %14 = sbr.rel target = $region3
    $region8: #{tpu_custom_call.1} parent=1 // loop_exit
      _
    %8317 = vsyncpa [#allocation4], 1
    %s8318 = scalar_lea.sflag [#allocation4], 1
    %8319 = vsyncpa %s8318, 1
    %8320 = vsyncpa [#allocation6], 1
    %s8321 = scalar_lea.sflag [#allocation6], 1
    %8322 = vsyncpa %s8321, 1
    %8323 = vsyncpa [#allocation9], 1

</llo_original>
